<compile_context>
chip_gen: v7x
topology: tpu7x:2x2x1
jax: 0.10.0
libtpu: 0.0.40
codegen_flags: <defaults>
</compile_context>

<pallas_src>
import functools

import jax
import jax.numpy as jnp
from jax.experimental import pallas as pl
from jax.experimental.pallas import tpu as pltpu


# ----------------------------------------------------------------------------
# Kernels
# ----------------------------------------------------------------------------
def _conv_bn_lrelu_kernel(a_ref, wt_ref, bias_ref, gamma_ref, beta_ref,
                          out_ref, *, eps, slope):
    """Conv-as-matmul + BatchNorm(train) + LeakyReLU, all VMEM-resident."""
    # (Cout, K) @ (K, M) on the MXU, bf16 operands, f32 accumulation.
    y = jnp.dot(wt_ref[...], a_ref[...], preferred_element_type=jnp.float32)
    y = y + bias_ref[...]                                   # (Cout, M) + (Cout, 1)
    m = y.shape[1]
    inv_m = 1.0 / m
    mean = jnp.sum(y, axis=1, keepdims=True) * inv_m        # per-channel mean
    d = y - mean
    var = jnp.sum(d * d, axis=1, keepdims=True) * inv_m     # biased variance
    scale = gamma_ref[...] * jax.lax.rsqrt(var + eps)
    z = d * scale + beta_ref[...]
    act = jnp.maximum(z, slope * z)                         # LeakyReLU(0.2)
    out_ref[...] = act.astype(out_ref.dtype)                # lane-dense bf16 store


def _final_layer_kernel(a_ref, wt_ref, bias_ref, gamma_ref, beta_ref,
                        wh_ref, hb_ref, head_ref, *, eps, slope, batch, hw):
    """Last conv layer + BN + LeakyReLU + Linear(4096, 1) + Sigmoid epilogue."""
    y = jnp.dot(wt_ref[...], a_ref[...], preferred_element_type=jnp.float32)
    y = y + bias_ref[...]
    m = y.shape[1]
    inv_m = 1.0 / m
    mean = jnp.sum(y, axis=1, keepdims=True) * inv_m
    d = y - mean
    var = jnp.sum(d * d, axis=1, keepdims=True) * inv_m
    scale = gamma_ref[...] * jax.lax.rsqrt(var + eps)
    z = d * scale + beta_ref[...]
    act = jnp.maximum(z, slope * z)                         # (Cout, B*HW), f32

    # Regressor: torch's x.view(B, -1) flattens NCHW as co*HW + i*W + j, so the
    # Linear weight is passed as (Cout, HW) and reduced per batch element via
    # lane-contiguous slices (no one-hot matrix, no tiled weight).
    wh = wh_ref[...]                                        # (Cout, HW)
    logits = []
    for b in range(batch):                                  # static (B small)
        chunk = act[:, b * hw:(b + 1) * hw]                 # (Cout, HW)
        s1 = jnp.sum(chunk * wh, axis=1, keepdims=True)     # (Cout, 1)
        logits.append(jnp.sum(s1, axis=0, keepdims=True) + hb_ref[...])
    logit_col = jnp.concatenate(logits, axis=0)             # (B, 1)
    head_ref[...] = 1.0 / (1.0 + jnp.exp(-logit_col))       # Sigmoid


# ----------------------------------------------------------------------------
# pallas_call wrappers (single block, no grid accumulation)
# ----------------------------------------------------------------------------
def conv_bn_lrelu(a, wt, bias, gamma, beta, *, eps=1e-5, slope=0.2):
    """a: (K, M) bf16 im2col patches (pixels on lanes); wt: (Cout, K) bf16."""
    k, m = a.shape
    cout = wt.shape[0]
    kernel = functools.partial(_conv_bn_lrelu_kernel, eps=eps, slope=slope)
    return pl.pallas_call(
        kernel,
        grid=(1,),
        in_specs=[
            pl.BlockSpec((k, m), lambda i: (0, 0)),
            pl.BlockSpec((cout, k), lambda i: (0, 0)),
            pl.BlockSpec((cout, 1), lambda i: (0, 0)),
            pl.BlockSpec((cout, 1), lambda i: (0, 0)),
            pl.BlockSpec((cout, 1), lambda i: (0, 0)),
        ],
        out_specs=pl.BlockSpec((cout, m), lambda i: (0, 0)),
        out_shape=jax.ShapeDtypeStruct((cout, m), jnp.bfloat16),
        compiler_params=pltpu.CompilerParams(
            dimension_semantics=("arbitrary",)),
    )(a, wt, bias, gamma, beta)


def conv_bn_lrelu_head(a, wt, bias, gamma, beta, head_w, head_b, *, batch,
                       eps=1e-5, slope=0.2):
    """Final layer: conv + BN + LReLU + Linear + Sigmoid -> (B, 1)."""
    k, m = a.shape
    cout = wt.shape[0]
    hw = m // batch
    kernel = functools.partial(_final_layer_kernel, eps=eps, slope=slope,
                               batch=batch, hw=hw)
    return pl.pallas_call(
        kernel,
        grid=(1,),
        in_specs=[
            pl.BlockSpec((k, m), lambda i: (0, 0)),
            pl.BlockSpec((cout, k), lambda i: (0, 0)),
            pl.BlockSpec((cout, 1), lambda i: (0, 0)),
            pl.BlockSpec((cout, 1), lambda i: (0, 0)),
            pl.BlockSpec((cout, 1), lambda i: (0, 0)),
            pl.BlockSpec((cout, hw), lambda i: (0, 0)),
            pl.BlockSpec((1, 1), lambda i: (0, 0)),
        ],
        out_specs=pl.BlockSpec((batch, 1), lambda i: (0, 0)),
        out_shape=jax.ShapeDtypeStruct((batch, 1), jnp.float32),
        compiler_params=pltpu.CompilerParams(
            dimension_semantics=("arbitrary",)),
    )(a, wt, bias, gamma, beta, head_w, head_b)


# ----------------------------------------------------------------------------
# Glue: im2col (channel-first, bf16), weights, spectral norm, forward.
# ----------------------------------------------------------------------------
def _im2col_k5_s2_p2(x_cbhw):
    """x: (Cin, B, H, W) -> patches (25*Cin, B*Ho*Wo), K-order (kh, kw, cin)."""
    cin, b, h, w = x_cbhw.shape
    ho = (h + 4 - 5) // 2 + 1
    wo = (w + 4 - 5) // 2 + 1
    xp = jnp.pad(x_cbhw, ((0, 0), (0, 0), (2, 2), (2, 2)))
    taps = []
    for kh in range(5):
        for kw in range(5):
            taps.append(xp[:, :, kh:kh + 2 * ho:2, kw:kw + 2 * wo:2])
    a = jnp.stack(taps, axis=0)                       # (25, Cin, B, Ho, Wo)
    return a.reshape(25 * cin, b * ho * wo), (b, ho, wo)


def _conv_weight_to_matrix(w_oihw):
    """(Cout, Cin, 5, 5) -> (Cout, 25*Cin) matching the (kh, kw, cin) K-order."""
    cout = w_oihw.shape[0]
    return jnp.transpose(w_oihw, (0, 2, 3, 1)).reshape(cout, -1)


def spectral_normalize(w_oihw, n_iter=50):
    """W / sigma_max(W.reshape(Cout, -1)), converged power iteration (setup)."""
    cout = w_oihw.shape[0]
    wm = w_oihw.reshape(cout, -1)
    u = jnp.ones((cout,), jnp.float32) / jnp.sqrt(cout)
    v = None
    for _ in range(n_iter):
        v = wm.T @ u
        v = v / (jnp.linalg.norm(v) + 1e-12)
        u = wm @ v
        u = u / (jnp.linalg.norm(u) + 1e-12)
    sigma = u @ (wm @ v)
    return w_oihw / sigma


def init_params(key, n_class=3):
    chans = [n_class, 8, 16, 32, 64]
    keys = jax.random.split(key, 2 * (len(chans) - 1) + 1)
    convs = []
    ki = 0
    for cin, cout in zip(chans[:-1], chans[1:]):
        w = 0.1 * jax.random.normal(keys[ki], (cout, cin, 5, 5), jnp.float32)
        ki += 1
        b = 0.1 * jax.random.normal(keys[ki], (cout,), jnp.float32)
        ki += 1
        convs.append(dict(
            wt=_conv_weight_to_matrix(spectral_normalize(w)).astype(jnp.bfloat16),
            b=b.reshape(cout, 1),
            gamma=jnp.ones((cout, 1), jnp.float32),   # torch BN default init
            beta=jnp.zeros((cout, 1), jnp.float32),
        ))
    cout_last = chans[-1]
    hw = 4096 // cout_last                            # Linear(4096,1) -> 8x8 maps
    lin_w = 0.02 * jax.random.normal(keys[ki], (1, 4096), jnp.float32)
    head_w = lin_w.reshape(cout_last, hw)             # (Cout, Ho*Wo)
    head_b = jnp.zeros((1, 1), jnp.float32)
    return dict(convs=convs, head_w=head_w, head_b=head_b)


@jax.jit
def dis_forward(img_nchw, params):
    # NCHW -> (C, B, H, W): channels on sublanes, pixels on lanes downstream.
    x = jnp.transpose(img_nchw, (1, 0, 2, 3)).astype(jnp.bfloat16)
    convs = params["convs"]
    n_layers = len(convs)
    out = None
    for li, layer in enumerate(convs):
        a, (b, ho, wo) = _im2col_k5_s2_p2(x)          # bf16 patches
        if li < n_layers - 1:
            act = conv_bn_lrelu(a, layer["wt"], layer["b"],
                                layer["gamma"], layer["beta"])
            # (Cout, B*Ho*Wo) -> (Cout, B, Ho, Wo): pure metadata reshape.
            x = act.reshape(layer["wt"].shape[0], b, ho, wo)
        else:
            out = conv_bn_lrelu_head(a, layer["wt"], layer["b"],
                                     layer["gamma"], layer["beta"],
                                     params["head_w"], params["head_b"],
                                     batch=b)
    return out                                        # (B, 1) in [0, 1]


if __name__ == "__main__":
    # Linear(4096, 1) + four stride-2 convs fix the input at 3 x 128 x 128.
    key = jax.random.PRNGKey(0)
    params = init_params(key, n_class=3)
    img = jax.random.normal(jax.random.PRNGKey(0), (2, 3, 128, 128), jnp.float32)

    out = jax.block_until_ready(dis_forward(img, params))
    assert out.shape == (2, 1), out.shape
    assert bool(jnp.all(jnp.isfinite(out)))
    assert bool(jnp.all((out >= 0.0) & (out <= 1.0)))
    print("KERNEL_OK")
</pallas_src>

<mosaic_0001>
module attributes {stable_mosaic.version = 11 : i64} {
  func.func @_conv_bn_lrelu_kernel(%arg0: i32, %arg1: memref<75x8192xbf16, #tpu.memory_space<vmem>>, %arg2: memref<8x75xbf16, #tpu.memory_space<vmem>>, %arg3: memref<8x1xf32, #tpu.memory_space<vmem>>, %arg4: memref<8x1xf32, #tpu.memory_space<vmem>>, %arg5: memref<8x1xf32, #tpu.memory_space<vmem>>, %arg6: memref<8x8192xbf16, #tpu.memory_space<vmem>>) attributes {dimension_semantics = [#tpu.dimension_semantics<arbitrary>], iteration_bounds = array<i64: 1>, scalar_prefetch = 0 : i64, scratch_operands = 0 : i64, tpu.core_type = #tpu.core_type<tc>, window_params = [{pipeline_mode = #tpu.pipeline_mode<synchronous>, transform_indices = @transform_0, window_bounds = array<i64: 75, 8192>}, {pipeline_mode = #tpu.pipeline_mode<synchronous>, transform_indices = @transform_1, window_bounds = array<i64: 8, 75>}, {pipeline_mode = #tpu.pipeline_mode<synchronous>, transform_indices = @transform_2, window_bounds = array<i64: 8, 1>}, {pipeline_mode = #tpu.pipeline_mode<synchronous>, transform_indices = @transform_3, window_bounds = array<i64: 8, 1>}, {pipeline_mode = #tpu.pipeline_mode<synchronous>, transform_indices = @transform_4, window_bounds = array<i64: 8, 1>}, {pipeline_mode = #tpu.pipeline_mode<synchronous>, transform_indices = @transform_5, window_bounds = array<i64: 8, 8192>}]} {
    %c0 = arith.constant 0 : index
    %c0_0 = arith.constant 0 : index
    %0 = vector.load %arg2[%c0, %c0_0] : memref<8x75xbf16, #tpu.memory_space<vmem>>, vector<8x75xbf16>
    %c0_1 = arith.constant 0 : index
    %c0_2 = arith.constant 0 : index
    %1 = vector.load %arg1[%c0_1, %c0_2] : memref<75x8192xbf16, #tpu.memory_space<vmem>>, vector<75x8192xbf16>
    %cst = arith.constant dense<0.000000e+00> : vector<8x8192xf32>
    %2 = tpu.matmul %0, %1, %cst {dimension_numbers = #tpu.dot_dimension_numbers<[1], [0], [0], [1], [0, 0, 1, 1], [], []>} : vector<8x75xbf16>, vector<75x8192xbf16>, vector<8x8192xf32> -> vector<8x8192xf32>
    %c0_3 = arith.constant 0 : index
    %c0_4 = arith.constant 0 : index
    %3 = vector.load %arg3[%c0_3, %c0_4] : memref<8x1xf32, #tpu.memory_space<vmem>>, vector<8x1xf32>
    %4 = vector.broadcast %3 : vector<8x1xf32> to vector<8x8192xf32>
    %5 = arith.addf %2, %4 : vector<8x8192xf32>
    %cst_5 = arith.constant dense<0.000000e+00> : vector<8xf32>
    %6 = vector.multi_reduction <add>, %5, %cst_5 [1] : vector<8x8192xf32> to vector<8xf32>
    %7 = vector.shape_cast %6 : vector<8xf32> to vector<8x1xf32>
    %cst_6 = arith.constant 1.22070313E-4 : f32
    %8 = vector.broadcast %cst_6 : f32 to vector<8x1xf32>
    %9 = arith.mulf %7, %8 : vector<8x1xf32>
    %10 = vector.broadcast %9 : vector<8x1xf32> to vector<8x8192xf32>
    %11 = arith.subf %5, %10 : vector<8x8192xf32>
    %12 = arith.mulf %11, %11 : vector<8x8192xf32>
    %cst_7 = arith.constant dense<0.000000e+00> : vector<8xf32>
    %13 = vector.multi_reduction <add>, %12, %cst_7 [1] : vector<8x8192xf32> to vector<8xf32>
    %14 = vector.shape_cast %13 : vector<8xf32> to vector<8x1xf32>
    %cst_8 = arith.constant 1.22070313E-4 : f32
    %15 = vector.broadcast %cst_8 : f32 to vector<8x1xf32>
    %16 = arith.mulf %14, %15 : vector<8x1xf32>
    %c0_9 = arith.constant 0 : index
    %c0_10 = arith.constant 0 : index
    %17 = vector.load %arg4[%c0_9, %c0_10] : memref<8x1xf32, #tpu.memory_space<vmem>>, vector<8x1xf32>
    %cst_11 = arith.constant 9.99999974E-6 : f32
    %18 = vector.broadcast %cst_11 : f32 to vector<8x1xf32>
    %19 = arith.addf %16, %18 : vector<8x1xf32>
    %20 = math.rsqrt %19 : vector<8x1xf32>
    %21 = arith.mulf %17, %20 : vector<8x1xf32>
    %22 = vector.broadcast %21 : vector<8x1xf32> to vector<8x8192xf32>
    %23 = arith.mulf %11, %22 : vector<8x8192xf32>
    %c0_12 = arith.constant 0 : index
    %c0_13 = arith.constant 0 : index
    %24 = vector.load %arg5[%c0_12, %c0_13] : memref<8x1xf32, #tpu.memory_space<vmem>>, vector<8x1xf32>
    %25 = vector.broadcast %24 : vector<8x1xf32> to vector<8x8192xf32>
    %26 = arith.addf %23, %25 : vector<8x8192xf32>
    %cst_14 = arith.constant 2.000000e-01 : f32
    %27 = vector.broadcast %cst_14 : f32 to vector<8x8192xf32>
    %28 = arith.mulf %27, %26 : vector<8x8192xf32>
    %29 = arith.maximumf %26, %28 : vector<8x8192xf32>
    %30 = arith.truncf %29 : vector<8x8192xf32> to vector<8x8192xbf16>
    %c0_15 = arith.constant 0 : index
    %c0_16 = arith.constant 0 : index
    %31 = vector.load %arg6[%c0_15, %c0_16] : memref<8x8192xbf16, #tpu.memory_space<vmem>>, vector<8x8192xbf16>
    tpu.vector_store %arg6[%c0_15, %c0_16], %30 {strides = array<i32>} : memref<8x8192xbf16, #tpu.memory_space<vmem>>, vector<8x8192xbf16>,
    return
  }
  func.func @transform_0(%arg0: i32) -> (i32, i32) {
    %c0_i32 = arith.constant 0 : i32
    %c0_i32_0 = arith.constant 0 : i32
    %c0_i32_1 = arith.constant 0 : i32
    return %c0_i32, %c0_i32_0 : i32, i32
  }
  func.func @transform_1(%arg0: i32) -> (i32, i32) {
    %c0_i32 = arith.constant 0 : i32
    %c0_i32_0 = arith.constant 0 : i32
    %c0_i32_1 = arith.constant 0 : i32
    return %c0_i32, %c0_i32_0 : i32, i32
  }
  func.func @transform_2(%arg0: i32) -> (i32, i32) {
    %c0_i32 = arith.constant 0 : i32
    %c0_i32_0 = arith.constant 0 : i32
    %c0_i32_1 = arith.constant 0 : i32
    return %c0_i32, %c0_i32_0 : i32, i32
  }
  func.func @transform_3(%arg0: i32) -> (i32, i32) {
    %c0_i32 = arith.constant 0 : i32
    %c0_i32_0 = arith.constant 0 : i32
    %c0_i32_1 = arith.constant 0 : i32
    return %c0_i32, %c0_i32_0 : i32, i32
  }
  func.func @transform_4(%arg0: i32) -> (i32, i32) {
    %c0_i32 = arith.constant 0 : i32
    %c0_i32_0 = arith.constant 0 : i32
    %c0_i32_1 = arith.constant 0 : i32
    return %c0_i32, %c0_i32_0 : i32, i32
  }
  func.func @transform_5(%arg0: i32) -> (i32, i32) {
    %c0_i32 = arith.constant 0 : i32
    %c0_i32_0 = arith.constant 0 : i32
    %c0_i32_1 = arith.constant 0 : i32
    return %c0_i32, %c0_i32_0 : i32, i32
  }
}

module attributes {stable_mosaic.version = 11 : i64} {
  func.func @_conv_bn_lrelu_kernel(%arg0: i32, %arg1: memref<200x2048xbf16, #tpu.memory_space<vmem>>, %arg2: memref<16x200xbf16, #tpu.memory_space<vmem>>, %arg3: memref<16x1xf32, #tpu.memory_space<vmem>>, %arg4: memref<16x1xf32, #tpu.memory_space<vmem>>, %arg5: memref<16x1xf32, #tpu.memory_space<vmem>>, %arg6: memref<16x2048xbf16, #tpu.memory_space<vmem>>) attributes {dimension_semantics = [#tpu.dimension_semantics<arbitrary>], iteration_bounds = array<i64: 1>, scalar_prefetch = 0 : i64, scratch_operands = 0 : i64, tpu.core_type = #tpu.core_type<tc>, window_params = [{pipeline_mode = #tpu.pipeline_mode<synchronous>, transform_indices = @transform_0, window_bounds = array<i64: 200, 2048>}, {pipeline_mode = #tpu.pipeline_mode<synchronous>, transform_indices = @transform_1, window_bounds = array<i64: 16, 200>}, {pipeline_mode = #tpu.pipeline_mode<synchronous>, transform_indices = @transform_2, window_bounds = array<i64: 16, 1>}, {pipeline_mode = #tpu.pipeline_mode<synchronous>, transform_indices = @transform_3, window_bounds = array<i64: 16, 1>}, {pipeline_mode = #tpu.pipeline_mode<synchronous>, transform_indices = @transform_4, window_bounds = array<i64: 16, 1>}, {pipeline_mode = #tpu.pipeline_mode<synchronous>, transform_indices = @transform_5, window_bounds = array<i64: 16, 2048>}]} {
    %c0 = arith.constant 0 : index
    %c0_0 = arith.constant 0 : index
    %0 = vector.load %arg2[%c0, %c0_0] : memref<16x200xbf16, #tpu.memory_space<vmem>>, vector<16x200xbf16>
    %c0_1 = arith.constant 0 : index
    %c0_2 = arith.constant 0 : index
    %1 = vector.load %arg1[%c0_1, %c0_2] : memref<200x2048xbf16, #tpu.memory_space<vmem>>, vector<200x2048xbf16>
    %cst = arith.constant dense<0.000000e+00> : vector<16x2048xf32>
    %2 = tpu.matmul %0, %1, %cst {dimension_numbers = #tpu.dot_dimension_numbers<[1], [0], [0], [1], [0, 0, 1, 1], [], []>} : vector<16x200xbf16>, vector<200x2048xbf16>, vector<16x2048xf32> -> vector<16x2048xf32>
    %c0_3 = arith.constant 0 : index
    %c0_4 = arith.constant 0 : index
    %3 = vector.load %arg3[%c0_3, %c0_4] : memref<16x1xf32, #tpu.memory_space<vmem>>, vector<16x1xf32>
    %4 = vector.broadcast %3 : vector<16x1xf32> to vector<16x2048xf32>
    %5 = arith.addf %2, %4 : vector<16x2048xf32>
    %cst_5 = arith.constant dense<0.000000e+00> : vector<16xf32>
    %6 = vector.multi_reduction <add>, %5, %cst_5 [1] : vector<16x2048xf32> to vector<16xf32>
    %7 = vector.shape_cast %6 : vector<16xf32> to vector<16x1xf32>
    %cst_6 = arith.constant 4.8828125E-4 : f32
    %8 = vector.broadcast %cst_6 : f32 to vector<16x1xf32>
    %9 = arith.mulf %7, %8 : vector<16x1xf32>
    %10 = vector.broadcast %9 : vector<16x1xf32> to vector<16x2048xf32>
    %11 = arith.subf %5, %10 : vector<16x2048xf32>
    %12 = arith.mulf %11, %11 : vector<16x2048xf32>
    %cst_7 = arith.constant dense<0.000000e+00> : vector<16xf32>
    %13 = vector.multi_reduction <add>, %12, %cst_7 [1] : vector<16x2048xf32> to vector<16xf32>
    %14 = vector.shape_cast %13 : vector<16xf32> to vector<16x1xf32>
    %cst_8 = arith.constant 4.8828125E-4 : f32
    %15 = vector.broadcast %cst_8 : f32 to vector<16x1xf32>
    %16 = arith.mulf %14, %15 : vector<16x1xf32>
    %c0_9 = arith.constant 0 : index
    %c0_10 = arith.constant 0 : index
    %17 = vector.load %arg4[%c0_9, %c0_10] : memref<16x1xf32, #tpu.memory_space<vmem>>, vector<16x1xf32>
    %cst_11 = arith.constant 9.99999974E-6 : f32
    %18 = vector.broadcast %cst_11 : f32 to vector<16x1xf32>
    %19 = arith.addf %16, %18 : vector<16x1xf32>
    %20 = math.rsqrt %19 : vector<16x1xf32>
    %21 = arith.mulf %17, %20 : vector<16x1xf32>
    %22 = vector.broadcast %21 : vector<16x1xf32> to vector<16x2048xf32>
    %23 = arith.mulf %11, %22 : vector<16x2048xf32>
    %c0_12 = arith.constant 0 : index
    %c0_13 = arith.constant 0 : index
    %24 = vector.load %arg5[%c0_12, %c0_13] : memref<16x1xf32, #tpu.memory_space<vmem>>, vector<16x1xf32>
    %25 = vector.broadcast %24 : vector<16x1xf32> to vector<16x2048xf32>
    %26 = arith.addf %23, %25 : vector<16x2048xf32>
    %cst_14 = arith.constant 2.000000e-01 : f32
    %27 = vector.broadcast %cst_14 : f32 to vector<16x2048xf32>
    %28 = arith.mulf %27, %26 : vector<16x2048xf32>
    %29 = arith.maximumf %26, %28 : vector<16x2048xf32>
    %30 = arith.truncf %29 : vector<16x2048xf32> to vector<16x2048xbf16>
    %c0_15 = arith.constant 0 : index
    %c0_16 = arith.constant 0 : index
    %31 = vector.load %arg6[%c0_15, %c0_16] : memref<16x2048xbf16, #tpu.memory_space<vmem>>, vector<16x2048xbf16>
    tpu.vector_store %arg6[%c0_15, %c0_16], %30 {strides = array<i32>} : memref<16x2048xbf16, #tpu.memory_space<vmem>>, vector<16x2048xbf16>,
    return
  }
  func.func @transform_0(%arg0: i32) -> (i32, i32) {
    %c0_i32 = arith.constant 0 : i32
    %c0_i32_0 = arith.constant 0 : i32
    %c0_i32_1 = arith.constant 0 : i32
    return %c0_i32, %c0_i32_0 : i32, i32
  }
  func.func @transform_1(%arg0: i32) -> (i32, i32) {
    %c0_i32 = arith.constant 0 : i32
    %c0_i32_0 = arith.constant 0 : i32
    %c0_i32_1 = arith.constant 0 : i32
    return %c0_i32, %c0_i32_0 : i32, i32
  }
  func.func @transform_2(%arg0: i32) -> (i32, i32) {
    %c0_i32 = arith.constant 0 : i32
    %c0_i32_0 = arith.constant 0 : i32
    %c0_i32_1 = arith.constant 0 : i32
    return %c0_i32, %c0_i32_0 : i32, i32
  }
  func.func @transform_3(%arg0: i32) -> (i32, i32) {
    %c0_i32 = arith.constant 0 : i32
    %c0_i32_0 = arith.constant 0 : i32
    %c0_i32_1 = arith.constant 0 : i32
    return %c0_i32, %c0_i32_0 : i32, i32
  }
  func.func @transform_4(%arg0: i32) -> (i32, i32) {
    %c0_i32 = arith.constant 0 : i32
    %c0_i32_0 = arith.constant 0 : i32
    %c0_i32_1 = arith.constant 0 : i32
    return %c0_i32, %c0_i32_0 : i32, i32
  }
  func.func @transform_5(%arg0: i32) -> (i32, i32) {
    %c0_i32 = arith.constant 0 : i32
    %c0_i32_0 = arith.constant 0 : i32
    %c0_i32_1 = arith.constant 0 : i32
    return %c0_i32, %c0_i32_0 : i32, i32
  }
}

module attributes {stable_mosaic.version = 11 : i64} {
  func.func @_conv_bn_lrelu_kernel(%arg0: i32, %arg1: memref<400x512xbf16, #tpu.memory_space<vmem>>, %arg2: memref<32x400xbf16, #tpu.memory_space<vmem>>, %arg3: memref<32x1xf32, #tpu.memory_space<vmem>>, %arg4: memref<32x1xf32, #tpu.memory_space<vmem>>, %arg5: memref<32x1xf32, #tpu.memory_space<vmem>>, %arg6: memref<32x512xbf16, #tpu.memory_space<vmem>>) attributes {dimension_semantics = [#tpu.dimension_semantics<arbitrary>], iteration_bounds = array<i64: 1>, scalar_prefetch = 0 : i64, scratch_operands = 0 : i64, tpu.core_type = #tpu.core_type<tc>, window_params = [{pipeline_mode = #tpu.pipeline_mode<synchronous>, transform_indices = @transform_0, window_bounds = array<i64: 400, 512>}, {pipeline_mode = #tpu.pipeline_mode<synchronous>, transform_indices = @transform_1, window_bounds = array<i64: 32, 400>}, {pipeline_mode = #tpu.pipeline_mode<synchronous>, transform_indices = @transform_2, window_bounds = array<i64: 32, 1>}, {pipeline_mode = #tpu.pipeline_mode<synchronous>, transform_indices = @transform_3, window_bounds = array<i64: 32, 1>}, {pipeline_mode = #tpu.pipeline_mode<synchronous>, transform_indices = @transform_4, window_bounds = array<i64: 32, 1>}, {pipeline_mode = #tpu.pipeline_mode<synchronous>, transform_indices = @transform_5, window_bounds = array<i64: 32, 512>}]} {
    %c0 = arith.constant 0 : index
    %c0_0 = arith.constant 0 : index
    %0 = vector.load %arg2[%c0, %c0_0] : memref<32x400xbf16, #tpu.memory_space<vmem>>, vector<32x400xbf16>
    %c0_1 = arith.constant 0 : index
    %c0_2 = arith.constant 0 : index
    %1 = vector.load %arg1[%c0_1, %c0_2] : memref<400x512xbf16, #tpu.memory_space<vmem>>, vector<400x512xbf16>
    %cst = arith.constant dense<0.000000e+00> : vector<32x512xf32>
    %2 = tpu.matmul %0, %1, %cst {dimension_numbers = #tpu.dot_dimension_numbers<[1], [0], [0], [1], [0, 0, 1, 1], [], []>} : vector<32x400xbf16>, vector<400x512xbf16>, vector<32x512xf32> -> vector<32x512xf32>
    %c0_3 = arith.constant 0 : index
    %c0_4 = arith.constant 0 : index
    %3 = vector.load %arg3[%c0_3, %c0_4] : memref<32x1xf32, #tpu.memory_space<vmem>>, vector<32x1xf32>
    %4 = vector.broadcast %3 : vector<32x1xf32> to vector<32x512xf32>
    %5 = arith.addf %2, %4 : vector<32x512xf32>
    %cst_5 = arith.constant dense<0.000000e+00> : vector<32xf32>
    %6 = vector.multi_reduction <add>, %5, %cst_5 [1] : vector<32x512xf32> to vector<32xf32>
    %7 = vector.shape_cast %6 : vector<32xf32> to vector<32x1xf32>
    %cst_6 = arith.constant 0.001953125 : f32
    %8 = vector.broadcast %cst_6 : f32 to vector<32x1xf32>
    %9 = arith.mulf %7, %8 : vector<32x1xf32>
    %10 = vector.broadcast %9 : vector<32x1xf32> to vector<32x512xf32>
    %11 = arith.subf %5, %10 : vector<32x512xf32>
    %12 = arith.mulf %11, %11 : vector<32x512xf32>
    %cst_7 = arith.constant dense<0.000000e+00> : vector<32xf32>
    %13 = vector.multi_reduction <add>, %12, %cst_7 [1] : vector<32x512xf32> to vector<32xf32>
    %14 = vector.shape_cast %13 : vector<32xf32> to vector<32x1xf32>
    %cst_8 = arith.constant 0.001953125 : f32
    %15 = vector.broadcast %cst_8 : f32 to vector<32x1xf32>
    %16 = arith.mulf %14, %15 : vector<32x1xf32>
    %c0_9 = arith.constant 0 : index
    %c0_10 = arith.constant 0 : index
    %17 = vector.load %arg4[%c0_9, %c0_10] : memref<32x1xf32, #tpu.memory_space<vmem>>, vector<32x1xf32>
    %cst_11 = arith.constant 9.99999974E-6 : f32
    %18 = vector.broadcast %cst_11 : f32 to vector<32x1xf32>
    %19 = arith.addf %16, %18 : vector<32x1xf32>
    %20 = math.rsqrt %19 : vector<32x1xf32>
    %21 = arith.mulf %17, %20 : vector<32x1xf32>
    %22 = vector.broadcast %21 : vector<32x1xf32> to vector<32x512xf32>
    %23 = arith.mulf %11, %22 : vector<32x512xf32>
    %c0_12 = arith.constant 0 : index
    %c0_13 = arith.constant 0 : index
    %24 = vector.load %arg5[%c0_12, %c0_13] : memref<32x1xf32, #tpu.memory_space<vmem>>, vector<32x1xf32>
    %25 = vector.broadcast %24 : vector<32x1xf32> to vector<32x512xf32>
    %26 = arith.addf %23, %25 : vector<32x512xf32>
    %cst_14 = arith.constant 2.000000e-01 : f32
    %27 = vector.broadcast %cst_14 : f32 to vector<32x512xf32>
    %28 = arith.mulf %27, %26 : vector<32x512xf32>
    %29 = arith.maximumf %26, %28 : vector<32x512xf32>
    %30 = arith.truncf %29 : vector<32x512xf32> to vector<32x512xbf16>
    %c0_15 = arith.constant 0 : index
    %c0_16 = arith.constant 0 : index
    %31 = vector.load %arg6[%c0_15, %c0_16] : memref<32x512xbf16, #tpu.memory_space<vmem>>, vector<32x512xbf16>
    tpu.vector_store %arg6[%c0_15, %c0_16], %30 {strides = array<i32>} : memref<32x512xbf16, #tpu.memory_space<vmem>>, vector<32x512xbf16>,
    return
  }
  func.func @transform_0(%arg0: i32) -> (i32, i32) {
    %c0_i32 = arith.constant 0 : i32
    %c0_i32_0 = arith.constant 0 : i32
    %c0_i32_1 = arith.constant 0 : i32
    return %c0_i32, %c0_i32_0 : i32, i32
  }
  func.func @transform_1(%arg0: i32) -> (i32, i32) {
    %c0_i32 = arith.constant 0 : i32
    %c0_i32_0 = arith.constant 0 : i32
    %c0_i32_1 = arith.constant 0 : i32
    return %c0_i32, %c0_i32_0 : i32, i32
  }
  func.func @transform_2(%arg0: i32) -> (i32, i32) {
    %c0_i32 = arith.constant 0 : i32
    %c0_i32_0 = arith.constant 0 : i32
    %c0_i32_1 = arith.constant 0 : i32
    return %c0_i32, %c0_i32_0 : i32, i32
  }
  func.func @transform_3(%arg0: i32) -> (i32, i32) {
    %c0_i32 = arith.constant 0 : i32
    %c0_i32_0 = arith.constant 0 : i32
    %c0_i32_1 = arith.constant 0 : i32
    return %c0_i32, %c0_i32_0 : i32, i32
  }
  func.func @transform_4(%arg0: i32) -> (i32, i32) {
    %c0_i32 = arith.constant 0 : i32
    %c0_i32_0 = arith.constant 0 : i32
    %c0_i32_1 = arith.constant 0 : i32
    return %c0_i32, %c0_i32_0 : i32, i32
  }
  func.func @transform_5(%arg0: i32) -> (i32, i32) {
    %c0_i32 = arith.constant 0 : i32
    %c0_i32_0 = arith.constant 0 : i32
    %c0_i32_1 = arith.constant 0 : i32
    return %c0_i32, %c0_i32_0 : i32, i32
  }
}

module attributes {stable_mosaic.version = 11 : i64} {
  func.func @_final_layer_kernel(%arg0: i32, %arg1: memref<800x128xbf16, #tpu.memory_space<vmem>>, %arg2: memref<64x800xbf16, #tpu.memory_space<vmem>>, %arg3: memref<64x1xf32, #tpu.memory_space<vmem>>, %arg4: memref<64x1xf32, #tpu.memory_space<vmem>>, %arg5: memref<64x1xf32, #tpu.memory_space<vmem>>, %arg6: memref<64x64xf32, #tpu.memory_space<vmem>>, %arg7: memref<1x1xf32, #tpu.memory_space<vmem>>, %arg8: memref<2x1xf32, #tpu.memory_space<vmem>>) attributes {dimension_semantics = [#tpu.dimension_semantics<arbitrary>], iteration_bounds = array<i64: 1>, scalar_prefetch = 0 : i64, scratch_operands = 0 : i64, tpu.core_type = #tpu.core_type<tc>, window_params = [{pipeline_mode = #tpu.pipeline_mode<synchronous>, transform_indices = @transform_0, window_bounds = array<i64: 800, 128>}, {pipeline_mode = #tpu.pipeline_mode<synchronous>, transform_indices = @transform_1, window_bounds = array<i64: 64, 800>}, {pipeline_mode = #tpu.pipeline_mode<synchronous>, transform_indices = @transform_2, window_bounds = array<i64: 64, 1>}, {pipeline_mode = #tpu.pipeline_mode<synchronous>, transform_indices = @transform_3, window_bounds = array<i64: 64, 1>}, {pipeline_mode = #tpu.pipeline_mode<synchronous>, transform_indices = @transform_4, window_bounds = array<i64: 64, 1>}, {pipeline_mode = #tpu.pipeline_mode<synchronous>, transform_indices = @transform_5, window_bounds = array<i64: 64, 64>}, {pipeline_mode = #tpu.pipeline_mode<synchronous>, transform_indices = @transform_6, window_bounds = array<i64: 1, 1>}, {pipeline_mode = #tpu.pipeline_mode<synchronous>, transform_indices = @transform_7, window_bounds = array<i64: 2, 1>}]} {
    %c0 = arith.constant 0 : index
    %c0_0 = arith.constant 0 : index
    %0 = vector.load %arg2[%c0, %c0_0] : memref<64x800xbf16, #tpu.memory_space<vmem>>, vector<64x800xbf16>
    %c0_1 = arith.constant 0 : index
    %c0_2 = arith.constant 0 : index
    %1 = vector.load %arg1[%c0_1, %c0_2] : memref<800x128xbf16, #tpu.memory_space<vmem>>, vector<800x128xbf16>
    %cst = arith.constant dense<0.000000e+00> : vector<64x128xf32>
    %2 = tpu.matmul %0, %1, %cst {dimension_numbers = #tpu.dot_dimension_numbers<[1], [0], [0], [1], [0, 0, 1, 1], [], []>} : vector<64x800xbf16>, vector<800x128xbf16>, vector<64x128xf32> -> vector<64x128xf32>
    %c0_3 = arith.constant 0 : index
    %c0_4 = arith.constant 0 : index
    %3 = vector.load %arg3[%c0_3, %c0_4] : memref<64x1xf32, #tpu.memory_space<vmem>>, vector<64x1xf32>
    %4 = vector.broadcast %3 : vector<64x1xf32> to vector<64x128xf32>
    %5 = arith.addf %2, %4 : vector<64x128xf32>
    %cst_5 = arith.constant dense<0.000000e+00> : vector<64xf32>
    %6 = vector.multi_reduction <add>, %5, %cst_5 [1] : vector<64x128xf32> to vector<64xf32>
    %7 = vector.shape_cast %6 : vector<64xf32> to vector<64x1xf32>
    %cst_6 = arith.constant 7.812500e-03 : f32
    %8 = vector.broadcast %cst_6 : f32 to vector<64x1xf32>
    %9 = arith.mulf %7, %8 : vector<64x1xf32>
    %10 = vector.broadcast %9 : vector<64x1xf32> to vector<64x128xf32>
    %11 = arith.subf %5, %10 : vector<64x128xf32>
    %12 = arith.mulf %11, %11 : vector<64x128xf32>
    %cst_7 = arith.constant dense<0.000000e+00> : vector<64xf32>
    %13 = vector.multi_reduction <add>, %12, %cst_7 [1] : vector<64x128xf32> to vector<64xf32>
    %14 = vector.shape_cast %13 : vector<64xf32> to vector<64x1xf32>
    %cst_8 = arith.constant 7.812500e-03 : f32
    %15 = vector.broadcast %cst_8 : f32 to vector<64x1xf32>
    %16 = arith.mulf %14, %15 : vector<64x1xf32>
    %c0_9 = arith.constant 0 : index
    %c0_10 = arith.constant 0 : index
    %17 = vector.load %arg4[%c0_9, %c0_10] : memref<64x1xf32, #tpu.memory_space<vmem>>, vector<64x1xf32>
    %cst_11 = arith.constant 9.99999974E-6 : f32
    %18 = vector.broadcast %cst_11 : f32 to vector<64x1xf32>
    %19 = arith.addf %16, %18 : vector<64x1xf32>
    %20 = math.rsqrt %19 : vector<64x1xf32>
    %21 = arith.mulf %17, %20 : vector<64x1xf32>
    %22 = vector.broadcast %21 : vector<64x1xf32> to vector<64x128xf32>
    %23 = arith.mulf %11, %22 : vector<64x128xf32>
    %c0_12 = arith.constant 0 : index
    %c0_13 = arith.constant 0 : index
    %24 = vector.load %arg5[%c0_12, %c0_13] : memref<64x1xf32, #tpu.memory_space<vmem>>, vector<64x1xf32>
    %25 = vector.broadcast %24 : vector<64x1xf32> to vector<64x128xf32>
    %26 = arith.addf %23, %25 : vector<64x128xf32>
    %cst_14 = arith.constant 2.000000e-01 : f32
    %27 = vector.broadcast %cst_14 : f32 to vector<64x128xf32>
    %28 = arith.mulf %27, %26 : vector<64x128xf32>
    %29 = arith.maximumf %26, %28 : vector<64x128xf32>
    %c0_15 = arith.constant 0 : index
    %c0_16 = arith.constant 0 : index
    %30 = vector.load %arg6[%c0_15, %c0_16] : memref<64x64xf32, #tpu.memory_space<vmem>>, vector<64x64xf32>
    %31 = vector.extract_strided_slice %29 {offsets = [0, 0], sizes = [64, 64], strides = [1, 1]} : vector<64x128xf32> to vector<64x64xf32>
    %32 = arith.mulf %31, %30 : vector<64x64xf32>
    %cst_17 = arith.constant dense<0.000000e+00> : vector<64xf32>
    %33 = vector.multi_reduction <add>, %32, %cst_17 [1] : vector<64x64xf32> to vector<64xf32>
    %34 = vector.shape_cast %33 : vector<64xf32> to vector<64x1xf32>
    %cst_18 = arith.constant dense<0.000000e+00> : vector<1xf32>
    %35 = vector.multi_reduction <add>, %34, %cst_18 [0] : vector<64x1xf32> to vector<1xf32>
    %36 = vector.shape_cast %35 : vector<1xf32> to vector<1x1xf32>
    %c0_19 = arith.constant 0 : index
    %c0_20 = arith.constant 0 : index
    %37 = vector.load %arg7[%c0_19, %c0_20] : memref<1x1xf32, #tpu.memory_space<vmem>>, vector<1x1xf32>
    %38 = arith.addf %36, %37 : vector<1x1xf32>
    %39 = vector.extract_strided_slice %29 {offsets = [0, 64], sizes = [64, 64], strides = [1, 1]} : vector<64x128xf32> to vector<64x64xf32>
    %40 = arith.mulf %39, %30 : vector<64x64xf32>
    %cst_21 = arith.constant dense<0.000000e+00> : vector<64xf32>
    %41 = vector.multi_reduction <add>, %40, %cst_21 [1] : vector<64x64xf32> to vector<64xf32>
    %42 = vector.shape_cast %41 : vector<64xf32> to vector<64x1xf32>
    %cst_22 = arith.constant dense<0.000000e+00> : vector<1xf32>
    %43 = vector.multi_reduction <add>, %42, %cst_22 [0] : vector<64x1xf32> to vector<1xf32>
    %44 = vector.shape_cast %43 : vector<1xf32> to vector<1x1xf32>
    %c0_23 = arith.constant 0 : index
    %c0_24 = arith.constant 0 : index
    %45 = vector.load %arg7[%c0_23, %c0_24] : memref<1x1xf32, #tpu.memory_space<vmem>>, vector<1x1xf32>
    %46 = arith.addf %44, %45 : vector<1x1xf32>
    %47 = tpu.concatenate %38, %46 in 0 : vector<1x1xf32>, vector<1x1xf32> -> vector<2x1xf32>
    %cst_25 = arith.constant 0.000000e+00 : f32
    %48 = vector.broadcast %cst_25 : f32 to vector<2x1xf32>
    %49 = arith.subf %48, %47 : vector<2x1xf32>
    %50 = math.exp %49 : vector<2x1xf32>
    %cst_26 = arith.constant 1.000000e+00 : f32
    %51 = vector.broadcast %cst_26 : f32 to vector<2x1xf32>
    %52 = arith.addf %51, %50 : vector<2x1xf32>
    %cst_27 = arith.constant 1.000000e+00 : f32
    %53 = vector.broadcast %cst_27 : f32 to vector<2x1xf32>
    %54 = arith.divf %53, %52 : vector<2x1xf32>
    %c0_28 = arith.constant 0 : index
    %c0_29 = arith.constant 0 : index
    %55 = vector.load %arg8[%c0_28, %c0_29] : memref<2x1xf32, #tpu.memory_space<vmem>>, vector<2x1xf32>
    tpu.vector_store %arg8[%c0_28, %c0_29], %54 {strides = array<i32>} : memref<2x1xf32, #tpu.memory_space<vmem>>, vector<2x1xf32>,
    return
  }
  func.func @transform_0(%arg0: i32) -> (i32, i32) {
    %c0_i32 = arith.constant 0 : i32
    %c0_i32_0 = arith.constant 0 : i32
    %c0_i32_1 = arith.constant 0 : i32
    return %c0_i32, %c0_i32_0 : i32, i32
  }
  func.func @transform_1(%arg0: i32) -> (i32, i32) {
    %c0_i32 = arith.constant 0 : i32
    %c0_i32_0 = arith.constant 0 : i32
    %c0_i32_1 = arith.constant 0 : i32
    return %c0_i32, %c0_i32_0 : i32, i32
  }
  func.func @transform_2(%arg0: i32) -> (i32, i32) {
    %c0_i32 = arith.constant 0 : i32
    %c0_i32_0 = arith.constant 0 : i32
    %c0_i32_1 = arith.constant 0 : i32
    return %c0_i32, %c0_i32_0 : i32, i32
  }
  func.func @transform_3(%arg0: i32) -> (i32, i32) {
    %c0_i32 = arith.constant 0 : i32
    %c0_i32_0 = arith.constant 0 : i32
    %c0_i32_1 = arith.constant 0 : i32
    return %c0_i32, %c0_i32_0 : i32, i32
  }
  func.func @transform_4(%arg0: i32) -> (i32, i32) {
    %c0_i32 = arith.constant 0 : i32
    %c0_i32_0 = arith.constant 0 : i32
    %c0_i32_1 = arith.constant 0 : i32
    return %c0_i32, %c0_i32_0 : i32, i32
  }
  func.func @transform_5(%arg0: i32) -> (i32, i32) {
    %c0_i32 = arith.constant 0 : i32
    %c0_i32_0 = arith.constant 0 : i32
    %c0_i32_1 = arith.constant 0 : i32
    return %c0_i32, %c0_i32_0 : i32, i32
  }
  func.func @transform_6(%arg0: i32) -> (i32, i32) {
    %c0_i32 = arith.constant 0 : i32
    %c0_i32_0 = arith.constant 0 : i32
    %c0_i32_1 = arith.constant 0 : i32
    return %c0_i32, %c0_i32_0 : i32, i32
  }
  func.func @transform_7(%arg0: i32) -> (i32, i32) {
    %c0_i32 = arith.constant 0 : i32
    %c0_i32_0 = arith.constant 0 : i32
    %c0_i32_1 = arith.constant 0 : i32
    return %c0_i32, %c0_i32_0 : i32, i32
  }
}

</mosaic_0001>

<llo_original>
// kernel: dis_forward.4
$region0: #{dis_forward.4}
  #allocation0 [shape = 'u32[]', space=smem, size = 0x4, offset = 0x4, fixed_abs, tag = 'smem constant byte address 0x4 - core index']
  #allocation1 [shape = 'u32[144,128]{1,0:T(1,128)}', space=vmem, size = 0x12000, scoped, tag = 'internal scratch']
  %s0 = inlined_call_operand.vmem [shape: bf16[75,8192], index: 0, kind: input, shape index: {}]
  %s1 = inlined_call_operand.vmem [shape: bf16[8,75], index: 1, kind: input, shape index: {}]
  %s2 = inlined_call_operand.vmem [shape: f32[8,1], index: 2, kind: input, shape index: {}]
  %s3 = inlined_call_operand.vmem [shape: f32[8,1], index: 3, kind: input, shape index: {}]
  %s4 = inlined_call_operand.vmem [shape: f32[8,1], index: 4, kind: input, shape index: {}]
  %s5 = inlined_call_operand.vmem [shape: bf16[8,8192], index: 5, kind: output, shape index: {}]
  %s6 = sld [smem:[#allocation0]]
  $region30: #{dis_forward.4} parent=0
    _
  %s8 = ssub.s32 1, %s6
  %s9 = scalar_select 0, %s8, %s6
  // Predicated region
  $region2: #{dis_forward.4} parent=0 // pred_check
    _
  $region3: #{dis_forward.4} parent=0 // pred_check_branch
    %11 = sbr.rel (0) target = $region5
  $region4: #{dis_forward.4} parent=0 // pred_region
    _
  $region5: #{dis_forward.4} parent=0 // pred_fallthru
    _
  // Predicated region
  $region6: #{dis_forward.4} parent=0 // pred_check
    _
  $region7: #{dis_forward.4} parent=0 // pred_check_branch
    %13 = sbr.rel (0) target = $region9
  $region8: #{dis_forward.4} parent=0 // pred_region
    _
  $region9: #{dis_forward.4} parent=0 // pred_fallthru
    _
  // Predicated region
  $region10: #{dis_forward.4} parent=0 // pred_check
    _
  $region11: #{dis_forward.4} parent=0 // pred_check_branch
    %15 = sbr.rel (0) target = $region13
  $region12: #{dis_forward.4} parent=0 // pred_region
    _
  $region13: #{dis_forward.4} parent=0 // pred_fallthru
    _
  // Predicated region
  $region14: #{dis_forward.4} parent=0 // pred_check
    _
  $region15: #{dis_forward.4} parent=0 // pred_check_branch
    %17 = sbr.rel (0) target = $region17
  $region16: #{dis_forward.4} parent=0 // pred_region
    _
  $region17: #{dis_forward.4} parent=0 // pred_fallthru
    _
  // Predicated region
  $region18: #{dis_forward.4} parent=0 // pred_check
    _
  $region19: #{dis_forward.4} parent=0 // pred_check_branch
    %19 = sbr.rel (0) target = $region21
  $region20: #{dis_forward.4} parent=0 // pred_region
    _
  $region21: #{dis_forward.4} parent=0 // pred_fallthru
    _
  %v21 = vld [vmem:[%s1] sm:$0xf]
  %v22 = vld [vmem:[%s0] sm:$0xff]
  %v23 = vld [vmem:[%s0 + $0x8] sm:$0xff]
  %v24 = vld [vmem:[%s0 + $0x10] sm:$0xff]
  %v25 = vld [vmem:[%s0 + $0x18] sm:$0xff]
  %v26 = vld [vmem:[%s0 + $0x20] sm:$0xff]
  %v27 = vld [vmem:[%s0 + $0x28] sm:$0xff]
  %v28 = vld [vmem:[%s0 + $0x30] sm:$0xff]
  %v29 = vld [vmem:[%s0 + $0x38] sm:$0xff]
  %v30 = vld [vmem:[%s0 + $0x40] sm:$0xff]
  %v31 = vld [vmem:[%s0 + $0x48] sm:$0xff]
  %v32 = vld [vmem:[%s0 + $0x50] sm:$0xff]
  %v33 = vld [vmem:[%s0 + $0x58] sm:$0xff]
  %v34 = vld [vmem:[%s0 + $0x60] sm:$0xff]
  %v35 = vld [vmem:[%s0 + $0x68] sm:$0xff]
  %v36 = vld [vmem:[%s0 + $0x70] sm:$0xff]
  %v37 = vld [vmem:[%s0 + $0x78] sm:$0xff]
  %v38 = vld [vmem:[%s0 + $0x80] sm:$0xff]
  %v39 = vld [vmem:[%s0 + $0x88] sm:$0xff]
  %v40 = vld [vmem:[%s0 + $0x90] sm:$0xff]
  %v41 = vld [vmem:[%s0 + $0x98] sm:$0xff]
  %v42 = vld [vmem:[%s0 + $0xa0] sm:$0xff]
  %v43 = vld [vmem:[%s0 + $0xa8] sm:$0xff]
  %v44 = vld [vmem:[%s0 + $0xb0] sm:$0xff]
  %v45 = vld [vmem:[%s0 + $0xb8] sm:$0xff]
  %v46 = vld [vmem:[%s0 + $0xc0] sm:$0xff]
  %v47 = vld [vmem:[%s0 + $0xc8] sm:$0xff]
  %v48 = vld [vmem:[%s0 + $0xd0] sm:$0xff]
  %v49 = vld [vmem:[%s0 + $0xd8] sm:$0xff]
  %v50 = vld [vmem:[%s0 + $0xe0] sm:$0xff]
  %v51 = vld [vmem:[%s0 + $0xe8] sm:$0xff]
  %v52 = vld [vmem:[%s0 + $0xf0] sm:$0xff]
  %v53 = vld [vmem:[%s0 + $0xf8] sm:$0xff]
  %v54 = vld [vmem:[%s0 + $0x100] sm:$0xff]
  %v55 = vld [vmem:[%s0 + $0x108] sm:$0xff]
  %v56 = vld [vmem:[%s0 + $0x110] sm:$0xff]
  %v57 = vld [vmem:[%s0 + $0x118] sm:$0xff]
  %v58 = vld [vmem:[%s0 + $0x120] sm:$0xff]
  %v59 = vld [vmem:[%s0 + $0x128] sm:$0xff]
  %v60 = vld [vmem:[%s0 + $0x130] sm:$0xff]
  %v61 = vld [vmem:[%s0 + $0x138] sm:$0xff]
  %v62 = vld [vmem:[%s0 + $0x140] sm:$0xff]
  %v63 = vld [vmem:[%s0 + $0x148] sm:$0xff]
  %v64 = vld [vmem:[%s0 + $0x150] sm:$0xff]
  %v65 = vld [vmem:[%s0 + $0x158] sm:$0xff]
  %v66 = vld [vmem:[%s0 + $0x160] sm:$0xff]
  %v67 = vld [vmem:[%s0 + $0x168] sm:$0xff]
  %v68 = vld [vmem:[%s0 + $0x170] sm:$0xff]
  %v69 = vld [vmem:[%s0 + $0x178] sm:$0xff]
  %v70 = vld [vmem:[%s0 + $0x180] sm:$0xff]
  %v71 = vld [vmem:[%s0 + $0x188] sm:$0xff]
  %v72 = vld [vmem:[%s0 + $0x190] sm:$0xff]
  %v73 = vld [vmem:[%s0 + $0x198] sm:$0xff]
  %v74 = vld [vmem:[%s0 + $0x1a0] sm:$0xff]
  %v75 = vld [vmem:[%s0 + $0x1a8] sm:$0xff]
  %v76 = vld [vmem:[%s0 + $0x1b0] sm:$0xff]
  %v77 = vld [vmem:[%s0 + $0x1b8] sm:$0xff]
  %v78 = vld [vmem:[%s0 + $0x1c0] sm:$0xff]
  %v79 = vld [vmem:[%s0 + $0x1c8] sm:$0xff]
  %v80 = vld [vmem:[%s0 + $0x1d0] sm:$0xff]
  %v81 = vld [vmem:[%s0 + $0x1d8] sm:$0xff]
  %v82 = vld [vmem:[%s0 + $0x1e0] sm:$0xff]
  %v83 = vld [vmem:[%s0 + $0x1e8] sm:$0xff]
  %v84 = vld [vmem:[%s0 + $0x1f0] sm:$0xff]
  %v85 = vld [vmem:[%s0 + $0x1f8] sm:$0xff]
  %v86 = vld [vmem:[%s0 + $0x200] sm:$0xff]
  %v87 = vld [vmem:[%s0 + $0x208] sm:$0xff]
  %v88 = vld [vmem:[%s0 + $0x210] sm:$0xff]
  %v89 = vld [vmem:[%s0 + $0x218] sm:$0xff]
  %v90 = vld [vmem:[%s0 + $0x220] sm:$0xff]
  %v91 = vld [vmem:[%s0 + $0x228] sm:$0xff]
  %v92 = vld [vmem:[%s0 + $0x230] sm:$0xff]
  %v93 = vld [vmem:[%s0 + $0x238] sm:$0xff]
  %v94 = vld [vmem:[%s0 + $0x240] sm:$0xff]
  %v95 = vld [vmem:[%s0 + $0x248] sm:$0xff]
  %v96 = vld [vmem:[%s0 + $0x250] sm:$0xff]
  %v97 = vld [vmem:[%s0 + $0x258] sm:$0xff]
  %v98 = vld [vmem:[%s0 + $0x260] sm:$0xff]
  %v99 = vld [vmem:[%s0 + $0x268] sm:$0xff]
  %v100 = vld [vmem:[%s0 + $0x270] sm:$0xff]
  %v101 = vld [vmem:[%s0 + $0x278] sm:$0xff]
  %v102 = vld [vmem:[%s0 + $0x280] sm:$0xff]
  %v103 = vld [vmem:[%s0 + $0x288] sm:$0xff]
  %v104 = vld [vmem:[%s0 + $0x290] sm:$0xff]
  %v105 = vld [vmem:[%s0 + $0x298] sm:$0xff]
  %v106 = vld [vmem:[%s0 + $0x2a0] sm:$0xff]
  %v107 = vld [vmem:[%s0 + $0x2a8] sm:$0xff]
  %v108 = vld [vmem:[%s0 + $0x2b0] sm:$0xff]
  %v109 = vld [vmem:[%s0 + $0x2b8] sm:$0xff]
  %v110 = vld [vmem:[%s0 + $0x2c0] sm:$0xff]
  %v111 = vld [vmem:[%s0 + $0x2c8] sm:$0xff]
  %v112 = vld [vmem:[%s0 + $0x2d0] sm:$0xff]
  %v113 = vld [vmem:[%s0 + $0x2d8] sm:$0xff]
  %v114 = vld [vmem:[%s0 + $0x2e0] sm:$0xff]
  %v115 = vld [vmem:[%s0 + $0x2e8] sm:$0xff]
  %v116 = vld [vmem:[%s0 + $0x2f0] sm:$0xff]
  %v117 = vld [vmem:[%s0 + $0x2f8] sm:$0xff]
  %v118 = vld [vmem:[%s0 + $0x300] sm:$0xff]
  %v119 = vld [vmem:[%s0 + $0x308] sm:$0xff]
  %v120 = vld [vmem:[%s0 + $0x310] sm:$0xff]
  %v121 = vld [vmem:[%s0 + $0x318] sm:$0xff]
  %v122 = vld [vmem:[%s0 + $0x320] sm:$0xff]
  %v123 = vld [vmem:[%s0 + $0x328] sm:$0xff]
  %v124 = vld [vmem:[%s0 + $0x330] sm:$0xff]
  %v125 = vld [vmem:[%s0 + $0x338] sm:$0xff]
  %v126 = vld [vmem:[%s0 + $0x340] sm:$0xff]
  %v127 = vld [vmem:[%s0 + $0x348] sm:$0xff]
  %v128 = vld [vmem:[%s0 + $0x350] sm:$0xff]
  %v129 = vld [vmem:[%s0 + $0x358] sm:$0xff]
  %v130 = vld [vmem:[%s0 + $0x360] sm:$0xff]
  %v131 = vld [vmem:[%s0 + $0x368] sm:$0xff]
  %v132 = vld [vmem:[%s0 + $0x370] sm:$0xff]
  %v133 = vld [vmem:[%s0 + $0x378] sm:$0xff]
  %v134 = vld [vmem:[%s0 + $0x380] sm:$0xff]
  %v135 = vld [vmem:[%s0 + $0x388] sm:$0xff]
  %v136 = vld [vmem:[%s0 + $0x390] sm:$0xff]
  %v137 = vld [vmem:[%s0 + $0x398] sm:$0xff]
  %v138 = vld [vmem:[%s0 + $0x3a0] sm:$0xff]
  %v139 = vld [vmem:[%s0 + $0x3a8] sm:$0xff]
  %v140 = vld [vmem:[%s0 + $0x3b0] sm:$0xff]
  %v141 = vld [vmem:[%s0 + $0x3b8] sm:$0xff]
  %v142 = vld [vmem:[%s0 + $0x3c0] sm:$0xff]
  %v143 = vld [vmem:[%s0 + $0x3c8] sm:$0xff]
  %v144 = vld [vmem:[%s0 + $0x3d0] sm:$0xff]
  %v145 = vld [vmem:[%s0 + $0x3d8] sm:$0xff]
  %v146 = vld [vmem:[%s0 + $0x3e0] sm:$0xff]
  %v147 = vld [vmem:[%s0 + $0x3e8] sm:$0xff]
  %v148 = vld [vmem:[%s0 + $0x3f0] sm:$0xff]
  %v149 = vld [vmem:[%s0 + $0x3f8] sm:$0xff]
  %v150 = vld [vmem:[%s0 + $0x400] sm:$0xff]
  %v151 = vld [vmem:[%s0 + $0x408] sm:$0xff]
  %v152 = vld [vmem:[%s0 + $0x410] sm:$0xff]
  %v153 = vld [vmem:[%s0 + $0x418] sm:$0xff]
  %v154 = vld [vmem:[%s0 + $0x420] sm:$0xff]
  %v155 = vld [vmem:[%s0 + $0x428] sm:$0xff]
  %v156 = vld [vmem:[%s0 + $0x430] sm:$0xff]
  %v157 = vld [vmem:[%s0 + $0x438] sm:$0xff]
  %v158 = vld [vmem:[%s0 + $0x440] sm:$0xff]
  %v159 = vld [vmem:[%s0 + $0x448] sm:$0xff]
  %v160 = vld [vmem:[%s0 + $0x450] sm:$0xff]
  %v161 = vld [vmem:[%s0 + $0x458] sm:$0xff]
  %v162 = vld [vmem:[%s0 + $0x460] sm:$0xff]
  %v163 = vld [vmem:[%s0 + $0x468] sm:$0xff]
  %v164 = vld [vmem:[%s0 + $0x470] sm:$0xff]
  %v165 = vld [vmem:[%s0 + $0x478] sm:$0xff]
  %v166 = vld [vmem:[%s0 + $0x480] sm:$0xff]
  %v167 = vld [vmem:[%s0 + $0x488] sm:$0xff]
  %v168 = vld [vmem:[%s0 + $0x490] sm:$0xff]
  %v169 = vld [vmem:[%s0 + $0x498] sm:$0xff]
  %v170 = vld [vmem:[%s0 + $0x4a0] sm:$0xff]
  %v171 = vld [vmem:[%s0 + $0x4a8] sm:$0xff]
  %v172 = vld [vmem:[%s0 + $0x4b0] sm:$0xff]
  %v173 = vld [vmem:[%s0 + $0x4b8] sm:$0xff]
  %v174 = vld [vmem:[%s0 + $0x4c0] sm:$0xff]
  %v175 = vld [vmem:[%s0 + $0x4c8] sm:$0xff]
  %v176 = vld [vmem:[%s0 + $0x4d0] sm:$0xff]
  %v177 = vld [vmem:[%s0 + $0x4d8] sm:$0xff]
  %v178 = vld [vmem:[%s0 + $0x4e0] sm:$0xff]
  %v179 = vld [vmem:[%s0 + $0x4e8] sm:$0xff]
  %v180 = vld [vmem:[%s0 + $0x4f0] sm:$0xff]
  %v181 = vld [vmem:[%s0 + $0x4f8] sm:$0xff]
  %v182 = vld [vmem:[%s0 + $0x500] sm:$0xff]
  %v183 = vld [vmem:[%s0 + $0x508] sm:$0xff]
  %v184 = vld [vmem:[%s0 + $0x510] sm:$0xff]
  %v185 = vld [vmem:[%s0 + $0x518] sm:$0xff]
  %v186 = vld [vmem:[%s0 + $0x520] sm:$0xff]
  %v187 = vld [vmem:[%s0 + $0x528] sm:$0xff]
  %v188 = vld [vmem:[%s0 + $0x530] sm:$0xff]
  %v189 = vld [vmem:[%s0 + $0x538] sm:$0xff]
  %v190 = vld [vmem:[%s0 + $0x540] sm:$0xff]
  %v191 = vld [vmem:[%s0 + $0x548] sm:$0xff]
  %v192 = vld [vmem:[%s0 + $0x550] sm:$0xff]
  %v193 = vld [vmem:[%s0 + $0x558] sm:$0xff]
  %v194 = vld [vmem:[%s0 + $0x560] sm:$0xff]
  %v195 = vld [vmem:[%s0 + $0x568] sm:$0xff]
  %v196 = vld [vmem:[%s0 + $0x570] sm:$0xff]
  %v197 = vld [vmem:[%s0 + $0x578] sm:$0xff]
  %v198 = vld [vmem:[%s0 + $0x580] sm:$0xff]
  %v199 = vld [vmem:[%s0 + $0x588] sm:$0xff]
  %v200 = vld [vmem:[%s0 + $0x590] sm:$0xff]
  %v201 = vld [vmem:[%s0 + $0x598] sm:$0xff]
  %v202 = vld [vmem:[%s0 + $0x5a0] sm:$0xff]
  %v203 = vld [vmem:[%s0 + $0x5a8] sm:$0xff]
  %v204 = vld [vmem:[%s0 + $0x5b0] sm:$0xff]
  %v205 = vld [vmem:[%s0 + $0x5b8] sm:$0xff]
  %v206 = vld [vmem:[%s0 + $0x5c0] sm:$0xff]
  %v207 = vld [vmem:[%s0 + $0x5c8] sm:$0xff]
  %v208 = vld [vmem:[%s0 + $0x5d0] sm:$0xff]
  %v209 = vld [vmem:[%s0 + $0x5d8] sm:$0xff]
  %v210 = vld [vmem:[%s0 + $0x5e0] sm:$0xff]
  %v211 = vld [vmem:[%s0 + $0x5e8] sm:$0xff]
  %v212 = vld [vmem:[%s0 + $0x5f0] sm:$0xff]
  %v213 = vld [vmem:[%s0 + $0x5f8] sm:$0xff]
  %v214 = vld [vmem:[%s0 + $0x600] sm:$0xff]
  %v215 = vld [vmem:[%s0 + $0x608] sm:$0xff]
  %v216 = vld [vmem:[%s0 + $0x610] sm:$0xff]
  %v217 = vld [vmem:[%s0 + $0x618] sm:$0xff]
  %v218 = vld [vmem:[%s0 + $0x620] sm:$0xff]
  %v219 = vld [vmem:[%s0 + $0x628] sm:$0xff]
  %v220 = vld [vmem:[%s0 + $0x630] sm:$0xff]
  %v221 = vld [vmem:[%s0 + $0x638] sm:$0xff]
  %v222 = vld [vmem:[%s0 + $0x640] sm:$0xff]
  %v223 = vld [vmem:[%s0 + $0x648] sm:$0xff]
  %v224 = vld [vmem:[%s0 + $0x650] sm:$0xff]
  %v225 = vld [vmem:[%s0 + $0x658] sm:$0xff]
  %v226 = vld [vmem:[%s0 + $0x660] sm:$0xff]
  %v227 = vld [vmem:[%s0 + $0x668] sm:$0xff]
  %v228 = vld [vmem:[%s0 + $0x670] sm:$0xff]
  %v229 = vld [vmem:[%s0 + $0x678] sm:$0xff]
  %v230 = vld [vmem:[%s0 + $0x680] sm:$0xff]
  %v231 = vld [vmem:[%s0 + $0x688] sm:$0xff]
  %v232 = vld [vmem:[%s0 + $0x690] sm:$0xff]
  %v233 = vld [vmem:[%s0 + $0x698] sm:$0xff]
  %v234 = vld [vmem:[%s0 + $0x6a0] sm:$0xff]
  %v235 = vld [vmem:[%s0 + $0x6a8] sm:$0xff]
  %v236 = vld [vmem:[%s0 + $0x6b0] sm:$0xff]
  %v237 = vld [vmem:[%s0 + $0x6b8] sm:$0xff]
  %v238 = vld [vmem:[%s0 + $0x6c0] sm:$0xff]
  %v239 = vld [vmem:[%s0 + $0x6c8] sm:$0xff]
  %v240 = vld [vmem:[%s0 + $0x6d0] sm:$0xff]
  %v241 = vld [vmem:[%s0 + $0x6d8] sm:$0xff]
  %v242 = vld [vmem:[%s0 + $0x6e0] sm:$0xff]
  %v243 = vld [vmem:[%s0 + $0x6e8] sm:$0xff]
  %v244 = vld [vmem:[%s0 + $0x6f0] sm:$0xff]
  %v245 = vld [vmem:[%s0 + $0x6f8] sm:$0xff]
  %v246 = vld [vmem:[%s0 + $0x700] sm:$0xff]
  %v247 = vld [vmem:[%s0 + $0x708] sm:$0xff]
  %v248 = vld [vmem:[%s0 + $0x710] sm:$0xff]
  %v249 = vld [vmem:[%s0 + $0x718] sm:$0xff]
  %v250 = vld [vmem:[%s0 + $0x720] sm:$0xff]
  %v251 = vld [vmem:[%s0 + $0x728] sm:$0xff]
  %v252 = vld [vmem:[%s0 + $0x730] sm:$0xff]
  %v253 = vld [vmem:[%s0 + $0x738] sm:$0xff]
  %v254 = vld [vmem:[%s0 + $0x740] sm:$0xff]
  %v255 = vld [vmem:[%s0 + $0x748] sm:$0xff]
  %v256 = vld [vmem:[%s0 + $0x750] sm:$0xff]
  %v257 = vld [vmem:[%s0 + $0x758] sm:$0xff]
  %v258 = vld [vmem:[%s0 + $0x760] sm:$0xff]
  %v259 = vld [vmem:[%s0 + $0x768] sm:$0xff]
  %v260 = vld [vmem:[%s0 + $0x770] sm:$0xff]
  %v261 = vld [vmem:[%s0 + $0x778] sm:$0xff]
  %v262 = vld [vmem:[%s0 + $0x780] sm:$0xff]
  %v263 = vld [vmem:[%s0 + $0x788] sm:$0xff]
  %v264 = vld [vmem:[%s0 + $0x790] sm:$0xff]
  %v265 = vld [vmem:[%s0 + $0x798] sm:$0xff]
  %v266 = vld [vmem:[%s0 + $0x7a0] sm:$0xff]
  %v267 = vld [vmem:[%s0 + $0x7a8] sm:$0xff]
  %v268 = vld [vmem:[%s0 + $0x7b0] sm:$0xff]
  %v269 = vld [vmem:[%s0 + $0x7b8] sm:$0xff]
  %v270 = vld [vmem:[%s0 + $0x7c0] sm:$0xff]
  %v271 = vld [vmem:[%s0 + $0x7c8] sm:$0xff]
  %v272 = vld [vmem:[%s0 + $0x7d0] sm:$0xff]
  %v273 = vld [vmem:[%s0 + $0x7d8] sm:$0xff]
  %v274 = vld [vmem:[%s0 + $0x7e0] sm:$0xff]
  %v275 = vld [vmem:[%s0 + $0x7e8] sm:$0xff]
  %v276 = vld [vmem:[%s0 + $0x7f0] sm:$0xff]
  %v277 = vld [vmem:[%s0 + $0x7f8] sm:$0xff]
  %v278 = vld [vmem:[%s0 + $0x800] sm:$0xff]
  %v279 = vld [vmem:[%s0 + $0x808] sm:$0xff]
  %v280 = vld [vmem:[%s0 + $0x810] sm:$0xff]
  %v281 = vld [vmem:[%s0 + $0x818] sm:$0xff]
  %v282 = vld [vmem:[%s0 + $0x820] sm:$0xff]
  %v283 = vld [vmem:[%s0 + $0x828] sm:$0xff]
  %v284 = vld [vmem:[%s0 + $0x830] sm:$0xff]
  %v285 = vld [vmem:[%s0 + $0x838] sm:$0xff]
  %v286 = vld [vmem:[%s0 + $0x840] sm:$0xff]
  %v287 = vld [vmem:[%s0 + $0x848] sm:$0xff]
  %v288 = vld [vmem:[%s0 + $0x850] sm:$0xff]
  %v289 = vld [vmem:[%s0 + $0x858] sm:$0xff]
  %v290 = vld [vmem:[%s0 + $0x860] sm:$0xff]
  %v291 = vld [vmem:[%s0 + $0x868] sm:$0xff]
  %v292 = vld [vmem:[%s0 + $0x870] sm:$0xff]
  %v293 = vld [vmem:[%s0 + $0x878] sm:$0xff]
  %v294 = vld [vmem:[%s0 + $0x880] sm:$0xff]
  %v295 = vld [vmem:[%s0 + $0x888] sm:$0xff]
  %v296 = vld [vmem:[%s0 + $0x890] sm:$0xff]
  %v297 = vld [vmem:[%s0 + $0x898] sm:$0xff]
  %v298 = vld [vmem:[%s0 + $0x8a0] sm:$0xff]
  %v299 = vld [vmem:[%s0 + $0x8a8] sm:$0xff]
  %v300 = vld [vmem:[%s0 + $0x8b0] sm:$0xff]
  %v301 = vld [vmem:[%s0 + $0x8b8] sm:$0xff]
  %v302 = vld [vmem:[%s0 + $0x8c0] sm:$0xff]
  %v303 = vld [vmem:[%s0 + $0x8c8] sm:$0xff]
  %v304 = vld [vmem:[%s0 + $0x8d0] sm:$0xff]
  %v305 = vld [vmem:[%s0 + $0x8d8] sm:$0xff]
  %v306 = vld [vmem:[%s0 + $0x8e0] sm:$0xff]
  %v307 = vld [vmem:[%s0 + $0x8e8] sm:$0xff]
  %v308 = vld [vmem:[%s0 + $0x8f0] sm:$0xff]
  %v309 = vld [vmem:[%s0 + $0x8f8] sm:$0xff]
  %v310 = vld [vmem:[%s0 + $0x900] sm:$0x33]
  %v311 = vld [vmem:[%s0 + $0x908] sm:$0x33]
  %v312 = vld [vmem:[%s0 + $0x910] sm:$0x33]
  %v313 = vld [vmem:[%s0 + $0x918] sm:$0x33]
  %v314 = vld [vmem:[%s0 + $0x920] sm:$0x33]
  %v315 = vld [vmem:[%s0 + $0x928] sm:$0x33]
  %v316 = vld [vmem:[%s0 + $0x930] sm:$0x33]
  %v317 = vld [vmem:[%s0 + $0x938] sm:$0x33]
  %v318 = vld [vmem:[%s0 + $0x940] sm:$0x33]
  %v319 = vld [vmem:[%s0 + $0x948] sm:$0x33]
  %v320 = vld [vmem:[%s0 + $0x950] sm:$0x33]
  %v321 = vld [vmem:[%s0 + $0x958] sm:$0x33]
  %v322 = vld [vmem:[%s0 + $0x960] sm:$0x33]
  %v323 = vld [vmem:[%s0 + $0x968] sm:$0x33]
  %v324 = vld [vmem:[%s0 + $0x970] sm:$0x33]
  %v325 = vld [vmem:[%s0 + $0x978] sm:$0x33]
  %v326 = vld [vmem:[%s0 + $0x980] sm:$0x33]
  %v327 = vld [vmem:[%s0 + $0x988] sm:$0x33]
  %v328 = vld [vmem:[%s0 + $0x990] sm:$0x33]
  %v329 = vld [vmem:[%s0 + $0x998] sm:$0x33]
  %v330 = vld [vmem:[%s0 + $0x9a0] sm:$0x33]
  %v331 = vld [vmem:[%s0 + $0x9a8] sm:$0x33]
  %v332 = vld [vmem:[%s0 + $0x9b0] sm:$0x33]
  %v333 = vld [vmem:[%s0 + $0x9b8] sm:$0x33]
  %v334 = vld [vmem:[%s0 + $0x9c0] sm:$0x33]
  %v335 = vld [vmem:[%s0 + $0x9c8] sm:$0x33]
  %v336 = vld [vmem:[%s0 + $0x9d0] sm:$0x33]
  %v337 = vld [vmem:[%s0 + $0x9d8] sm:$0x33]
  %v338 = vld [vmem:[%s0 + $0x9e0] sm:$0x33]
  %v339 = vld [vmem:[%s0 + $0x9e8] sm:$0x33]
  %v340 = vld [vmem:[%s0 + $0x9f0] sm:$0x33]
  %v341 = vld [vmem:[%s0 + $0x9f8] sm:$0x33]
  %v342 = vld [vmem:[%s2] sm:$0xff]
  %344 = vset.pattern.permute.xlu0 0
  %345 = vperm.xlu0 %344, %v342
  %v346 = vpop.permute.xlu0 %345
  %v668 = vunpack.c.l.b16 %v22
  %v669 = vunpack.c.h.b16 %v22
  %v670 = vunpack.c.l.b16 %v23
  %v671 = vunpack.c.h.b16 %v23
  %v672 = vunpack.c.l.b16 %v24
  %v673 = vunpack.c.h.b16 %v24
  %v674 = vunpack.c.l.b16 %v25
  %v675 = vunpack.c.h.b16 %v25
  %v676 = vunpack.c.l.b16 %v26
  %v677 = vunpack.c.h.b16 %v26
  %v678 = vunpack.c.l.b16 %v27
  %v679 = vunpack.c.h.b16 %v27
  %v680 = vunpack.c.l.b16 %v28
  %v681 = vunpack.c.h.b16 %v28
  %v682 = vunpack.c.l.b16 %v29
  %v683 = vunpack.c.h.b16 %v29
  %v684 = vunpack.c.l.b16 %v30
  %v685 = vunpack.c.h.b16 %v30
  %v686 = vunpack.c.l.b16 %v31
  %v687 = vunpack.c.h.b16 %v31
  %v688 = vunpack.c.l.b16 %v32
  %v689 = vunpack.c.h.b16 %v32
  %v690 = vunpack.c.l.b16 %v33
  %v691 = vunpack.c.h.b16 %v33
  %v692 = vunpack.c.l.b16 %v34
  %v693 = vunpack.c.h.b16 %v34
  %v694 = vunpack.c.l.b16 %v35
  %v695 = vunpack.c.h.b16 %v35
  %v696 = vunpack.c.l.b16 %v36
  %v697 = vunpack.c.h.b16 %v36
  %v698 = vunpack.c.l.b16 %v37
  %v699 = vunpack.c.h.b16 %v37
  %v700 = vunpack.c.l.b16 %v38
  %v701 = vunpack.c.h.b16 %v38
  %v702 = vunpack.c.l.b16 %v39
  %v703 = vunpack.c.h.b16 %v39
  %v704 = vunpack.c.l.b16 %v40
  %v705 = vunpack.c.h.b16 %v40
  %v706 = vunpack.c.l.b16 %v41
  %v707 = vunpack.c.h.b16 %v41
  %v708 = vunpack.c.l.b16 %v42
  %v709 = vunpack.c.h.b16 %v42
  %v710 = vunpack.c.l.b16 %v43
  %v711 = vunpack.c.h.b16 %v43
  %v712 = vunpack.c.l.b16 %v44
  %v713 = vunpack.c.h.b16 %v44
  %v714 = vunpack.c.l.b16 %v45
  %v715 = vunpack.c.h.b16 %v45
  %v716 = vunpack.c.l.b16 %v46
  %v717 = vunpack.c.h.b16 %v46
  %v718 = vunpack.c.l.b16 %v47
  %v719 = vunpack.c.h.b16 %v47
  %v720 = vunpack.c.l.b16 %v48
  %v721 = vunpack.c.h.b16 %v48
  %v722 = vunpack.c.l.b16 %v49
  %v723 = vunpack.c.h.b16 %v49
  %v724 = vunpack.c.l.b16 %v50
  %v725 = vunpack.c.h.b16 %v50
  %v726 = vunpack.c.l.b16 %v51
  %v727 = vunpack.c.h.b16 %v51
  %v728 = vunpack.c.l.b16 %v52
  %v729 = vunpack.c.h.b16 %v52
  %v730 = vunpack.c.l.b16 %v53
  %v731 = vunpack.c.h.b16 %v53
  %v732 = vunpack.c.l.b16 %v54
  %v733 = vunpack.c.h.b16 %v54
  %v734 = vunpack.c.l.b16 %v55
  %v735 = vunpack.c.h.b16 %v55
  %v736 = vunpack.c.l.b16 %v56
  %v737 = vunpack.c.h.b16 %v56
  %v738 = vunpack.c.l.b16 %v57
  %v739 = vunpack.c.h.b16 %v57
  %v740 = vunpack.c.l.b16 %v58
  %v741 = vunpack.c.h.b16 %v58
  %v742 = vunpack.c.l.b16 %v59
  %v743 = vunpack.c.h.b16 %v59
  %v744 = vunpack.c.l.b16 %v60
  %v745 = vunpack.c.h.b16 %v60
  %v746 = vunpack.c.l.b16 %v61
  %v747 = vunpack.c.h.b16 %v61
  %v748 = vunpack.c.l.b16 %v62
  %v749 = vunpack.c.h.b16 %v62
  %v750 = vunpack.c.l.b16 %v63
  %v751 = vunpack.c.h.b16 %v63
  %v752 = vunpack.c.l.b16 %v64
  %v753 = vunpack.c.h.b16 %v64
  %v754 = vunpack.c.l.b16 %v65
  %v755 = vunpack.c.h.b16 %v65
  %v756 = vunpack.c.l.b16 %v66
  %v757 = vunpack.c.h.b16 %v66
  %v758 = vunpack.c.l.b16 %v67
  %v759 = vunpack.c.h.b16 %v67
  %v760 = vunpack.c.l.b16 %v68
  %v761 = vunpack.c.h.b16 %v68
  %v762 = vunpack.c.l.b16 %v69
  %v763 = vunpack.c.h.b16 %v69
  %v764 = vunpack.c.l.b16 %v70
  %v765 = vunpack.c.h.b16 %v70
  %v766 = vunpack.c.l.b16 %v71
  %v767 = vunpack.c.h.b16 %v71
  %v768 = vunpack.c.l.b16 %v72
  %v769 = vunpack.c.h.b16 %v72
  %v770 = vunpack.c.l.b16 %v73
  %v771 = vunpack.c.h.b16 %v73
  %v772 = vunpack.c.l.b16 %v74
  %v773 = vunpack.c.h.b16 %v74
  %v774 = vunpack.c.l.b16 %v75
  %v775 = vunpack.c.h.b16 %v75
  %v776 = vunpack.c.l.b16 %v76
  %v777 = vunpack.c.h.b16 %v76
  %v778 = vunpack.c.l.b16 %v77
  %v779 = vunpack.c.h.b16 %v77
  %v780 = vunpack.c.l.b16 %v78
  %v781 = vunpack.c.h.b16 %v78
  %v782 = vunpack.c.l.b16 %v79
  %v783 = vunpack.c.h.b16 %v79
  %v784 = vunpack.c.l.b16 %v80
  %v785 = vunpack.c.h.b16 %v80
  %v786 = vunpack.c.l.b16 %v81
  %v787 = vunpack.c.h.b16 %v81
  %v788 = vunpack.c.l.b16 %v82
  %v789 = vunpack.c.h.b16 %v82
  %v790 = vunpack.c.l.b16 %v83
  %v791 = vunpack.c.h.b16 %v83
  %v792 = vunpack.c.l.b16 %v84
  %v793 = vunpack.c.h.b16 %v84
  %v794 = vunpack.c.l.b16 %v85
  %v795 = vunpack.c.h.b16 %v85
  %v796 = vunpack.c.l.b16 %v86
  %v797 = vunpack.c.h.b16 %v86
  %v798 = vunpack.c.l.b16 %v87
  %v799 = vunpack.c.h.b16 %v87
  %v800 = vunpack.c.l.b16 %v88
  %v801 = vunpack.c.h.b16 %v88
  %v802 = vunpack.c.l.b16 %v89
  %v803 = vunpack.c.h.b16 %v89
  %v804 = vunpack.c.l.b16 %v90
  %v805 = vunpack.c.h.b16 %v90
  %v806 = vunpack.c.l.b16 %v91
  %v807 = vunpack.c.h.b16 %v91
  %v808 = vunpack.c.l.b16 %v92
  %v809 = vunpack.c.h.b16 %v92
  %v810 = vunpack.c.l.b16 %v93
  %v811 = vunpack.c.h.b16 %v93
  %v812 = vunpack.c.l.b16 %v94
  %v813 = vunpack.c.h.b16 %v94
  %v814 = vunpack.c.l.b16 %v95
  %v815 = vunpack.c.h.b16 %v95
  %v816 = vunpack.c.l.b16 %v96
  %v817 = vunpack.c.h.b16 %v96
  %v818 = vunpack.c.l.b16 %v97
  %v819 = vunpack.c.h.b16 %v97
  %v820 = vunpack.c.l.b16 %v98
  %v821 = vunpack.c.h.b16 %v98
  %v822 = vunpack.c.l.b16 %v99
  %v823 = vunpack.c.h.b16 %v99
  %v824 = vunpack.c.l.b16 %v100
  %v825 = vunpack.c.h.b16 %v100
  %v826 = vunpack.c.l.b16 %v101
  %v827 = vunpack.c.h.b16 %v101
  %v828 = vunpack.c.l.b16 %v102
  %v829 = vunpack.c.h.b16 %v102
  %v830 = vunpack.c.l.b16 %v103
  %v831 = vunpack.c.h.b16 %v103
  %v832 = vunpack.c.l.b16 %v104
  %v833 = vunpack.c.h.b16 %v104
  %v834 = vunpack.c.l.b16 %v105
  %v835 = vunpack.c.h.b16 %v105
  %v836 = vunpack.c.l.b16 %v106
  %v837 = vunpack.c.h.b16 %v106
  %v838 = vunpack.c.l.b16 %v107
  %v839 = vunpack.c.h.b16 %v107
  %v840 = vunpack.c.l.b16 %v108
  %v841 = vunpack.c.h.b16 %v108
  %v842 = vunpack.c.l.b16 %v109
  %v843 = vunpack.c.h.b16 %v109
  %v844 = vunpack.c.l.b16 %v110
  %v845 = vunpack.c.h.b16 %v110
  %v846 = vunpack.c.l.b16 %v111
  %v847 = vunpack.c.h.b16 %v111
  %v848 = vunpack.c.l.b16 %v112
  %v849 = vunpack.c.h.b16 %v112
  %v850 = vunpack.c.l.b16 %v113
  %v851 = vunpack.c.h.b16 %v113
  %v852 = vunpack.c.l.b16 %v114
  %v853 = vunpack.c.h.b16 %v114
  %v854 = vunpack.c.l.b16 %v115
  %v855 = vunpack.c.h.b16 %v115
  %v856 = vunpack.c.l.b16 %v116
  %v857 = vunpack.c.h.b16 %v116
  %v858 = vunpack.c.l.b16 %v117
  %v859 = vunpack.c.h.b16 %v117
  %v860 = vunpack.c.l.b16 %v118
  %v861 = vunpack.c.h.b16 %v118
  %v862 = vunpack.c.l.b16 %v119
  %v863 = vunpack.c.h.b16 %v119
  %v864 = vunpack.c.l.b16 %v120
  %v865 = vunpack.c.h.b16 %v120
  %v866 = vunpack.c.l.b16 %v121
  %v867 = vunpack.c.h.b16 %v121
  %v868 = vunpack.c.l.b16 %v122
  %v869 = vunpack.c.h.b16 %v122
  %v870 = vunpack.c.l.b16 %v123
  %v871 = vunpack.c.h.b16 %v123
  %v872 = vunpack.c.l.b16 %v124
  %v873 = vunpack.c.h.b16 %v124
  %v874 = vunpack.c.l.b16 %v125
  %v875 = vunpack.c.h.b16 %v125
  %v876 = vunpack.c.l.b16 %v126
  %v877 = vunpack.c.h.b16 %v126
  %v878 = vunpack.c.l.b16 %v127
  %v879 = vunpack.c.h.b16 %v127
  %v880 = vunpack.c.l.b16 %v128
  %v881 = vunpack.c.h.b16 %v128
  %v882 = vunpack.c.l.b16 %v129
  %v883 = vunpack.c.h.b16 %v129
  %v884 = vunpack.c.l.b16 %v130
  %v885 = vunpack.c.h.b16 %v130
  %v886 = vunpack.c.l.b16 %v131
  %v887 = vunpack.c.h.b16 %v131
  %v888 = vunpack.c.l.b16 %v132
  %v889 = vunpack.c.h.b16 %v132
  %v890 = vunpack.c.l.b16 %v133
  %v891 = vunpack.c.h.b16 %v133
  %v892 = vunpack.c.l.b16 %v134
  %v893 = vunpack.c.h.b16 %v134
  %v894 = vunpack.c.l.b16 %v135
  %v895 = vunpack.c.h.b16 %v135
  %v896 = vunpack.c.l.b16 %v136
  %v897 = vunpack.c.h.b16 %v136
  %v898 = vunpack.c.l.b16 %v137
  %v899 = vunpack.c.h.b16 %v137
  %v900 = vunpack.c.l.b16 %v138
  %v901 = vunpack.c.h.b16 %v138
  %v902 = vunpack.c.l.b16 %v139
  %v903 = vunpack.c.h.b16 %v139
  %v904 = vunpack.c.l.b16 %v140
  %v905 = vunpack.c.h.b16 %v140
  %v906 = vunpack.c.l.b16 %v141
  %v907 = vunpack.c.h.b16 %v141
  %v908 = vunpack.c.l.b16 %v142
  %v909 = vunpack.c.h.b16 %v142
  %v910 = vunpack.c.l.b16 %v143
  %v911 = vunpack.c.h.b16 %v143
  %v912 = vunpack.c.l.b16 %v144
  %v913 = vunpack.c.h.b16 %v144
  %v914 = vunpack.c.l.b16 %v145
  %v915 = vunpack.c.h.b16 %v145
  %v916 = vunpack.c.l.b16 %v146
  %v917 = vunpack.c.h.b16 %v146
  %v918 = vunpack.c.l.b16 %v147
  %v919 = vunpack.c.h.b16 %v147
  %v920 = vunpack.c.l.b16 %v148
  %v921 = vunpack.c.h.b16 %v148
  %v922 = vunpack.c.l.b16 %v149
  %v923 = vunpack.c.h.b16 %v149
  %v924 = vunpack.c.l.b16 %v150
  %v925 = vunpack.c.h.b16 %v150
  %v926 = vunpack.c.l.b16 %v151
  %v927 = vunpack.c.h.b16 %v151
  %v928 = vunpack.c.l.b16 %v152
  %v929 = vunpack.c.h.b16 %v152
  %v930 = vunpack.c.l.b16 %v153
  %v931 = vunpack.c.h.b16 %v153
  %v932 = vunpack.c.l.b16 %v154
  %v933 = vunpack.c.h.b16 %v154
  %v934 = vunpack.c.l.b16 %v155
  %v935 = vunpack.c.h.b16 %v155
  %v936 = vunpack.c.l.b16 %v156
  %v937 = vunpack.c.h.b16 %v156
  %v938 = vunpack.c.l.b16 %v157
  %v939 = vunpack.c.h.b16 %v157
  %v940 = vunpack.c.l.b16 %v158
  %v941 = vunpack.c.h.b16 %v158
  %v942 = vunpack.c.l.b16 %v159
  %v943 = vunpack.c.h.b16 %v159
  %v944 = vunpack.c.l.b16 %v160
  %v945 = vunpack.c.h.b16 %v160
  %v946 = vunpack.c.l.b16 %v161
  %v947 = vunpack.c.h.b16 %v161
  %v948 = vunpack.c.l.b16 %v162
  %v949 = vunpack.c.h.b16 %v162
  %v950 = vunpack.c.l.b16 %v163
  %v951 = vunpack.c.h.b16 %v163
  %v952 = vunpack.c.l.b16 %v164
  %v953 = vunpack.c.h.b16 %v164
  %v954 = vunpack.c.l.b16 %v165
  %v955 = vunpack.c.h.b16 %v165
  %v956 = vunpack.c.l.b16 %v166
  %v957 = vunpack.c.h.b16 %v166
  %v958 = vunpack.c.l.b16 %v167
  %v959 = vunpack.c.h.b16 %v167
  %v960 = vunpack.c.l.b16 %v168
  %v961 = vunpack.c.h.b16 %v168
  %v962 = vunpack.c.l.b16 %v169
  %v963 = vunpack.c.h.b16 %v169
  %v964 = vunpack.c.l.b16 %v170
  %v965 = vunpack.c.h.b16 %v170
  %v966 = vunpack.c.l.b16 %v171
  %v967 = vunpack.c.h.b16 %v171
  %v968 = vunpack.c.l.b16 %v172
  %v969 = vunpack.c.h.b16 %v172
  %v970 = vunpack.c.l.b16 %v173
  %v971 = vunpack.c.h.b16 %v173
  %v972 = vunpack.c.l.b16 %v174
  %v973 = vunpack.c.h.b16 %v174
  %v974 = vunpack.c.l.b16 %v175
  %v975 = vunpack.c.h.b16 %v175
  %v976 = vunpack.c.l.b16 %v176
  %v977 = vunpack.c.h.b16 %v176
  %v978 = vunpack.c.l.b16 %v177
  %v979 = vunpack.c.h.b16 %v177
  %v980 = vunpack.c.l.b16 %v178
  %v981 = vunpack.c.h.b16 %v178
  %v982 = vunpack.c.l.b16 %v179
  %v983 = vunpack.c.h.b16 %v179
  %v984 = vunpack.c.l.b16 %v180
  %v985 = vunpack.c.h.b16 %v180
  %v986 = vunpack.c.l.b16 %v181
  %v987 = vunpack.c.h.b16 %v181
  %v988 = vunpack.c.l.b16 %v182
  %v989 = vunpack.c.h.b16 %v182
  %v990 = vunpack.c.l.b16 %v183
  %v991 = vunpack.c.h.b16 %v183
  %v992 = vunpack.c.l.b16 %v184
  %v993 = vunpack.c.h.b16 %v184
  %v994 = vunpack.c.l.b16 %v185
  %v995 = vunpack.c.h.b16 %v185
  %v996 = vunpack.c.l.b16 %v186
  %v997 = vunpack.c.h.b16 %v186
  %v998 = vunpack.c.l.b16 %v187
  %v999 = vunpack.c.h.b16 %v187
  %v1000 = vunpack.c.l.b16 %v188
  %v1001 = vunpack.c.h.b16 %v188
  %v1002 = vunpack.c.l.b16 %v189
  %v1003 = vunpack.c.h.b16 %v189
  %v1004 = vunpack.c.l.b16 %v190
  %v1005 = vunpack.c.h.b16 %v190
  %v1006 = vunpack.c.l.b16 %v191
  %v1007 = vunpack.c.h.b16 %v191
  %v1008 = vunpack.c.l.b16 %v192
  %v1009 = vunpack.c.h.b16 %v192
  %v1010 = vunpack.c.l.b16 %v193
  %v1011 = vunpack.c.h.b16 %v193
  %v1012 = vunpack.c.l.b16 %v194
  %v1013 = vunpack.c.h.b16 %v194
  %v1014 = vunpack.c.l.b16 %v195
  %v1015 = vunpack.c.h.b16 %v195
  %v1016 = vunpack.c.l.b16 %v196
  %v1017 = vunpack.c.h.b16 %v196
  %v1018 = vunpack.c.l.b16 %v197
  %v1019 = vunpack.c.h.b16 %v197
  %v1020 = vunpack.c.l.b16 %v198
  %v1021 = vunpack.c.h.b16 %v198
  %v1022 = vunpack.c.l.b16 %v199
  %v1023 = vunpack.c.h.b16 %v199
  %v1024 = vunpack.c.l.b16 %v200
  %v1025 = vunpack.c.h.b16 %v200
  %v1026 = vunpack.c.l.b16 %v201
  %v1027 = vunpack.c.h.b16 %v201
  %v1028 = vunpack.c.l.b16 %v202
  %v1029 = vunpack.c.h.b16 %v202
  %v1030 = vunpack.c.l.b16 %v203
  %v1031 = vunpack.c.h.b16 %v203
  %v1032 = vunpack.c.l.b16 %v204
  %v1033 = vunpack.c.h.b16 %v204
  %v1034 = vunpack.c.l.b16 %v205
  %v1035 = vunpack.c.h.b16 %v205
  %v1036 = vunpack.c.l.b16 %v206
  %v1037 = vunpack.c.h.b16 %v206
  %v1038 = vunpack.c.l.b16 %v207
  %v1039 = vunpack.c.h.b16 %v207
  %v1040 = vunpack.c.l.b16 %v208
  %v1041 = vunpack.c.h.b16 %v208
  %v1042 = vunpack.c.l.b16 %v209
  %v1043 = vunpack.c.h.b16 %v209
  %v1044 = vunpack.c.l.b16 %v210
  %v1045 = vunpack.c.h.b16 %v210
  %v1046 = vunpack.c.l.b16 %v211
  %v1047 = vunpack.c.h.b16 %v211
  %v1048 = vunpack.c.l.b16 %v212
  %v1049 = vunpack.c.h.b16 %v212
  %v1050 = vunpack.c.l.b16 %v213
  %v1051 = vunpack.c.h.b16 %v213
  %v1052 = vunpack.c.l.b16 %v214
  %v1053 = vunpack.c.h.b16 %v214
  %v1054 = vunpack.c.l.b16 %v215
  %v1055 = vunpack.c.h.b16 %v215
  %v1056 = vunpack.c.l.b16 %v216
  %v1057 = vunpack.c.h.b16 %v216
  %v1058 = vunpack.c.l.b16 %v217
  %v1059 = vunpack.c.h.b16 %v217
  %v1060 = vunpack.c.l.b16 %v218
  %v1061 = vunpack.c.h.b16 %v218
  %v1062 = vunpack.c.l.b16 %v219
  %v1063 = vunpack.c.h.b16 %v219
  %v1064 = vunpack.c.l.b16 %v220
  %v1065 = vunpack.c.h.b16 %v220
  %v1066 = vunpack.c.l.b16 %v221
  %v1067 = vunpack.c.h.b16 %v221
  %v1068 = vunpack.c.l.b16 %v222
  %v1069 = vunpack.c.h.b16 %v222
  %v1070 = vunpack.c.l.b16 %v223
  %v1071 = vunpack.c.h.b16 %v223
  %v1072 = vunpack.c.l.b16 %v224
  %v1073 = vunpack.c.h.b16 %v224
  %v1074 = vunpack.c.l.b16 %v225
  %v1075 = vunpack.c.h.b16 %v225
  %v1076 = vunpack.c.l.b16 %v226
  %v1077 = vunpack.c.h.b16 %v226
  %v1078 = vunpack.c.l.b16 %v227
  %v1079 = vunpack.c.h.b16 %v227
  %v1080 = vunpack.c.l.b16 %v228
  %v1081 = vunpack.c.h.b16 %v228
  %v1082 = vunpack.c.l.b16 %v229
  %v1083 = vunpack.c.h.b16 %v229
  %v1084 = vunpack.c.l.b16 %v230
  %v1085 = vunpack.c.h.b16 %v230
  %v1086 = vunpack.c.l.b16 %v231
  %v1087 = vunpack.c.h.b16 %v231
  %v1088 = vunpack.c.l.b16 %v232
  %v1089 = vunpack.c.h.b16 %v232
  %v1090 = vunpack.c.l.b16 %v233
  %v1091 = vunpack.c.h.b16 %v233
  %v1092 = vunpack.c.l.b16 %v234
  %v1093 = vunpack.c.h.b16 %v234
  %v1094 = vunpack.c.l.b16 %v235
  %v1095 = vunpack.c.h.b16 %v235
  %v1096 = vunpack.c.l.b16 %v236
  %v1097 = vunpack.c.h.b16 %v236
  %v1098 = vunpack.c.l.b16 %v237
  %v1099 = vunpack.c.h.b16 %v237
  %v1100 = vunpack.c.l.b16 %v238
  %v1101 = vunpack.c.h.b16 %v238
  %v1102 = vunpack.c.l.b16 %v239
  %v1103 = vunpack.c.h.b16 %v239
  %v1104 = vunpack.c.l.b16 %v240
  %v1105 = vunpack.c.h.b16 %v240
  %v1106 = vunpack.c.l.b16 %v241
  %v1107 = vunpack.c.h.b16 %v241
  %v1108 = vunpack.c.l.b16 %v242
  %v1109 = vunpack.c.h.b16 %v242
  %v1110 = vunpack.c.l.b16 %v243
  %v1111 = vunpack.c.h.b16 %v243
  %v1112 = vunpack.c.l.b16 %v244
  %v1113 = vunpack.c.h.b16 %v244
  %v1114 = vunpack.c.l.b16 %v245
  %v1115 = vunpack.c.h.b16 %v245
  %v1116 = vunpack.c.l.b16 %v246
  %v1117 = vunpack.c.h.b16 %v246
  %v1118 = vunpack.c.l.b16 %v247
  %v1119 = vunpack.c.h.b16 %v247
  %v1120 = vunpack.c.l.b16 %v248
  %v1121 = vunpack.c.h.b16 %v248
  %v1122 = vunpack.c.l.b16 %v249
  %v1123 = vunpack.c.h.b16 %v249
  %v1124 = vunpack.c.l.b16 %v250
  %v1125 = vunpack.c.h.b16 %v250
  %v1126 = vunpack.c.l.b16 %v251
  %v1127 = vunpack.c.h.b16 %v251
  %v1128 = vunpack.c.l.b16 %v252
  %v1129 = vunpack.c.h.b16 %v252
  %v1130 = vunpack.c.l.b16 %v253
  %v1131 = vunpack.c.h.b16 %v253
  %v1132 = vunpack.c.l.b16 %v254
  %v1133 = vunpack.c.h.b16 %v254
  %v1134 = vunpack.c.l.b16 %v255
  %v1135 = vunpack.c.h.b16 %v255
  %v1136 = vunpack.c.l.b16 %v256
  %v1137 = vunpack.c.h.b16 %v256
  %v1138 = vunpack.c.l.b16 %v257
  %v1139 = vunpack.c.h.b16 %v257
  %v1140 = vunpack.c.l.b16 %v258
  %v1141 = vunpack.c.h.b16 %v258
  %v1142 = vunpack.c.l.b16 %v259
  %v1143 = vunpack.c.h.b16 %v259
  %v1144 = vunpack.c.l.b16 %v260
  %v1145 = vunpack.c.h.b16 %v260
  %v1146 = vunpack.c.l.b16 %v261
  %v1147 = vunpack.c.h.b16 %v261
  %v1148 = vunpack.c.l.b16 %v262
  %v1149 = vunpack.c.h.b16 %v262
  %v1150 = vunpack.c.l.b16 %v263
  %v1151 = vunpack.c.h.b16 %v263
  %v1152 = vunpack.c.l.b16 %v264
  %v1153 = vunpack.c.h.b16 %v264
  %v1154 = vunpack.c.l.b16 %v265
  %v1155 = vunpack.c.h.b16 %v265
  %v1156 = vunpack.c.l.b16 %v266
  %v1157 = vunpack.c.h.b16 %v266
  %v1158 = vunpack.c.l.b16 %v267
  %v1159 = vunpack.c.h.b16 %v267
  %v1160 = vunpack.c.l.b16 %v268
  %v1161 = vunpack.c.h.b16 %v268
  %v1162 = vunpack.c.l.b16 %v269
  %v1163 = vunpack.c.h.b16 %v269
  %v1164 = vunpack.c.l.b16 %v270
  %v1165 = vunpack.c.h.b16 %v270
  %v1166 = vunpack.c.l.b16 %v271
  %v1167 = vunpack.c.h.b16 %v271
  %v1168 = vunpack.c.l.b16 %v272
  %v1169 = vunpack.c.h.b16 %v272
  %v1170 = vunpack.c.l.b16 %v273
  %v1171 = vunpack.c.h.b16 %v273
  %v1172 = vunpack.c.l.b16 %v274
  %v1173 = vunpack.c.h.b16 %v274
  %v1174 = vunpack.c.l.b16 %v275
  %v1175 = vunpack.c.h.b16 %v275
  %v1176 = vunpack.c.l.b16 %v276
  %v1177 = vunpack.c.h.b16 %v276
  %v1178 = vunpack.c.l.b16 %v277
  %v1179 = vunpack.c.h.b16 %v277
  %v1180 = vunpack.c.l.b16 %v278
  %v1181 = vunpack.c.h.b16 %v278
  %v1182 = vunpack.c.l.b16 %v279
  %v1183 = vunpack.c.h.b16 %v279
  %v1184 = vunpack.c.l.b16 %v280
  %v1185 = vunpack.c.h.b16 %v280
  %v1186 = vunpack.c.l.b16 %v281
  %v1187 = vunpack.c.h.b16 %v281
  %v1188 = vunpack.c.l.b16 %v282
  %v1189 = vunpack.c.h.b16 %v282
  %v1190 = vunpack.c.l.b16 %v283
  %v1191 = vunpack.c.h.b16 %v283
  %v1192 = vunpack.c.l.b16 %v284
  %v1193 = vunpack.c.h.b16 %v284
  %v1194 = vunpack.c.l.b16 %v285
  %v1195 = vunpack.c.h.b16 %v285
  %v1196 = vunpack.c.l.b16 %v286
  %v1197 = vunpack.c.h.b16 %v286
  %v1198 = vunpack.c.l.b16 %v287
  %v1199 = vunpack.c.h.b16 %v287
  %v1200 = vunpack.c.l.b16 %v288
  %v1201 = vunpack.c.h.b16 %v288
  %v1202 = vunpack.c.l.b16 %v289
  %v1203 = vunpack.c.h.b16 %v289
  %v1204 = vunpack.c.l.b16 %v290
  %v1205 = vunpack.c.h.b16 %v290
  %v1206 = vunpack.c.l.b16 %v291
  %v1207 = vunpack.c.h.b16 %v291
  %v1208 = vunpack.c.l.b16 %v292
  %v1209 = vunpack.c.h.b16 %v292
  %v1210 = vunpack.c.l.b16 %v293
  %v1211 = vunpack.c.h.b16 %v293
  %v1212 = vunpack.c.l.b16 %v294
  %v1213 = vunpack.c.h.b16 %v294
  %v1214 = vunpack.c.l.b16 %v295
  %v1215 = vunpack.c.h.b16 %v295
  %v1216 = vunpack.c.l.b16 %v296
  %v1217 = vunpack.c.h.b16 %v296
  %v1218 = vunpack.c.l.b16 %v297
  %v1219 = vunpack.c.h.b16 %v297
  %v1220 = vunpack.c.l.b16 %v298
  %v1221 = vunpack.c.h.b16 %v298
  %v1222 = vunpack.c.l.b16 %v299
  %v1223 = vunpack.c.h.b16 %v299
  %v1224 = vunpack.c.l.b16 %v300
  %v1225 = vunpack.c.h.b16 %v300
  %v1226 = vunpack.c.l.b16 %v301
  %v1227 = vunpack.c.h.b16 %v301
  %v1228 = vunpack.c.l.b16 %v302
  %v1229 = vunpack.c.h.b16 %v302
  %v1230 = vunpack.c.l.b16 %v303
  %v1231 = vunpack.c.h.b16 %v303
  %v1232 = vunpack.c.l.b16 %v304
  %v1233 = vunpack.c.h.b16 %v304
  %v1234 = vunpack.c.l.b16 %v305
  %v1235 = vunpack.c.h.b16 %v305
  %v1236 = vunpack.c.l.b16 %v306
  %v1237 = vunpack.c.h.b16 %v306
  %v1238 = vunpack.c.l.b16 %v307
  %v1239 = vunpack.c.h.b16 %v307
  %v1240 = vunpack.c.l.b16 %v308
  %v1241 = vunpack.c.h.b16 %v308
  %v1242 = vunpack.c.l.b16 %v309
  %v1243 = vunpack.c.h.b16 %v309
  %v1244 = vunpack.c.l.b16 %v310
  %v1245 = vunpack.c.h.b16 %v310
  %v1246 = vunpack.c.l.b16 %v311
  %v1247 = vunpack.c.h.b16 %v311
  %v1248 = vunpack.c.l.b16 %v312
  %v1249 = vunpack.c.h.b16 %v312
  %v1250 = vunpack.c.l.b16 %v313
  %v1251 = vunpack.c.h.b16 %v313
  %v1252 = vunpack.c.l.b16 %v314
  %v1253 = vunpack.c.h.b16 %v314
  %v1254 = vunpack.c.l.b16 %v315
  %v1255 = vunpack.c.h.b16 %v315
  %v1256 = vunpack.c.l.b16 %v316
  %v1257 = vunpack.c.h.b16 %v316
  %v1258 = vunpack.c.l.b16 %v317
  %v1259 = vunpack.c.h.b16 %v317
  %v1260 = vunpack.c.l.b16 %v318
  %v1261 = vunpack.c.h.b16 %v318
  %v1262 = vunpack.c.l.b16 %v319
  %v1263 = vunpack.c.h.b16 %v319
  %v1264 = vunpack.c.l.b16 %v320
  %v1265 = vunpack.c.h.b16 %v320
  %v1266 = vunpack.c.l.b16 %v321
  %v1267 = vunpack.c.h.b16 %v321
  %v1268 = vunpack.c.l.b16 %v322
  %v1269 = vunpack.c.h.b16 %v322
  %v1270 = vunpack.c.l.b16 %v323
  %v1271 = vunpack.c.h.b16 %v323
  %v1272 = vunpack.c.l.b16 %v324
  %v1273 = vunpack.c.h.b16 %v324
  %v1274 = vunpack.c.l.b16 %v325
  %v1275 = vunpack.c.h.b16 %v325
  %v1276 = vunpack.c.l.b16 %v326
  %v1277 = vunpack.c.h.b16 %v326
  %v1278 = vunpack.c.l.b16 %v327
  %v1279 = vunpack.c.h.b16 %v327
  %v1280 = vunpack.c.l.b16 %v328
  %v1281 = vunpack.c.h.b16 %v328
  %v1282 = vunpack.c.l.b16 %v329
  %v1283 = vunpack.c.h.b16 %v329
  %v1284 = vunpack.c.l.b16 %v330
  %v1285 = vunpack.c.h.b16 %v330
  %v1286 = vunpack.c.l.b16 %v331
  %v1287 = vunpack.c.h.b16 %v331
  %v1288 = vunpack.c.l.b16 %v332
  %v1289 = vunpack.c.h.b16 %v332
  %v1290 = vunpack.c.l.b16 %v333
  %v1291 = vunpack.c.h.b16 %v333
  %v1292 = vunpack.c.l.b16 %v334
  %v1293 = vunpack.c.h.b16 %v334
  %v1294 = vunpack.c.l.b16 %v335
  %v1295 = vunpack.c.h.b16 %v335
  %v1296 = vunpack.c.l.b16 %v336
  %v1297 = vunpack.c.h.b16 %v336
  %v1298 = vunpack.c.l.b16 %v337
  %v1299 = vunpack.c.h.b16 %v337
  %v1300 = vunpack.c.l.b16 %v338
  %v1301 = vunpack.c.h.b16 %v338
  %v1302 = vunpack.c.l.b16 %v339
  %v1303 = vunpack.c.h.b16 %v339
  %v1304 = vunpack.c.l.b16 %v340
  %v1305 = vunpack.c.h.b16 %v340
  %v1306 = vunpack.c.l.b16 %v341
  %v1307 = vunpack.c.h.b16 %v341
  %v1308 = vpack.c.b16 %v732, %v668
  %v1309 = vpack.c.b16 %v733, %v669
  %v1310 = vpack.c.b16 %v734, %v670
  %v1311 = vpack.c.b16 %v735, %v671
  %v1312 = vpack.c.b16 %v736, %v672
  %v1313 = vpack.c.b16 %v737, %v673
  %v1314 = vpack.c.b16 %v738, %v674
  %v1315 = vpack.c.b16 %v739, %v675
  %v1316 = vpack.c.b16 %v740, %v676
  %v1317 = vpack.c.b16 %v741, %v677
  %v1318 = vpack.c.b16 %v742, %v678
  %v1319 = vpack.c.b16 %v743, %v679
  %v1320 = vpack.c.b16 %v744, %v680
  %v1321 = vpack.c.b16 %v745, %v681
  %v1322 = vpack.c.b16 %v746, %v682
  %v1323 = vpack.c.b16 %v747, %v683
  %v1324 = vpack.c.b16 %v748, %v684
  %v1325 = vpack.c.b16 %v749, %v685
  %v1326 = vpack.c.b16 %v750, %v686
  %v1327 = vpack.c.b16 %v751, %v687
  %v1328 = vpack.c.b16 %v752, %v688
  %v1329 = vpack.c.b16 %v753, %v689
  %v1330 = vpack.c.b16 %v754, %v690
  %v1331 = vpack.c.b16 %v755, %v691
  %v1332 = vpack.c.b16 %v756, %v692
  %v1333 = vpack.c.b16 %v757, %v693
  %v1334 = vpack.c.b16 %v758, %v694
  %v1335 = vpack.c.b16 %v759, %v695
  %v1336 = vpack.c.b16 %v760, %v696
  %v1337 = vpack.c.b16 %v761, %v697
  %v1338 = vpack.c.b16 %v762, %v698
  %v1339 = vpack.c.b16 %v763, %v699
  %v1340 = vpack.c.b16 %v764, %v700
  %v1341 = vpack.c.b16 %v765, %v701
  %v1342 = vpack.c.b16 %v766, %v702
  %v1343 = vpack.c.b16 %v767, %v703
  %v1344 = vpack.c.b16 %v768, %v704
  %v1345 = vpack.c.b16 %v769, %v705
  %v1346 = vpack.c.b16 %v770, %v706
  %v1347 = vpack.c.b16 %v771, %v707
  %v1348 = vpack.c.b16 %v772, %v708
  %v1349 = vpack.c.b16 %v773, %v709
  %v1350 = vpack.c.b16 %v774, %v710
  %v1351 = vpack.c.b16 %v775, %v711
  %v1352 = vpack.c.b16 %v776, %v712
  %v1353 = vpack.c.b16 %v777, %v713
  %v1354 = vpack.c.b16 %v778, %v714
  %v1355 = vpack.c.b16 %v779, %v715
  %v1356 = vpack.c.b16 %v780, %v716
  %v1357 = vpack.c.b16 %v781, %v717
  %v1358 = vpack.c.b16 %v782, %v718
  %v1359 = vpack.c.b16 %v783, %v719
  %v1360 = vpack.c.b16 %v784, %v720
  %v1361 = vpack.c.b16 %v785, %v721
  %v1362 = vpack.c.b16 %v786, %v722
  %v1363 = vpack.c.b16 %v787, %v723
  %v1364 = vpack.c.b16 %v788, %v724
  %v1365 = vpack.c.b16 %v789, %v725
  %v1366 = vpack.c.b16 %v790, %v726
  %v1367 = vpack.c.b16 %v791, %v727
  %v1368 = vpack.c.b16 %v792, %v728
  %v1369 = vpack.c.b16 %v793, %v729
  %v1370 = vpack.c.b16 %v794, %v730
  %v1371 = vpack.c.b16 %v795, %v731
  %v1372 = vpack.c.b16 %v860, %v796
  %v1373 = vpack.c.b16 %v861, %v797
  %v1374 = vpack.c.b16 %v862, %v798
  %v1375 = vpack.c.b16 %v863, %v799
  %v1376 = vpack.c.b16 %v864, %v800
  %v1377 = vpack.c.b16 %v865, %v801
  %v1378 = vpack.c.b16 %v866, %v802
  %v1379 = vpack.c.b16 %v867, %v803
  %v1380 = vpack.c.b16 %v868, %v804
  %v1381 = vpack.c.b16 %v869, %v805
  %v1382 = vpack.c.b16 %v870, %v806
  %v1383 = vpack.c.b16 %v871, %v807
  %v1384 = vpack.c.b16 %v872, %v808
  %v1385 = vpack.c.b16 %v873, %v809
  %v1386 = vpack.c.b16 %v874, %v810
  %v1387 = vpack.c.b16 %v875, %v811
  %v1388 = vpack.c.b16 %v876, %v812
  %v1389 = vpack.c.b16 %v877, %v813
  %v1390 = vpack.c.b16 %v878, %v814
  %v1391 = vpack.c.b16 %v879, %v815
  %v1392 = vpack.c.b16 %v880, %v816
  %v1393 = vpack.c.b16 %v881, %v817
  %v1394 = vpack.c.b16 %v882, %v818
  %v1395 = vpack.c.b16 %v883, %v819
  %v1396 = vpack.c.b16 %v884, %v820
  %v1397 = vpack.c.b16 %v885, %v821
  %v1398 = vpack.c.b16 %v886, %v822
  %v1399 = vpack.c.b16 %v887, %v823
  %v1400 = vpack.c.b16 %v888, %v824
  %v1401 = vpack.c.b16 %v889, %v825
  %v1402 = vpack.c.b16 %v890, %v826
  %v1403 = vpack.c.b16 %v891, %v827
  %v1404 = vpack.c.b16 %v892, %v828
  %v1405 = vpack.c.b16 %v893, %v829
  %v1406 = vpack.c.b16 %v894, %v830
  %v1407 = vpack.c.b16 %v895, %v831
  %v1408 = vpack.c.b16 %v896, %v832
  %v1409 = vpack.c.b16 %v897, %v833
  %v1410 = vpack.c.b16 %v898, %v834
  %v1411 = vpack.c.b16 %v899, %v835
  %v1412 = vpack.c.b16 %v900, %v836
  %v1413 = vpack.c.b16 %v901, %v837
  %v1414 = vpack.c.b16 %v902, %v838
  %v1415 = vpack.c.b16 %v903, %v839
  %v1416 = vpack.c.b16 %v904, %v840
  %v1417 = vpack.c.b16 %v905, %v841
  %v1418 = vpack.c.b16 %v906, %v842
  %v1419 = vpack.c.b16 %v907, %v843
  %v1420 = vpack.c.b16 %v908, %v844
  %v1421 = vpack.c.b16 %v909, %v845
  %v1422 = vpack.c.b16 %v910, %v846
  %v1423 = vpack.c.b16 %v911, %v847
  %v1424 = vpack.c.b16 %v912, %v848
  %v1425 = vpack.c.b16 %v913, %v849
  %v1426 = vpack.c.b16 %v914, %v850
  %v1427 = vpack.c.b16 %v915, %v851
  %v1428 = vpack.c.b16 %v916, %v852
  %v1429 = vpack.c.b16 %v917, %v853
  %v1430 = vpack.c.b16 %v918, %v854
  %v1431 = vpack.c.b16 %v919, %v855
  %v1432 = vpack.c.b16 %v920, %v856
  %v1433 = vpack.c.b16 %v921, %v857
  %v1434 = vpack.c.b16 %v922, %v858
  %v1435 = vpack.c.b16 %v923, %v859
  %v1436 = vpack.c.b16 %v988, %v924
  %v1437 = vpack.c.b16 %v989, %v925
  %v1438 = vpack.c.b16 %v990, %v926
  %v1439 = vpack.c.b16 %v991, %v927
  %v1440 = vpack.c.b16 %v992, %v928
  %v1441 = vpack.c.b16 %v993, %v929
  %v1442 = vpack.c.b16 %v994, %v930
  %v1443 = vpack.c.b16 %v995, %v931
  %v1444 = vpack.c.b16 %v996, %v932
  %v1445 = vpack.c.b16 %v997, %v933
  %v1446 = vpack.c.b16 %v998, %v934
  %v1447 = vpack.c.b16 %v999, %v935
  %v1448 = vpack.c.b16 %v1000, %v936
  %v1449 = vpack.c.b16 %v1001, %v937
  %v1450 = vpack.c.b16 %v1002, %v938
  %v1451 = vpack.c.b16 %v1003, %v939
  %v1452 = vpack.c.b16 %v1004, %v940
  %v1453 = vpack.c.b16 %v1005, %v941
  %v1454 = vpack.c.b16 %v1006, %v942
  %v1455 = vpack.c.b16 %v1007, %v943
  %v1456 = vpack.c.b16 %v1008, %v944
  %v1457 = vpack.c.b16 %v1009, %v945
  %v1458 = vpack.c.b16 %v1010, %v946
  %v1459 = vpack.c.b16 %v1011, %v947
  %v1460 = vpack.c.b16 %v1012, %v948
  %v1461 = vpack.c.b16 %v1013, %v949
  %v1462 = vpack.c.b16 %v1014, %v950
  %v1463 = vpack.c.b16 %v1015, %v951
  %v1464 = vpack.c.b16 %v1016, %v952
  %v1465 = vpack.c.b16 %v1017, %v953
  %v1466 = vpack.c.b16 %v1018, %v954
  %v1467 = vpack.c.b16 %v1019, %v955
  %v1468 = vpack.c.b16 %v1020, %v956
  %v1469 = vpack.c.b16 %v1021, %v957
  %v1470 = vpack.c.b16 %v1022, %v958
  %v1471 = vpack.c.b16 %v1023, %v959
  %v1472 = vpack.c.b16 %v1024, %v960
  %v1473 = vpack.c.b16 %v1025, %v961
  %v1474 = vpack.c.b16 %v1026, %v962
  %v1475 = vpack.c.b16 %v1027, %v963
  %v1476 = vpack.c.b16 %v1028, %v964
  %v1477 = vpack.c.b16 %v1029, %v965
  %v1478 = vpack.c.b16 %v1030, %v966
  %v1479 = vpack.c.b16 %v1031, %v967
  %v1480 = vpack.c.b16 %v1032, %v968
  %v1481 = vpack.c.b16 %v1033, %v969
  %v1482 = vpack.c.b16 %v1034, %v970
  %v1483 = vpack.c.b16 %v1035, %v971
  %v1484 = vpack.c.b16 %v1036, %v972
  %v1485 = vpack.c.b16 %v1037, %v973
  %v1486 = vpack.c.b16 %v1038, %v974
  %v1487 = vpack.c.b16 %v1039, %v975
  %v1488 = vpack.c.b16 %v1040, %v976
  %v1489 = vpack.c.b16 %v1041, %v977
  %v1490 = vpack.c.b16 %v1042, %v978
  %v1491 = vpack.c.b16 %v1043, %v979
  %v1492 = vpack.c.b16 %v1044, %v980
  %v1493 = vpack.c.b16 %v1045, %v981
  %v1494 = vpack.c.b16 %v1046, %v982
  %v1495 = vpack.c.b16 %v1047, %v983
  %v1496 = vpack.c.b16 %v1048, %v984
  %v1497 = vpack.c.b16 %v1049, %v985
  %v1498 = vpack.c.b16 %v1050, %v986
  %v1499 = vpack.c.b16 %v1051, %v987
  %v1500 = vpack.c.b16 %v1116, %v1052
  %v1501 = vpack.c.b16 %v1117, %v1053
  %v1502 = vpack.c.b16 %v1118, %v1054
  %v1503 = vpack.c.b16 %v1119, %v1055
  %v1504 = vpack.c.b16 %v1120, %v1056
  %v1505 = vpack.c.b16 %v1121, %v1057
  %v1506 = vpack.c.b16 %v1122, %v1058
  %v1507 = vpack.c.b16 %v1123, %v1059
  %v1508 = vpack.c.b16 %v1124, %v1060
  %v1509 = vpack.c.b16 %v1125, %v1061
  %v1510 = vpack.c.b16 %v1126, %v1062
  %v1511 = vpack.c.b16 %v1127, %v1063
  %v1512 = vpack.c.b16 %v1128, %v1064
  %v1513 = vpack.c.b16 %v1129, %v1065
  %v1514 = vpack.c.b16 %v1130, %v1066
  %v1515 = vpack.c.b16 %v1131, %v1067
  %v1516 = vpack.c.b16 %v1132, %v1068
  %v1517 = vpack.c.b16 %v1133, %v1069
  %v1518 = vpack.c.b16 %v1134, %v1070
  %v1519 = vpack.c.b16 %v1135, %v1071
  %v1520 = vpack.c.b16 %v1136, %v1072
  %v1521 = vpack.c.b16 %v1137, %v1073
  %v1522 = vpack.c.b16 %v1138, %v1074
  %v1523 = vpack.c.b16 %v1139, %v1075
  %v1524 = vpack.c.b16 %v1140, %v1076
  %v1525 = vpack.c.b16 %v1141, %v1077
  %v1526 = vpack.c.b16 %v1142, %v1078
  %v1527 = vpack.c.b16 %v1143, %v1079
  %v1528 = vpack.c.b16 %v1144, %v1080
  %v1529 = vpack.c.b16 %v1145, %v1081
  %v1530 = vpack.c.b16 %v1146, %v1082
  %v1531 = vpack.c.b16 %v1147, %v1083
  %v1532 = vpack.c.b16 %v1148, %v1084
  %v1533 = vpack.c.b16 %v1149, %v1085
  %v1534 = vpack.c.b16 %v1150, %v1086
  %v1535 = vpack.c.b16 %v1151, %v1087
  %v1536 = vpack.c.b16 %v1152, %v1088
  %v1537 = vpack.c.b16 %v1153, %v1089
  %v1538 = vpack.c.b16 %v1154, %v1090
  %v1539 = vpack.c.b16 %v1155, %v1091
  %v1540 = vpack.c.b16 %v1156, %v1092
  %v1541 = vpack.c.b16 %v1157, %v1093
  %v1542 = vpack.c.b16 %v1158, %v1094
  %v1543 = vpack.c.b16 %v1159, %v1095
  %v1544 = vpack.c.b16 %v1160, %v1096
  %v1545 = vpack.c.b16 %v1161, %v1097
  %v1546 = vpack.c.b16 %v1162, %v1098
  %v1547 = vpack.c.b16 %v1163, %v1099
  %v1548 = vpack.c.b16 %v1164, %v1100
  %v1549 = vpack.c.b16 %v1165, %v1101
  %v1550 = vpack.c.b16 %v1166, %v1102
  %v1551 = vpack.c.b16 %v1167, %v1103
  %v1552 = vpack.c.b16 %v1168, %v1104
  %v1553 = vpack.c.b16 %v1169, %v1105
  %v1554 = vpack.c.b16 %v1170, %v1106
  %v1555 = vpack.c.b16 %v1171, %v1107
  %v1556 = vpack.c.b16 %v1172, %v1108
  %v1557 = vpack.c.b16 %v1173, %v1109
  %v1558 = vpack.c.b16 %v1174, %v1110
  %v1559 = vpack.c.b16 %v1175, %v1111
  %v1560 = vpack.c.b16 %v1176, %v1112
  %v1561 = vpack.c.b16 %v1177, %v1113
  %v1562 = vpack.c.b16 %v1178, %v1114
  %v1563 = vpack.c.b16 %v1179, %v1115
  %v1564 = vpack.c.b16 %v1244, %v1180
  %v1565 = vpack.c.b16 %v1245, %v1181
  %v1566 = vpack.c.b16 %v1246, %v1182
  %v1567 = vpack.c.b16 %v1247, %v1183
  %v1568 = vpack.c.b16 %v1248, %v1184
  %v1569 = vpack.c.b16 %v1249, %v1185
  %v1570 = vpack.c.b16 %v1250, %v1186
  %v1571 = vpack.c.b16 %v1251, %v1187
  %v1572 = vpack.c.b16 %v1252, %v1188
  %v1573 = vpack.c.b16 %v1253, %v1189
  %v1574 = vpack.c.b16 %v1254, %v1190
  %v1575 = vpack.c.b16 %v1255, %v1191
  %v1576 = vpack.c.b16 %v1256, %v1192
  %v1577 = vpack.c.b16 %v1257, %v1193
  %v1578 = vpack.c.b16 %v1258, %v1194
  %v1579 = vpack.c.b16 %v1259, %v1195
  %v1580 = vpack.c.b16 %v1260, %v1196
  %v1581 = vpack.c.b16 %v1261, %v1197
  %v1582 = vpack.c.b16 %v1262, %v1198
  %v1583 = vpack.c.b16 %v1263, %v1199
  %v1584 = vpack.c.b16 %v1264, %v1200
  %v1585 = vpack.c.b16 %v1265, %v1201
  %v1586 = vpack.c.b16 %v1266, %v1202
  %v1587 = vpack.c.b16 %v1267, %v1203
  %v1588 = vpack.c.b16 %v1268, %v1204
  %v1589 = vpack.c.b16 %v1269, %v1205
  %v1590 = vpack.c.b16 %v1270, %v1206
  %v1591 = vpack.c.b16 %v1271, %v1207
  %v1592 = vpack.c.b16 %v1272, %v1208
  %v1593 = vpack.c.b16 %v1273, %v1209
  %v1594 = vpack.c.b16 %v1274, %v1210
  %v1595 = vpack.c.b16 %v1275, %v1211
  %v1596 = vpack.c.b16 %v1276, %v1212
  %v1597 = vpack.c.b16 %v1277, %v1213
  %v1598 = vpack.c.b16 %v1278, %v1214
  %v1599 = vpack.c.b16 %v1279, %v1215
  %v1600 = vpack.c.b16 %v1280, %v1216
  %v1601 = vpack.c.b16 %v1281, %v1217
  %v1602 = vpack.c.b16 %v1282, %v1218
  %v1603 = vpack.c.b16 %v1283, %v1219
  %v1604 = vpack.c.b16 %v1284, %v1220
  %v1605 = vpack.c.b16 %v1285, %v1221
  %v1606 = vpack.c.b16 %v1286, %v1222
  %v1607 = vpack.c.b16 %v1287, %v1223
  %v1608 = vpack.c.b16 %v1288, %v1224
  %v1609 = vpack.c.b16 %v1289, %v1225
  %v1610 = vpack.c.b16 %v1290, %v1226
  %v1611 = vpack.c.b16 %v1291, %v1227
  %v1612 = vpack.c.b16 %v1292, %v1228
  %v1613 = vpack.c.b16 %v1293, %v1229
  %v1614 = vpack.c.b16 %v1294, %v1230
  %v1615 = vpack.c.b16 %v1295, %v1231
  %v1616 = vpack.c.b16 %v1296, %v1232
  %v1617 = vpack.c.b16 %v1297, %v1233
  %v1618 = vpack.c.b16 %v1298, %v1234
  %v1619 = vpack.c.b16 %v1299, %v1235
  %v1620 = vpack.c.b16 %v1300, %v1236
  %v1621 = vpack.c.b16 %v1301, %v1237
  %v1622 = vpack.c.b16 %v1302, %v1238
  %v1623 = vpack.c.b16 %v1303, %v1239
  %v1624 = vpack.c.b16 %v1304, %v1240
  %v1625 = vpack.c.b16 %v1305, %v1241
  %v1626 = vpack.c.b16 %v1306, %v1242
  %v1627 = vpack.c.b16 %v1307, %v1243
  %vm1884 = vcmask 613376
  %v1886 = vsel %vm1884, %v21, 0
  %vm1888 = vcmask 1044480
  %vm1889 = vcmask 1045504
  %v1890 = vsel %vm1888, 4294967295, 65535
  %v1891 = vsel %vm1889, %v1890, 0
  %v1893 = vand.u32 %v1564, %v1891
  %v1896 = vand.u32 %v1565, %v1891
  %v1899 = vand.u32 %v1566, %v1891
  %v1902 = vand.u32 %v1567, %v1891
  %v1905 = vand.u32 %v1568, %v1891
  %v1908 = vand.u32 %v1569, %v1891
  %v1911 = vand.u32 %v1570, %v1891
  %v1914 = vand.u32 %v1571, %v1891
  %v1917 = vand.u32 %v1572, %v1891
  %v1920 = vand.u32 %v1573, %v1891
  %v1923 = vand.u32 %v1574, %v1891
  %v1926 = vand.u32 %v1575, %v1891
  %v1929 = vand.u32 %v1576, %v1891
  %v1932 = vand.u32 %v1577, %v1891
  %v1935 = vand.u32 %v1578, %v1891
  %v1938 = vand.u32 %v1579, %v1891
  %v1941 = vand.u32 %v1580, %v1891
  %v1944 = vand.u32 %v1581, %v1891
  %v1947 = vand.u32 %v1582, %v1891
  %v1950 = vand.u32 %v1583, %v1891
  %v1953 = vand.u32 %v1584, %v1891
  %v1956 = vand.u32 %v1585, %v1891
  %v1959 = vand.u32 %v1586, %v1891
  %v1962 = vand.u32 %v1587, %v1891
  %v1965 = vand.u32 %v1588, %v1891
  %v1968 = vand.u32 %v1589, %v1891
  %v1971 = vand.u32 %v1590, %v1891
  %v1974 = vand.u32 %v1591, %v1891
  %v1977 = vand.u32 %v1592, %v1891
  %v1980 = vand.u32 %v1593, %v1891
  %v1983 = vand.u32 %v1594, %v1891
  %v1986 = vand.u32 %v1595, %v1891
  %v1989 = vand.u32 %v1596, %v1891
  %v1992 = vand.u32 %v1597, %v1891
  %v1995 = vand.u32 %v1598, %v1891
  %v1998 = vand.u32 %v1599, %v1891
  %v2001 = vand.u32 %v1600, %v1891
  %v2004 = vand.u32 %v1601, %v1891
  %v2007 = vand.u32 %v1602, %v1891
  %v2010 = vand.u32 %v1603, %v1891
  %v2013 = vand.u32 %v1604, %v1891
  %v2016 = vand.u32 %v1605, %v1891
  %v2019 = vand.u32 %v1606, %v1891
  %v2022 = vand.u32 %v1607, %v1891
  %v2025 = vand.u32 %v1608, %v1891
  %v2028 = vand.u32 %v1609, %v1891
  %v2031 = vand.u32 %v1610, %v1891
  %v2034 = vand.u32 %v1611, %v1891
  %v2037 = vand.u32 %v1612, %v1891
  %v2040 = vand.u32 %v1613, %v1891
  %v2043 = vand.u32 %v1614, %v1891
  %v2046 = vand.u32 %v1615, %v1891
  %v2049 = vand.u32 %v1616, %v1891
  %v2052 = vand.u32 %v1617, %v1891
  %v2055 = vand.u32 %v1618, %v1891
  %v2058 = vand.u32 %v1619, %v1891
  %v2061 = vand.u32 %v1620, %v1891
  %v2064 = vand.u32 %v1621, %v1891
  %v2067 = vand.u32 %v1622, %v1891
  %v2070 = vand.u32 %v1623, %v1891
  %v2073 = vand.u32 %v1624, %v1891
  %v2076 = vand.u32 %v1625, %v1891
  %v2079 = vand.u32 %v1626, %v1891
  %v2082 = vand.u32 %v1627, %v1891
  %2084 = vmatprep.subr.bf16.mxu0 %v1309
  %2085 = vmatpush1.bf16.msra.mxu0 %v1308
  %2086 = vmatprep.subr.bf16.mxu0 %v1373
  %2087 = vmatpush1.bf16.msra.mxu0 %v1372
  %2088 = vmatprep.subr.bf16.mxu0 %v1437
  %2089 = vmatpush1.bf16.msra.mxu0 %v1436
  %2090 = vmatprep.subr.bf16.mxu0 %v1501
  %2091 = vmatpush1.bf16.msra.mxu0 %v1500
  %2092 = vmatprep.subr.bf16.mxu0 %v1896
  %2093 = vmatpush1.bf16.msra.mxu0 %v1893
  %2094 = vmatprep.subr.bf16.mxu0 0
  %2095 = vmatpush1.bf16.msra.mxu0 0
  %2096 = vmatprep.subr.bf16.mxu0 0
  %2097 = vmatpush1.bf16.msra.mxu0 0
  %2098 = vmatprep.subr.bf16.mxu0 0
  %2099 = vmatpush1.bf16.msra.mxu0 0
  %2100 = vmatprep.subr.bf16.mxu0 0
  %2101 = vmatpush1.bf16.msra.mxu0 0
  %2102 = vmatprep.subr.bf16.mxu0 0
  %2103 = vmatpush1.bf16.msra.mxu0 0
  %2104 = vmatprep.subr.bf16.mxu0 0
  %2105 = vmatpush1.bf16.msra.mxu0 0
  %2106 = vmatprep.subr.bf16.mxu0 0
  %2107 = vmatpush1.bf16.msra.mxu0 0
  %2108 = vmatprep.subr.bf16.mxu0 0
  %2109 = vmatpush1.bf16.msra.mxu0 0
  %2110 = vmatprep.subr.bf16.mxu0 0
  %2111 = vmatpush1.bf16.msra.mxu0 0
  %2112 = vmatprep.subr.bf16.mxu0 0
  %2113 = vmatpush1.bf16.msra.mxu0 0
  %2114 = vmatprep.subr.bf16.mxu0 0
  %2115 = vmatpush1.bf16.msra.mxu0 0
  %2116 = vmatprep.mubr.bf16.mxu0 0
  %2117 = vmatmul.mubr.bf16.gmra.mrb[0].mxu0 %v1886
  %v2118 = vpop.f32.mrb[0].mxu0
  %v2119 = vadd.f32 %v346, %v2118
  %v2120 = vpop.f32.mrb[0].mxu0
  %v2121 = vadd.f32 %v346, %v2120
  %v2122 = vpop.f32.mrb[0].mxu0
  %v2123 = vpop.f32.mrb[0].mxu0
  %2124 = vdwg.mxu0
  %2125 = vmatprep.subr.bf16.mxu0 %v1311
  %2126 = vmatpush1.bf16.msra.mxu0 %v1310
  %2127 = vmatprep.subr.bf16.mxu0 %v1375
  %2128 = vmatpush1.bf16.msra.mxu0 %v1374
  %2129 = vmatprep.subr.bf16.mxu0 %v1439
  %2130 = vmatpush1.bf16.msra.mxu0 %v1438
  %2131 = vmatprep.subr.bf16.mxu0 %v1503
  %2132 = vmatpush1.bf16.msra.mxu0 %v1502
  %2133 = vmatprep.subr.bf16.mxu0 %v1902
  %2134 = vmatpush1.bf16.msra.mxu0 %v1899
  %2135 = vmatprep.subr.bf16.mxu0 0
  %2136 = vmatpush1.bf16.msra.mxu0 0
  %2137 = vmatprep.subr.bf16.mxu0 0
  %2138 = vmatpush1.bf16.msra.mxu0 0
  %2139 = vmatprep.subr.bf16.mxu0 0
  %2140 = vmatpush1.bf16.msra.mxu0 0
  %2141 = vmatprep.subr.bf16.mxu0 0
  %2142 = vmatpush1.bf16.msra.mxu0 0
  %2143 = vmatprep.subr.bf16.mxu0 0
  %2144 = vmatpush1.bf16.msra.mxu0 0
  %2145 = vmatprep.subr.bf16.mxu0 0
  %2146 = vmatpush1.bf16.msra.mxu0 0
  %2147 = vmatprep.subr.bf16.mxu0 0
  %2148 = vmatpush1.bf16.msra.mxu0 0
  %2149 = vmatprep.subr.bf16.mxu0 0
  %2150 = vmatpush1.bf16.msra.mxu0 0
  %2151 = vmatprep.subr.bf16.mxu0 0
  %2152 = vmatpush1.bf16.msra.mxu0 0
  %2153 = vmatprep.subr.bf16.mxu0 0
  %2154 = vmatpush1.bf16.msra.mxu0 0
  %2155 = vmatprep.subr.bf16.mxu0 0
  %2156 = vmatpush1.bf16.msra.mxu0 0
  %2157 = vmatprep.mubr.bf16.mxu0 0
  %2158 = vmatmul.mubr.bf16.gmra.mrb[0].mxu0 %v1886
  %v2159 = vpop.f32.mrb[0].mxu0
  %v2160 = vadd.f32 %v346, %v2159
  %v2161 = vpop.f32.mrb[0].mxu0
  %v2162 = vadd.f32 %v346, %v2161
  %v2163 = vpop.f32.mrb[0].mxu0
  %v2164 = vpop.f32.mrb[0].mxu0
  %2165 = vdwg.mxu0
  %2166 = vmatprep.subr.bf16.mxu0 %v1313
  %2167 = vmatpush1.bf16.msra.mxu0 %v1312
  %2168 = vmatprep.subr.bf16.mxu0 %v1377
  %2169 = vmatpush1.bf16.msra.mxu0 %v1376
  %2170 = vmatprep.subr.bf16.mxu0 %v1441
  %2171 = vmatpush1.bf16.msra.mxu0 %v1440
  %2172 = vmatprep.subr.bf16.mxu0 %v1505
  %2173 = vmatpush1.bf16.msra.mxu0 %v1504
  %2174 = vmatprep.subr.bf16.mxu0 %v1908
  %2175 = vmatpush1.bf16.msra.mxu0 %v1905
  %2176 = vmatprep.subr.bf16.mxu0 0
  %2177 = vmatpush1.bf16.msra.mxu0 0
  %2178 = vmatprep.subr.bf16.mxu0 0
  %2179 = vmatpush1.bf16.msra.mxu0 0
  %2180 = vmatprep.subr.bf16.mxu0 0
  %2181 = vmatpush1.bf16.msra.mxu0 0
  %2182 = vmatprep.subr.bf16.mxu0 0
  %2183 = vmatpush1.bf16.msra.mxu0 0
  %2184 = vmatprep.subr.bf16.mxu0 0
  %2185 = vmatpush1.bf16.msra.mxu0 0
  %2186 = vmatprep.subr.bf16.mxu0 0
  %2187 = vmatpush1.bf16.msra.mxu0 0
  %2188 = vmatprep.subr.bf16.mxu0 0
  %2189 = vmatpush1.bf16.msra.mxu0 0
  %2190 = vmatprep.subr.bf16.mxu0 0
  %2191 = vmatpush1.bf16.msra.mxu0 0
  %2192 = vmatprep.subr.bf16.mxu0 0
  %2193 = vmatpush1.bf16.msra.mxu0 0
  %2194 = vmatprep.subr.bf16.mxu0 0
  %2195 = vmatpush1.bf16.msra.mxu0 0
  %2196 = vmatprep.subr.bf16.mxu0 0
  %2197 = vmatpush1.bf16.msra.mxu0 0
  %2198 = vmatprep.mubr.bf16.mxu0 0
  %2199 = vmatmul.mubr.bf16.gmra.mrb[0].mxu0 %v1886
  %v2200 = vpop.f32.mrb[0].mxu0
  %v2201 = vadd.f32 %v346, %v2200
  %v2202 = vpop.f32.mrb[0].mxu0
  %v2203 = vadd.f32 %v346, %v2202
  %v2204 = vpop.f32.mrb[0].mxu0
  %v2205 = vpop.f32.mrb[0].mxu0
  %2206 = vdwg.mxu0
  %2207 = vmatprep.subr.bf16.mxu0 %v1315
  %2208 = vmatpush1.bf16.msra.mxu0 %v1314
  %2209 = vmatprep.subr.bf16.mxu0 %v1379
  %2210 = vmatpush1.bf16.msra.mxu0 %v1378
  %2211 = vmatprep.subr.bf16.mxu0 %v1443
  %2212 = vmatpush1.bf16.msra.mxu0 %v1442
  %2213 = vmatprep.subr.bf16.mxu0 %v1507
  %2214 = vmatpush1.bf16.msra.mxu0 %v1506
  %2215 = vmatprep.subr.bf16.mxu0 %v1914
  %2216 = vmatpush1.bf16.msra.mxu0 %v1911
  %2217 = vmatprep.subr.bf16.mxu0 0
  %2218 = vmatpush1.bf16.msra.mxu0 0
  %2219 = vmatprep.subr.bf16.mxu0 0
  %2220 = vmatpush1.bf16.msra.mxu0 0
  %2221 = vmatprep.subr.bf16.mxu0 0
  %2222 = vmatpush1.bf16.msra.mxu0 0
  %2223 = vmatprep.subr.bf16.mxu0 0
  %2224 = vmatpush1.bf16.msra.mxu0 0
  %2225 = vmatprep.subr.bf16.mxu0 0
  %2226 = vmatpush1.bf16.msra.mxu0 0
  %2227 = vmatprep.subr.bf16.mxu0 0
  %2228 = vmatpush1.bf16.msra.mxu0 0
  %2229 = vmatprep.subr.bf16.mxu0 0
  %2230 = vmatpush1.bf16.msra.mxu0 0
  %2231 = vmatprep.subr.bf16.mxu0 0
  %2232 = vmatpush1.bf16.msra.mxu0 0
  %2233 = vmatprep.subr.bf16.mxu0 0
  %2234 = vmatpush1.bf16.msra.mxu0 0
  %2235 = vmatprep.subr.bf16.mxu0 0
  %2236 = vmatpush1.bf16.msra.mxu0 0
  %2237 = vmatprep.subr.bf16.mxu0 0
  %2238 = vmatpush1.bf16.msra.mxu0 0
  %2239 = vmatprep.mubr.bf16.mxu0 0
  %2240 = vmatmul.mubr.bf16.gmra.mrb[0].mxu0 %v1886
  %v2241 = vpop.f32.mrb[0].mxu0
  %v2242 = vadd.f32 %v346, %v2241
  %v2243 = vpop.f32.mrb[0].mxu0
  %v2244 = vadd.f32 %v346, %v2243
  %v2245 = vpop.f32.mrb[0].mxu0
  %v2246 = vpop.f32.mrb[0].mxu0
  %2247 = vdwg.mxu0
  %2248 = vmatprep.subr.bf16.mxu0 %v1317
  %2249 = vmatpush1.bf16.msra.mxu0 %v1316
  %2250 = vmatprep.subr.bf16.mxu0 %v1381
  %2251 = vmatpush1.bf16.msra.mxu0 %v1380
  %2252 = vmatprep.subr.bf16.mxu0 %v1445
  %2253 = vmatpush1.bf16.msra.mxu0 %v1444
  %2254 = vmatprep.subr.bf16.mxu0 %v1509
  %2255 = vmatpush1.bf16.msra.mxu0 %v1508
  %2256 = vmatprep.subr.bf16.mxu0 %v1920
  %2257 = vmatpush1.bf16.msra.mxu0 %v1917
  %2258 = vmatprep.subr.bf16.mxu0 0
  %2259 = vmatpush1.bf16.msra.mxu0 0
  %2260 = vmatprep.subr.bf16.mxu0 0
  %2261 = vmatpush1.bf16.msra.mxu0 0
  %2262 = vmatprep.subr.bf16.mxu0 0
  %2263 = vmatpush1.bf16.msra.mxu0 0
  %2264 = vmatprep.subr.bf16.mxu0 0
  %2265 = vmatpush1.bf16.msra.mxu0 0
  %2266 = vmatprep.subr.bf16.mxu0 0
  %2267 = vmatpush1.bf16.msra.mxu0 0
  %2268 = vmatprep.subr.bf16.mxu0 0
  %2269 = vmatpush1.bf16.msra.mxu0 0
  %2270 = vmatprep.subr.bf16.mxu0 0
  %2271 = vmatpush1.bf16.msra.mxu0 0
  %2272 = vmatprep.subr.bf16.mxu0 0
  %2273 = vmatpush1.bf16.msra.mxu0 0
  %2274 = vmatprep.subr.bf16.mxu0 0
  %2275 = vmatpush1.bf16.msra.mxu0 0
  %2276 = vmatprep.subr.bf16.mxu0 0
  %2277 = vmatpush1.bf16.msra.mxu0 0
  %2278 = vmatprep.subr.bf16.mxu0 0
  %2279 = vmatpush1.bf16.msra.mxu0 0
  %2280 = vmatprep.mubr.bf16.mxu0 0
  %2281 = vmatmul.mubr.bf16.gmra.mrb[0].mxu0 %v1886
  %v2282 = vpop.f32.mrb[0].mxu0
  %v2283 = vadd.f32 %v346, %v2282
  %v2284 = vpop.f32.mrb[0].mxu0
  %v2285 = vadd.f32 %v346, %v2284
  %v2286 = vpop.f32.mrb[0].mxu0
  %v2287 = vpop.f32.mrb[0].mxu0
  %2288 = vdwg.mxu0
  %2289 = vmatprep.subr.bf16.mxu0 %v1319
  %2290 = vmatpush1.bf16.msra.mxu0 %v1318
  %2291 = vmatprep.subr.bf16.mxu0 %v1383
  %2292 = vmatpush1.bf16.msra.mxu0 %v1382
  %2293 = vmatprep.subr.bf16.mxu0 %v1447
  %2294 = vmatpush1.bf16.msra.mxu0 %v1446
  %2295 = vmatprep.subr.bf16.mxu0 %v1511
  %2296 = vmatpush1.bf16.msra.mxu0 %v1510
  %2297 = vmatprep.subr.bf16.mxu0 %v1926
  %2298 = vmatpush1.bf16.msra.mxu0 %v1923
  %2299 = vmatprep.subr.bf16.mxu0 0
  %2300 = vmatpush1.bf16.msra.mxu0 0
  %2301 = vmatprep.subr.bf16.mxu0 0
  %2302 = vmatpush1.bf16.msra.mxu0 0
  %2303 = vmatprep.subr.bf16.mxu0 0
  %2304 = vmatpush1.bf16.msra.mxu0 0
  %2305 = vmatprep.subr.bf16.mxu0 0
  %2306 = vmatpush1.bf16.msra.mxu0 0
  %2307 = vmatprep.subr.bf16.mxu0 0
  %2308 = vmatpush1.bf16.msra.mxu0 0
  %2309 = vmatprep.subr.bf16.mxu0 0
  %2310 = vmatpush1.bf16.msra.mxu0 0
  %2311 = vmatprep.subr.bf16.mxu0 0
  %2312 = vmatpush1.bf16.msra.mxu0 0
  %2313 = vmatprep.subr.bf16.mxu0 0
  %2314 = vmatpush1.bf16.msra.mxu0 0
  %2315 = vmatprep.subr.bf16.mxu0 0
  %2316 = vmatpush1.bf16.msra.mxu0 0
  %2317 = vmatprep.subr.bf16.mxu0 0
  %2318 = vmatpush1.bf16.msra.mxu0 0
  %2319 = vmatprep.subr.bf16.mxu0 0
  %2320 = vmatpush1.bf16.msra.mxu0 0
  %2321 = vmatprep.mubr.bf16.mxu0 0
  %2322 = vmatmul.mubr.bf16.gmra.mrb[0].mxu0 %v1886
  %v2323 = vpop.f32.mrb[0].mxu0
  %v2324 = vadd.f32 %v346, %v2323
  %v2325 = vpop.f32.mrb[0].mxu0
  %v2326 = vadd.f32 %v346, %v2325
  %v2327 = vpop.f32.mrb[0].mxu0
  %v2328 = vpop.f32.mrb[0].mxu0
  %2329 = vdwg.mxu0
  %2330 = vmatprep.subr.bf16.mxu0 %v1321
  %2331 = vmatpush1.bf16.msra.mxu0 %v1320
  %2332 = vmatprep.subr.bf16.mxu0 %v1385
  %2333 = vmatpush1.bf16.msra.mxu0 %v1384
  %2334 = vmatprep.subr.bf16.mxu0 %v1449
  %2335 = vmatpush1.bf16.msra.mxu0 %v1448
  %2336 = vmatprep.subr.bf16.mxu0 %v1513
  %2337 = vmatpush1.bf16.msra.mxu0 %v1512
  %2338 = vmatprep.subr.bf16.mxu0 %v1932
  %2339 = vmatpush1.bf16.msra.mxu0 %v1929
  %2340 = vmatprep.subr.bf16.mxu0 0
  %2341 = vmatpush1.bf16.msra.mxu0 0
  %2342 = vmatprep.subr.bf16.mxu0 0
  %2343 = vmatpush1.bf16.msra.mxu0 0
  %2344 = vmatprep.subr.bf16.mxu0 0
  %2345 = vmatpush1.bf16.msra.mxu0 0
  %2346 = vmatprep.subr.bf16.mxu0 0
  %2347 = vmatpush1.bf16.msra.mxu0 0
  %2348 = vmatprep.subr.bf16.mxu0 0
  %2349 = vmatpush1.bf16.msra.mxu0 0
  %2350 = vmatprep.subr.bf16.mxu0 0
  %2351 = vmatpush1.bf16.msra.mxu0 0
  %2352 = vmatprep.subr.bf16.mxu0 0
  %2353 = vmatpush1.bf16.msra.mxu0 0
  %2354 = vmatprep.subr.bf16.mxu0 0
  %2355 = vmatpush1.bf16.msra.mxu0 0
  %2356 = vmatprep.subr.bf16.mxu0 0
  %2357 = vmatpush1.bf16.msra.mxu0 0
  %2358 = vmatprep.subr.bf16.mxu0 0
  %2359 = vmatpush1.bf16.msra.mxu0 0
  %2360 = vmatprep.subr.bf16.mxu0 0
  %2361 = vmatpush1.bf16.msra.mxu0 0
  %2362 = vmatprep.mubr.bf16.mxu0 0
  %2363 = vmatmul.mubr.bf16.gmra.mrb[0].mxu0 %v1886
  %v2364 = vpop.f32.mrb[0].mxu0
  %v2365 = vadd.f32 %v346, %v2364
  %v2366 = vpop.f32.mrb[0].mxu0
  %v2367 = vadd.f32 %v346, %v2366
  %v2368 = vpop.f32.mrb[0].mxu0
  %v2369 = vpop.f32.mrb[0].mxu0
  %2370 = vdwg.mxu0
  %2371 = vmatprep.subr.bf16.mxu0 %v1323
  %2372 = vmatpush1.bf16.msra.mxu0 %v1322
  %2373 = vmatprep.subr.bf16.mxu0 %v1387
  %2374 = vmatpush1.bf16.msra.mxu0 %v1386
  %2375 = vmatprep.subr.bf16.mxu0 %v1451
  %2376 = vmatpush1.bf16.msra.mxu0 %v1450
  %2377 = vmatprep.subr.bf16.mxu0 %v1515
  %2378 = vmatpush1.bf16.msra.mxu0 %v1514
  %2379 = vmatprep.subr.bf16.mxu0 %v1938
  %2380 = vmatpush1.bf16.msra.mxu0 %v1935
  %2381 = vmatprep.subr.bf16.mxu0 0
  %2382 = vmatpush1.bf16.msra.mxu0 0
  %2383 = vmatprep.subr.bf16.mxu0 0
  %2384 = vmatpush1.bf16.msra.mxu0 0
  %2385 = vmatprep.subr.bf16.mxu0 0
  %2386 = vmatpush1.bf16.msra.mxu0 0
  %2387 = vmatprep.subr.bf16.mxu0 0
  %2388 = vmatpush1.bf16.msra.mxu0 0
  %2389 = vmatprep.subr.bf16.mxu0 0
  %2390 = vmatpush1.bf16.msra.mxu0 0
  %2391 = vmatprep.subr.bf16.mxu0 0
  %2392 = vmatpush1.bf16.msra.mxu0 0
  %2393 = vmatprep.subr.bf16.mxu0 0
  %2394 = vmatpush1.bf16.msra.mxu0 0
  %2395 = vmatprep.subr.bf16.mxu0 0
  %2396 = vmatpush1.bf16.msra.mxu0 0
  %2397 = vmatprep.subr.bf16.mxu0 0
  %2398 = vmatpush1.bf16.msra.mxu0 0
  %2399 = vmatprep.subr.bf16.mxu0 0
  %2400 = vmatpush1.bf16.msra.mxu0 0
  %2401 = vmatprep.subr.bf16.mxu0 0
  %2402 = vmatpush1.bf16.msra.mxu0 0
  %2403 = vmatprep.mubr.bf16.mxu0 0
  %2404 = vmatmul.mubr.bf16.gmra.mrb[0].mxu0 %v1886
  %v2405 = vpop.f32.mrb[0].mxu0
  %v2406 = vadd.f32 %v346, %v2405
  %v2407 = vpop.f32.mrb[0].mxu0
  %v2408 = vadd.f32 %v346, %v2407
  %v2409 = vpop.f32.mrb[0].mxu0
  %v2410 = vpop.f32.mrb[0].mxu0
  %2411 = vdwg.mxu0
  %2412 = vmatprep.subr.bf16.mxu0 %v1325
  %2413 = vmatpush1.bf16.msra.mxu0 %v1324
  %2414 = vmatprep.subr.bf16.mxu0 %v1389
  %2415 = vmatpush1.bf16.msra.mxu0 %v1388
  %2416 = vmatprep.subr.bf16.mxu0 %v1453
  %2417 = vmatpush1.bf16.msra.mxu0 %v1452
  %2418 = vmatprep.subr.bf16.mxu0 %v1517
  %2419 = vmatpush1.bf16.msra.mxu0 %v1516
  %2420 = vmatprep.subr.bf16.mxu0 %v1944
  %2421 = vmatpush1.bf16.msra.mxu0 %v1941
  %2422 = vmatprep.subr.bf16.mxu0 0
  %2423 = vmatpush1.bf16.msra.mxu0 0
  %2424 = vmatprep.subr.bf16.mxu0 0
  %2425 = vmatpush1.bf16.msra.mxu0 0
  %2426 = vmatprep.subr.bf16.mxu0 0
  %2427 = vmatpush1.bf16.msra.mxu0 0
  %2428 = vmatprep.subr.bf16.mxu0 0
  %2429 = vmatpush1.bf16.msra.mxu0 0
  %2430 = vmatprep.subr.bf16.mxu0 0
  %2431 = vmatpush1.bf16.msra.mxu0 0
  %2432 = vmatprep.subr.bf16.mxu0 0
  %2433 = vmatpush1.bf16.msra.mxu0 0
  %2434 = vmatprep.subr.bf16.mxu0 0
  %2435 = vmatpush1.bf16.msra.mxu0 0
  %2436 = vmatprep.subr.bf16.mxu0 0
  %2437 = vmatpush1.bf16.msra.mxu0 0
  %2438 = vmatprep.subr.bf16.mxu0 0
  %2439 = vmatpush1.bf16.msra.mxu0 0
  %2440 = vmatprep.subr.bf16.mxu0 0
  %2441 = vmatpush1.bf16.msra.mxu0 0
  %2442 = vmatprep.subr.bf16.mxu0 0
  %2443 = vmatpush1.bf16.msra.mxu0 0
  %2444 = vmatprep.mubr.bf16.mxu0 0
  %2445 = vmatmul.mubr.bf16.gmra.mrb[0].mxu0 %v1886
  %v2446 = vpop.f32.mrb[0].mxu0
  %v2447 = vadd.f32 %v346, %v2446
  %v2448 = vpop.f32.mrb[0].mxu0
  %v2449 = vadd.f32 %v346, %v2448
  %v2450 = vpop.f32.mrb[0].mxu0
  %v2451 = vpop.f32.mrb[0].mxu0
  %2452 = vdwg.mxu0
  %2453 = vmatprep.subr.bf16.mxu0 %v1327
  %2454 = vmatpush1.bf16.msra.mxu0 %v1326
  %2455 = vmatprep.subr.bf16.mxu0 %v1391
  %2456 = vmatpush1.bf16.msra.mxu0 %v1390
  %2457 = vmatprep.subr.bf16.mxu0 %v1455
  %2458 = vmatpush1.bf16.msra.mxu0 %v1454
  %2459 = vmatprep.subr.bf16.mxu0 %v1519
  %2460 = vmatpush1.bf16.msra.mxu0 %v1518
  %2461 = vmatprep.subr.bf16.mxu0 %v1950
  %2462 = vmatpush1.bf16.msra.mxu0 %v1947
  %2463 = vmatprep.subr.bf16.mxu0 0
  %2464 = vmatpush1.bf16.msra.mxu0 0
  %2465 = vmatprep.subr.bf16.mxu0 0
  %2466 = vmatpush1.bf16.msra.mxu0 0
  %2467 = vmatprep.subr.bf16.mxu0 0
  %2468 = vmatpush1.bf16.msra.mxu0 0
  %2469 = vmatprep.subr.bf16.mxu0 0
  %2470 = vmatpush1.bf16.msra.mxu0 0
  %2471 = vmatprep.subr.bf16.mxu0 0
  %2472 = vmatpush1.bf16.msra.mxu0 0
  %2473 = vmatprep.subr.bf16.mxu0 0
  %2474 = vmatpush1.bf16.msra.mxu0 0
  %2475 = vmatprep.subr.bf16.mxu0 0
  %2476 = vmatpush1.bf16.msra.mxu0 0
  %2477 = vmatprep.subr.bf16.mxu0 0
  %2478 = vmatpush1.bf16.msra.mxu0 0
  %2479 = vmatprep.subr.bf16.mxu0 0
  %2480 = vmatpush1.bf16.msra.mxu0 0
  %2481 = vmatprep.subr.bf16.mxu0 0
  %2482 = vmatpush1.bf16.msra.mxu0 0
  %2483 = vmatprep.subr.bf16.mxu0 0
  %2484 = vmatpush1.bf16.msra.mxu0 0
  %2485 = vmatprep.mubr.bf16.mxu0 0
  %2486 = vmatmul.mubr.bf16.gmra.mrb[0].mxu0 %v1886
  %v2487 = vpop.f32.mrb[0].mxu0
  %v2488 = vadd.f32 %v346, %v2487
  %v2489 = vpop.f32.mrb[0].mxu0
  %v2490 = vadd.f32 %v346, %v2489
  %v2491 = vpop.f32.mrb[0].mxu0
  %v2492 = vpop.f32.mrb[0].mxu0
  %2493 = vdwg.mxu0
  %2494 = vmatprep.subr.bf16.mxu0 %v1329
  %2495 = vmatpush1.bf16.msra.mxu0 %v1328
  %2496 = vmatprep.subr.bf16.mxu0 %v1393
  %2497 = vmatpush1.bf16.msra.mxu0 %v1392
  %2498 = vmatprep.subr.bf16.mxu0 %v1457
  %2499 = vmatpush1.bf16.msra.mxu0 %v1456
  %2500 = vmatprep.subr.bf16.mxu0 %v1521
  %2501 = vmatpush1.bf16.msra.mxu0 %v1520
  %2502 = vmatprep.subr.bf16.mxu0 %v1956
  %2503 = vmatpush1.bf16.msra.mxu0 %v1953
  %2504 = vmatprep.subr.bf16.mxu0 0
  %2505 = vmatpush1.bf16.msra.mxu0 0
  %2506 = vmatprep.subr.bf16.mxu0 0
  %2507 = vmatpush1.bf16.msra.mxu0 0
  %2508 = vmatprep.subr.bf16.mxu0 0
  %2509 = vmatpush1.bf16.msra.mxu0 0
  %2510 = vmatprep.subr.bf16.mxu0 0
  %2511 = vmatpush1.bf16.msra.mxu0 0
  %2512 = vmatprep.subr.bf16.mxu0 0
  %2513 = vmatpush1.bf16.msra.mxu0 0
  %2514 = vmatprep.subr.bf16.mxu0 0
  %2515 = vmatpush1.bf16.msra.mxu0 0
  %2516 = vmatprep.subr.bf16.mxu0 0
  %2517 = vmatpush1.bf16.msra.mxu0 0
  %2518 = vmatprep.subr.bf16.mxu0 0
  %2519 = vmatpush1.bf16.msra.mxu0 0
  %2520 = vmatprep.subr.bf16.mxu0 0
  %2521 = vmatpush1.bf16.msra.mxu0 0
  %2522 = vmatprep.subr.bf16.mxu0 0
  %2523 = vmatpush1.bf16.msra.mxu0 0
  %2524 = vmatprep.subr.bf16.mxu0 0
  %2525 = vmatpush1.bf16.msra.mxu0 0
  %2526 = vmatprep.mubr.bf16.mxu0 0
  %2527 = vmatmul.mubr.bf16.gmra.mrb[0].mxu0 %v1886
  %v2528 = vpop.f32.mrb[0].mxu0
  %v2529 = vadd.f32 %v346, %v2528
  %v2530 = vpop.f32.mrb[0].mxu0
  %v2531 = vadd.f32 %v346, %v2530
  %v2532 = vpop.f32.mrb[0].mxu0
  %v2533 = vpop.f32.mrb[0].mxu0
  %2534 = vdwg.mxu0
  %2535 = vmatprep.subr.bf16.mxu0 %v1331
  %2536 = vmatpush1.bf16.msra.mxu0 %v1330
  %2537 = vmatprep.subr.bf16.mxu0 %v1395
  %2538 = vmatpush1.bf16.msra.mxu0 %v1394
  %2539 = vmatprep.subr.bf16.mxu0 %v1459
  %2540 = vmatpush1.bf16.msra.mxu0 %v1458
  %2541 = vmatprep.subr.bf16.mxu0 %v1523
  %2542 = vmatpush1.bf16.msra.mxu0 %v1522
  %2543 = vmatprep.subr.bf16.mxu0 %v1962
  %2544 = vmatpush1.bf16.msra.mxu0 %v1959
  %2545 = vmatprep.subr.bf16.mxu0 0
  %2546 = vmatpush1.bf16.msra.mxu0 0
  %2547 = vmatprep.subr.bf16.mxu0 0
  %2548 = vmatpush1.bf16.msra.mxu0 0
  %2549 = vmatprep.subr.bf16.mxu0 0
  %2550 = vmatpush1.bf16.msra.mxu0 0
  %2551 = vmatprep.subr.bf16.mxu0 0
  %2552 = vmatpush1.bf16.msra.mxu0 0
  %2553 = vmatprep.subr.bf16.mxu0 0
  %2554 = vmatpush1.bf16.msra.mxu0 0
  %2555 = vmatprep.subr.bf16.mxu0 0
  %2556 = vmatpush1.bf16.msra.mxu0 0
  %2557 = vmatprep.subr.bf16.mxu0 0
  %2558 = vmatpush1.bf16.msra.mxu0 0
  %2559 = vmatprep.subr.bf16.mxu0 0
  %2560 = vmatpush1.bf16.msra.mxu0 0
  %2561 = vmatprep.subr.bf16.mxu0 0
  %2562 = vmatpush1.bf16.msra.mxu0 0
  %2563 = vmatprep.subr.bf16.mxu0 0
  %2564 = vmatpush1.bf16.msra.mxu0 0
  %2565 = vmatprep.subr.bf16.mxu0 0
  %2566 = vmatpush1.bf16.msra.mxu0 0
  %2567 = vmatprep.mubr.bf16.mxu0 0
  %2568 = vmatmul.mubr.bf16.gmra.mrb[0].mxu0 %v1886
  %v2569 = vpop.f32.mrb[0].mxu0
  %v2570 = vadd.f32 %v346, %v2569
  %v2571 = vpop.f32.mrb[0].mxu0
  %v2572 = vadd.f32 %v346, %v2571
  %v2573 = vpop.f32.mrb[0].mxu0
  %v2574 = vpop.f32.mrb[0].mxu0
  %2575 = vdwg.mxu0
  %2576 = vmatprep.subr.bf16.mxu0 %v1333
  %2577 = vmatpush1.bf16.msra.mxu0 %v1332
  %2578 = vmatprep.subr.bf16.mxu0 %v1397
  %2579 = vmatpush1.bf16.msra.mxu0 %v1396
  %2580 = vmatprep.subr.bf16.mxu0 %v1461
  %2581 = vmatpush1.bf16.msra.mxu0 %v1460
  %2582 = vmatprep.subr.bf16.mxu0 %v1525
  %2583 = vmatpush1.bf16.msra.mxu0 %v1524
  %2584 = vmatprep.subr.bf16.mxu0 %v1968
  %2585 = vmatpush1.bf16.msra.mxu0 %v1965
  %2586 = vmatprep.subr.bf16.mxu0 0
  %2587 = vmatpush1.bf16.msra.mxu0 0
  %2588 = vmatprep.subr.bf16.mxu0 0
  %2589 = vmatpush1.bf16.msra.mxu0 0
  %2590 = vmatprep.subr.bf16.mxu0 0
  %2591 = vmatpush1.bf16.msra.mxu0 0
  %2592 = vmatprep.subr.bf16.mxu0 0
  %2593 = vmatpush1.bf16.msra.mxu0 0
  %2594 = vmatprep.subr.bf16.mxu0 0
  %2595 = vmatpush1.bf16.msra.mxu0 0
  %2596 = vmatprep.subr.bf16.mxu0 0
  %2597 = vmatpush1.bf16.msra.mxu0 0
  %2598 = vmatprep.subr.bf16.mxu0 0
  %2599 = vmatpush1.bf16.msra.mxu0 0
  %2600 = vmatprep.subr.bf16.mxu0 0
  %2601 = vmatpush1.bf16.msra.mxu0 0
  %2602 = vmatprep.subr.bf16.mxu0 0
  %2603 = vmatpush1.bf16.msra.mxu0 0
  %2604 = vmatprep.subr.bf16.mxu0 0
  %2605 = vmatpush1.bf16.msra.mxu0 0
  %2606 = vmatprep.subr.bf16.mxu0 0
  %2607 = vmatpush1.bf16.msra.mxu0 0
  %2608 = vmatprep.mubr.bf16.mxu0 0
  %2609 = vmatmul.mubr.bf16.gmra.mrb[0].mxu0 %v1886
  %v2610 = vpop.f32.mrb[0].mxu0
  %v2611 = vadd.f32 %v346, %v2610
  %v2612 = vpop.f32.mrb[0].mxu0
  %v2613 = vadd.f32 %v346, %v2612
  %v2614 = vpop.f32.mrb[0].mxu0
  %v2615 = vpop.f32.mrb[0].mxu0
  %2616 = vdwg.mxu0
  %2617 = vmatprep.subr.bf16.mxu0 %v1335
  %2618 = vmatpush1.bf16.msra.mxu0 %v1334
  %2619 = vmatprep.subr.bf16.mxu0 %v1399
  %2620 = vmatpush1.bf16.msra.mxu0 %v1398
  %2621 = vmatprep.subr.bf16.mxu0 %v1463
  %2622 = vmatpush1.bf16.msra.mxu0 %v1462
  %2623 = vmatprep.subr.bf16.mxu0 %v1527
  %2624 = vmatpush1.bf16.msra.mxu0 %v1526
  %2625 = vmatprep.subr.bf16.mxu0 %v1974
  %2626 = vmatpush1.bf16.msra.mxu0 %v1971
  %2627 = vmatprep.subr.bf16.mxu0 0
  %2628 = vmatpush1.bf16.msra.mxu0 0
  %2629 = vmatprep.subr.bf16.mxu0 0
  %2630 = vmatpush1.bf16.msra.mxu0 0
  %2631 = vmatprep.subr.bf16.mxu0 0
  %2632 = vmatpush1.bf16.msra.mxu0 0
  %2633 = vmatprep.subr.bf16.mxu0 0
  %2634 = vmatpush1.bf16.msra.mxu0 0
  %2635 = vmatprep.subr.bf16.mxu0 0
  %2636 = vmatpush1.bf16.msra.mxu0 0
  %2637 = vmatprep.subr.bf16.mxu0 0
  %2638 = vmatpush1.bf16.msra.mxu0 0
  %2639 = vmatprep.subr.bf16.mxu0 0
  %2640 = vmatpush1.bf16.msra.mxu0 0
  %2641 = vmatprep.subr.bf16.mxu0 0
  %2642 = vmatpush1.bf16.msra.mxu0 0
  %2643 = vmatprep.subr.bf16.mxu0 0
  %2644 = vmatpush1.bf16.msra.mxu0 0
  %2645 = vmatprep.subr.bf16.mxu0 0
  %2646 = vmatpush1.bf16.msra.mxu0 0
  %2647 = vmatprep.subr.bf16.mxu0 0
  %2648 = vmatpush1.bf16.msra.mxu0 0
  %2649 = vmatprep.mubr.bf16.mxu0 0
  %2650 = vmatmul.mubr.bf16.gmra.mrb[0].mxu0 %v1886
  %v2651 = vpop.f32.mrb[0].mxu0
  %v2652 = vadd.f32 %v346, %v2651
  %v2653 = vpop.f32.mrb[0].mxu0
  %v2654 = vadd.f32 %v346, %v2653
  %v2655 = vpop.f32.mrb[0].mxu0
  %v2656 = vpop.f32.mrb[0].mxu0
  %2657 = vdwg.mxu0
  %2658 = vmatprep.subr.bf16.mxu0 %v1337
  %2659 = vmatpush1.bf16.msra.mxu0 %v1336
  %2660 = vmatprep.subr.bf16.mxu0 %v1401
  %2661 = vmatpush1.bf16.msra.mxu0 %v1400
  %2662 = vmatprep.subr.bf16.mxu0 %v1465
  %2663 = vmatpush1.bf16.msra.mxu0 %v1464
  %2664 = vmatprep.subr.bf16.mxu0 %v1529
  %2665 = vmatpush1.bf16.msra.mxu0 %v1528
  %2666 = vmatprep.subr.bf16.mxu0 %v1980
  %2667 = vmatpush1.bf16.msra.mxu0 %v1977
  %2668 = vmatprep.subr.bf16.mxu0 0
  %2669 = vmatpush1.bf16.msra.mxu0 0
  %2670 = vmatprep.subr.bf16.mxu0 0
  %2671 = vmatpush1.bf16.msra.mxu0 0
  %2672 = vmatprep.subr.bf16.mxu0 0
  %2673 = vmatpush1.bf16.msra.mxu0 0
  %2674 = vmatprep.subr.bf16.mxu0 0
  %2675 = vmatpush1.bf16.msra.mxu0 0
  %2676 = vmatprep.subr.bf16.mxu0 0
  %2677 = vmatpush1.bf16.msra.mxu0 0
  %2678 = vmatprep.subr.bf16.mxu0 0
  %2679 = vmatpush1.bf16.msra.mxu0 0
  %2680 = vmatprep.subr.bf16.mxu0 0
  %2681 = vmatpush1.bf16.msra.mxu0 0
  %2682 = vmatprep.subr.bf16.mxu0 0
  %2683 = vmatpush1.bf16.msra.mxu0 0
  %2684 = vmatprep.subr.bf16.mxu0 0
  %2685 = vmatpush1.bf16.msra.mxu0 0
  %2686 = vmatprep.subr.bf16.mxu0 0
  %2687 = vmatpush1.bf16.msra.mxu0 0
  %2688 = vmatprep.subr.bf16.mxu0 0
  %2689 = vmatpush1.bf16.msra.mxu0 0
  %2690 = vmatprep.mubr.bf16.mxu0 0
  %2691 = vmatmul.mubr.bf16.gmra.mrb[0].mxu0 %v1886
  %v2692 = vpop.f32.mrb[0].mxu0
  %v2693 = vadd.f32 %v346, %v2692
  %v2694 = vpop.f32.mrb[0].mxu0
  %v2695 = vadd.f32 %v346, %v2694
  %v2696 = vpop.f32.mrb[0].mxu0
  %v2697 = vpop.f32.mrb[0].mxu0
  %2698 = vdwg.mxu0
  %2699 = vmatprep.subr.bf16.mxu0 %v1339
  %2700 = vmatpush1.bf16.msra.mxu0 %v1338
  %2701 = vmatprep.subr.bf16.mxu0 %v1403
  %2702 = vmatpush1.bf16.msra.mxu0 %v1402
  %2703 = vmatprep.subr.bf16.mxu0 %v1467
  %2704 = vmatpush1.bf16.msra.mxu0 %v1466
  %2705 = vmatprep.subr.bf16.mxu0 %v1531
  %2706 = vmatpush1.bf16.msra.mxu0 %v1530
  %2707 = vmatprep.subr.bf16.mxu0 %v1986
  %2708 = vmatpush1.bf16.msra.mxu0 %v1983
  %2709 = vmatprep.subr.bf16.mxu0 0
  %2710 = vmatpush1.bf16.msra.mxu0 0
  %2711 = vmatprep.subr.bf16.mxu0 0
  %2712 = vmatpush1.bf16.msra.mxu0 0
  %2713 = vmatprep.subr.bf16.mxu0 0
  %2714 = vmatpush1.bf16.msra.mxu0 0
  %2715 = vmatprep.subr.bf16.mxu0 0
  %2716 = vmatpush1.bf16.msra.mxu0 0
  %2717 = vmatprep.subr.bf16.mxu0 0
  %2718 = vmatpush1.bf16.msra.mxu0 0
  %2719 = vmatprep.subr.bf16.mxu0 0
  %2720 = vmatpush1.bf16.msra.mxu0 0
  %2721 = vmatprep.subr.bf16.mxu0 0
  %2722 = vmatpush1.bf16.msra.mxu0 0
  %2723 = vmatprep.subr.bf16.mxu0 0
  %2724 = vmatpush1.bf16.msra.mxu0 0
  %2725 = vmatprep.subr.bf16.mxu0 0
  %2726 = vmatpush1.bf16.msra.mxu0 0
  %2727 = vmatprep.subr.bf16.mxu0 0
  %2728 = vmatpush1.bf16.msra.mxu0 0
  %2729 = vmatprep.subr.bf16.mxu0 0
  %2730 = vmatpush1.bf16.msra.mxu0 0
  %2731 = vmatprep.mubr.bf16.mxu0 0
  %2732 = vmatmul.mubr.bf16.gmra.mrb[0].mxu0 %v1886
  %v2733 = vpop.f32.mrb[0].mxu0
  %v2734 = vadd.f32 %v346, %v2733
  %v2735 = vpop.f32.mrb[0].mxu0
  %v2736 = vadd.f32 %v346, %v2735
  %v2737 = vpop.f32.mrb[0].mxu0
  %v2738 = vpop.f32.mrb[0].mxu0
  %2739 = vdwg.mxu0
  %2740 = vmatprep.subr.bf16.mxu0 %v1341
  %2741 = vmatpush1.bf16.msra.mxu0 %v1340
  %2742 = vmatprep.subr.bf16.mxu0 %v1405
  %2743 = vmatpush1.bf16.msra.mxu0 %v1404
  %2744 = vmatprep.subr.bf16.mxu0 %v1469
  %2745 = vmatpush1.bf16.msra.mxu0 %v1468
  %2746 = vmatprep.subr.bf16.mxu0 %v1533
  %2747 = vmatpush1.bf16.msra.mxu0 %v1532
  %2748 = vmatprep.subr.bf16.mxu0 %v1992
  %2749 = vmatpush1.bf16.msra.mxu0 %v1989
  %2750 = vmatprep.subr.bf16.mxu0 0
  %2751 = vmatpush1.bf16.msra.mxu0 0
  %2752 = vmatprep.subr.bf16.mxu0 0
  %2753 = vmatpush1.bf16.msra.mxu0 0
  %2754 = vmatprep.subr.bf16.mxu0 0
  %2755 = vmatpush1.bf16.msra.mxu0 0
  %2756 = vmatprep.subr.bf16.mxu0 0
  %2757 = vmatpush1.bf16.msra.mxu0 0
  %2758 = vmatprep.subr.bf16.mxu0 0
  %2759 = vmatpush1.bf16.msra.mxu0 0
  %2760 = vmatprep.subr.bf16.mxu0 0
  %2761 = vmatpush1.bf16.msra.mxu0 0
  %2762 = vmatprep.subr.bf16.mxu0 0
  %2763 = vmatpush1.bf16.msra.mxu0 0
  %2764 = vmatprep.subr.bf16.mxu0 0
  %2765 = vmatpush1.bf16.msra.mxu0 0
  %2766 = vmatprep.subr.bf16.mxu0 0
  %2767 = vmatpush1.bf16.msra.mxu0 0
  %2768 = vmatprep.subr.bf16.mxu0 0
  %2769 = vmatpush1.bf16.msra.mxu0 0
  %2770 = vmatprep.subr.bf16.mxu0 0
  %2771 = vmatpush1.bf16.msra.mxu0 0
  %2772 = vmatprep.mubr.bf16.mxu0 0
  %2773 = vmatmul.mubr.bf16.gmra.mrb[0].mxu0 %v1886
  %v2774 = vpop.f32.mrb[0].mxu0
  %v2775 = vadd.f32 %v346, %v2774
  %v2776 = vpop.f32.mrb[0].mxu0
  %v2777 = vadd.f32 %v346, %v2776
  %v2778 = vpop.f32.mrb[0].mxu0
  %v2779 = vpop.f32.mrb[0].mxu0
  %2780 = vdwg.mxu0
  %2781 = vmatprep.subr.bf16.mxu0 %v1343
  %2782 = vmatpush1.bf16.msra.mxu0 %v1342
  %2783 = vmatprep.subr.bf16.mxu0 %v1407
  %2784 = vmatpush1.bf16.msra.mxu0 %v1406
  %2785 = vmatprep.subr.bf16.mxu0 %v1471
  %2786 = vmatpush1.bf16.msra.mxu0 %v1470
  %2787 = vmatprep.subr.bf16.mxu0 %v1535
  %2788 = vmatpush1.bf16.msra.mxu0 %v1534
  %2789 = vmatprep.subr.bf16.mxu0 %v1998
  %2790 = vmatpush1.bf16.msra.mxu0 %v1995
  %2791 = vmatprep.subr.bf16.mxu0 0
  %2792 = vmatpush1.bf16.msra.mxu0 0
  %2793 = vmatprep.subr.bf16.mxu0 0
  %2794 = vmatpush1.bf16.msra.mxu0 0
  %2795 = vmatprep.subr.bf16.mxu0 0
  %2796 = vmatpush1.bf16.msra.mxu0 0
  %2797 = vmatprep.subr.bf16.mxu0 0
  %2798 = vmatpush1.bf16.msra.mxu0 0
  %2799 = vmatprep.subr.bf16.mxu0 0
  %2800 = vmatpush1.bf16.msra.mxu0 0
  %2801 = vmatprep.subr.bf16.mxu0 0
  %2802 = vmatpush1.bf16.msra.mxu0 0
  %2803 = vmatprep.subr.bf16.mxu0 0
  %2804 = vmatpush1.bf16.msra.mxu0 0
  %2805 = vmatprep.subr.bf16.mxu0 0
  %2806 = vmatpush1.bf16.msra.mxu0 0
  %2807 = vmatprep.subr.bf16.mxu0 0
  %2808 = vmatpush1.bf16.msra.mxu0 0
  %2809 = vmatprep.subr.bf16.mxu0 0
  %2810 = vmatpush1.bf16.msra.mxu0 0
  %2811 = vmatprep.subr.bf16.mxu0 0
  %2812 = vmatpush1.bf16.msra.mxu0 0
  %2813 = vmatprep.mubr.bf16.mxu0 0
  %2814 = vmatmul.mubr.bf16.gmra.mrb[0].mxu0 %v1886
  %v2815 = vpop.f32.mrb[0].mxu0
  %v2816 = vadd.f32 %v346, %v2815
  %v2817 = vpop.f32.mrb[0].mxu0
  %v2818 = vadd.f32 %v346, %v2817
  %v2819 = vpop.f32.mrb[0].mxu0
  %v2820 = vpop.f32.mrb[0].mxu0
  %2821 = vdwg.mxu0
  %2822 = vmatprep.subr.bf16.mxu0 %v1345
  %2823 = vmatpush1.bf16.msra.mxu0 %v1344
  %2824 = vmatprep.subr.bf16.mxu0 %v1409
  %2825 = vmatpush1.bf16.msra.mxu0 %v1408
  %2826 = vmatprep.subr.bf16.mxu0 %v1473
  %2827 = vmatpush1.bf16.msra.mxu0 %v1472
  %2828 = vmatprep.subr.bf16.mxu0 %v1537
  %2829 = vmatpush1.bf16.msra.mxu0 %v1536
  %2830 = vmatprep.subr.bf16.mxu0 %v2004
  %2831 = vmatpush1.bf16.msra.mxu0 %v2001
  %2832 = vmatprep.subr.bf16.mxu0 0
  %2833 = vmatpush1.bf16.msra.mxu0 0
  %2834 = vmatprep.subr.bf16.mxu0 0
  %2835 = vmatpush1.bf16.msra.mxu0 0
  %2836 = vmatprep.subr.bf16.mxu0 0
  %2837 = vmatpush1.bf16.msra.mxu0 0
  %2838 = vmatprep.subr.bf16.mxu0 0
  %2839 = vmatpush1.bf16.msra.mxu0 0
  %2840 = vmatprep.subr.bf16.mxu0 0
  %2841 = vmatpush1.bf16.msra.mxu0 0
  %2842 = vmatprep.subr.bf16.mxu0 0
  %2843 = vmatpush1.bf16.msra.mxu0 0
  %2844 = vmatprep.subr.bf16.mxu0 0
  %2845 = vmatpush1.bf16.msra.mxu0 0
  %2846 = vmatprep.subr.bf16.mxu0 0
  %2847 = vmatpush1.bf16.msra.mxu0 0
  %2848 = vmatprep.subr.bf16.mxu0 0
  %2849 = vmatpush1.bf16.msra.mxu0 0
  %2850 = vmatprep.subr.bf16.mxu0 0
  %2851 = vmatpush1.bf16.msra.mxu0 0
  %2852 = vmatprep.subr.bf16.mxu0 0
  %2853 = vmatpush1.bf16.msra.mxu0 0
  %2854 = vmatprep.mubr.bf16.mxu0 0
  %2855 = vmatmul.mubr.bf16.gmra.mrb[0].mxu0 %v1886
  %v2856 = vpop.f32.mrb[0].mxu0
  %v2857 = vadd.f32 %v346, %v2856
  %v2858 = vpop.f32.mrb[0].mxu0
  %v2859 = vadd.f32 %v346, %v2858
  %v2860 = vpop.f32.mrb[0].mxu0
  %v2861 = vpop.f32.mrb[0].mxu0
  %2862 = vdwg.mxu0
  %2863 = vmatprep.subr.bf16.mxu0 %v1347
  %2864 = vmatpush1.bf16.msra.mxu0 %v1346
  %2865 = vmatprep.subr.bf16.mxu0 %v1411
  %2866 = vmatpush1.bf16.msra.mxu0 %v1410
  %2867 = vmatprep.subr.bf16.mxu0 %v1475
  %2868 = vmatpush1.bf16.msra.mxu0 %v1474
  %2869 = vmatprep.subr.bf16.mxu0 %v1539
  %2870 = vmatpush1.bf16.msra.mxu0 %v1538
  %2871 = vmatprep.subr.bf16.mxu0 %v2010
  %2872 = vmatpush1.bf16.msra.mxu0 %v2007
  %2873 = vmatprep.subr.bf16.mxu0 0
  %2874 = vmatpush1.bf16.msra.mxu0 0
  %2875 = vmatprep.subr.bf16.mxu0 0
  %2876 = vmatpush1.bf16.msra.mxu0 0
  %2877 = vmatprep.subr.bf16.mxu0 0
  %2878 = vmatpush1.bf16.msra.mxu0 0
  %2879 = vmatprep.subr.bf16.mxu0 0
  %2880 = vmatpush1.bf16.msra.mxu0 0
  %2881 = vmatprep.subr.bf16.mxu0 0
  %2882 = vmatpush1.bf16.msra.mxu0 0
  %2883 = vmatprep.subr.bf16.mxu0 0
  %2884 = vmatpush1.bf16.msra.mxu0 0
  %2885 = vmatprep.subr.bf16.mxu0 0
  %2886 = vmatpush1.bf16.msra.mxu0 0
  %2887 = vmatprep.subr.bf16.mxu0 0
  %2888 = vmatpush1.bf16.msra.mxu0 0
  %2889 = vmatprep.subr.bf16.mxu0 0
  %2890 = vmatpush1.bf16.msra.mxu0 0
  %2891 = vmatprep.subr.bf16.mxu0 0
  %2892 = vmatpush1.bf16.msra.mxu0 0
  %2893 = vmatprep.subr.bf16.mxu0 0
  %2894 = vmatpush1.bf16.msra.mxu0 0
  %2895 = vmatprep.mubr.bf16.mxu0 0
  %2896 = vmatmul.mubr.bf16.gmra.mrb[0].mxu0 %v1886
  %v2897 = vpop.f32.mrb[0].mxu0
  %v2898 = vadd.f32 %v346, %v2897
  %v2899 = vpop.f32.mrb[0].mxu0
  %v2900 = vadd.f32 %v346, %v2899
  %v2901 = vpop.f32.mrb[0].mxu0
  %v2902 = vpop.f32.mrb[0].mxu0
  %2903 = vdwg.mxu0
  %2904 = vmatprep.subr.bf16.mxu0 %v1349
  %2905 = vmatpush1.bf16.msra.mxu0 %v1348
  %2906 = vmatprep.subr.bf16.mxu0 %v1413
  %2907 = vmatpush1.bf16.msra.mxu0 %v1412
  %2908 = vmatprep.subr.bf16.mxu0 %v1477
  %2909 = vmatpush1.bf16.msra.mxu0 %v1476
  %2910 = vmatprep.subr.bf16.mxu0 %v1541
  %2911 = vmatpush1.bf16.msra.mxu0 %v1540
  %2912 = vmatprep.subr.bf16.mxu0 %v2016
  %2913 = vmatpush1.bf16.msra.mxu0 %v2013
  %2914 = vmatprep.subr.bf16.mxu0 0
  %2915 = vmatpush1.bf16.msra.mxu0 0
  %2916 = vmatprep.subr.bf16.mxu0 0
  %2917 = vmatpush1.bf16.msra.mxu0 0
  %2918 = vmatprep.subr.bf16.mxu0 0
  %2919 = vmatpush1.bf16.msra.mxu0 0
  %2920 = vmatprep.subr.bf16.mxu0 0
  %2921 = vmatpush1.bf16.msra.mxu0 0
  %2922 = vmatprep.subr.bf16.mxu0 0
  %2923 = vmatpush1.bf16.msra.mxu0 0
  %2924 = vmatprep.subr.bf16.mxu0 0
  %2925 = vmatpush1.bf16.msra.mxu0 0
  %2926 = vmatprep.subr.bf16.mxu0 0
  %2927 = vmatpush1.bf16.msra.mxu0 0
  %2928 = vmatprep.subr.bf16.mxu0 0
  %2929 = vmatpush1.bf16.msra.mxu0 0
  %2930 = vmatprep.subr.bf16.mxu0 0
  %2931 = vmatpush1.bf16.msra.mxu0 0
  %2932 = vmatprep.subr.bf16.mxu0 0
  %2933 = vmatpush1.bf16.msra.mxu0 0
  %2934 = vmatprep.subr.bf16.mxu0 0
  %2935 = vmatpush1.bf16.msra.mxu0 0
  %2936 = vmatprep.mubr.bf16.mxu0 0
  %2937 = vmatmul.mubr.bf16.gmra.mrb[0].mxu0 %v1886
  %v2938 = vpop.f32.mrb[0].mxu0
  %v2939 = vadd.f32 %v346, %v2938
  %v2940 = vpop.f32.mrb[0].mxu0
  %v2941 = vadd.f32 %v346, %v2940
  %v2942 = vpop.f32.mrb[0].mxu0
  %v2943 = vpop.f32.mrb[0].mxu0
  %2944 = vdwg.mxu0
  %2945 = vmatprep.subr.bf16.mxu0 %v1351
  %2946 = vmatpush1.bf16.msra.mxu0 %v1350
  %2947 = vmatprep.subr.bf16.mxu0 %v1415
  %2948 = vmatpush1.bf16.msra.mxu0 %v1414
  %2949 = vmatprep.subr.bf16.mxu0 %v1479
  %2950 = vmatpush1.bf16.msra.mxu0 %v1478
  %2951 = vmatprep.subr.bf16.mxu0 %v1543
  %2952 = vmatpush1.bf16.msra.mxu0 %v1542
  %2953 = vmatprep.subr.bf16.mxu0 %v2022
  %2954 = vmatpush1.bf16.msra.mxu0 %v2019
  %2955 = vmatprep.subr.bf16.mxu0 0
  %2956 = vmatpush1.bf16.msra.mxu0 0
  %2957 = vmatprep.subr.bf16.mxu0 0
  %2958 = vmatpush1.bf16.msra.mxu0 0
  %2959 = vmatprep.subr.bf16.mxu0 0
  %2960 = vmatpush1.bf16.msra.mxu0 0
  %2961 = vmatprep.subr.bf16.mxu0 0
  %2962 = vmatpush1.bf16.msra.mxu0 0
  %2963 = vmatprep.subr.bf16.mxu0 0
  %2964 = vmatpush1.bf16.msra.mxu0 0
  %2965 = vmatprep.subr.bf16.mxu0 0
  %2966 = vmatpush1.bf16.msra.mxu0 0
  %2967 = vmatprep.subr.bf16.mxu0 0
  %2968 = vmatpush1.bf16.msra.mxu0 0
  %2969 = vmatprep.subr.bf16.mxu0 0
  %2970 = vmatpush1.bf16.msra.mxu0 0
  %2971 = vmatprep.subr.bf16.mxu0 0
  %2972 = vmatpush1.bf16.msra.mxu0 0
  %2973 = vmatprep.subr.bf16.mxu0 0
  %2974 = vmatpush1.bf16.msra.mxu0 0
  %2975 = vmatprep.subr.bf16.mxu0 0
  %2976 = vmatpush1.bf16.msra.mxu0 0
  %2977 = vmatprep.mubr.bf16.mxu0 0
  %2978 = vmatmul.mubr.bf16.gmra.mrb[0].mxu0 %v1886
  %v2979 = vpop.f32.mrb[0].mxu0
  %v2980 = vadd.f32 %v346, %v2979
  %v2981 = vpop.f32.mrb[0].mxu0
  %v2982 = vadd.f32 %v346, %v2981
  %v2983 = vpop.f32.mrb[0].mxu0
  %v2984 = vpop.f32.mrb[0].mxu0
  %2985 = vdwg.mxu0
  %2986 = vmatprep.subr.bf16.mxu0 %v1353
  %2987 = vmatpush1.bf16.msra.mxu0 %v1352
  %2988 = vmatprep.subr.bf16.mxu0 %v1417
  %2989 = vmatpush1.bf16.msra.mxu0 %v1416
  %2990 = vmatprep.subr.bf16.mxu0 %v1481
  %2991 = vmatpush1.bf16.msra.mxu0 %v1480
  %2992 = vmatprep.subr.bf16.mxu0 %v1545
  %2993 = vmatpush1.bf16.msra.mxu0 %v1544
  %2994 = vmatprep.subr.bf16.mxu0 %v2028
  %2995 = vmatpush1.bf16.msra.mxu0 %v2025
  %2996 = vmatprep.subr.bf16.mxu0 0
  %2997 = vmatpush1.bf16.msra.mxu0 0
  %2998 = vmatprep.subr.bf16.mxu0 0
  %2999 = vmatpush1.bf16.msra.mxu0 0
  %3000 = vmatprep.subr.bf16.mxu0 0
  %3001 = vmatpush1.bf16.msra.mxu0 0
  %3002 = vmatprep.subr.bf16.mxu0 0
  %3003 = vmatpush1.bf16.msra.mxu0 0
  %3004 = vmatprep.subr.bf16.mxu0 0
  %3005 = vmatpush1.bf16.msra.mxu0 0
  %3006 = vmatprep.subr.bf16.mxu0 0
  %3007 = vmatpush1.bf16.msra.mxu0 0
  %3008 = vmatprep.subr.bf16.mxu0 0
  %3009 = vmatpush1.bf16.msra.mxu0 0
  %3010 = vmatprep.subr.bf16.mxu0 0
  %3011 = vmatpush1.bf16.msra.mxu0 0
  %3012 = vmatprep.subr.bf16.mxu0 0
  %3013 = vmatpush1.bf16.msra.mxu0 0
  %3014 = vmatprep.subr.bf16.mxu0 0
  %3015 = vmatpush1.bf16.msra.mxu0 0
  %3016 = vmatprep.subr.bf16.mxu0 0
  %3017 = vmatpush1.bf16.msra.mxu0 0
  %3018 = vmatprep.mubr.bf16.mxu0 0
  %3019 = vmatmul.mubr.bf16.gmra.mrb[0].mxu0 %v1886
  %v3020 = vpop.f32.mrb[0].mxu0
  %v3021 = vadd.f32 %v346, %v3020
  %v3022 = vpop.f32.mrb[0].mxu0
  %v3023 = vadd.f32 %v346, %v3022
  %v3024 = vpop.f32.mrb[0].mxu0
  %v3025 = vpop.f32.mrb[0].mxu0
  %3026 = vdwg.mxu0
  %3027 = vmatprep.subr.bf16.mxu0 %v1355
  %3028 = vmatpush1.bf16.msra.mxu0 %v1354
  %3029 = vmatprep.subr.bf16.mxu0 %v1419
  %3030 = vmatpush1.bf16.msra.mxu0 %v1418
  %3031 = vmatprep.subr.bf16.mxu0 %v1483
  %3032 = vmatpush1.bf16.msra.mxu0 %v1482
  %3033 = vmatprep.subr.bf16.mxu0 %v1547
  %3034 = vmatpush1.bf16.msra.mxu0 %v1546
  %3035 = vmatprep.subr.bf16.mxu0 %v2034
  %3036 = vmatpush1.bf16.msra.mxu0 %v2031
  %3037 = vmatprep.subr.bf16.mxu0 0
  %3038 = vmatpush1.bf16.msra.mxu0 0
  %3039 = vmatprep.subr.bf16.mxu0 0
  %3040 = vmatpush1.bf16.msra.mxu0 0
  %3041 = vmatprep.subr.bf16.mxu0 0
  %3042 = vmatpush1.bf16.msra.mxu0 0
  %3043 = vmatprep.subr.bf16.mxu0 0
  %3044 = vmatpush1.bf16.msra.mxu0 0
  %3045 = vmatprep.subr.bf16.mxu0 0
  %3046 = vmatpush1.bf16.msra.mxu0 0
  %3047 = vmatprep.subr.bf16.mxu0 0
  %3048 = vmatpush1.bf16.msra.mxu0 0
  %3049 = vmatprep.subr.bf16.mxu0 0
  %3050 = vmatpush1.bf16.msra.mxu0 0
  %3051 = vmatprep.subr.bf16.mxu0 0
  %3052 = vmatpush1.bf16.msra.mxu0 0
  %3053 = vmatprep.subr.bf16.mxu0 0
  %3054 = vmatpush1.bf16.msra.mxu0 0
  %3055 = vmatprep.subr.bf16.mxu0 0
  %3056 = vmatpush1.bf16.msra.mxu0 0
  %3057 = vmatprep.subr.bf16.mxu0 0
  %3058 = vmatpush1.bf16.msra.mxu0 0
  %3059 = vmatprep.mubr.bf16.mxu0 0
  %3060 = vmatmul.mubr.bf16.gmra.mrb[0].mxu0 %v1886
  %v3061 = vpop.f32.mrb[0].mxu0
  %v3062 = vadd.f32 %v346, %v3061
  %v3063 = vpop.f32.mrb[0].mxu0
  %v3064 = vadd.f32 %v346, %v3063
  %v3065 = vpop.f32.mrb[0].mxu0
  %v3066 = vpop.f32.mrb[0].mxu0
  %3067 = vdwg.mxu0
  %3068 = vmatprep.subr.bf16.mxu0 %v1357
  %3069 = vmatpush1.bf16.msra.mxu0 %v1356
  %3070 = vmatprep.subr.bf16.mxu0 %v1421
  %3071 = vmatpush1.bf16.msra.mxu0 %v1420
  %3072 = vmatprep.subr.bf16.mxu0 %v1485
  %3073 = vmatpush1.bf16.msra.mxu0 %v1484
  %3074 = vmatprep.subr.bf16.mxu0 %v1549
  %3075 = vmatpush1.bf16.msra.mxu0 %v1548
  %3076 = vmatprep.subr.bf16.mxu0 %v2040
  %3077 = vmatpush1.bf16.msra.mxu0 %v2037
  %3078 = vmatprep.subr.bf16.mxu0 0
  %3079 = vmatpush1.bf16.msra.mxu0 0
  %3080 = vmatprep.subr.bf16.mxu0 0
  %3081 = vmatpush1.bf16.msra.mxu0 0
  %3082 = vmatprep.subr.bf16.mxu0 0
  %3083 = vmatpush1.bf16.msra.mxu0 0
  %3084 = vmatprep.subr.bf16.mxu0 0
  %3085 = vmatpush1.bf16.msra.mxu0 0
  %3086 = vmatprep.subr.bf16.mxu0 0
  %3087 = vmatpush1.bf16.msra.mxu0 0
  %3088 = vmatprep.subr.bf16.mxu0 0
  %3089 = vmatpush1.bf16.msra.mxu0 0
  %3090 = vmatprep.subr.bf16.mxu0 0
  %3091 = vmatpush1.bf16.msra.mxu0 0
  %3092 = vmatprep.subr.bf16.mxu0 0
  %3093 = vmatpush1.bf16.msra.mxu0 0
  %3094 = vmatprep.subr.bf16.mxu0 0
  %3095 = vmatpush1.bf16.msra.mxu0 0
  %3096 = vmatprep.subr.bf16.mxu0 0
  %3097 = vmatpush1.bf16.msra.mxu0 0
  %3098 = vmatprep.subr.bf16.mxu0 0
  %3099 = vmatpush1.bf16.msra.mxu0 0
  %3100 = vmatprep.mubr.bf16.mxu0 0
  %3101 = vmatmul.mubr.bf16.gmra.mrb[0].mxu0 %v1886
  %v3102 = vpop.f32.mrb[0].mxu0
  %v3103 = vadd.f32 %v346, %v3102
  %v3104 = vpop.f32.mrb[0].mxu0
  %v3105 = vadd.f32 %v346, %v3104
  %v3106 = vpop.f32.mrb[0].mxu0
  %v3107 = vpop.f32.mrb[0].mxu0
  %3108 = vdwg.mxu0
  %3109 = vmatprep.subr.bf16.mxu0 %v1359
  %3110 = vmatpush1.bf16.msra.mxu0 %v1358
  %3111 = vmatprep.subr.bf16.mxu0 %v1423
  %3112 = vmatpush1.bf16.msra.mxu0 %v1422
  %3113 = vmatprep.subr.bf16.mxu0 %v1487
  %3114 = vmatpush1.bf16.msra.mxu0 %v1486
  %3115 = vmatprep.subr.bf16.mxu0 %v1551
  %3116 = vmatpush1.bf16.msra.mxu0 %v1550
  %3117 = vmatprep.subr.bf16.mxu0 %v2046
  %3118 = vmatpush1.bf16.msra.mxu0 %v2043
  %3119 = vmatprep.subr.bf16.mxu0 0
  %3120 = vmatpush1.bf16.msra.mxu0 0
  %3121 = vmatprep.subr.bf16.mxu0 0
  %3122 = vmatpush1.bf16.msra.mxu0 0
  %3123 = vmatprep.subr.bf16.mxu0 0
  %3124 = vmatpush1.bf16.msra.mxu0 0
  %3125 = vmatprep.subr.bf16.mxu0 0
  %3126 = vmatpush1.bf16.msra.mxu0 0
  %3127 = vmatprep.subr.bf16.mxu0 0
  %3128 = vmatpush1.bf16.msra.mxu0 0
  %3129 = vmatprep.subr.bf16.mxu0 0
  %3130 = vmatpush1.bf16.msra.mxu0 0
  %3131 = vmatprep.subr.bf16.mxu0 0
  %3132 = vmatpush1.bf16.msra.mxu0 0
  %3133 = vmatprep.subr.bf16.mxu0 0
  %3134 = vmatpush1.bf16.msra.mxu0 0
  %3135 = vmatprep.subr.bf16.mxu0 0
  %3136 = vmatpush1.bf16.msra.mxu0 0
  %3137 = vmatprep.subr.bf16.mxu0 0
  %3138 = vmatpush1.bf16.msra.mxu0 0
  %3139 = vmatprep.subr.bf16.mxu0 0
  %3140 = vmatpush1.bf16.msra.mxu0 0
  %3141 = vmatprep.mubr.bf16.mxu0 0
  %3142 = vmatmul.mubr.bf16.gmra.mrb[0].mxu0 %v1886
  %v3143 = vpop.f32.mrb[0].mxu0
  %v3144 = vadd.f32 %v346, %v3143
  %v3145 = vpop.f32.mrb[0].mxu0
  %v3146 = vadd.f32 %v346, %v3145
  %v3147 = vpop.f32.mrb[0].mxu0
  %v3148 = vpop.f32.mrb[0].mxu0
  %3149 = vdwg.mxu0
  %3150 = vmatprep.subr.bf16.mxu0 %v1361
  %3151 = vmatpush1.bf16.msra.mxu0 %v1360
  %3152 = vmatprep.subr.bf16.mxu0 %v1425
  %3153 = vmatpush1.bf16.msra.mxu0 %v1424
  %3154 = vmatprep.subr.bf16.mxu0 %v1489
  %3155 = vmatpush1.bf16.msra.mxu0 %v1488
  %3156 = vmatprep.subr.bf16.mxu0 %v1553
  %3157 = vmatpush1.bf16.msra.mxu0 %v1552
  %3158 = vmatprep.subr.bf16.mxu0 %v2052
  %3159 = vmatpush1.bf16.msra.mxu0 %v2049
  %3160 = vmatprep.subr.bf16.mxu0 0
  %3161 = vmatpush1.bf16.msra.mxu0 0
  %3162 = vmatprep.subr.bf16.mxu0 0
  %3163 = vmatpush1.bf16.msra.mxu0 0
  %3164 = vmatprep.subr.bf16.mxu0 0
  %3165 = vmatpush1.bf16.msra.mxu0 0
  %3166 = vmatprep.subr.bf16.mxu0 0
  %3167 = vmatpush1.bf16.msra.mxu0 0
  %3168 = vmatprep.subr.bf16.mxu0 0
  %3169 = vmatpush1.bf16.msra.mxu0 0
  %3170 = vmatprep.subr.bf16.mxu0 0
  %3171 = vmatpush1.bf16.msra.mxu0 0
  %3172 = vmatprep.subr.bf16.mxu0 0
  %3173 = vmatpush1.bf16.msra.mxu0 0
  %3174 = vmatprep.subr.bf16.mxu0 0
  %3175 = vmatpush1.bf16.msra.mxu0 0
  %3176 = vmatprep.subr.bf16.mxu0 0
  %3177 = vmatpush1.bf16.msra.mxu0 0
  %3178 = vmatprep.subr.bf16.mxu0 0
  %3179 = vmatpush1.bf16.msra.mxu0 0
  %3180 = vmatprep.subr.bf16.mxu0 0
  %3181 = vmatpush1.bf16.msra.mxu0 0
  %3182 = vmatprep.mubr.bf16.mxu0 0
  %3183 = vmatmul.mubr.bf16.gmra.mrb[0].mxu0 %v1886
  %v3184 = vpop.f32.mrb[0].mxu0
  %v3185 = vadd.f32 %v346, %v3184
  %v3186 = vpop.f32.mrb[0].mxu0
  %v3187 = vadd.f32 %v346, %v3186
  %v3188 = vpop.f32.mrb[0].mxu0
  %v3189 = vpop.f32.mrb[0].mxu0
  %3190 = vdwg.mxu0
  %3191 = vmatprep.subr.bf16.mxu0 %v1363
  %3192 = vmatpush1.bf16.msra.mxu0 %v1362
  %3193 = vmatprep.subr.bf16.mxu0 %v1427
  %3194 = vmatpush1.bf16.msra.mxu0 %v1426
  %3195 = vmatprep.subr.bf16.mxu0 %v1491
  %3196 = vmatpush1.bf16.msra.mxu0 %v1490
  %3197 = vmatprep.subr.bf16.mxu0 %v1555
  %3198 = vmatpush1.bf16.msra.mxu0 %v1554
  %3199 = vmatprep.subr.bf16.mxu0 %v2058
  %3200 = vmatpush1.bf16.msra.mxu0 %v2055
  %3201 = vmatprep.subr.bf16.mxu0 0
  %3202 = vmatpush1.bf16.msra.mxu0 0
  %3203 = vmatprep.subr.bf16.mxu0 0
  %3204 = vmatpush1.bf16.msra.mxu0 0
  %3205 = vmatprep.subr.bf16.mxu0 0
  %3206 = vmatpush1.bf16.msra.mxu0 0
  %3207 = vmatprep.subr.bf16.mxu0 0
  %3208 = vmatpush1.bf16.msra.mxu0 0
  %3209 = vmatprep.subr.bf16.mxu0 0
  %3210 = vmatpush1.bf16.msra.mxu0 0
  %3211 = vmatprep.subr.bf16.mxu0 0
  %3212 = vmatpush1.bf16.msra.mxu0 0
  %3213 = vmatprep.subr.bf16.mxu0 0
  %3214 = vmatpush1.bf16.msra.mxu0 0
  %3215 = vmatprep.subr.bf16.mxu0 0
  %3216 = vmatpush1.bf16.msra.mxu0 0
  %3217 = vmatprep.subr.bf16.mxu0 0
  %3218 = vmatpush1.bf16.msra.mxu0 0
  %3219 = vmatprep.subr.bf16.mxu0 0
  %3220 = vmatpush1.bf16.msra.mxu0 0
  %3221 = vmatprep.subr.bf16.mxu0 0
  %3222 = vmatpush1.bf16.msra.mxu0 0
  %3223 = vmatprep.mubr.bf16.mxu0 0
  %3224 = vmatmul.mubr.bf16.gmra.mrb[0].mxu0 %v1886
  %v3225 = vpop.f32.mrb[0].mxu0
  %v3226 = vadd.f32 %v346, %v3225
  %v3227 = vpop.f32.mrb[0].mxu0
  %v3228 = vadd.f32 %v346, %v3227
  %v3229 = vpop.f32.mrb[0].mxu0
  %v3230 = vpop.f32.mrb[0].mxu0
  %3231 = vdwg.mxu0
  %3232 = vmatprep.subr.bf16.mxu0 %v1365
  %3233 = vmatpush1.bf16.msra.mxu0 %v1364
  %3234 = vmatprep.subr.bf16.mxu0 %v1429
  %3235 = vmatpush1.bf16.msra.mxu0 %v1428
  %3236 = vmatprep.subr.bf16.mxu0 %v1493
  %3237 = vmatpush1.bf16.msra.mxu0 %v1492
  %3238 = vmatprep.subr.bf16.mxu0 %v1557
  %3239 = vmatpush1.bf16.msra.mxu0 %v1556
  %3240 = vmatprep.subr.bf16.mxu0 %v2064
  %3241 = vmatpush1.bf16.msra.mxu0 %v2061
  %3242 = vmatprep.subr.bf16.mxu0 0
  %3243 = vmatpush1.bf16.msra.mxu0 0
  %3244 = vmatprep.subr.bf16.mxu0 0
  %3245 = vmatpush1.bf16.msra.mxu0 0
  %3246 = vmatprep.subr.bf16.mxu0 0
  %3247 = vmatpush1.bf16.msra.mxu0 0
  %3248 = vmatprep.subr.bf16.mxu0 0
  %3249 = vmatpush1.bf16.msra.mxu0 0
  %3250 = vmatprep.subr.bf16.mxu0 0
  %3251 = vmatpush1.bf16.msra.mxu0 0
  %3252 = vmatprep.subr.bf16.mxu0 0
  %3253 = vmatpush1.bf16.msra.mxu0 0
  %3254 = vmatprep.subr.bf16.mxu0 0
  %3255 = vmatpush1.bf16.msra.mxu0 0
  %3256 = vmatprep.subr.bf16.mxu0 0
  %3257 = vmatpush1.bf16.msra.mxu0 0
  %3258 = vmatprep.subr.bf16.mxu0 0
  %3259 = vmatpush1.bf16.msra.mxu0 0
  %3260 = vmatprep.subr.bf16.mxu0 0
  %3261 = vmatpush1.bf16.msra.mxu0 0
  %3262 = vmatprep.subr.bf16.mxu0 0
  %3263 = vmatpush1.bf16.msra.mxu0 0
  %3264 = vmatprep.mubr.bf16.mxu0 0
  %3265 = vmatmul.mubr.bf16.gmra.mrb[0].mxu0 %v1886
  %v3266 = vpop.f32.mrb[0].mxu0
  %v3267 = vadd.f32 %v346, %v3266
  %v3268 = vpop.f32.mrb[0].mxu0
  %v3269 = vadd.f32 %v346, %v3268
  %v3270 = vpop.f32.mrb[0].mxu0
  %v3271 = vpop.f32.mrb[0].mxu0
  %3272 = vdwg.mxu0
  %3273 = vmatprep.subr.bf16.mxu0 %v1367
  %3274 = vmatpush1.bf16.msra.mxu0 %v1366
  %3275 = vmatprep.subr.bf16.mxu0 %v1431
  %3276 = vmatpush1.bf16.msra.mxu0 %v1430
  %3277 = vmatprep.subr.bf16.mxu0 %v1495
  %3278 = vmatpush1.bf16.msra.mxu0 %v1494
  %3279 = vmatprep.subr.bf16.mxu0 %v1559
  %3280 = vmatpush1.bf16.msra.mxu0 %v1558
  %3281 = vmatprep.subr.bf16.mxu0 %v2070
  %3282 = vmatpush1.bf16.msra.mxu0 %v2067
  %3283 = vmatprep.subr.bf16.mxu0 0
  %3284 = vmatpush1.bf16.msra.mxu0 0
  %3285 = vmatprep.subr.bf16.mxu0 0
  %3286 = vmatpush1.bf16.msra.mxu0 0
  %3287 = vmatprep.subr.bf16.mxu0 0
  %3288 = vmatpush1.bf16.msra.mxu0 0
  %3289 = vmatprep.subr.bf16.mxu0 0
  %3290 = vmatpush1.bf16.msra.mxu0 0
  %3291 = vmatprep.subr.bf16.mxu0 0
  %3292 = vmatpush1.bf16.msra.mxu0 0
  %3293 = vmatprep.subr.bf16.mxu0 0
  %3294 = vmatpush1.bf16.msra.mxu0 0
  %3295 = vmatprep.subr.bf16.mxu0 0
  %3296 = vmatpush1.bf16.msra.mxu0 0
  %3297 = vmatprep.subr.bf16.mxu0 0
  %3298 = vmatpush1.bf16.msra.mxu0 0
  %3299 = vmatprep.subr.bf16.mxu0 0
  %3300 = vmatpush1.bf16.msra.mxu0 0
  %3301 = vmatprep.subr.bf16.mxu0 0
  %3302 = vmatpush1.bf16.msra.mxu0 0
  %3303 = vmatprep.subr.bf16.mxu0 0
  %3304 = vmatpush1.bf16.msra.mxu0 0
  %3305 = vmatprep.mubr.bf16.mxu0 0
  %3306 = vmatmul.mubr.bf16.gmra.mrb[0].mxu0 %v1886
  %v3307 = vpop.f32.mrb[0].mxu0
  %v3308 = vadd.f32 %v346, %v3307
  %v3309 = vpop.f32.mrb[0].mxu0
  %v3310 = vadd.f32 %v346, %v3309
  %v3311 = vpop.f32.mrb[0].mxu0
  %v3312 = vpop.f32.mrb[0].mxu0
  %3313 = vdwg.mxu0
  %3314 = vmatprep.subr.bf16.mxu0 %v1369
  %3315 = vmatpush1.bf16.msra.mxu0 %v1368
  %3316 = vmatprep.subr.bf16.mxu0 %v1433
  %3317 = vmatpush1.bf16.msra.mxu0 %v1432
  %3318 = vmatprep.subr.bf16.mxu0 %v1497
  %3319 = vmatpush1.bf16.msra.mxu0 %v1496
  %3320 = vmatprep.subr.bf16.mxu0 %v1561
  %3321 = vmatpush1.bf16.msra.mxu0 %v1560
  %3322 = vmatprep.subr.bf16.mxu0 %v2076
  %3323 = vmatpush1.bf16.msra.mxu0 %v2073
  %3324 = vmatprep.subr.bf16.mxu0 0
  %3325 = vmatpush1.bf16.msra.mxu0 0
  %3326 = vmatprep.subr.bf16.mxu0 0
  %3327 = vmatpush1.bf16.msra.mxu0 0
  %3328 = vmatprep.subr.bf16.mxu0 0
  %3329 = vmatpush1.bf16.msra.mxu0 0
  %3330 = vmatprep.subr.bf16.mxu0 0
  %3331 = vmatpush1.bf16.msra.mxu0 0
  %3332 = vmatprep.subr.bf16.mxu0 0
  %3333 = vmatpush1.bf16.msra.mxu0 0
  %3334 = vmatprep.subr.bf16.mxu0 0
  %3335 = vmatpush1.bf16.msra.mxu0 0
  %3336 = vmatprep.subr.bf16.mxu0 0
  %3337 = vmatpush1.bf16.msra.mxu0 0
  %3338 = vmatprep.subr.bf16.mxu0 0
  %3339 = vmatpush1.bf16.msra.mxu0 0
  %3340 = vmatprep.subr.bf16.mxu0 0
  %3341 = vmatpush1.bf16.msra.mxu0 0
  %3342 = vmatprep.subr.bf16.mxu0 0
  %3343 = vmatpush1.bf16.msra.mxu0 0
  %3344 = vmatprep.subr.bf16.mxu0 0
  %3345 = vmatpush1.bf16.msra.mxu0 0
  %3346 = vmatprep.mubr.bf16.mxu0 0
  %3347 = vmatmul.mubr.bf16.gmra.mrb[0].mxu0 %v1886
  %v3348 = vpop.f32.mrb[0].mxu0
  %v3349 = vadd.f32 %v346, %v3348
  %v3350 = vpop.f32.mrb[0].mxu0
  %v3351 = vadd.f32 %v346, %v3350
  %v3352 = vpop.f32.mrb[0].mxu0
  %v3353 = vpop.f32.mrb[0].mxu0
  %3354 = vdwg.mxu0
  %3355 = vmatprep.subr.bf16.mxu0 %v1371
  %3356 = vmatpush1.bf16.msra.mxu0 %v1370
  %3357 = vmatprep.subr.bf16.mxu0 %v1435
  %3358 = vmatpush1.bf16.msra.mxu0 %v1434
  %3359 = vmatprep.subr.bf16.mxu0 %v1499
  %3360 = vmatpush1.bf16.msra.mxu0 %v1498
  %3361 = vmatprep.subr.bf16.mxu0 %v1563
  %3362 = vmatpush1.bf16.msra.mxu0 %v1562
  %3363 = vmatprep.subr.bf16.mxu0 %v2082
  %3364 = vmatpush1.bf16.msra.mxu0 %v2079
  %3365 = vmatprep.subr.bf16.mxu0 0
  %3366 = vmatpush1.bf16.msra.mxu0 0
  %3367 = vmatprep.subr.bf16.mxu0 0
  %3368 = vmatpush1.bf16.msra.mxu0 0
  %3369 = vmatprep.subr.bf16.mxu0 0
  %3370 = vmatpush1.bf16.msra.mxu0 0
  %3371 = vmatprep.subr.bf16.mxu0 0
  %3372 = vmatpush1.bf16.msra.mxu0 0
  %3373 = vmatprep.subr.bf16.mxu0 0
  %3374 = vmatpush1.bf16.msra.mxu0 0
  %3375 = vmatprep.subr.bf16.mxu0 0
  %3376 = vmatpush1.bf16.msra.mxu0 0
  %3377 = vmatprep.subr.bf16.mxu0 0
  %3378 = vmatpush1.bf16.msra.mxu0 0
  %3379 = vmatprep.subr.bf16.mxu0 0
  %3380 = vmatpush1.bf16.msra.mxu0 0
  %3381 = vmatprep.subr.bf16.mxu0 0
  %3382 = vmatpush1.bf16.msra.mxu0 0
  %3383 = vmatprep.subr.bf16.mxu0 0
  %3384 = vmatpush1.bf16.msra.mxu0 0
  %3385 = vmatprep.subr.bf16.mxu0 0
  %3386 = vmatpush1.bf16.msra.mxu0 0
  %3387 = vmatprep.mubr.bf16.mxu0 0
  %3388 = vmatmul.mubr.bf16.gmra.mrb[0].mxu0 %v1886
  %v3389 = vpop.f32.mrb[0].mxu0
  %v3390 = vadd.f32 %v346, %v3389
  %v3391 = vpop.f32.mrb[0].mxu0
  %v3392 = vadd.f32 %v346, %v3391
  %v3393 = vpop.f32.mrb[0].mxu0
  %v3394 = vpop.f32.mrb[0].mxu0
  %3395 = vdwg.mxu0
  %v3396 = vadd.f32 %v2119, %v2121
  %v3397 = vadd.f32 %v3396, %v2160
  %v3398 = vadd.f32 %v3397, %v2162
  %v3399 = vadd.f32 %v3398, %v2201
  %v3400 = vadd.f32 %v3399, %v2203
  %v3401 = vadd.f32 %v3400, %v2242
  %v3402 = vadd.f32 %v3401, %v2244
  %v3403 = vadd.f32 %v3402, %v2283
  %v3404 = vadd.f32 %v3403, %v2285
  %v3405 = vadd.f32 %v3404, %v2324
  %v3406 = vadd.f32 %v3405, %v2326
  %v3407 = vadd.f32 %v3406, %v2365
  %v3408 = vadd.f32 %v3407, %v2367
  %v3409 = vadd.f32 %v3408, %v2406
  %v3410 = vadd.f32 %v3409, %v2408
  %v3411 = vadd.f32 %v3410, %v2447
  %v3412 = vadd.f32 %v3411, %v2449
  %v3413 = vadd.f32 %v3412, %v2488
  %v3414 = vadd.f32 %v3413, %v2490
  %v3415 = vadd.f32 %v3414, %v2529
  %v3416 = vadd.f32 %v3415, %v2531
  %v3417 = vadd.f32 %v3416, %v2570
  %v3418 = vadd.f32 %v3417, %v2572
  %v3419 = vadd.f32 %v3418, %v2611
  %v3420 = vadd.f32 %v3419, %v2613
  %v3421 = vadd.f32 %v3420, %v2652
  %v3422 = vadd.f32 %v3421, %v2654
  %v3423 = vadd.f32 %v3422, %v2693
  %v3424 = vadd.f32 %v3423, %v2695
  %v3425 = vadd.f32 %v3424, %v2734
  %v3426 = vadd.f32 %v3425, %v2736
  %v3427 = vadd.f32 %v3426, %v2775
  %v3428 = vadd.f32 %v3427, %v2777
  %v3429 = vadd.f32 %v3428, %v2816
  %v3430 = vadd.f32 %v3429, %v2818
  %v3431 = vadd.f32 %v3430, %v2857
  %v3432 = vadd.f32 %v3431, %v2859
  %v3433 = vadd.f32 %v3432, %v2898
  %v3434 = vadd.f32 %v3433, %v2900
  %v3435 = vadd.f32 %v3434, %v2939
  %v3436 = vadd.f32 %v3435, %v2941
  %v3437 = vadd.f32 %v3436, %v2980
  %v3438 = vadd.f32 %v3437, %v2982
  %v3439 = vadd.f32 %v3438, %v3021
  %v3440 = vadd.f32 %v3439, %v3023
  %v3441 = vadd.f32 %v3440, %v3062
  %v3442 = vadd.f32 %v3441, %v3064
  %v3443 = vadd.f32 %v3442, %v3103
  %v3444 = vadd.f32 %v3443, %v3105
  %v3445 = vadd.f32 %v3444, %v3144
  %v3446 = vadd.f32 %v3445, %v3146
  %v3447 = vadd.f32 %v3446, %v3185
  %v3448 = vadd.f32 %v3447, %v3187
  %v3449 = vadd.f32 %v3448, %v3226
  %v3450 = vadd.f32 %v3449, %v3228
  %v3451 = vadd.f32 %v3450, %v3267
  %v3452 = vadd.f32 %v3451, %v3269
  %v3453 = vadd.f32 %v3452, %v3308
  %v3454 = vadd.f32 %v3453, %v3310
  %v3455 = vadd.f32 %v3454, %v3349
  %v3456 = vadd.f32 %v3455, %v3351
  %v3457 = vadd.f32 %v3456, %v3390
  %v3458 = vadd.f32 %v3457, %v3392
  %3459 = vadd.xlane.f32.xlu0 %v3458
  %v3460 = vpop.xlane.xlu0 %3459
  %v3461 = vmul.f32 %v3460, 0.00012207031
  %v3462 = vsub.f32 %v2119, %v3461
  %v3463 = vsub.f32 %v2121, %v3461
  %v3464 = vsub.f32 %v2160, %v3461
  %v3465 = vsub.f32 %v2162, %v3461
  %v3466 = vsub.f32 %v2201, %v3461
  %v3467 = vsub.f32 %v2203, %v3461
  %v3468 = vsub.f32 %v2242, %v3461
  %v3469 = vsub.f32 %v2244, %v3461
  %v3470 = vsub.f32 %v2283, %v3461
  %v3471 = vsub.f32 %v2285, %v3461
  %v3472 = vsub.f32 %v2324, %v3461
  %v3473 = vsub.f32 %v2326, %v3461
  %v3474 = vsub.f32 %v2365, %v3461
  %v3475 = vsub.f32 %v2367, %v3461
  %v3476 = vsub.f32 %v2406, %v3461
  %v3477 = vsub.f32 %v2408, %v3461
  %v3478 = vsub.f32 %v2447, %v3461
  %v3479 = vsub.f32 %v2449, %v3461
  %v3480 = vsub.f32 %v2488, %v3461
  %v3481 = vsub.f32 %v2490, %v3461
  %v3482 = vsub.f32 %v2529, %v3461
  %v3483 = vsub.f32 %v2531, %v3461
  %v3484 = vsub.f32 %v2570, %v3461
  %v3485 = vsub.f32 %v2572, %v3461
  %v3486 = vsub.f32 %v2611, %v3461
  %v3487 = vsub.f32 %v2613, %v3461
  %v3488 = vsub.f32 %v2652, %v3461
  %v3489 = vsub.f32 %v2654, %v3461
  %v3490 = vsub.f32 %v2693, %v3461
  %v3491 = vsub.f32 %v2695, %v3461
  %v3492 = vsub.f32 %v2734, %v3461
  %v3493 = vsub.f32 %v2736, %v3461
  %v3494 = vsub.f32 %v2775, %v3461
  %v3495 = vsub.f32 %v2777, %v3461
  %v3496 = vsub.f32 %v2816, %v3461
  %v3497 = vsub.f32 %v2818, %v3461
  %v3498 = vsub.f32 %v2857, %v3461
  %v3499 = vsub.f32 %v2859, %v3461
  %v3500 = vsub.f32 %v2898, %v3461
  %v3501 = vsub.f32 %v2900, %v3461
  %v3502 = vsub.f32 %v2939, %v3461
  %v3503 = vsub.f32 %v2941, %v3461
  %v3504 = vsub.f32 %v2980, %v3461
  %v3505 = vsub.f32 %v2982, %v3461
  %v3506 = vsub.f32 %v3021, %v3461
  %v3507 = vsub.f32 %v3023, %v3461
  %v3508 = vsub.f32 %v3062, %v3461
  %v3509 = vsub.f32 %v3064, %v3461
  %v3510 = vsub.f32 %v3103, %v3461
  %v3511 = vsub.f32 %v3105, %v3461
  %v3512 = vsub.f32 %v3144, %v3461
  %v3513 = vsub.f32 %v3146, %v3461
  %v3514 = vsub.f32 %v3185, %v3461
  %v3515 = vsub.f32 %v3187, %v3461
  %v3516 = vsub.f32 %v3226, %v3461
  %v3517 = vsub.f32 %v3228, %v3461
  %v3518 = vsub.f32 %v3267, %v3461
  %v3519 = vsub.f32 %v3269, %v3461
  %v3520 = vsub.f32 %v3308, %v3461
  %v3521 = vsub.f32 %v3310, %v3461
  %v3522 = vsub.f32 %v3349, %v3461
  %v3523 = vsub.f32 %v3351, %v3461
  %v3524 = vsub.f32 %v3390, %v3461
  %v3525 = vsub.f32 %v3392, %v3461
  %v3526 = vmul.f32 %v3462, %v3462
  %v3527 = vmul.f32 %v3463, %v3463
  %v3528 = vmul.f32 %v3464, %v3464
  %v3529 = vmul.f32 %v3465, %v3465
  %v3530 = vmul.f32 %v3466, %v3466
  %v3531 = vmul.f32 %v3467, %v3467
  %v3532 = vmul.f32 %v3468, %v3468
  %v3533 = vmul.f32 %v3469, %v3469
  %v3534 = vmul.f32 %v3470, %v3470
  %v3535 = vmul.f32 %v3471, %v3471
  %v3536 = vmul.f32 %v3472, %v3472
  %v3537 = vmul.f32 %v3473, %v3473
  %v3538 = vmul.f32 %v3474, %v3474
  %v3539 = vmul.f32 %v3475, %v3475
  %v3540 = vmul.f32 %v3476, %v3476
  %v3541 = vmul.f32 %v3477, %v3477
  %v3542 = vmul.f32 %v3478, %v3478
  %v3543 = vmul.f32 %v3479, %v3479
  %v3544 = vmul.f32 %v3480, %v3480
  %v3545 = vmul.f32 %v3481, %v3481
  %v3546 = vmul.f32 %v3482, %v3482
  %v3547 = vmul.f32 %v3483, %v3483
  %v3548 = vmul.f32 %v3484, %v3484
  %v3549 = vmul.f32 %v3485, %v3485
  %v3550 = vmul.f32 %v3486, %v3486
  %v3551 = vmul.f32 %v3487, %v3487
  %v3552 = vmul.f32 %v3488, %v3488
  %v3553 = vmul.f32 %v3489, %v3489
  %v3554 = vmul.f32 %v3490, %v3490
  %v3555 = vmul.f32 %v3491, %v3491
  %v3556 = vmul.f32 %v3492, %v3492
  %v3557 = vmul.f32 %v3493, %v3493
  %v3558 = vmul.f32 %v3494, %v3494
  %v3559 = vmul.f32 %v3495, %v3495
  %v3560 = vmul.f32 %v3496, %v3496
  %v3561 = vmul.f32 %v3497, %v3497
  %v3562 = vmul.f32 %v3498, %v3498
  %v3563 = vmul.f32 %v3499, %v3499
  %v3564 = vmul.f32 %v3500, %v3500
  %v3565 = vmul.f32 %v3501, %v3501
  %v3566 = vmul.f32 %v3502, %v3502
  %v3567 = vmul.f32 %v3503, %v3503
  %v3568 = vmul.f32 %v3504, %v3504
  %v3569 = vmul.f32 %v3505, %v3505
  %v3570 = vmul.f32 %v3506, %v3506
  %v3571 = vmul.f32 %v3507, %v3507
  %v3572 = vmul.f32 %v3508, %v3508
  %v3573 = vmul.f32 %v3509, %v3509
  %v3574 = vmul.f32 %v3510, %v3510
  %v3575 = vmul.f32 %v3511, %v3511
  %v3576 = vmul.f32 %v3512, %v3512
  %v3577 = vmul.f32 %v3513, %v3513
  %v3578 = vmul.f32 %v3514, %v3514
  %v3579 = vmul.f32 %v3515, %v3515
  %v3580 = vmul.f32 %v3516, %v3516
  %v3581 = vmul.f32 %v3517, %v3517
  %v3582 = vmul.f32 %v3518, %v3518
  %v3583 = vmul.f32 %v3519, %v3519
  %v3584 = vmul.f32 %v3520, %v3520
  %v3585 = vmul.f32 %v3521, %v3521
  %v3586 = vmul.f32 %v3522, %v3522
  %v3587 = vmul.f32 %v3523, %v3523
  %v3588 = vmul.f32 %v3524, %v3524
  %v3589 = vmul.f32 %v3525, %v3525
  %v3590 = vadd.f32 %v3526, %v3527
  %v3591 = vadd.f32 %v3590, %v3528
  %v3592 = vadd.f32 %v3591, %v3529
  %v3593 = vadd.f32 %v3592, %v3530
  %v3594 = vadd.f32 %v3593, %v3531
  %v3595 = vadd.f32 %v3594, %v3532
  %v3596 = vadd.f32 %v3595, %v3533
  %v3597 = vadd.f32 %v3596, %v3534
  %v3598 = vadd.f32 %v3597, %v3535
  %v3599 = vadd.f32 %v3598, %v3536
  %v3600 = vadd.f32 %v3599, %v3537
  %v3601 = vadd.f32 %v3600, %v3538
  %v3602 = vadd.f32 %v3601, %v3539
  %v3603 = vadd.f32 %v3602, %v3540
  %v3604 = vadd.f32 %v3603, %v3541
  %v3605 = vadd.f32 %v3604, %v3542
  %v3606 = vadd.f32 %v3605, %v3543
  %v3607 = vadd.f32 %v3606, %v3544
  %v3608 = vadd.f32 %v3607, %v3545
  %v3609 = vadd.f32 %v3608, %v3546
  %v3610 = vadd.f32 %v3609, %v3547
  %v3611 = vadd.f32 %v3610, %v3548
  %v3612 = vadd.f32 %v3611, %v3549
  %v3613 = vadd.f32 %v3612, %v3550
  %v3614 = vadd.f32 %v3613, %v3551
  %v3615 = vadd.f32 %v3614, %v3552
  %v3616 = vadd.f32 %v3615, %v3553
  %v3617 = vadd.f32 %v3616, %v3554
  %v3618 = vadd.f32 %v3617, %v3555
  %v3619 = vadd.f32 %v3618, %v3556
  %v3620 = vadd.f32 %v3619, %v3557
  %v3621 = vadd.f32 %v3620, %v3558
  %v3622 = vadd.f32 %v3621, %v3559
  %v3623 = vadd.f32 %v3622, %v3560
  %v3624 = vadd.f32 %v3623, %v3561
  %v3625 = vadd.f32 %v3624, %v3562
  %v3626 = vadd.f32 %v3625, %v3563
  %v3627 = vadd.f32 %v3626, %v3564
  %v3628 = vadd.f32 %v3627, %v3565
  %v3629 = vadd.f32 %v3628, %v3566
  %v3630 = vadd.f32 %v3629, %v3567
  %v3631 = vadd.f32 %v3630, %v3568
  %v3632 = vadd.f32 %v3631, %v3569
  %v3633 = vadd.f32 %v3632, %v3570
  %v3634 = vadd.f32 %v3633, %v3571
  %v3635 = vadd.f32 %v3634, %v3572
  %v3636 = vadd.f32 %v3635, %v3573
  %v3637 = vadd.f32 %v3636, %v3574
  %v3638 = vadd.f32 %v3637, %v3575
  %v3639 = vadd.f32 %v3638, %v3576
  %v3640 = vadd.f32 %v3639, %v3577
  %v3641 = vadd.f32 %v3640, %v3578
  %v3642 = vadd.f32 %v3641, %v3579
  %v3643 = vadd.f32 %v3642, %v3580
  %v3644 = vadd.f32 %v3643, %v3581
  %v3645 = vadd.f32 %v3644, %v3582
  %v3646 = vadd.f32 %v3645, %v3583
  %v3647 = vadd.f32 %v3646, %v3584
  %v3648 = vadd.f32 %v3647, %v3585
  %v3649 = vadd.f32 %v3648, %v3586
  %v3650 = vadd.f32 %v3649, %v3587
  %v3651 = vadd.f32 %v3650, %v3588
  %v3652 = vadd.f32 %v3651, %v3589
  %3653 = vadd.xlane.f32.xlu0 %v3652
  %v3654 = vpop.xlane.xlu0 %3653
  %v3655 = vmul.f32 %v3654, 0.00012207031
  %v3656 = vld [vmem:[%s3] sm:$0xff]
  %v3657 = vadd.f32 %v3655, 1e-05
  %v3658 = vrsqrt.pop %v3657
  %v3659 = vmul.f32 %v3656, %v3658
  %3661 = vset.pattern.permute.xlu0 0
  %3662 = vperm.xlu0 %3661, %v3659
  %v3663 = vpop.permute.xlu0 %3662
  %v3665 = vmul.f32 %v3462, %v3663
  %v3666 = vmul.f32 %v3463, %v3663
  %v3667 = vmul.f32 %v3464, %v3663
  %v3668 = vmul.f32 %v3465, %v3663
  %v3669 = vmul.f32 %v3466, %v3663
  %v3670 = vmul.f32 %v3467, %v3663
  %v3671 = vmul.f32 %v3468, %v3663
  %v3672 = vmul.f32 %v3469, %v3663
  %v3673 = vmul.f32 %v3470, %v3663
  %v3674 = vmul.f32 %v3471, %v3663
  %v3675 = vmul.f32 %v3472, %v3663
  %v3676 = vmul.f32 %v3473, %v3663
  %v3677 = vmul.f32 %v3474, %v3663
  %v3678 = vmul.f32 %v3475, %v3663
  %v3679 = vmul.f32 %v3476, %v3663
  %v3680 = vmul.f32 %v3477, %v3663
  %v3681 = vmul.f32 %v3478, %v3663
  %v3682 = vmul.f32 %v3479, %v3663
  %v3683 = vmul.f32 %v3480, %v3663
  %v3684 = vmul.f32 %v3481, %v3663
  %v3685 = vmul.f32 %v3482, %v3663
  %v3686 = vmul.f32 %v3483, %v3663
  %v3687 = vmul.f32 %v3484, %v3663
  %v3688 = vmul.f32 %v3485, %v3663
  %v3689 = vmul.f32 %v3486, %v3663
  %v3690 = vmul.f32 %v3487, %v3663
  %v3691 = vmul.f32 %v3488, %v3663
  %v3692 = vmul.f32 %v3489, %v3663
  %v3693 = vmul.f32 %v3490, %v3663
  %v3694 = vmul.f32 %v3491, %v3663
  %v3695 = vmul.f32 %v3492, %v3663
  %v3696 = vmul.f32 %v3493, %v3663
  %v3697 = vmul.f32 %v3494, %v3663
  %v3698 = vmul.f32 %v3495, %v3663
  %v3699 = vmul.f32 %v3496, %v3663
  %v3700 = vmul.f32 %v3497, %v3663
  %v3701 = vmul.f32 %v3498, %v3663
  %v3702 = vmul.f32 %v3499, %v3663
  %v3703 = vmul.f32 %v3500, %v3663
  %v3704 = vmul.f32 %v3501, %v3663
  %v3705 = vmul.f32 %v3502, %v3663
  %v3706 = vmul.f32 %v3503, %v3663
  %v3707 = vmul.f32 %v3504, %v3663
  %v3708 = vmul.f32 %v3505, %v3663
  %v3709 = vmul.f32 %v3506, %v3663
  %v3710 = vmul.f32 %v3507, %v3663
  %v3711 = vmul.f32 %v3508, %v3663
  %v3712 = vmul.f32 %v3509, %v3663
  %v3713 = vmul.f32 %v3510, %v3663
  %v3714 = vmul.f32 %v3511, %v3663
  %v3715 = vmul.f32 %v3512, %v3663
  %v3716 = vmul.f32 %v3513, %v3663
  %v3717 = vmul.f32 %v3514, %v3663
  %v3718 = vmul.f32 %v3515, %v3663
  %v3719 = vmul.f32 %v3516, %v3663
  %v3720 = vmul.f32 %v3517, %v3663
  %v3721 = vmul.f32 %v3518, %v3663
  %v3722 = vmul.f32 %v3519, %v3663
  %v3723 = vmul.f32 %v3520, %v3663
  %v3724 = vmul.f32 %v3521, %v3663
  %v3725 = vmul.f32 %v3522, %v3663
  %v3726 = vmul.f32 %v3523, %v3663
  %v3727 = vmul.f32 %v3524, %v3663
  %v3728 = vmul.f32 %v3525, %v3663
  %v3729 = vld [vmem:[%s4] sm:$0xff]
  %3731 = vset.pattern.permute.xlu0 0
  %3732 = vperm.xlu0 %3731, %v3729
  %v3733 = vpop.permute.xlu0 %3732
  %v3735 = vadd.f32 %v3665, %v3733
  %v3736 = vadd.f32 %v3666, %v3733
  %v3737 = vadd.f32 %v3667, %v3733
  %v3738 = vadd.f32 %v3668, %v3733
  %v3739 = vadd.f32 %v3669, %v3733
  %v3740 = vadd.f32 %v3670, %v3733
  %v3741 = vadd.f32 %v3671, %v3733
  %v3742 = vadd.f32 %v3672, %v3733
  %v3743 = vadd.f32 %v3673, %v3733
  %v3744 = vadd.f32 %v3674, %v3733
  %v3745 = vadd.f32 %v3675, %v3733
  %v3746 = vadd.f32 %v3676, %v3733
  %v3747 = vadd.f32 %v3677, %v3733
  %v3748 = vadd.f32 %v3678, %v3733
  %v3749 = vadd.f32 %v3679, %v3733
  %v3750 = vadd.f32 %v3680, %v3733
  %v3751 = vadd.f32 %v3681, %v3733
  %v3752 = vadd.f32 %v3682, %v3733
  %v3753 = vadd.f32 %v3683, %v3733
  %v3754 = vadd.f32 %v3684, %v3733
  %v3755 = vadd.f32 %v3685, %v3733
  %v3756 = vadd.f32 %v3686, %v3733
  %v3757 = vadd.f32 %v3687, %v3733
  %v3758 = vadd.f32 %v3688, %v3733
  %v3759 = vadd.f32 %v3689, %v3733
  %v3760 = vadd.f32 %v3690, %v3733
  %v3761 = vadd.f32 %v3691, %v3733
  %v3762 = vadd.f32 %v3692, %v3733
  %v3763 = vadd.f32 %v3693, %v3733
  %v3764 = vadd.f32 %v3694, %v3733
  %v3765 = vadd.f32 %v3695, %v3733
  %v3766 = vadd.f32 %v3696, %v3733
  %v3767 = vadd.f32 %v3697, %v3733
  %v3768 = vadd.f32 %v3698, %v3733
  %v3769 = vadd.f32 %v3699, %v3733
  %v3770 = vadd.f32 %v3700, %v3733
  %v3771 = vadd.f32 %v3701, %v3733
  %v3772 = vadd.f32 %v3702, %v3733
  %v3773 = vadd.f32 %v3703, %v3733
  %v3774 = vadd.f32 %v3704, %v3733
  %v3775 = vadd.f32 %v3705, %v3733
  %v3776 = vadd.f32 %v3706, %v3733
  %v3777 = vadd.f32 %v3707, %v3733
  %v3778 = vadd.f32 %v3708, %v3733
  %v3779 = vadd.f32 %v3709, %v3733
  %v3780 = vadd.f32 %v3710, %v3733
  %v3781 = vadd.f32 %v3711, %v3733
  %v3782 = vadd.f32 %v3712, %v3733
  %v3783 = vadd.f32 %v3713, %v3733
  %v3784 = vadd.f32 %v3714, %v3733
  %v3785 = vadd.f32 %v3715, %v3733
  %v3786 = vadd.f32 %v3716, %v3733
  %v3787 = vadd.f32 %v3717, %v3733
  %v3788 = vadd.f32 %v3718, %v3733
  %v3789 = vadd.f32 %v3719, %v3733
  %v3790 = vadd.f32 %v3720, %v3733
  %v3791 = vadd.f32 %v3721, %v3733
  %v3792 = vadd.f32 %v3722, %v3733
  %v3793 = vadd.f32 %v3723, %v3733
  %v3794 = vadd.f32 %v3724, %v3733
  %v3795 = vadd.f32 %v3725, %v3733
  %v3796 = vadd.f32 %v3726, %v3733
  %v3797 = vadd.f32 %v3727, %v3733
  %v3798 = vadd.f32 %v3728, %v3733
  %v3799 = vmul.f32 %v3735, 0.2
  %v3800 = vmul.f32 %v3736, 0.2
  %v3801 = vmul.f32 %v3737, 0.2
  %v3802 = vmul.f32 %v3738, 0.2
  %v3803 = vmul.f32 %v3739, 0.2
  %v3804 = vmul.f32 %v3740, 0.2
  %v3805 = vmul.f32 %v3741, 0.2
  %v3806 = vmul.f32 %v3742, 0.2
  %v3807 = vmul.f32 %v3743, 0.2
  %v3808 = vmul.f32 %v3744, 0.2
  %v3809 = vmul.f32 %v3745, 0.2
  %v3810 = vmul.f32 %v3746, 0.2
  %v3811 = vmul.f32 %v3747, 0.2
  %v3812 = vmul.f32 %v3748, 0.2
  %v3813 = vmul.f32 %v3749, 0.2
  %v3814 = vmul.f32 %v3750, 0.2
  %v3815 = vmul.f32 %v3751, 0.2
  %v3816 = vmul.f32 %v3752, 0.2
  %v3817 = vmul.f32 %v3753, 0.2
  %v3818 = vmul.f32 %v3754, 0.2
  %v3819 = vmul.f32 %v3755, 0.2
  %v3820 = vmul.f32 %v3756, 0.2
  %v3821 = vmul.f32 %v3757, 0.2
  %v3822 = vmul.f32 %v3758, 0.2
  %v3823 = vmul.f32 %v3759, 0.2
  %v3824 = vmul.f32 %v3760, 0.2
  %v3825 = vmul.f32 %v3761, 0.2
  %v3826 = vmul.f32 %v3762, 0.2
  %v3827 = vmul.f32 %v3763, 0.2
  %v3828 = vmul.f32 %v3764, 0.2
  %v3829 = vmul.f32 %v3765, 0.2
  %v3830 = vmul.f32 %v3766, 0.2
  %v3831 = vmul.f32 %v3767, 0.2
  %v3832 = vmul.f32 %v3768, 0.2
  %v3833 = vmul.f32 %v3769, 0.2
  %v3834 = vmul.f32 %v3770, 0.2
  %v3835 = vmul.f32 %v3771, 0.2
  %v3836 = vmul.f32 %v3772, 0.2
  %v3837 = vmul.f32 %v3773, 0.2
  %v3838 = vmul.f32 %v3774, 0.2
  %v3839 = vmul.f32 %v3775, 0.2
  %v3840 = vmul.f32 %v3776, 0.2
  %v3841 = vmul.f32 %v3777, 0.2
  %v3842 = vmul.f32 %v3778, 0.2
  %v3843 = vmul.f32 %v3779, 0.2
  %v3844 = vmul.f32 %v3780, 0.2
  %v3845 = vmul.f32 %v3781, 0.2
  %v3846 = vmul.f32 %v3782, 0.2
  %v3847 = vmul.f32 %v3783, 0.2
  %v3848 = vmul.f32 %v3784, 0.2
  %v3849 = vmul.f32 %v3785, 0.2
  %v3850 = vmul.f32 %v3786, 0.2
  %v3851 = vmul.f32 %v3787, 0.2
  %v3852 = vmul.f32 %v3788, 0.2
  %v3853 = vmul.f32 %v3789, 0.2
  %v3854 = vmul.f32 %v3790, 0.2
  %v3855 = vmul.f32 %v3791, 0.2
  %v3856 = vmul.f32 %v3792, 0.2
  %v3857 = vmul.f32 %v3793, 0.2
  %v3858 = vmul.f32 %v3794, 0.2
  %v3859 = vmul.f32 %v3795, 0.2
  %v3860 = vmul.f32 %v3796, 0.2
  %v3861 = vmul.f32 %v3797, 0.2
  %v3862 = vmul.f32 %v3798, 0.2
  %v3863 = vmax.f32 %v3735, %v3799
  %v3864 = vmax.f32 %v3736, %v3800
  %v3865 = vmax.f32 %v3737, %v3801
  %v3866 = vmax.f32 %v3738, %v3802
  %v3867 = vmax.f32 %v3739, %v3803
  %v3868 = vmax.f32 %v3740, %v3804
  %v3869 = vmax.f32 %v3741, %v3805
  %v3870 = vmax.f32 %v3742, %v3806
  %v3871 = vmax.f32 %v3743, %v3807
  %v3872 = vmax.f32 %v3744, %v3808
  %v3873 = vmax.f32 %v3745, %v3809
  %v3874 = vmax.f32 %v3746, %v3810
  %v3875 = vmax.f32 %v3747, %v3811
  %v3876 = vmax.f32 %v3748, %v3812
  %v3877 = vmax.f32 %v3749, %v3813
  %v3878 = vmax.f32 %v3750, %v3814
  %v3879 = vmax.f32 %v3751, %v3815
  %v3880 = vmax.f32 %v3752, %v3816
  %v3881 = vmax.f32 %v3753, %v3817
  %v3882 = vmax.f32 %v3754, %v3818
  %v3883 = vmax.f32 %v3755, %v3819
  %v3884 = vmax.f32 %v3756, %v3820
  %v3885 = vmax.f32 %v3757, %v3821
  %v3886 = vmax.f32 %v3758, %v3822
  %v3887 = vmax.f32 %v3759, %v3823
  %v3888 = vmax.f32 %v3760, %v3824
  %v3889 = vmax.f32 %v3761, %v3825
  %v3890 = vmax.f32 %v3762, %v3826
  %v3891 = vmax.f32 %v3763, %v3827
  %v3892 = vmax.f32 %v3764, %v3828
  %v3893 = vmax.f32 %v3765, %v3829
  %v3894 = vmax.f32 %v3766, %v3830
  %v3895 = vmax.f32 %v3767, %v3831
  %v3896 = vmax.f32 %v3768, %v3832
  %v3897 = vmax.f32 %v3769, %v3833
  %v3898 = vmax.f32 %v3770, %v3834
  %v3899 = vmax.f32 %v3771, %v3835
  %v3900 = vmax.f32 %v3772, %v3836
  %v3901 = vmax.f32 %v3773, %v3837
  %v3902 = vmax.f32 %v3774, %v3838
  %v3903 = vmax.f32 %v3775, %v3839
  %v3904 = vmax.f32 %v3776, %v3840
  %v3905 = vmax.f32 %v3777, %v3841
  %v3906 = vmax.f32 %v3778, %v3842
  %v3907 = vmax.f32 %v3779, %v3843
  %v3908 = vmax.f32 %v3780, %v3844
  %v3909 = vmax.f32 %v3781, %v3845
  %v3910 = vmax.f32 %v3782, %v3846
  %v3911 = vmax.f32 %v3783, %v3847
  %v3912 = vmax.f32 %v3784, %v3848
  %v3913 = vmax.f32 %v3785, %v3849
  %v3914 = vmax.f32 %v3786, %v3850
  %v3915 = vmax.f32 %v3787, %v3851
  %v3916 = vmax.f32 %v3788, %v3852
  %v3917 = vmax.f32 %v3789, %v3853
  %v3918 = vmax.f32 %v3790, %v3854
  %v3919 = vmax.f32 %v3791, %v3855
  %v3920 = vmax.f32 %v3792, %v3856
  %v3921 = vmax.f32 %v3793, %v3857
  %v3922 = vmax.f32 %v3794, %v3858
  %v3923 = vmax.f32 %v3795, %v3859
  %v3924 = vmax.f32 %v3796, %v3860
  %v3925 = vmax.f32 %v3797, %v3861
  %v3926 = vmax.f32 %v3798, %v3862
  %v3927 = vpack.c.bf16 %v3863, %v3863
  %v3928 = vpack.c.bf16 %v3864, %v3864
  %v3929 = vpack.c.bf16 %v3865, %v3865
  %v3930 = vpack.c.bf16 %v3866, %v3866
  %v3931 = vpack.c.bf16 %v3867, %v3867
  %v3932 = vpack.c.bf16 %v3868, %v3868
  %v3933 = vpack.c.bf16 %v3869, %v3869
  %v3934 = vpack.c.bf16 %v3870, %v3870
  %v3935 = vpack.c.bf16 %v3871, %v3871
  %v3936 = vpack.c.bf16 %v3872, %v3872
  %v3937 = vpack.c.bf16 %v3873, %v3873
  %v3938 = vpack.c.bf16 %v3874, %v3874
  %v3939 = vpack.c.bf16 %v3875, %v3875
  %v3940 = vpack.c.bf16 %v3876, %v3876
  %v3941 = vpack.c.bf16 %v3877, %v3877
  %v3942 = vpack.c.bf16 %v3878, %v3878
  %v3943 = vpack.c.bf16 %v3879, %v3879
  %v3944 = vpack.c.bf16 %v3880, %v3880
  %v3945 = vpack.c.bf16 %v3881, %v3881
  %v3946 = vpack.c.bf16 %v3882, %v3882
  %v3947 = vpack.c.bf16 %v3883, %v3883
  %v3948 = vpack.c.bf16 %v3884, %v3884
  %v3949 = vpack.c.bf16 %v3885, %v3885
  %v3950 = vpack.c.bf16 %v3886, %v3886
  %v3951 = vpack.c.bf16 %v3887, %v3887
  %v3952 = vpack.c.bf16 %v3888, %v3888
  %v3953 = vpack.c.bf16 %v3889, %v3889
  %v3954 = vpack.c.bf16 %v3890, %v3890
  %v3955 = vpack.c.bf16 %v3891, %v3891
  %v3956 = vpack.c.bf16 %v3892, %v3892
  %v3957 = vpack.c.bf16 %v3893, %v3893
  %v3958 = vpack.c.bf16 %v3894, %v3894
  %v3959 = vpack.c.bf16 %v3895, %v3895
  %v3960 = vpack.c.bf16 %v3896, %v3896
  %v3961 = vpack.c.bf16 %v3897, %v3897
  %v3962 = vpack.c.bf16 %v3898, %v3898
  %v3963 = vpack.c.bf16 %v3899, %v3899
  %v3964 = vpack.c.bf16 %v3900, %v3900
  %v3965 = vpack.c.bf16 %v3901, %v3901
  %v3966 = vpack.c.bf16 %v3902, %v3902
  %v3967 = vpack.c.bf16 %v3903, %v3903
  %v3968 = vpack.c.bf16 %v3904, %v3904
  %v3969 = vpack.c.bf16 %v3905, %v3905
  %v3970 = vpack.c.bf16 %v3906, %v3906
  %v3971 = vpack.c.bf16 %v3907, %v3907
  %v3972 = vpack.c.bf16 %v3908, %v3908
  %v3973 = vpack.c.bf16 %v3909, %v3909
  %v3974 = vpack.c.bf16 %v3910, %v3910
  %v3975 = vpack.c.bf16 %v3911, %v3911
  %v3976 = vpack.c.bf16 %v3912, %v3912
  %v3977 = vpack.c.bf16 %v3913, %v3913
  %v3978 = vpack.c.bf16 %v3914, %v3914
  %v3979 = vpack.c.bf16 %v3915, %v3915
  %v3980 = vpack.c.bf16 %v3916, %v3916
  %v3981 = vpack.c.bf16 %v3917, %v3917
  %v3982 = vpack.c.bf16 %v3918, %v3918
  %v3983 = vpack.c.bf16 %v3919, %v3919
  %v3984 = vpack.c.bf16 %v3920, %v3920
  %v3985 = vpack.c.bf16 %v3921, %v3921
  %v3986 = vpack.c.bf16 %v3922, %v3922
  %v3987 = vpack.c.bf16 %v3923, %v3923
  %v3988 = vpack.c.bf16 %v3924, %v3924
  %v3989 = vpack.c.bf16 %v3925, %v3925
  %v3990 = vpack.c.bf16 %v3926, %v3926
  %v4055 = vunpack.c.l.b16 %v3927
  %v4056 = vunpack.c.l.b16 %v3928
  %v4057 = vunpack.c.l.b16 %v3929
  %v4058 = vunpack.c.l.b16 %v3930
  %v4059 = vunpack.c.l.b16 %v3931
  %v4060 = vunpack.c.l.b16 %v3932
  %v4061 = vunpack.c.l.b16 %v3933
  %v4062 = vunpack.c.l.b16 %v3934
  %v4063 = vunpack.c.l.b16 %v3935
  %v4064 = vunpack.c.l.b16 %v3936
  %v4065 = vunpack.c.l.b16 %v3937
  %v4066 = vunpack.c.l.b16 %v3938
  %v4067 = vunpack.c.l.b16 %v3939
  %v4068 = vunpack.c.l.b16 %v3940
  %v4069 = vunpack.c.l.b16 %v3941
  %v4070 = vunpack.c.l.b16 %v3942
  %v4071 = vunpack.c.l.b16 %v3943
  %v4072 = vunpack.c.l.b16 %v3944
  %v4073 = vunpack.c.l.b16 %v3945
  %v4074 = vunpack.c.l.b16 %v3946
  %v4075 = vunpack.c.l.b16 %v3947
  %v4076 = vunpack.c.l.b16 %v3948
  %v4077 = vunpack.c.l.b16 %v3949
  %v4078 = vunpack.c.l.b16 %v3950
  %v4079 = vunpack.c.l.b16 %v3951
  %v4080 = vunpack.c.l.b16 %v3952
  %v4081 = vunpack.c.l.b16 %v3953
  %v4082 = vunpack.c.l.b16 %v3954
  %v4083 = vunpack.c.l.b16 %v3955
  %v4084 = vunpack.c.l.b16 %v3956
  %v4085 = vunpack.c.l.b16 %v3957
  %v4086 = vunpack.c.l.b16 %v3958
  %v4087 = vunpack.c.l.b16 %v3959
  %v4088 = vunpack.c.l.b16 %v3960
  %v4089 = vunpack.c.l.b16 %v3961
  %v4090 = vunpack.c.l.b16 %v3962
  %v4091 = vunpack.c.l.b16 %v3963
  %v4092 = vunpack.c.l.b16 %v3964
  %v4093 = vunpack.c.l.b16 %v3965
  %v4094 = vunpack.c.l.b16 %v3966
  %v4095 = vunpack.c.l.b16 %v3967
  %v4096 = vunpack.c.l.b16 %v3968
  %v4097 = vunpack.c.l.b16 %v3969
  %v4098 = vunpack.c.l.b16 %v3970
  %v4099 = vunpack.c.l.b16 %v3971
  %v4100 = vunpack.c.l.b16 %v3972
  %v4101 = vunpack.c.l.b16 %v3973
  %v4102 = vunpack.c.l.b16 %v3974
  %v4103 = vunpack.c.l.b16 %v3975
  %v4104 = vunpack.c.l.b16 %v3976
  %v4105 = vunpack.c.l.b16 %v3977
  %v4106 = vunpack.c.l.b16 %v3978
  %v4107 = vunpack.c.l.b16 %v3979
  %v4108 = vunpack.c.l.b16 %v3980
  %v4109 = vunpack.c.l.b16 %v3981
  %v4110 = vunpack.c.l.b16 %v3982
  %v4111 = vunpack.c.l.b16 %v3983
  %v4112 = vunpack.c.l.b16 %v3984
  %v4113 = vunpack.c.l.b16 %v3985
  %v4114 = vunpack.c.l.b16 %v3986
  %v4115 = vunpack.c.l.b16 %v3987
  %v4116 = vunpack.c.l.b16 %v3988
  %v4117 = vunpack.c.l.b16 %v3989
  %v4118 = vunpack.c.l.b16 %v3990
  %v4119 = vpack.c.b16 %v4056, %v4055
  %v4120 = vpack.c.b16 %v4058, %v4057
  %v4121 = vpack.c.b16 %v4060, %v4059
  %v4122 = vpack.c.b16 %v4062, %v4061
  %v4123 = vpack.c.b16 %v4064, %v4063
  %v4124 = vpack.c.b16 %v4066, %v4065
  %v4125 = vpack.c.b16 %v4068, %v4067
  %v4126 = vpack.c.b16 %v4070, %v4069
  %v4127 = vpack.c.b16 %v4072, %v4071
  %v4128 = vpack.c.b16 %v4074, %v4073
  %v4129 = vpack.c.b16 %v4076, %v4075
  %v4130 = vpack.c.b16 %v4078, %v4077
  %v4131 = vpack.c.b16 %v4080, %v4079
  %v4132 = vpack.c.b16 %v4082, %v4081
  %v4133 = vpack.c.b16 %v4084, %v4083
  %v4134 = vpack.c.b16 %v4086, %v4085
  %v4135 = vpack.c.b16 %v4088, %v4087
  %v4136 = vpack.c.b16 %v4090, %v4089
  %v4137 = vpack.c.b16 %v4092, %v4091
  %v4138 = vpack.c.b16 %v4094, %v4093
  %v4139 = vpack.c.b16 %v4096, %v4095
  %v4140 = vpack.c.b16 %v4098, %v4097
  %v4141 = vpack.c.b16 %v4100, %v4099
  %v4142 = vpack.c.b16 %v4102, %v4101
  %v4143 = vpack.c.b16 %v4104, %v4103
  %v4144 = vpack.c.b16 %v4106, %v4105
  %v4145 = vpack.c.b16 %v4108, %v4107
  %v4146 = vpack.c.b16 %v4110, %v4109
  %v4147 = vpack.c.b16 %v4112, %v4111
  %v4148 = vpack.c.b16 %v4114, %v4113
  %v4149 = vpack.c.b16 %v4116, %v4115
  %v4150 = vpack.c.b16 %v4118, %v4117
  %4183 = vst [vmem:[%s5] sm:$0xff] %v4119
  %4184 = vst [vmem:[%s5 + $0x8] sm:$0xff] %v4120
  %4185 = vst [vmem:[%s5 + $0x10] sm:$0xff] %v4121
  %4186 = vst [vmem:[%s5 + $0x18] sm:$0xff] %v4122
  %4187 = vst [vmem:[%s5 + $0x20] sm:$0xff] %v4123
  %4188 = vst [vmem:[%s5 + $0x28] sm:$0xff] %v4124
  %4189 = vst [vmem:[%s5 + $0x30] sm:$0xff] %v4125
  %4190 = vst [vmem:[%s5 + $0x38] sm:$0xff] %v4126
  %4191 = vst [vmem:[%s5 + $0x40] sm:$0xff] %v4127
  %4192 = vst [vmem:[%s5 + $0x48] sm:$0xff] %v4128
  %4193 = vst [vmem:[%s5 + $0x50] sm:$0xff] %v4129
  %4194 = vst [vmem:[%s5 + $0x58] sm:$0xff] %v4130
  %4195 = vst [vmem:[%s5 + $0x60] sm:$0xff] %v4131
  %4196 = vst [vmem:[%s5 + $0x68] sm:$0xff] %v4132
  %4197 = vst [vmem:[%s5 + $0x70] sm:$0xff] %v4133
  %4198 = vst [vmem:[%s5 + $0x78] sm:$0xff] %v4134
  %4199 = vst [vmem:[%s5 + $0x80] sm:$0xff] %v4135
  %4200 = vst [vmem:[%s5 + $0x88] sm:$0xff] %v4136
  %4201 = vst [vmem:[%s5 + $0x90] sm:$0xff] %v4137
  %4202 = vst [vmem:[%s5 + $0x98] sm:$0xff] %v4138
  %4203 = vst [vmem:[%s5 + $0xa0] sm:$0xff] %v4139
  %4204 = vst [vmem:[%s5 + $0xa8] sm:$0xff] %v4140
  %4205 = vst [vmem:[%s5 + $0xb0] sm:$0xff] %v4141
  %4206 = vst [vmem:[%s5 + $0xb8] sm:$0xff] %v4142
  %4207 = vst [vmem:[%s5 + $0xc0] sm:$0xff] %v4143
  %4208 = vst [vmem:[%s5 + $0xc8] sm:$0xff] %v4144
  %4209 = vst [vmem:[%s5 + $0xd0] sm:$0xff] %v4145
  %4210 = vst [vmem:[%s5 + $0xd8] sm:$0xff] %v4146
  %4211 = vst [vmem:[%s5 + $0xe0] sm:$0xff] %v4147
  %4212 = vst [vmem:[%s5 + $0xe8] sm:$0xff] %v4148
  %4213 = vst [vmem:[%s5 + $0xf0] sm:$0xff] %v4149
  %4214 = vst [vmem:[%s5 + $0xf8] sm:$0xff] %v4150
  // Predicated region
  $region22: #{dis_forward.4} parent=0 // pred_check
    _
  $region23: #{dis_forward.4} parent=0 // pred_check_branch
    %4216 = sbr.rel (0) target = $region25
  $region24: #{dis_forward.4} parent=0 // pred_region
    _
  $region25: #{dis_forward.4} parent=0 // pred_fallthru
    _
  // Predicated region
  $region26: #{dis_forward.4} parent=0 // pred_check
    _
  $region27: #{dis_forward.4} parent=0 // pred_check_branch
    %4218 = sbr.rel (0) target = $region29
  $region28: #{dis_forward.4} parent=0 // pred_region
    _
  $region29: #{dis_forward.4} parent=0 // pred_fallthru
    _

// kernel: dis_forward.5
$region0: #{dis_forward.5}
  #allocation0 [shape = 'u32[]', space=smem, size = 0x4, offset = 0x4, fixed_abs, tag = 'smem constant byte address 0x4 - core index']
  #allocation1 [shape = 'u32[144,128]{1,0:T(1,128)}', space=vmem, size = 0x12000, scoped, tag = 'internal scratch']
  %s0 = inlined_call_operand.vmem [shape: bf16[200,2048], index: 0, kind: input, shape index: {}]
  %s1 = inlined_call_operand.vmem [shape: bf16[16,200], index: 1, kind: input, shape index: {}]
  %s2 = inlined_call_operand.vmem [shape: f32[16,1], index: 2, kind: input, shape index: {}]
  %s3 = inlined_call_operand.vmem [shape: f32[16,1], index: 3, kind: input, shape index: {}]
  %s4 = inlined_call_operand.vmem [shape: f32[16,1], index: 4, kind: input, shape index: {}]
  %s5 = inlined_call_operand.vmem [shape: bf16[16,2048], index: 5, kind: output, shape index: {}]
  %s6 = sld [smem:[#allocation0]]
  $region30: #{dis_forward.5} parent=0
    _
  %s8 = ssub.s32 1, %s6
  %s9 = scalar_select 0, %s8, %s6
  // Predicated region
  $region2: #{dis_forward.5} parent=0 // pred_check
    _
  $region3: #{dis_forward.5} parent=0 // pred_check_branch
    %11 = sbr.rel (0) target = $region5
  $region4: #{dis_forward.5} parent=0 // pred_region
    _
  $region5: #{dis_forward.5} parent=0 // pred_fallthru
    _
  // Predicated region
  $region6: #{dis_forward.5} parent=0 // pred_check
    _
  $region7: #{dis_forward.5} parent=0 // pred_check_branch
    %13 = sbr.rel (0) target = $region9
  $region8: #{dis_forward.5} parent=0 // pred_region
    _
  $region9: #{dis_forward.5} parent=0 // pred_fallthru
    _
  // Predicated region
  $region10: #{dis_forward.5} parent=0 // pred_check
    _
  $region11: #{dis_forward.5} parent=0 // pred_check_branch
    %15 = sbr.rel (0) target = $region13
  $region12: #{dis_forward.5} parent=0 // pred_region
    _
  $region13: #{dis_forward.5} parent=0 // pred_fallthru
    _
  // Predicated region
  $region14: #{dis_forward.5} parent=0 // pred_check
    _
  $region15: #{dis_forward.5} parent=0 // pred_check_branch
    %17 = sbr.rel (0) target = $region17
  $region16: #{dis_forward.5} parent=0 // pred_region
    _
  $region17: #{dis_forward.5} parent=0 // pred_fallthru
    _
  // Predicated region
  $region18: #{dis_forward.5} parent=0 // pred_check
    _
  $region19: #{dis_forward.5} parent=0 // pred_check_branch
    %19 = sbr.rel (0) target = $region21
  $region20: #{dis_forward.5} parent=0 // pred_region
    _
  $region21: #{dis_forward.5} parent=0 // pred_fallthru
    _
  %v21 = vld [vmem:[%s1] sm:$0xff]
  %v22 = vld [vmem:[%s1 + $0x8] sm:$0xff]
  %v23 = vld [vmem:[%s0] sm:$0xff]
  %v24 = vld [vmem:[%s0 + $0x8] sm:$0xff]
  %v25 = vld [vmem:[%s0 + $0x10] sm:$0xff]
  %v26 = vld [vmem:[%s0 + $0x18] sm:$0xff]
  %v27 = vld [vmem:[%s0 + $0x20] sm:$0xff]
  %v28 = vld [vmem:[%s0 + $0x28] sm:$0xff]
  %v29 = vld [vmem:[%s0 + $0x30] sm:$0xff]
  %v30 = vld [vmem:[%s0 + $0x38] sm:$0xff]
  %v31 = vld [vmem:[%s0 + $0x40] sm:$0xff]
  %v32 = vld [vmem:[%s0 + $0x48] sm:$0xff]
  %v33 = vld [vmem:[%s0 + $0x50] sm:$0xff]
  %v34 = vld [vmem:[%s0 + $0x58] sm:$0xff]
  %v35 = vld [vmem:[%s0 + $0x60] sm:$0xff]
  %v36 = vld [vmem:[%s0 + $0x68] sm:$0xff]
  %v37 = vld [vmem:[%s0 + $0x70] sm:$0xff]
  %v38 = vld [vmem:[%s0 + $0x78] sm:$0xff]
  %v39 = vld [vmem:[%s0 + $0x80] sm:$0xff]
  %v40 = vld [vmem:[%s0 + $0x88] sm:$0xff]
  %v41 = vld [vmem:[%s0 + $0x90] sm:$0xff]
  %v42 = vld [vmem:[%s0 + $0x98] sm:$0xff]
  %v43 = vld [vmem:[%s0 + $0xa0] sm:$0xff]
  %v44 = vld [vmem:[%s0 + $0xa8] sm:$0xff]
  %v45 = vld [vmem:[%s0 + $0xb0] sm:$0xff]
  %v46 = vld [vmem:[%s0 + $0xb8] sm:$0xff]
  %v47 = vld [vmem:[%s0 + $0xc0] sm:$0xff]
  %v48 = vld [vmem:[%s0 + $0xc8] sm:$0xff]
  %v49 = vld [vmem:[%s0 + $0xd0] sm:$0xff]
  %v50 = vld [vmem:[%s0 + $0xd8] sm:$0xff]
  %v51 = vld [vmem:[%s0 + $0xe0] sm:$0xff]
  %v52 = vld [vmem:[%s0 + $0xe8] sm:$0xff]
  %v53 = vld [vmem:[%s0 + $0xf0] sm:$0xff]
  %v54 = vld [vmem:[%s0 + $0xf8] sm:$0xff]
  %v55 = vld [vmem:[%s0 + $0x100] sm:$0xff]
  %v56 = vld [vmem:[%s0 + $0x108] sm:$0xff]
  %v57 = vld [vmem:[%s0 + $0x110] sm:$0xff]
  %v58 = vld [vmem:[%s0 + $0x118] sm:$0xff]
  %v59 = vld [vmem:[%s0 + $0x120] sm:$0xff]
  %v60 = vld [vmem:[%s0 + $0x128] sm:$0xff]
  %v61 = vld [vmem:[%s0 + $0x130] sm:$0xff]
  %v62 = vld [vmem:[%s0 + $0x138] sm:$0xff]
  %v63 = vld [vmem:[%s0 + $0x140] sm:$0xff]
  %v64 = vld [vmem:[%s0 + $0x148] sm:$0xff]
  %v65 = vld [vmem:[%s0 + $0x150] sm:$0xff]
  %v66 = vld [vmem:[%s0 + $0x158] sm:$0xff]
  %v67 = vld [vmem:[%s0 + $0x160] sm:$0xff]
  %v68 = vld [vmem:[%s0 + $0x168] sm:$0xff]
  %v69 = vld [vmem:[%s0 + $0x170] sm:$0xff]
  %v70 = vld [vmem:[%s0 + $0x178] sm:$0xff]
  %v71 = vld [vmem:[%s0 + $0x180] sm:$0xff]
  %v72 = vld [vmem:[%s0 + $0x188] sm:$0xff]
  %v73 = vld [vmem:[%s0 + $0x190] sm:$0xff]
  %v74 = vld [vmem:[%s0 + $0x198] sm:$0xff]
  %v75 = vld [vmem:[%s0 + $0x1a0] sm:$0xff]
  %v76 = vld [vmem:[%s0 + $0x1a8] sm:$0xff]
  %v77 = vld [vmem:[%s0 + $0x1b0] sm:$0xff]
  %v78 = vld [vmem:[%s0 + $0x1b8] sm:$0xff]
  %v79 = vld [vmem:[%s0 + $0x1c0] sm:$0xff]
  %v80 = vld [vmem:[%s0 + $0x1c8] sm:$0xff]
  %v81 = vld [vmem:[%s0 + $0x1d0] sm:$0xff]
  %v82 = vld [vmem:[%s0 + $0x1d8] sm:$0xff]
  %v83 = vld [vmem:[%s0 + $0x1e0] sm:$0xff]
  %v84 = vld [vmem:[%s0 + $0x1e8] sm:$0xff]
  %v85 = vld [vmem:[%s0 + $0x1f0] sm:$0xff]
  %v86 = vld [vmem:[%s0 + $0x1f8] sm:$0xff]
  %v87 = vld [vmem:[%s0 + $0x200] sm:$0xff]
  %v88 = vld [vmem:[%s0 + $0x208] sm:$0xff]
  %v89 = vld [vmem:[%s0 + $0x210] sm:$0xff]
  %v90 = vld [vmem:[%s0 + $0x218] sm:$0xff]
  %v91 = vld [vmem:[%s0 + $0x220] sm:$0xff]
  %v92 = vld [vmem:[%s0 + $0x228] sm:$0xff]
  %v93 = vld [vmem:[%s0 + $0x230] sm:$0xff]
  %v94 = vld [vmem:[%s0 + $0x238] sm:$0xff]
  %v95 = vld [vmem:[%s0 + $0x240] sm:$0xff]
  %v96 = vld [vmem:[%s0 + $0x248] sm:$0xff]
  %v97 = vld [vmem:[%s0 + $0x250] sm:$0xff]
  %v98 = vld [vmem:[%s0 + $0x258] sm:$0xff]
  %v99 = vld [vmem:[%s0 + $0x260] sm:$0xff]
  %v100 = vld [vmem:[%s0 + $0x268] sm:$0xff]
  %v101 = vld [vmem:[%s0 + $0x270] sm:$0xff]
  %v102 = vld [vmem:[%s0 + $0x278] sm:$0xff]
  %v103 = vld [vmem:[%s0 + $0x280] sm:$0xff]
  %v104 = vld [vmem:[%s0 + $0x288] sm:$0xff]
  %v105 = vld [vmem:[%s0 + $0x290] sm:$0xff]
  %v106 = vld [vmem:[%s0 + $0x298] sm:$0xff]
  %v107 = vld [vmem:[%s0 + $0x2a0] sm:$0xff]
  %v108 = vld [vmem:[%s0 + $0x2a8] sm:$0xff]
  %v109 = vld [vmem:[%s0 + $0x2b0] sm:$0xff]
  %v110 = vld [vmem:[%s0 + $0x2b8] sm:$0xff]
  %v111 = vld [vmem:[%s0 + $0x2c0] sm:$0xff]
  %v112 = vld [vmem:[%s0 + $0x2c8] sm:$0xff]
  %v113 = vld [vmem:[%s0 + $0x2d0] sm:$0xff]
  %v114 = vld [vmem:[%s0 + $0x2d8] sm:$0xff]
  %v115 = vld [vmem:[%s0 + $0x2e0] sm:$0xff]
  %v116 = vld [vmem:[%s0 + $0x2e8] sm:$0xff]
  %v117 = vld [vmem:[%s0 + $0x2f0] sm:$0xff]
  %v118 = vld [vmem:[%s0 + $0x2f8] sm:$0xff]
  %v119 = vld [vmem:[%s0 + $0x300] sm:$0xff]
  %v120 = vld [vmem:[%s0 + $0x308] sm:$0xff]
  %v121 = vld [vmem:[%s0 + $0x310] sm:$0xff]
  %v122 = vld [vmem:[%s0 + $0x318] sm:$0xff]
  %v123 = vld [vmem:[%s0 + $0x320] sm:$0xff]
  %v124 = vld [vmem:[%s0 + $0x328] sm:$0xff]
  %v125 = vld [vmem:[%s0 + $0x330] sm:$0xff]
  %v126 = vld [vmem:[%s0 + $0x338] sm:$0xff]
  %v127 = vld [vmem:[%s0 + $0x340] sm:$0xff]
  %v128 = vld [vmem:[%s0 + $0x348] sm:$0xff]
  %v129 = vld [vmem:[%s0 + $0x350] sm:$0xff]
  %v130 = vld [vmem:[%s0 + $0x358] sm:$0xff]
  %v131 = vld [vmem:[%s0 + $0x360] sm:$0xff]
  %v132 = vld [vmem:[%s0 + $0x368] sm:$0xff]
  %v133 = vld [vmem:[%s0 + $0x370] sm:$0xff]
  %v134 = vld [vmem:[%s0 + $0x378] sm:$0xff]
  %v135 = vld [vmem:[%s0 + $0x380] sm:$0xff]
  %v136 = vld [vmem:[%s0 + $0x388] sm:$0xff]
  %v137 = vld [vmem:[%s0 + $0x390] sm:$0xff]
  %v138 = vld [vmem:[%s0 + $0x398] sm:$0xff]
  %v139 = vld [vmem:[%s0 + $0x3a0] sm:$0xff]
  %v140 = vld [vmem:[%s0 + $0x3a8] sm:$0xff]
  %v141 = vld [vmem:[%s0 + $0x3b0] sm:$0xff]
  %v142 = vld [vmem:[%s0 + $0x3b8] sm:$0xff]
  %v143 = vld [vmem:[%s0 + $0x3c0] sm:$0xff]
  %v144 = vld [vmem:[%s0 + $0x3c8] sm:$0xff]
  %v145 = vld [vmem:[%s0 + $0x3d0] sm:$0xff]
  %v146 = vld [vmem:[%s0 + $0x3d8] sm:$0xff]
  %v147 = vld [vmem:[%s0 + $0x3e0] sm:$0xff]
  %v148 = vld [vmem:[%s0 + $0x3e8] sm:$0xff]
  %v149 = vld [vmem:[%s0 + $0x3f0] sm:$0xff]
  %v150 = vld [vmem:[%s0 + $0x3f8] sm:$0xff]
  %v151 = vld [vmem:[%s0 + $0x400] sm:$0xff]
  %v152 = vld [vmem:[%s0 + $0x408] sm:$0xff]
  %v153 = vld [vmem:[%s0 + $0x410] sm:$0xff]
  %v154 = vld [vmem:[%s0 + $0x418] sm:$0xff]
  %v155 = vld [vmem:[%s0 + $0x420] sm:$0xff]
  %v156 = vld [vmem:[%s0 + $0x428] sm:$0xff]
  %v157 = vld [vmem:[%s0 + $0x430] sm:$0xff]
  %v158 = vld [vmem:[%s0 + $0x438] sm:$0xff]
  %v159 = vld [vmem:[%s0 + $0x440] sm:$0xff]
  %v160 = vld [vmem:[%s0 + $0x448] sm:$0xff]
  %v161 = vld [vmem:[%s0 + $0x450] sm:$0xff]
  %v162 = vld [vmem:[%s0 + $0x458] sm:$0xff]
  %v163 = vld [vmem:[%s0 + $0x460] sm:$0xff]
  %v164 = vld [vmem:[%s0 + $0x468] sm:$0xff]
  %v165 = vld [vmem:[%s0 + $0x470] sm:$0xff]
  %v166 = vld [vmem:[%s0 + $0x478] sm:$0xff]
  %v167 = vld [vmem:[%s0 + $0x480] sm:$0xff]
  %v168 = vld [vmem:[%s0 + $0x488] sm:$0xff]
  %v169 = vld [vmem:[%s0 + $0x490] sm:$0xff]
  %v170 = vld [vmem:[%s0 + $0x498] sm:$0xff]
  %v171 = vld [vmem:[%s0 + $0x4a0] sm:$0xff]
  %v172 = vld [vmem:[%s0 + $0x4a8] sm:$0xff]
  %v173 = vld [vmem:[%s0 + $0x4b0] sm:$0xff]
  %v174 = vld [vmem:[%s0 + $0x4b8] sm:$0xff]
  %v175 = vld [vmem:[%s0 + $0x4c0] sm:$0xff]
  %v176 = vld [vmem:[%s0 + $0x4c8] sm:$0xff]
  %v177 = vld [vmem:[%s0 + $0x4d0] sm:$0xff]
  %v178 = vld [vmem:[%s0 + $0x4d8] sm:$0xff]
  %v179 = vld [vmem:[%s0 + $0x4e0] sm:$0xff]
  %v180 = vld [vmem:[%s0 + $0x4e8] sm:$0xff]
  %v181 = vld [vmem:[%s0 + $0x4f0] sm:$0xff]
  %v182 = vld [vmem:[%s0 + $0x4f8] sm:$0xff]
  %v183 = vld [vmem:[%s0 + $0x500] sm:$0xff]
  %v184 = vld [vmem:[%s0 + $0x508] sm:$0xff]
  %v185 = vld [vmem:[%s0 + $0x510] sm:$0xff]
  %v186 = vld [vmem:[%s0 + $0x518] sm:$0xff]
  %v187 = vld [vmem:[%s0 + $0x520] sm:$0xff]
  %v188 = vld [vmem:[%s0 + $0x528] sm:$0xff]
  %v189 = vld [vmem:[%s0 + $0x530] sm:$0xff]
  %v190 = vld [vmem:[%s0 + $0x538] sm:$0xff]
  %v191 = vld [vmem:[%s0 + $0x540] sm:$0xff]
  %v192 = vld [vmem:[%s0 + $0x548] sm:$0xff]
  %v193 = vld [vmem:[%s0 + $0x550] sm:$0xff]
  %v194 = vld [vmem:[%s0 + $0x558] sm:$0xff]
  %v195 = vld [vmem:[%s0 + $0x560] sm:$0xff]
  %v196 = vld [vmem:[%s0 + $0x568] sm:$0xff]
  %v197 = vld [vmem:[%s0 + $0x570] sm:$0xff]
  %v198 = vld [vmem:[%s0 + $0x578] sm:$0xff]
  %v199 = vld [vmem:[%s0 + $0x580] sm:$0xff]
  %v200 = vld [vmem:[%s0 + $0x588] sm:$0xff]
  %v201 = vld [vmem:[%s0 + $0x590] sm:$0xff]
  %v202 = vld [vmem:[%s0 + $0x598] sm:$0xff]
  %v203 = vld [vmem:[%s0 + $0x5a0] sm:$0xff]
  %v204 = vld [vmem:[%s0 + $0x5a8] sm:$0xff]
  %v205 = vld [vmem:[%s0 + $0x5b0] sm:$0xff]
  %v206 = vld [vmem:[%s0 + $0x5b8] sm:$0xff]
  %v207 = vld [vmem:[%s0 + $0x5c0] sm:$0xff]
  %v208 = vld [vmem:[%s0 + $0x5c8] sm:$0xff]
  %v209 = vld [vmem:[%s0 + $0x5d0] sm:$0xff]
  %v210 = vld [vmem:[%s0 + $0x5d8] sm:$0xff]
  %v211 = vld [vmem:[%s0 + $0x5e0] sm:$0xff]
  %v212 = vld [vmem:[%s0 + $0x5e8] sm:$0xff]
  %v213 = vld [vmem:[%s0 + $0x5f0] sm:$0xff]
  %v214 = vld [vmem:[%s0 + $0x5f8] sm:$0xff]
  %v215 = vld [vmem:[%s0 + $0x600] sm:$0xff]
  %v216 = vld [vmem:[%s0 + $0x608] sm:$0xff]
  %v217 = vld [vmem:[%s0 + $0x610] sm:$0xff]
  %v218 = vld [vmem:[%s0 + $0x618] sm:$0xff]
  %v219 = vld [vmem:[%s0 + $0x620] sm:$0xff]
  %v220 = vld [vmem:[%s0 + $0x628] sm:$0xff]
  %v221 = vld [vmem:[%s0 + $0x630] sm:$0xff]
  %v222 = vld [vmem:[%s0 + $0x638] sm:$0xff]
  %v223 = vld [vmem:[%s2] sm:$0xff]
  %v224 = vld [vmem:[%s2 + $0x8] sm:$0xff]
  %226 = vset.pattern.permute.xlu0 0
  %227 = vperm.xlu0 %226, %v223
  %v228 = vpop.permute.xlu0 %227
  %231 = vset.pattern.permute.xlu0 0
  %232 = vperm.xlu0 %231, %v224
  %v233 = vpop.permute.xlu0 %232
  %v237 = vunpack.c.l.b16 %v21
  %v238 = vunpack.c.h.b16 %v21
  %v239 = vunpack.c.l.b16 %v22
  %v240 = vunpack.c.h.b16 %v22
  %v241 = vpack.c.b16 %v239, %v237
  %v242 = vpack.c.b16 %v240, %v238
  %v444 = vunpack.c.l.b16 %v23
  %v445 = vunpack.c.h.b16 %v23
  %v446 = vunpack.c.l.b16 %v24
  %v447 = vunpack.c.h.b16 %v24
  %v448 = vunpack.c.l.b16 %v25
  %v449 = vunpack.c.h.b16 %v25
  %v450 = vunpack.c.l.b16 %v26
  %v451 = vunpack.c.h.b16 %v26
  %v452 = vunpack.c.l.b16 %v27
  %v453 = vunpack.c.h.b16 %v27
  %v454 = vunpack.c.l.b16 %v28
  %v455 = vunpack.c.h.b16 %v28
  %v456 = vunpack.c.l.b16 %v29
  %v457 = vunpack.c.h.b16 %v29
  %v458 = vunpack.c.l.b16 %v30
  %v459 = vunpack.c.h.b16 %v30
  %v460 = vunpack.c.l.b16 %v31
  %v461 = vunpack.c.h.b16 %v31
  %v462 = vunpack.c.l.b16 %v32
  %v463 = vunpack.c.h.b16 %v32
  %v464 = vunpack.c.l.b16 %v33
  %v465 = vunpack.c.h.b16 %v33
  %v466 = vunpack.c.l.b16 %v34
  %v467 = vunpack.c.h.b16 %v34
  %v468 = vunpack.c.l.b16 %v35
  %v469 = vunpack.c.h.b16 %v35
  %v470 = vunpack.c.l.b16 %v36
  %v471 = vunpack.c.h.b16 %v36
  %v472 = vunpack.c.l.b16 %v37
  %v473 = vunpack.c.h.b16 %v37
  %v474 = vunpack.c.l.b16 %v38
  %v475 = vunpack.c.h.b16 %v38
  %v476 = vunpack.c.l.b16 %v39
  %v477 = vunpack.c.h.b16 %v39
  %v478 = vunpack.c.l.b16 %v40
  %v479 = vunpack.c.h.b16 %v40
  %v480 = vunpack.c.l.b16 %v41
  %v481 = vunpack.c.h.b16 %v41
  %v482 = vunpack.c.l.b16 %v42
  %v483 = vunpack.c.h.b16 %v42
  %v484 = vunpack.c.l.b16 %v43
  %v485 = vunpack.c.h.b16 %v43
  %v486 = vunpack.c.l.b16 %v44
  %v487 = vunpack.c.h.b16 %v44
  %v488 = vunpack.c.l.b16 %v45
  %v489 = vunpack.c.h.b16 %v45
  %v490 = vunpack.c.l.b16 %v46
  %v491 = vunpack.c.h.b16 %v46
  %v492 = vunpack.c.l.b16 %v47
  %v493 = vunpack.c.h.b16 %v47
  %v494 = vunpack.c.l.b16 %v48
  %v495 = vunpack.c.h.b16 %v48
  %v496 = vunpack.c.l.b16 %v49
  %v497 = vunpack.c.h.b16 %v49
  %v498 = vunpack.c.l.b16 %v50
  %v499 = vunpack.c.h.b16 %v50
  %v500 = vunpack.c.l.b16 %v51
  %v501 = vunpack.c.h.b16 %v51
  %v502 = vunpack.c.l.b16 %v52
  %v503 = vunpack.c.h.b16 %v52
  %v504 = vunpack.c.l.b16 %v53
  %v505 = vunpack.c.h.b16 %v53
  %v506 = vunpack.c.l.b16 %v54
  %v507 = vunpack.c.h.b16 %v54
  %v508 = vunpack.c.l.b16 %v55
  %v509 = vunpack.c.h.b16 %v55
  %v510 = vunpack.c.l.b16 %v56
  %v511 = vunpack.c.h.b16 %v56
  %v512 = vunpack.c.l.b16 %v57
  %v513 = vunpack.c.h.b16 %v57
  %v514 = vunpack.c.l.b16 %v58
  %v515 = vunpack.c.h.b16 %v58
  %v516 = vunpack.c.l.b16 %v59
  %v517 = vunpack.c.h.b16 %v59
  %v518 = vunpack.c.l.b16 %v60
  %v519 = vunpack.c.h.b16 %v60
  %v520 = vunpack.c.l.b16 %v61
  %v521 = vunpack.c.h.b16 %v61
  %v522 = vunpack.c.l.b16 %v62
  %v523 = vunpack.c.h.b16 %v62
  %v524 = vunpack.c.l.b16 %v63
  %v525 = vunpack.c.h.b16 %v63
  %v526 = vunpack.c.l.b16 %v64
  %v527 = vunpack.c.h.b16 %v64
  %v528 = vunpack.c.l.b16 %v65
  %v529 = vunpack.c.h.b16 %v65
  %v530 = vunpack.c.l.b16 %v66
  %v531 = vunpack.c.h.b16 %v66
  %v532 = vunpack.c.l.b16 %v67
  %v533 = vunpack.c.h.b16 %v67
  %v534 = vunpack.c.l.b16 %v68
  %v535 = vunpack.c.h.b16 %v68
  %v536 = vunpack.c.l.b16 %v69
  %v537 = vunpack.c.h.b16 %v69
  %v538 = vunpack.c.l.b16 %v70
  %v539 = vunpack.c.h.b16 %v70
  %v540 = vunpack.c.l.b16 %v71
  %v541 = vunpack.c.h.b16 %v71
  %v542 = vunpack.c.l.b16 %v72
  %v543 = vunpack.c.h.b16 %v72
  %v544 = vunpack.c.l.b16 %v73
  %v545 = vunpack.c.h.b16 %v73
  %v546 = vunpack.c.l.b16 %v74
  %v547 = vunpack.c.h.b16 %v74
  %v548 = vunpack.c.l.b16 %v75
  %v549 = vunpack.c.h.b16 %v75
  %v550 = vunpack.c.l.b16 %v76
  %v551 = vunpack.c.h.b16 %v76
  %v552 = vunpack.c.l.b16 %v77
  %v553 = vunpack.c.h.b16 %v77
  %v554 = vunpack.c.l.b16 %v78
  %v555 = vunpack.c.h.b16 %v78
  %v556 = vunpack.c.l.b16 %v79
  %v557 = vunpack.c.h.b16 %v79
  %v558 = vunpack.c.l.b16 %v80
  %v559 = vunpack.c.h.b16 %v80
  %v560 = vunpack.c.l.b16 %v81
  %v561 = vunpack.c.h.b16 %v81
  %v562 = vunpack.c.l.b16 %v82
  %v563 = vunpack.c.h.b16 %v82
  %v564 = vunpack.c.l.b16 %v83
  %v565 = vunpack.c.h.b16 %v83
  %v566 = vunpack.c.l.b16 %v84
  %v567 = vunpack.c.h.b16 %v84
  %v568 = vunpack.c.l.b16 %v85
  %v569 = vunpack.c.h.b16 %v85
  %v570 = vunpack.c.l.b16 %v86
  %v571 = vunpack.c.h.b16 %v86
  %v572 = vunpack.c.l.b16 %v87
  %v573 = vunpack.c.h.b16 %v87
  %v574 = vunpack.c.l.b16 %v88
  %v575 = vunpack.c.h.b16 %v88
  %v576 = vunpack.c.l.b16 %v89
  %v577 = vunpack.c.h.b16 %v89
  %v578 = vunpack.c.l.b16 %v90
  %v579 = vunpack.c.h.b16 %v90
  %v580 = vunpack.c.l.b16 %v91
  %v581 = vunpack.c.h.b16 %v91
  %v582 = vunpack.c.l.b16 %v92
  %v583 = vunpack.c.h.b16 %v92
  %v584 = vunpack.c.l.b16 %v93
  %v585 = vunpack.c.h.b16 %v93
  %v586 = vunpack.c.l.b16 %v94
  %v587 = vunpack.c.h.b16 %v94
  %v588 = vunpack.c.l.b16 %v95
  %v589 = vunpack.c.h.b16 %v95
  %v590 = vunpack.c.l.b16 %v96
  %v591 = vunpack.c.h.b16 %v96
  %v592 = vunpack.c.l.b16 %v97
  %v593 = vunpack.c.h.b16 %v97
  %v594 = vunpack.c.l.b16 %v98
  %v595 = vunpack.c.h.b16 %v98
  %v596 = vunpack.c.l.b16 %v99
  %v597 = vunpack.c.h.b16 %v99
  %v598 = vunpack.c.l.b16 %v100
  %v599 = vunpack.c.h.b16 %v100
  %v600 = vunpack.c.l.b16 %v101
  %v601 = vunpack.c.h.b16 %v101
  %v602 = vunpack.c.l.b16 %v102
  %v603 = vunpack.c.h.b16 %v102
  %v604 = vunpack.c.l.b16 %v103
  %v605 = vunpack.c.h.b16 %v103
  %v606 = vunpack.c.l.b16 %v104
  %v607 = vunpack.c.h.b16 %v104
  %v608 = vunpack.c.l.b16 %v105
  %v609 = vunpack.c.h.b16 %v105
  %v610 = vunpack.c.l.b16 %v106
  %v611 = vunpack.c.h.b16 %v106
  %v612 = vunpack.c.l.b16 %v107
  %v613 = vunpack.c.h.b16 %v107
  %v614 = vunpack.c.l.b16 %v108
  %v615 = vunpack.c.h.b16 %v108
  %v616 = vunpack.c.l.b16 %v109
  %v617 = vunpack.c.h.b16 %v109
  %v618 = vunpack.c.l.b16 %v110
  %v619 = vunpack.c.h.b16 %v110
  %v620 = vunpack.c.l.b16 %v111
  %v621 = vunpack.c.h.b16 %v111
  %v622 = vunpack.c.l.b16 %v112
  %v623 = vunpack.c.h.b16 %v112
  %v624 = vunpack.c.l.b16 %v113
  %v625 = vunpack.c.h.b16 %v113
  %v626 = vunpack.c.l.b16 %v114
  %v627 = vunpack.c.h.b16 %v114
  %v628 = vunpack.c.l.b16 %v115
  %v629 = vunpack.c.h.b16 %v115
  %v630 = vunpack.c.l.b16 %v116
  %v631 = vunpack.c.h.b16 %v116
  %v632 = vunpack.c.l.b16 %v117
  %v633 = vunpack.c.h.b16 %v117
  %v634 = vunpack.c.l.b16 %v118
  %v635 = vunpack.c.h.b16 %v118
  %v636 = vunpack.c.l.b16 %v119
  %v637 = vunpack.c.h.b16 %v119
  %v638 = vunpack.c.l.b16 %v120
  %v639 = vunpack.c.h.b16 %v120
  %v640 = vunpack.c.l.b16 %v121
  %v641 = vunpack.c.h.b16 %v121
  %v642 = vunpack.c.l.b16 %v122
  %v643 = vunpack.c.h.b16 %v122
  %v644 = vunpack.c.l.b16 %v123
  %v645 = vunpack.c.h.b16 %v123
  %v646 = vunpack.c.l.b16 %v124
  %v647 = vunpack.c.h.b16 %v124
  %v648 = vunpack.c.l.b16 %v125
  %v649 = vunpack.c.h.b16 %v125
  %v650 = vunpack.c.l.b16 %v126
  %v651 = vunpack.c.h.b16 %v126
  %v652 = vunpack.c.l.b16 %v127
  %v653 = vunpack.c.h.b16 %v127
  %v654 = vunpack.c.l.b16 %v128
  %v655 = vunpack.c.h.b16 %v128
  %v656 = vunpack.c.l.b16 %v129
  %v657 = vunpack.c.h.b16 %v129
  %v658 = vunpack.c.l.b16 %v130
  %v659 = vunpack.c.h.b16 %v130
  %v660 = vunpack.c.l.b16 %v131
  %v661 = vunpack.c.h.b16 %v131
  %v662 = vunpack.c.l.b16 %v132
  %v663 = vunpack.c.h.b16 %v132
  %v664 = vunpack.c.l.b16 %v133
  %v665 = vunpack.c.h.b16 %v133
  %v666 = vunpack.c.l.b16 %v134
  %v667 = vunpack.c.h.b16 %v134
  %v668 = vunpack.c.l.b16 %v135
  %v669 = vunpack.c.h.b16 %v135
  %v670 = vunpack.c.l.b16 %v136
  %v671 = vunpack.c.h.b16 %v136
  %v672 = vunpack.c.l.b16 %v137
  %v673 = vunpack.c.h.b16 %v137
  %v674 = vunpack.c.l.b16 %v138
  %v675 = vunpack.c.h.b16 %v138
  %v676 = vunpack.c.l.b16 %v139
  %v677 = vunpack.c.h.b16 %v139
  %v678 = vunpack.c.l.b16 %v140
  %v679 = vunpack.c.h.b16 %v140
  %v680 = vunpack.c.l.b16 %v141
  %v681 = vunpack.c.h.b16 %v141
  %v682 = vunpack.c.l.b16 %v142
  %v683 = vunpack.c.h.b16 %v142
  %v684 = vunpack.c.l.b16 %v143
  %v685 = vunpack.c.h.b16 %v143
  %v686 = vunpack.c.l.b16 %v144
  %v687 = vunpack.c.h.b16 %v144
  %v688 = vunpack.c.l.b16 %v145
  %v689 = vunpack.c.h.b16 %v145
  %v690 = vunpack.c.l.b16 %v146
  %v691 = vunpack.c.h.b16 %v146
  %v692 = vunpack.c.l.b16 %v147
  %v693 = vunpack.c.h.b16 %v147
  %v694 = vunpack.c.l.b16 %v148
  %v695 = vunpack.c.h.b16 %v148
  %v696 = vunpack.c.l.b16 %v149
  %v697 = vunpack.c.h.b16 %v149
  %v698 = vunpack.c.l.b16 %v150
  %v699 = vunpack.c.h.b16 %v150
  %v700 = vunpack.c.l.b16 %v151
  %v701 = vunpack.c.h.b16 %v151
  %v702 = vunpack.c.l.b16 %v152
  %v703 = vunpack.c.h.b16 %v152
  %v704 = vunpack.c.l.b16 %v153
  %v705 = vunpack.c.h.b16 %v153
  %v706 = vunpack.c.l.b16 %v154
  %v707 = vunpack.c.h.b16 %v154
  %v708 = vunpack.c.l.b16 %v155
  %v709 = vunpack.c.h.b16 %v155
  %v710 = vunpack.c.l.b16 %v156
  %v711 = vunpack.c.h.b16 %v156
  %v712 = vunpack.c.l.b16 %v157
  %v713 = vunpack.c.h.b16 %v157
  %v714 = vunpack.c.l.b16 %v158
  %v715 = vunpack.c.h.b16 %v158
  %v716 = vunpack.c.l.b16 %v159
  %v717 = vunpack.c.h.b16 %v159
  %v718 = vunpack.c.l.b16 %v160
  %v719 = vunpack.c.h.b16 %v160
  %v720 = vunpack.c.l.b16 %v161
  %v721 = vunpack.c.h.b16 %v161
  %v722 = vunpack.c.l.b16 %v162
  %v723 = vunpack.c.h.b16 %v162
  %v724 = vunpack.c.l.b16 %v163
  %v725 = vunpack.c.h.b16 %v163
  %v726 = vunpack.c.l.b16 %v164
  %v727 = vunpack.c.h.b16 %v164
  %v728 = vunpack.c.l.b16 %v165
  %v729 = vunpack.c.h.b16 %v165
  %v730 = vunpack.c.l.b16 %v166
  %v731 = vunpack.c.h.b16 %v166
  %v732 = vunpack.c.l.b16 %v167
  %v733 = vunpack.c.h.b16 %v167
  %v734 = vunpack.c.l.b16 %v168
  %v735 = vunpack.c.h.b16 %v168
  %v736 = vunpack.c.l.b16 %v169
  %v737 = vunpack.c.h.b16 %v169
  %v738 = vunpack.c.l.b16 %v170
  %v739 = vunpack.c.h.b16 %v170
  %v740 = vunpack.c.l.b16 %v171
  %v741 = vunpack.c.h.b16 %v171
  %v742 = vunpack.c.l.b16 %v172
  %v743 = vunpack.c.h.b16 %v172
  %v744 = vunpack.c.l.b16 %v173
  %v745 = vunpack.c.h.b16 %v173
  %v746 = vunpack.c.l.b16 %v174
  %v747 = vunpack.c.h.b16 %v174
  %v748 = vunpack.c.l.b16 %v175
  %v749 = vunpack.c.h.b16 %v175
  %v750 = vunpack.c.l.b16 %v176
  %v751 = vunpack.c.h.b16 %v176
  %v752 = vunpack.c.l.b16 %v177
  %v753 = vunpack.c.h.b16 %v177
  %v754 = vunpack.c.l.b16 %v178
  %v755 = vunpack.c.h.b16 %v178
  %v756 = vunpack.c.l.b16 %v179
  %v757 = vunpack.c.h.b16 %v179
  %v758 = vunpack.c.l.b16 %v180
  %v759 = vunpack.c.h.b16 %v180
  %v760 = vunpack.c.l.b16 %v181
  %v761 = vunpack.c.h.b16 %v181
  %v762 = vunpack.c.l.b16 %v182
  %v763 = vunpack.c.h.b16 %v182
  %v764 = vunpack.c.l.b16 %v183
  %v765 = vunpack.c.h.b16 %v183
  %v766 = vunpack.c.l.b16 %v184
  %v767 = vunpack.c.h.b16 %v184
  %v768 = vunpack.c.l.b16 %v185
  %v769 = vunpack.c.h.b16 %v185
  %v770 = vunpack.c.l.b16 %v186
  %v771 = vunpack.c.h.b16 %v186
  %v772 = vunpack.c.l.b16 %v187
  %v773 = vunpack.c.h.b16 %v187
  %v774 = vunpack.c.l.b16 %v188
  %v775 = vunpack.c.h.b16 %v188
  %v776 = vunpack.c.l.b16 %v189
  %v777 = vunpack.c.h.b16 %v189
  %v778 = vunpack.c.l.b16 %v190
  %v779 = vunpack.c.h.b16 %v190
  %v780 = vunpack.c.l.b16 %v191
  %v781 = vunpack.c.h.b16 %v191
  %v782 = vunpack.c.l.b16 %v192
  %v783 = vunpack.c.h.b16 %v192
  %v784 = vunpack.c.l.b16 %v193
  %v785 = vunpack.c.h.b16 %v193
  %v786 = vunpack.c.l.b16 %v194
  %v787 = vunpack.c.h.b16 %v194
  %v788 = vunpack.c.l.b16 %v195
  %v789 = vunpack.c.h.b16 %v195
  %v790 = vunpack.c.l.b16 %v196
  %v791 = vunpack.c.h.b16 %v196
  %v792 = vunpack.c.l.b16 %v197
  %v793 = vunpack.c.h.b16 %v197
  %v794 = vunpack.c.l.b16 %v198
  %v795 = vunpack.c.h.b16 %v198
  %v796 = vunpack.c.l.b16 %v199
  %v797 = vunpack.c.h.b16 %v199
  %v798 = vunpack.c.l.b16 %v200
  %v799 = vunpack.c.h.b16 %v200
  %v800 = vunpack.c.l.b16 %v201
  %v801 = vunpack.c.h.b16 %v201
  %v802 = vunpack.c.l.b16 %v202
  %v803 = vunpack.c.h.b16 %v202
  %v804 = vunpack.c.l.b16 %v203
  %v805 = vunpack.c.h.b16 %v203
  %v806 = vunpack.c.l.b16 %v204
  %v807 = vunpack.c.h.b16 %v204
  %v808 = vunpack.c.l.b16 %v205
  %v809 = vunpack.c.h.b16 %v205
  %v810 = vunpack.c.l.b16 %v206
  %v811 = vunpack.c.h.b16 %v206
  %v812 = vunpack.c.l.b16 %v207
  %v813 = vunpack.c.h.b16 %v207
  %v814 = vunpack.c.l.b16 %v208
  %v815 = vunpack.c.h.b16 %v208
  %v816 = vunpack.c.l.b16 %v209
  %v817 = vunpack.c.h.b16 %v209
  %v818 = vunpack.c.l.b16 %v210
  %v819 = vunpack.c.h.b16 %v210
  %v820 = vunpack.c.l.b16 %v211
  %v821 = vunpack.c.h.b16 %v211
  %v822 = vunpack.c.l.b16 %v212
  %v823 = vunpack.c.h.b16 %v212
  %v824 = vunpack.c.l.b16 %v213
  %v825 = vunpack.c.h.b16 %v213
  %v826 = vunpack.c.l.b16 %v214
  %v827 = vunpack.c.h.b16 %v214
  %v828 = vunpack.c.l.b16 %v215
  %v829 = vunpack.c.h.b16 %v215
  %v830 = vunpack.c.l.b16 %v216
  %v831 = vunpack.c.h.b16 %v216
  %v832 = vunpack.c.l.b16 %v217
  %v833 = vunpack.c.h.b16 %v217
  %v834 = vunpack.c.l.b16 %v218
  %v835 = vunpack.c.h.b16 %v218
  %v836 = vunpack.c.l.b16 %v219
  %v837 = vunpack.c.h.b16 %v219
  %v838 = vunpack.c.l.b16 %v220
  %v839 = vunpack.c.h.b16 %v220
  %v840 = vunpack.c.l.b16 %v221
  %v841 = vunpack.c.h.b16 %v221
  %v842 = vunpack.c.l.b16 %v222
  %v843 = vunpack.c.h.b16 %v222
  %v844 = vpack.c.b16 %v460, %v444
  %v845 = vpack.c.b16 %v461, %v445
  %v846 = vpack.c.b16 %v462, %v446
  %v847 = vpack.c.b16 %v463, %v447
  %v848 = vpack.c.b16 %v464, %v448
  %v849 = vpack.c.b16 %v465, %v449
  %v850 = vpack.c.b16 %v466, %v450
  %v851 = vpack.c.b16 %v467, %v451
  %v852 = vpack.c.b16 %v468, %v452
  %v853 = vpack.c.b16 %v469, %v453
  %v854 = vpack.c.b16 %v470, %v454
  %v855 = vpack.c.b16 %v471, %v455
  %v856 = vpack.c.b16 %v472, %v456
  %v857 = vpack.c.b16 %v473, %v457
  %v858 = vpack.c.b16 %v474, %v458
  %v859 = vpack.c.b16 %v475, %v459
  %v860 = vpack.c.b16 %v492, %v476
  %v861 = vpack.c.b16 %v493, %v477
  %v862 = vpack.c.b16 %v494, %v478
  %v863 = vpack.c.b16 %v495, %v479
  %v864 = vpack.c.b16 %v496, %v480
  %v865 = vpack.c.b16 %v497, %v481
  %v866 = vpack.c.b16 %v498, %v482
  %v867 = vpack.c.b16 %v499, %v483
  %v868 = vpack.c.b16 %v500, %v484
  %v869 = vpack.c.b16 %v501, %v485
  %v870 = vpack.c.b16 %v502, %v486
  %v871 = vpack.c.b16 %v503, %v487
  %v872 = vpack.c.b16 %v504, %v488
  %v873 = vpack.c.b16 %v505, %v489
  %v874 = vpack.c.b16 %v506, %v490
  %v875 = vpack.c.b16 %v507, %v491
  %v876 = vpack.c.b16 %v524, %v508
  %v877 = vpack.c.b16 %v525, %v509
  %v878 = vpack.c.b16 %v526, %v510
  %v879 = vpack.c.b16 %v527, %v511
  %v880 = vpack.c.b16 %v528, %v512
  %v881 = vpack.c.b16 %v529, %v513
  %v882 = vpack.c.b16 %v530, %v514
  %v883 = vpack.c.b16 %v531, %v515
  %v884 = vpack.c.b16 %v532, %v516
  %v885 = vpack.c.b16 %v533, %v517
  %v886 = vpack.c.b16 %v534, %v518
  %v887 = vpack.c.b16 %v535, %v519
  %v888 = vpack.c.b16 %v536, %v520
  %v889 = vpack.c.b16 %v537, %v521
  %v890 = vpack.c.b16 %v538, %v522
  %v891 = vpack.c.b16 %v539, %v523
  %v892 = vpack.c.b16 %v556, %v540
  %v893 = vpack.c.b16 %v557, %v541
  %v894 = vpack.c.b16 %v558, %v542
  %v895 = vpack.c.b16 %v559, %v543
  %v896 = vpack.c.b16 %v560, %v544
  %v897 = vpack.c.b16 %v561, %v545
  %v898 = vpack.c.b16 %v562, %v546
  %v899 = vpack.c.b16 %v563, %v547
  %v900 = vpack.c.b16 %v564, %v548
  %v901 = vpack.c.b16 %v565, %v549
  %v902 = vpack.c.b16 %v566, %v550
  %v903 = vpack.c.b16 %v567, %v551
  %v904 = vpack.c.b16 %v568, %v552
  %v905 = vpack.c.b16 %v569, %v553
  %v906 = vpack.c.b16 %v570, %v554
  %v907 = vpack.c.b16 %v571, %v555
  %v908 = vpack.c.b16 %v588, %v572
  %v909 = vpack.c.b16 %v589, %v573
  %v910 = vpack.c.b16 %v590, %v574
  %v911 = vpack.c.b16 %v591, %v575
  %v912 = vpack.c.b16 %v592, %v576
  %v913 = vpack.c.b16 %v593, %v577
  %v914 = vpack.c.b16 %v594, %v578
  %v915 = vpack.c.b16 %v595, %v579
  %v916 = vpack.c.b16 %v596, %v580
  %v917 = vpack.c.b16 %v597, %v581
  %v918 = vpack.c.b16 %v598, %v582
  %v919 = vpack.c.b16 %v599, %v583
  %v920 = vpack.c.b16 %v600, %v584
  %v921 = vpack.c.b16 %v601, %v585
  %v922 = vpack.c.b16 %v602, %v586
  %v923 = vpack.c.b16 %v603, %v587
  %v924 = vpack.c.b16 %v620, %v604
  %v925 = vpack.c.b16 %v621, %v605
  %v926 = vpack.c.b16 %v622, %v606
  %v927 = vpack.c.b16 %v623, %v607
  %v928 = vpack.c.b16 %v624, %v608
  %v929 = vpack.c.b16 %v625, %v609
  %v930 = vpack.c.b16 %v626, %v610
  %v931 = vpack.c.b16 %v627, %v611
  %v932 = vpack.c.b16 %v628, %v612
  %v933 = vpack.c.b16 %v629, %v613
  %v934 = vpack.c.b16 %v630, %v614
  %v935 = vpack.c.b16 %v631, %v615
  %v936 = vpack.c.b16 %v632, %v616
  %v937 = vpack.c.b16 %v633, %v617
  %v938 = vpack.c.b16 %v634, %v618
  %v939 = vpack.c.b16 %v635, %v619
  %v940 = vpack.c.b16 %v652, %v636
  %v941 = vpack.c.b16 %v653, %v637
  %v942 = vpack.c.b16 %v654, %v638
  %v943 = vpack.c.b16 %v655, %v639
  %v944 = vpack.c.b16 %v656, %v640
  %v945 = vpack.c.b16 %v657, %v641
  %v946 = vpack.c.b16 %v658, %v642
  %v947 = vpack.c.b16 %v659, %v643
  %v948 = vpack.c.b16 %v660, %v644
  %v949 = vpack.c.b16 %v661, %v645
  %v950 = vpack.c.b16 %v662, %v646
  %v951 = vpack.c.b16 %v663, %v647
  %v952 = vpack.c.b16 %v664, %v648
  %v953 = vpack.c.b16 %v665, %v649
  %v954 = vpack.c.b16 %v666, %v650
  %v955 = vpack.c.b16 %v667, %v651
  %v956 = vpack.c.b16 %v684, %v668
  %v957 = vpack.c.b16 %v685, %v669
  %v958 = vpack.c.b16 %v686, %v670
  %v959 = vpack.c.b16 %v687, %v671
  %v960 = vpack.c.b16 %v688, %v672
  %v961 = vpack.c.b16 %v689, %v673
  %v962 = vpack.c.b16 %v690, %v674
  %v963 = vpack.c.b16 %v691, %v675
  %v964 = vpack.c.b16 %v692, %v676
  %v965 = vpack.c.b16 %v693, %v677
  %v966 = vpack.c.b16 %v694, %v678
  %v967 = vpack.c.b16 %v695, %v679
  %v968 = vpack.c.b16 %v696, %v680
  %v969 = vpack.c.b16 %v697, %v681
  %v970 = vpack.c.b16 %v698, %v682
  %v971 = vpack.c.b16 %v699, %v683
  %v972 = vpack.c.b16 %v716, %v700
  %v973 = vpack.c.b16 %v717, %v701
  %v974 = vpack.c.b16 %v718, %v702
  %v975 = vpack.c.b16 %v719, %v703
  %v976 = vpack.c.b16 %v720, %v704
  %v977 = vpack.c.b16 %v721, %v705
  %v978 = vpack.c.b16 %v722, %v706
  %v979 = vpack.c.b16 %v723, %v707
  %v980 = vpack.c.b16 %v724, %v708
  %v981 = vpack.c.b16 %v725, %v709
  %v982 = vpack.c.b16 %v726, %v710
  %v983 = vpack.c.b16 %v727, %v711
  %v984 = vpack.c.b16 %v728, %v712
  %v985 = vpack.c.b16 %v729, %v713
  %v986 = vpack.c.b16 %v730, %v714
  %v987 = vpack.c.b16 %v731, %v715
  %v988 = vpack.c.b16 %v748, %v732
  %v989 = vpack.c.b16 %v749, %v733
  %v990 = vpack.c.b16 %v750, %v734
  %v991 = vpack.c.b16 %v751, %v735
  %v992 = vpack.c.b16 %v752, %v736
  %v993 = vpack.c.b16 %v753, %v737
  %v994 = vpack.c.b16 %v754, %v738
  %v995 = vpack.c.b16 %v755, %v739
  %v996 = vpack.c.b16 %v756, %v740
  %v997 = vpack.c.b16 %v757, %v741
  %v998 = vpack.c.b16 %v758, %v742
  %v999 = vpack.c.b16 %v759, %v743
  %v1000 = vpack.c.b16 %v760, %v744
  %v1001 = vpack.c.b16 %v761, %v745
  %v1002 = vpack.c.b16 %v762, %v746
  %v1003 = vpack.c.b16 %v763, %v747
  %v1004 = vpack.c.b16 %v780, %v764
  %v1005 = vpack.c.b16 %v781, %v765
  %v1006 = vpack.c.b16 %v782, %v766
  %v1007 = vpack.c.b16 %v783, %v767
  %v1008 = vpack.c.b16 %v784, %v768
  %v1009 = vpack.c.b16 %v785, %v769
  %v1010 = vpack.c.b16 %v786, %v770
  %v1011 = vpack.c.b16 %v787, %v771
  %v1012 = vpack.c.b16 %v788, %v772
  %v1013 = vpack.c.b16 %v789, %v773
  %v1014 = vpack.c.b16 %v790, %v774
  %v1015 = vpack.c.b16 %v791, %v775
  %v1016 = vpack.c.b16 %v792, %v776
  %v1017 = vpack.c.b16 %v793, %v777
  %v1018 = vpack.c.b16 %v794, %v778
  %v1019 = vpack.c.b16 %v795, %v779
  %v1020 = vpack.c.b16 %v812, %v796
  %v1021 = vpack.c.b16 %v813, %v797
  %v1022 = vpack.c.b16 %v814, %v798
  %v1023 = vpack.c.b16 %v815, %v799
  %v1024 = vpack.c.b16 %v816, %v800
  %v1025 = vpack.c.b16 %v817, %v801
  %v1026 = vpack.c.b16 %v818, %v802
  %v1027 = vpack.c.b16 %v819, %v803
  %v1028 = vpack.c.b16 %v820, %v804
  %v1029 = vpack.c.b16 %v821, %v805
  %v1030 = vpack.c.b16 %v822, %v806
  %v1031 = vpack.c.b16 %v823, %v807
  %v1032 = vpack.c.b16 %v824, %v808
  %v1033 = vpack.c.b16 %v825, %v809
  %v1034 = vpack.c.b16 %v826, %v810
  %v1035 = vpack.c.b16 %v827, %v811
  %v1036 = vpack.c.b16 %v828, %v828
  %v1037 = vpack.c.b16 %v829, %v829
  %v1038 = vpack.c.b16 %v830, %v830
  %v1039 = vpack.c.b16 %v831, %v831
  %v1040 = vpack.c.b16 %v832, %v832
  %v1041 = vpack.c.b16 %v833, %v833
  %v1042 = vpack.c.b16 %v834, %v834
  %v1043 = vpack.c.b16 %v835, %v835
  %v1044 = vpack.c.b16 %v836, %v836
  %v1045 = vpack.c.b16 %v837, %v837
  %v1046 = vpack.c.b16 %v838, %v838
  %v1047 = vpack.c.b16 %v839, %v839
  %v1048 = vpack.c.b16 %v840, %v840
  %v1049 = vpack.c.b16 %v841, %v841
  %v1050 = vpack.c.b16 %v842, %v842
  %v1051 = vpack.c.b16 %v843, %v843
  %vm1244 = vcmask 588800
  %v1246 = vsel %vm1244, %v242, 0
  %vm1248 = vcmask 1043456
  %v1250 = vsel %vm1248, %v1036, 0
  %v1253 = vsel %vm1248, %v1037, 0
  %v1256 = vsel %vm1248, %v1038, 0
  %v1259 = vsel %vm1248, %v1039, 0
  %v1262 = vsel %vm1248, %v1040, 0
  %v1265 = vsel %vm1248, %v1041, 0
  %v1268 = vsel %vm1248, %v1042, 0
  %v1271 = vsel %vm1248, %v1043, 0
  %v1274 = vsel %vm1248, %v1044, 0
  %v1277 = vsel %vm1248, %v1045, 0
  %v1280 = vsel %vm1248, %v1046, 0
  %v1283 = vsel %vm1248, %v1047, 0
  %v1286 = vsel %vm1248, %v1048, 0
  %v1289 = vsel %vm1248, %v1049, 0
  %v1292 = vsel %vm1248, %v1050, 0
  %v1295 = vsel %vm1248, %v1051, 0
  %1297 = vmatprep.subr.bf16.mxu0 %v845
  %1298 = vmatpush1.bf16.msra.mxu0 %v844
  %1299 = vmatprep.subr.bf16.mxu0 %v861
  %1300 = vmatpush1.bf16.msra.mxu0 %v860
  %1301 = vmatprep.subr.bf16.mxu0 %v877
  %1302 = vmatpush1.bf16.msra.mxu0 %v876
  %1303 = vmatprep.subr.bf16.mxu0 %v893
  %1304 = vmatpush1.bf16.msra.mxu0 %v892
  %1305 = vmatprep.subr.bf16.mxu0 %v909
  %1306 = vmatpush1.bf16.msra.mxu0 %v908
  %1307 = vmatprep.subr.bf16.mxu0 %v925
  %1308 = vmatpush1.bf16.msra.mxu0 %v924
  %1309 = vmatprep.subr.bf16.mxu0 %v941
  %1310 = vmatpush1.bf16.msra.mxu0 %v940
  %1311 = vmatprep.subr.bf16.mxu0 %v957
  %1312 = vmatpush1.bf16.msra.mxu0 %v956
  %1313 = vmatprep.subr.bf16.mxu0 %v973
  %1314 = vmatpush1.bf16.msra.mxu0 %v972
  %1315 = vmatprep.subr.bf16.mxu0 %v989
  %1316 = vmatpush1.bf16.msra.mxu0 %v988
  %1317 = vmatprep.subr.bf16.mxu0 %v1005
  %1318 = vmatpush1.bf16.msra.mxu0 %v1004
  %1319 = vmatprep.subr.bf16.mxu0 %v1021
  %1320 = vmatpush1.bf16.msra.mxu0 %v1020
  %1321 = vmatprep.subr.bf16.mxu0 %v1253
  %1322 = vmatpush1.bf16.msra.mxu0 %v1250
  %1323 = vmatprep.subr.bf16.mxu0 0
  %1324 = vmatpush1.bf16.msra.mxu0 0
  %1325 = vmatprep.subr.bf16.mxu0 0
  %1326 = vmatpush1.bf16.msra.mxu0 0
  %1327 = vmatprep.subr.bf16.mxu0 0
  %1328 = vmatpush1.bf16.msra.mxu0 0
  %1329 = vmatprep.mubr.bf16.mxu0 %v1246
  %1330 = vmatmul.mubr.bf16.gmra.mrb[0].mxu0 %v241
  %v1331 = vpop.f32.mrb[0].mxu0
  %v1332 = vadd.f32 %v228, %v1331
  %v1333 = vpop.f32.mrb[0].mxu0
  %v1334 = vadd.f32 %v228, %v1333
  %v1335 = vpop.f32.mrb[0].mxu0
  %v1336 = vadd.f32 %v233, %v1335
  %v1337 = vpop.f32.mrb[0].mxu0
  %v1338 = vadd.f32 %v233, %v1337
  %1339 = vdwg.mxu0
  %1340 = vmatprep.subr.bf16.mxu0 %v847
  %1341 = vmatpush1.bf16.msra.mxu0 %v846
  %1342 = vmatprep.subr.bf16.mxu0 %v863
  %1343 = vmatpush1.bf16.msra.mxu0 %v862
  %1344 = vmatprep.subr.bf16.mxu0 %v879
  %1345 = vmatpush1.bf16.msra.mxu0 %v878
  %1346 = vmatprep.subr.bf16.mxu0 %v895
  %1347 = vmatpush1.bf16.msra.mxu0 %v894
  %1348 = vmatprep.subr.bf16.mxu0 %v911
  %1349 = vmatpush1.bf16.msra.mxu0 %v910
  %1350 = vmatprep.subr.bf16.mxu0 %v927
  %1351 = vmatpush1.bf16.msra.mxu0 %v926
  %1352 = vmatprep.subr.bf16.mxu0 %v943
  %1353 = vmatpush1.bf16.msra.mxu0 %v942
  %1354 = vmatprep.subr.bf16.mxu0 %v959
  %1355 = vmatpush1.bf16.msra.mxu0 %v958
  %1356 = vmatprep.subr.bf16.mxu0 %v975
  %1357 = vmatpush1.bf16.msra.mxu0 %v974
  %1358 = vmatprep.subr.bf16.mxu0 %v991
  %1359 = vmatpush1.bf16.msra.mxu0 %v990
  %1360 = vmatprep.subr.bf16.mxu0 %v1007
  %1361 = vmatpush1.bf16.msra.mxu0 %v1006
  %1362 = vmatprep.subr.bf16.mxu0 %v1023
  %1363 = vmatpush1.bf16.msra.mxu0 %v1022
  %1364 = vmatprep.subr.bf16.mxu0 %v1259
  %1365 = vmatpush1.bf16.msra.mxu0 %v1256
  %1366 = vmatprep.subr.bf16.mxu0 0
  %1367 = vmatpush1.bf16.msra.mxu0 0
  %1368 = vmatprep.subr.bf16.mxu0 0
  %1369 = vmatpush1.bf16.msra.mxu0 0
  %1370 = vmatprep.subr.bf16.mxu0 0
  %1371 = vmatpush1.bf16.msra.mxu0 0
  %1372 = vmatprep.mubr.bf16.mxu0 %v1246
  %1373 = vmatmul.mubr.bf16.gmra.mrb[0].mxu0 %v241
  %v1374 = vpop.f32.mrb[0].mxu0
  %v1375 = vadd.f32 %v228, %v1374
  %v1376 = vpop.f32.mrb[0].mxu0
  %v1377 = vadd.f32 %v228, %v1376
  %v1378 = vpop.f32.mrb[0].mxu0
  %v1379 = vadd.f32 %v233, %v1378
  %v1380 = vpop.f32.mrb[0].mxu0
  %v1381 = vadd.f32 %v233, %v1380
  %1382 = vdwg.mxu0
  %1383 = vmatprep.subr.bf16.mxu0 %v849
  %1384 = vmatpush1.bf16.msra.mxu0 %v848
  %1385 = vmatprep.subr.bf16.mxu0 %v865
  %1386 = vmatpush1.bf16.msra.mxu0 %v864
  %1387 = vmatprep.subr.bf16.mxu0 %v881
  %1388 = vmatpush1.bf16.msra.mxu0 %v880
  %1389 = vmatprep.subr.bf16.mxu0 %v897
  %1390 = vmatpush1.bf16.msra.mxu0 %v896
  %1391 = vmatprep.subr.bf16.mxu0 %v913
  %1392 = vmatpush1.bf16.msra.mxu0 %v912
  %1393 = vmatprep.subr.bf16.mxu0 %v929
  %1394 = vmatpush1.bf16.msra.mxu0 %v928
  %1395 = vmatprep.subr.bf16.mxu0 %v945
  %1396 = vmatpush1.bf16.msra.mxu0 %v944
  %1397 = vmatprep.subr.bf16.mxu0 %v961
  %1398 = vmatpush1.bf16.msra.mxu0 %v960
  %1399 = vmatprep.subr.bf16.mxu0 %v977
  %1400 = vmatpush1.bf16.msra.mxu0 %v976
  %1401 = vmatprep.subr.bf16.mxu0 %v993
  %1402 = vmatpush1.bf16.msra.mxu0 %v992
  %1403 = vmatprep.subr.bf16.mxu0 %v1009
  %1404 = vmatpush1.bf16.msra.mxu0 %v1008
  %1405 = vmatprep.subr.bf16.mxu0 %v1025
  %1406 = vmatpush1.bf16.msra.mxu0 %v1024
  %1407 = vmatprep.subr.bf16.mxu0 %v1265
  %1408 = vmatpush1.bf16.msra.mxu0 %v1262
  %1409 = vmatprep.subr.bf16.mxu0 0
  %1410 = vmatpush1.bf16.msra.mxu0 0
  %1411 = vmatprep.subr.bf16.mxu0 0
  %1412 = vmatpush1.bf16.msra.mxu0 0
  %1413 = vmatprep.subr.bf16.mxu0 0
  %1414 = vmatpush1.bf16.msra.mxu0 0
  %1415 = vmatprep.mubr.bf16.mxu0 %v1246
  %1416 = vmatmul.mubr.bf16.gmra.mrb[0].mxu0 %v241
  %v1417 = vpop.f32.mrb[0].mxu0
  %v1418 = vadd.f32 %v228, %v1417
  %v1419 = vpop.f32.mrb[0].mxu0
  %v1420 = vadd.f32 %v228, %v1419
  %v1421 = vpop.f32.mrb[0].mxu0
  %v1422 = vadd.f32 %v233, %v1421
  %v1423 = vpop.f32.mrb[0].mxu0
  %v1424 = vadd.f32 %v233, %v1423
  %1425 = vdwg.mxu0
  %1426 = vmatprep.subr.bf16.mxu0 %v851
  %1427 = vmatpush1.bf16.msra.mxu0 %v850
  %1428 = vmatprep.subr.bf16.mxu0 %v867
  %1429 = vmatpush1.bf16.msra.mxu0 %v866
  %1430 = vmatprep.subr.bf16.mxu0 %v883
  %1431 = vmatpush1.bf16.msra.mxu0 %v882
  %1432 = vmatprep.subr.bf16.mxu0 %v899
  %1433 = vmatpush1.bf16.msra.mxu0 %v898
  %1434 = vmatprep.subr.bf16.mxu0 %v915
  %1435 = vmatpush1.bf16.msra.mxu0 %v914
  %1436 = vmatprep.subr.bf16.mxu0 %v931
  %1437 = vmatpush1.bf16.msra.mxu0 %v930
  %1438 = vmatprep.subr.bf16.mxu0 %v947
  %1439 = vmatpush1.bf16.msra.mxu0 %v946
  %1440 = vmatprep.subr.bf16.mxu0 %v963
  %1441 = vmatpush1.bf16.msra.mxu0 %v962
  %1442 = vmatprep.subr.bf16.mxu0 %v979
  %1443 = vmatpush1.bf16.msra.mxu0 %v978
  %1444 = vmatprep.subr.bf16.mxu0 %v995
  %1445 = vmatpush1.bf16.msra.mxu0 %v994
  %1446 = vmatprep.subr.bf16.mxu0 %v1011
  %1447 = vmatpush1.bf16.msra.mxu0 %v1010
  %1448 = vmatprep.subr.bf16.mxu0 %v1027
  %1449 = vmatpush1.bf16.msra.mxu0 %v1026
  %1450 = vmatprep.subr.bf16.mxu0 %v1271
  %1451 = vmatpush1.bf16.msra.mxu0 %v1268
  %1452 = vmatprep.subr.bf16.mxu0 0
  %1453 = vmatpush1.bf16.msra.mxu0 0
  %1454 = vmatprep.subr.bf16.mxu0 0
  %1455 = vmatpush1.bf16.msra.mxu0 0
  %1456 = vmatprep.subr.bf16.mxu0 0
  %1457 = vmatpush1.bf16.msra.mxu0 0
  %1458 = vmatprep.mubr.bf16.mxu0 %v1246
  %1459 = vmatmul.mubr.bf16.gmra.mrb[0].mxu0 %v241
  %v1460 = vpop.f32.mrb[0].mxu0
  %v1461 = vadd.f32 %v228, %v1460
  %v1462 = vpop.f32.mrb[0].mxu0
  %v1463 = vadd.f32 %v228, %v1462
  %v1464 = vpop.f32.mrb[0].mxu0
  %v1465 = vadd.f32 %v233, %v1464
  %v1466 = vpop.f32.mrb[0].mxu0
  %v1467 = vadd.f32 %v233, %v1466
  %1468 = vdwg.mxu0
  %1469 = vmatprep.subr.bf16.mxu0 %v853
  %1470 = vmatpush1.bf16.msra.mxu0 %v852
  %1471 = vmatprep.subr.bf16.mxu0 %v869
  %1472 = vmatpush1.bf16.msra.mxu0 %v868
  %1473 = vmatprep.subr.bf16.mxu0 %v885
  %1474 = vmatpush1.bf16.msra.mxu0 %v884
  %1475 = vmatprep.subr.bf16.mxu0 %v901
  %1476 = vmatpush1.bf16.msra.mxu0 %v900
  %1477 = vmatprep.subr.bf16.mxu0 %v917
  %1478 = vmatpush1.bf16.msra.mxu0 %v916
  %1479 = vmatprep.subr.bf16.mxu0 %v933
  %1480 = vmatpush1.bf16.msra.mxu0 %v932
  %1481 = vmatprep.subr.bf16.mxu0 %v949
  %1482 = vmatpush1.bf16.msra.mxu0 %v948
  %1483 = vmatprep.subr.bf16.mxu0 %v965
  %1484 = vmatpush1.bf16.msra.mxu0 %v964
  %1485 = vmatprep.subr.bf16.mxu0 %v981
  %1486 = vmatpush1.bf16.msra.mxu0 %v980
  %1487 = vmatprep.subr.bf16.mxu0 %v997
  %1488 = vmatpush1.bf16.msra.mxu0 %v996
  %1489 = vmatprep.subr.bf16.mxu0 %v1013
  %1490 = vmatpush1.bf16.msra.mxu0 %v1012
  %1491 = vmatprep.subr.bf16.mxu0 %v1029
  %1492 = vmatpush1.bf16.msra.mxu0 %v1028
  %1493 = vmatprep.subr.bf16.mxu0 %v1277
  %1494 = vmatpush1.bf16.msra.mxu0 %v1274
  %1495 = vmatprep.subr.bf16.mxu0 0
  %1496 = vmatpush1.bf16.msra.mxu0 0
  %1497 = vmatprep.subr.bf16.mxu0 0
  %1498 = vmatpush1.bf16.msra.mxu0 0
  %1499 = vmatprep.subr.bf16.mxu0 0
  %1500 = vmatpush1.bf16.msra.mxu0 0
  %1501 = vmatprep.mubr.bf16.mxu0 %v1246
  %1502 = vmatmul.mubr.bf16.gmra.mrb[0].mxu0 %v241
  %v1503 = vpop.f32.mrb[0].mxu0
  %v1504 = vadd.f32 %v228, %v1503
  %v1505 = vpop.f32.mrb[0].mxu0
  %v1506 = vadd.f32 %v228, %v1505
  %v1507 = vpop.f32.mrb[0].mxu0
  %v1508 = vadd.f32 %v233, %v1507
  %v1509 = vpop.f32.mrb[0].mxu0
  %v1510 = vadd.f32 %v233, %v1509
  %1511 = vdwg.mxu0
  %1512 = vmatprep.subr.bf16.mxu0 %v855
  %1513 = vmatpush1.bf16.msra.mxu0 %v854
  %1514 = vmatprep.subr.bf16.mxu0 %v871
  %1515 = vmatpush1.bf16.msra.mxu0 %v870
  %1516 = vmatprep.subr.bf16.mxu0 %v887
  %1517 = vmatpush1.bf16.msra.mxu0 %v886
  %1518 = vmatprep.subr.bf16.mxu0 %v903
  %1519 = vmatpush1.bf16.msra.mxu0 %v902
  %1520 = vmatprep.subr.bf16.mxu0 %v919
  %1521 = vmatpush1.bf16.msra.mxu0 %v918
  %1522 = vmatprep.subr.bf16.mxu0 %v935
  %1523 = vmatpush1.bf16.msra.mxu0 %v934
  %1524 = vmatprep.subr.bf16.mxu0 %v951
  %1525 = vmatpush1.bf16.msra.mxu0 %v950
  %1526 = vmatprep.subr.bf16.mxu0 %v967
  %1527 = vmatpush1.bf16.msra.mxu0 %v966
  %1528 = vmatprep.subr.bf16.mxu0 %v983
  %1529 = vmatpush1.bf16.msra.mxu0 %v982
  %1530 = vmatprep.subr.bf16.mxu0 %v999
  %1531 = vmatpush1.bf16.msra.mxu0 %v998
  %1532 = vmatprep.subr.bf16.mxu0 %v1015
  %1533 = vmatpush1.bf16.msra.mxu0 %v1014
  %1534 = vmatprep.subr.bf16.mxu0 %v1031
  %1535 = vmatpush1.bf16.msra.mxu0 %v1030
  %1536 = vmatprep.subr.bf16.mxu0 %v1283
  %1537 = vmatpush1.bf16.msra.mxu0 %v1280
  %1538 = vmatprep.subr.bf16.mxu0 0
  %1539 = vmatpush1.bf16.msra.mxu0 0
  %1540 = vmatprep.subr.bf16.mxu0 0
  %1541 = vmatpush1.bf16.msra.mxu0 0
  %1542 = vmatprep.subr.bf16.mxu0 0
  %1543 = vmatpush1.bf16.msra.mxu0 0
  %1544 = vmatprep.mubr.bf16.mxu0 %v1246
  %1545 = vmatmul.mubr.bf16.gmra.mrb[0].mxu0 %v241
  %v1546 = vpop.f32.mrb[0].mxu0
  %v1547 = vadd.f32 %v228, %v1546
  %v1548 = vpop.f32.mrb[0].mxu0
  %v1549 = vadd.f32 %v228, %v1548
  %v1550 = vpop.f32.mrb[0].mxu0
  %v1551 = vadd.f32 %v233, %v1550
  %v1552 = vpop.f32.mrb[0].mxu0
  %v1553 = vadd.f32 %v233, %v1552
  %1554 = vdwg.mxu0
  %1555 = vmatprep.subr.bf16.mxu0 %v857
  %1556 = vmatpush1.bf16.msra.mxu0 %v856
  %1557 = vmatprep.subr.bf16.mxu0 %v873
  %1558 = vmatpush1.bf16.msra.mxu0 %v872
  %1559 = vmatprep.subr.bf16.mxu0 %v889
  %1560 = vmatpush1.bf16.msra.mxu0 %v888
  %1561 = vmatprep.subr.bf16.mxu0 %v905
  %1562 = vmatpush1.bf16.msra.mxu0 %v904
  %1563 = vmatprep.subr.bf16.mxu0 %v921
  %1564 = vmatpush1.bf16.msra.mxu0 %v920
  %1565 = vmatprep.subr.bf16.mxu0 %v937
  %1566 = vmatpush1.bf16.msra.mxu0 %v936
  %1567 = vmatprep.subr.bf16.mxu0 %v953
  %1568 = vmatpush1.bf16.msra.mxu0 %v952
  %1569 = vmatprep.subr.bf16.mxu0 %v969
  %1570 = vmatpush1.bf16.msra.mxu0 %v968
  %1571 = vmatprep.subr.bf16.mxu0 %v985
  %1572 = vmatpush1.bf16.msra.mxu0 %v984
  %1573 = vmatprep.subr.bf16.mxu0 %v1001
  %1574 = vmatpush1.bf16.msra.mxu0 %v1000
  %1575 = vmatprep.subr.bf16.mxu0 %v1017
  %1576 = vmatpush1.bf16.msra.mxu0 %v1016
  %1577 = vmatprep.subr.bf16.mxu0 %v1033
  %1578 = vmatpush1.bf16.msra.mxu0 %v1032
  %1579 = vmatprep.subr.bf16.mxu0 %v1289
  %1580 = vmatpush1.bf16.msra.mxu0 %v1286
  %1581 = vmatprep.subr.bf16.mxu0 0
  %1582 = vmatpush1.bf16.msra.mxu0 0
  %1583 = vmatprep.subr.bf16.mxu0 0
  %1584 = vmatpush1.bf16.msra.mxu0 0
  %1585 = vmatprep.subr.bf16.mxu0 0
  %1586 = vmatpush1.bf16.msra.mxu0 0
  %1587 = vmatprep.mubr.bf16.mxu0 %v1246
  %1588 = vmatmul.mubr.bf16.gmra.mrb[0].mxu0 %v241
  %v1589 = vpop.f32.mrb[0].mxu0
  %v1590 = vadd.f32 %v228, %v1589
  %v1591 = vpop.f32.mrb[0].mxu0
  %v1592 = vadd.f32 %v228, %v1591
  %v1593 = vpop.f32.mrb[0].mxu0
  %v1594 = vadd.f32 %v233, %v1593
  %v1595 = vpop.f32.mrb[0].mxu0
  %v1596 = vadd.f32 %v233, %v1595
  %1597 = vdwg.mxu0
  %1598 = vmatprep.subr.bf16.mxu0 %v859
  %1599 = vmatpush1.bf16.msra.mxu0 %v858
  %1600 = vmatprep.subr.bf16.mxu0 %v875
  %1601 = vmatpush1.bf16.msra.mxu0 %v874
  %1602 = vmatprep.subr.bf16.mxu0 %v891
  %1603 = vmatpush1.bf16.msra.mxu0 %v890
  %1604 = vmatprep.subr.bf16.mxu0 %v907
  %1605 = vmatpush1.bf16.msra.mxu0 %v906
  %1606 = vmatprep.subr.bf16.mxu0 %v923
  %1607 = vmatpush1.bf16.msra.mxu0 %v922
  %1608 = vmatprep.subr.bf16.mxu0 %v939
  %1609 = vmatpush1.bf16.msra.mxu0 %v938
  %1610 = vmatprep.subr.bf16.mxu0 %v955
  %1611 = vmatpush1.bf16.msra.mxu0 %v954
  %1612 = vmatprep.subr.bf16.mxu0 %v971
  %1613 = vmatpush1.bf16.msra.mxu0 %v970
  %1614 = vmatprep.subr.bf16.mxu0 %v987
  %1615 = vmatpush1.bf16.msra.mxu0 %v986
  %1616 = vmatprep.subr.bf16.mxu0 %v1003
  %1617 = vmatpush1.bf16.msra.mxu0 %v1002
  %1618 = vmatprep.subr.bf16.mxu0 %v1019
  %1619 = vmatpush1.bf16.msra.mxu0 %v1018
  %1620 = vmatprep.subr.bf16.mxu0 %v1035
  %1621 = vmatpush1.bf16.msra.mxu0 %v1034
  %1622 = vmatprep.subr.bf16.mxu0 %v1295
  %1623 = vmatpush1.bf16.msra.mxu0 %v1292
  %1624 = vmatprep.subr.bf16.mxu0 0
  %1625 = vmatpush1.bf16.msra.mxu0 0
  %1626 = vmatprep.subr.bf16.mxu0 0
  %1627 = vmatpush1.bf16.msra.mxu0 0
  %1628 = vmatprep.subr.bf16.mxu0 0
  %1629 = vmatpush1.bf16.msra.mxu0 0
  %1630 = vmatprep.mubr.bf16.mxu0 %v1246
  %1631 = vmatmul.mubr.bf16.gmra.mrb[0].mxu0 %v241
  %v1632 = vpop.f32.mrb[0].mxu0
  %v1633 = vadd.f32 %v228, %v1632
  %v1634 = vpop.f32.mrb[0].mxu0
  %v1635 = vadd.f32 %v228, %v1634
  %v1636 = vpop.f32.mrb[0].mxu0
  %v1637 = vadd.f32 %v233, %v1636
  %v1638 = vpop.f32.mrb[0].mxu0
  %v1639 = vadd.f32 %v233, %v1638
  %1640 = vdwg.mxu0
  %v1641 = vadd.f32 %v1332, %v1334
  %v1642 = vadd.f32 %v1641, %v1375
  %v1643 = vadd.f32 %v1642, %v1377
  %v1644 = vadd.f32 %v1643, %v1418
  %v1645 = vadd.f32 %v1644, %v1420
  %v1646 = vadd.f32 %v1645, %v1461
  %v1647 = vadd.f32 %v1646, %v1463
  %v1648 = vadd.f32 %v1647, %v1504
  %v1649 = vadd.f32 %v1648, %v1506
  %v1650 = vadd.f32 %v1649, %v1547
  %v1651 = vadd.f32 %v1650, %v1549
  %v1652 = vadd.f32 %v1651, %v1590
  %v1653 = vadd.f32 %v1652, %v1592
  %v1654 = vadd.f32 %v1653, %v1633
  %v1655 = vadd.f32 %v1654, %v1635
  %1656 = vadd.xlane.f32.xlu0 %v1655
  %v1657 = vpop.xlane.xlu0 %1656
  %v1658 = vadd.f32 %v1336, %v1338
  %v1659 = vadd.f32 %v1658, %v1379
  %v1660 = vadd.f32 %v1659, %v1381
  %v1661 = vadd.f32 %v1660, %v1422
  %v1662 = vadd.f32 %v1661, %v1424
  %v1663 = vadd.f32 %v1662, %v1465
  %v1664 = vadd.f32 %v1663, %v1467
  %v1665 = vadd.f32 %v1664, %v1508
  %v1666 = vadd.f32 %v1665, %v1510
  %v1667 = vadd.f32 %v1666, %v1551
  %v1668 = vadd.f32 %v1667, %v1553
  %v1669 = vadd.f32 %v1668, %v1594
  %v1670 = vadd.f32 %v1669, %v1596
  %v1671 = vadd.f32 %v1670, %v1637
  %v1672 = vadd.f32 %v1671, %v1639
  %1673 = vadd.xlane.f32.xlu0 %v1672
  %v1674 = vpop.xlane.xlu0 %1673
  %v1675 = vmul.f32 %v1657, 0.00048828125
  %v1676 = vmul.f32 %v1674, 0.00048828125
  %v1677 = vsub.f32 %v1332, %v1675
  %v1678 = vsub.f32 %v1334, %v1675
  %v1679 = vsub.f32 %v1375, %v1675
  %v1680 = vsub.f32 %v1377, %v1675
  %v1681 = vsub.f32 %v1418, %v1675
  %v1682 = vsub.f32 %v1420, %v1675
  %v1683 = vsub.f32 %v1461, %v1675
  %v1684 = vsub.f32 %v1463, %v1675
  %v1685 = vsub.f32 %v1504, %v1675
  %v1686 = vsub.f32 %v1506, %v1675
  %v1687 = vsub.f32 %v1547, %v1675
  %v1688 = vsub.f32 %v1549, %v1675
  %v1689 = vsub.f32 %v1590, %v1675
  %v1690 = vsub.f32 %v1592, %v1675
  %v1691 = vsub.f32 %v1633, %v1675
  %v1692 = vsub.f32 %v1635, %v1675
  %v1693 = vsub.f32 %v1336, %v1676
  %v1694 = vsub.f32 %v1338, %v1676
  %v1695 = vsub.f32 %v1379, %v1676
  %v1696 = vsub.f32 %v1381, %v1676
  %v1697 = vsub.f32 %v1422, %v1676
  %v1698 = vsub.f32 %v1424, %v1676
  %v1699 = vsub.f32 %v1465, %v1676
  %v1700 = vsub.f32 %v1467, %v1676
  %v1701 = vsub.f32 %v1508, %v1676
  %v1702 = vsub.f32 %v1510, %v1676
  %v1703 = vsub.f32 %v1551, %v1676
  %v1704 = vsub.f32 %v1553, %v1676
  %v1705 = vsub.f32 %v1594, %v1676
  %v1706 = vsub.f32 %v1596, %v1676
  %v1707 = vsub.f32 %v1637, %v1676
  %v1708 = vsub.f32 %v1639, %v1676
  %v1709 = vmul.f32 %v1677, %v1677
  %v1710 = vmul.f32 %v1678, %v1678
  %v1711 = vmul.f32 %v1679, %v1679
  %v1712 = vmul.f32 %v1680, %v1680
  %v1713 = vmul.f32 %v1681, %v1681
  %v1714 = vmul.f32 %v1682, %v1682
  %v1715 = vmul.f32 %v1683, %v1683
  %v1716 = vmul.f32 %v1684, %v1684
  %v1717 = vmul.f32 %v1685, %v1685
  %v1718 = vmul.f32 %v1686, %v1686
  %v1719 = vmul.f32 %v1687, %v1687
  %v1720 = vmul.f32 %v1688, %v1688
  %v1721 = vmul.f32 %v1689, %v1689
  %v1722 = vmul.f32 %v1690, %v1690
  %v1723 = vmul.f32 %v1691, %v1691
  %v1724 = vmul.f32 %v1692, %v1692
  %v1725 = vmul.f32 %v1693, %v1693
  %v1726 = vmul.f32 %v1694, %v1694
  %v1727 = vmul.f32 %v1695, %v1695
  %v1728 = vmul.f32 %v1696, %v1696
  %v1729 = vmul.f32 %v1697, %v1697
  %v1730 = vmul.f32 %v1698, %v1698
  %v1731 = vmul.f32 %v1699, %v1699
  %v1732 = vmul.f32 %v1700, %v1700
  %v1733 = vmul.f32 %v1701, %v1701
  %v1734 = vmul.f32 %v1702, %v1702
  %v1735 = vmul.f32 %v1703, %v1703
  %v1736 = vmul.f32 %v1704, %v1704
  %v1737 = vmul.f32 %v1705, %v1705
  %v1738 = vmul.f32 %v1706, %v1706
  %v1739 = vmul.f32 %v1707, %v1707
  %v1740 = vmul.f32 %v1708, %v1708
  %v1741 = vadd.f32 %v1709, %v1710
  %v1742 = vadd.f32 %v1741, %v1711
  %v1743 = vadd.f32 %v1742, %v1712
  %v1744 = vadd.f32 %v1743, %v1713
  %v1745 = vadd.f32 %v1744, %v1714
  %v1746 = vadd.f32 %v1745, %v1715
  %v1747 = vadd.f32 %v1746, %v1716
  %v1748 = vadd.f32 %v1747, %v1717
  %v1749 = vadd.f32 %v1748, %v1718
  %v1750 = vadd.f32 %v1749, %v1719
  %v1751 = vadd.f32 %v1750, %v1720
  %v1752 = vadd.f32 %v1751, %v1721
  %v1753 = vadd.f32 %v1752, %v1722
  %v1754 = vadd.f32 %v1753, %v1723
  %v1755 = vadd.f32 %v1754, %v1724
  %1756 = vadd.xlane.f32.xlu0 %v1755
  %v1757 = vpop.xlane.xlu0 %1756
  %v1758 = vadd.f32 %v1725, %v1726
  %v1759 = vadd.f32 %v1758, %v1727
  %v1760 = vadd.f32 %v1759, %v1728
  %v1761 = vadd.f32 %v1760, %v1729
  %v1762 = vadd.f32 %v1761, %v1730
  %v1763 = vadd.f32 %v1762, %v1731
  %v1764 = vadd.f32 %v1763, %v1732
  %v1765 = vadd.f32 %v1764, %v1733
  %v1766 = vadd.f32 %v1765, %v1734
  %v1767 = vadd.f32 %v1766, %v1735
  %v1768 = vadd.f32 %v1767, %v1736
  %v1769 = vadd.f32 %v1768, %v1737
  %v1770 = vadd.f32 %v1769, %v1738
  %v1771 = vadd.f32 %v1770, %v1739
  %v1772 = vadd.f32 %v1771, %v1740
  %1773 = vadd.xlane.f32.xlu0 %v1772
  %v1774 = vpop.xlane.xlu0 %1773
  %v1775 = vmul.f32 %v1757, 0.00048828125
  %v1776 = vmul.f32 %v1774, 0.00048828125
  %v1777 = vld [vmem:[%s3] sm:$0xff]
  %v1778 = vld [vmem:[%s3 + $0x8] sm:$0xff]
  %v1779 = vadd.f32 %v1775, 1e-05
  %v1780 = vadd.f32 %v1776, 1e-05
  %v1781 = vrsqrt.pop %v1779
  %v1782 = vrsqrt.pop %v1780
  %v1783 = vmul.f32 %v1777, %v1781
  %v1784 = vmul.f32 %v1778, %v1782
  %1786 = vset.pattern.permute.xlu0 0
  %1787 = vperm.xlu0 %1786, %v1783
  %v1788 = vpop.permute.xlu0 %1787
  %1791 = vset.pattern.permute.xlu0 0
  %1792 = vperm.xlu0 %1791, %v1784
  %v1793 = vpop.permute.xlu0 %1792
  %v1795 = vmul.f32 %v1677, %v1788
  %v1796 = vmul.f32 %v1678, %v1788
  %v1797 = vmul.f32 %v1679, %v1788
  %v1798 = vmul.f32 %v1680, %v1788
  %v1799 = vmul.f32 %v1681, %v1788
  %v1800 = vmul.f32 %v1682, %v1788
  %v1801 = vmul.f32 %v1683, %v1788
  %v1802 = vmul.f32 %v1684, %v1788
  %v1803 = vmul.f32 %v1685, %v1788
  %v1804 = vmul.f32 %v1686, %v1788
  %v1805 = vmul.f32 %v1687, %v1788
  %v1806 = vmul.f32 %v1688, %v1788
  %v1807 = vmul.f32 %v1689, %v1788
  %v1808 = vmul.f32 %v1690, %v1788
  %v1809 = vmul.f32 %v1691, %v1788
  %v1810 = vmul.f32 %v1692, %v1788
  %v1811 = vmul.f32 %v1693, %v1793
  %v1812 = vmul.f32 %v1694, %v1793
  %v1813 = vmul.f32 %v1695, %v1793
  %v1814 = vmul.f32 %v1696, %v1793
  %v1815 = vmul.f32 %v1697, %v1793
  %v1816 = vmul.f32 %v1698, %v1793
  %v1817 = vmul.f32 %v1699, %v1793
  %v1818 = vmul.f32 %v1700, %v1793
  %v1819 = vmul.f32 %v1701, %v1793
  %v1820 = vmul.f32 %v1702, %v1793
  %v1821 = vmul.f32 %v1703, %v1793
  %v1822 = vmul.f32 %v1704, %v1793
  %v1823 = vmul.f32 %v1705, %v1793
  %v1824 = vmul.f32 %v1706, %v1793
  %v1825 = vmul.f32 %v1707, %v1793
  %v1826 = vmul.f32 %v1708, %v1793
  %v1827 = vld [vmem:[%s4] sm:$0xff]
  %v1828 = vld [vmem:[%s4 + $0x8] sm:$0xff]
  %1830 = vset.pattern.permute.xlu0 0
  %1831 = vperm.xlu0 %1830, %v1827
  %v1832 = vpop.permute.xlu0 %1831
  %1835 = vset.pattern.permute.xlu0 0
  %1836 = vperm.xlu0 %1835, %v1828
  %v1837 = vpop.permute.xlu0 %1836
  %v1839 = vadd.f32 %v1795, %v1832
  %v1840 = vadd.f32 %v1796, %v1832
  %v1841 = vadd.f32 %v1797, %v1832
  %v1842 = vadd.f32 %v1798, %v1832
  %v1843 = vadd.f32 %v1799, %v1832
  %v1844 = vadd.f32 %v1800, %v1832
  %v1845 = vadd.f32 %v1801, %v1832
  %v1846 = vadd.f32 %v1802, %v1832
  %v1847 = vadd.f32 %v1803, %v1832
  %v1848 = vadd.f32 %v1804, %v1832
  %v1849 = vadd.f32 %v1805, %v1832
  %v1850 = vadd.f32 %v1806, %v1832
  %v1851 = vadd.f32 %v1807, %v1832
  %v1852 = vadd.f32 %v1808, %v1832
  %v1853 = vadd.f32 %v1809, %v1832
  %v1854 = vadd.f32 %v1810, %v1832
  %v1855 = vadd.f32 %v1811, %v1837
  %v1856 = vadd.f32 %v1812, %v1837
  %v1857 = vadd.f32 %v1813, %v1837
  %v1858 = vadd.f32 %v1814, %v1837
  %v1859 = vadd.f32 %v1815, %v1837
  %v1860 = vadd.f32 %v1816, %v1837
  %v1861 = vadd.f32 %v1817, %v1837
  %v1862 = vadd.f32 %v1818, %v1837
  %v1863 = vadd.f32 %v1819, %v1837
  %v1864 = vadd.f32 %v1820, %v1837
  %v1865 = vadd.f32 %v1821, %v1837
  %v1866 = vadd.f32 %v1822, %v1837
  %v1867 = vadd.f32 %v1823, %v1837
  %v1868 = vadd.f32 %v1824, %v1837
  %v1869 = vadd.f32 %v1825, %v1837
  %v1870 = vadd.f32 %v1826, %v1837
  %v1871 = vmul.f32 %v1839, 0.2
  %v1872 = vmul.f32 %v1840, 0.2
  %v1873 = vmul.f32 %v1841, 0.2
  %v1874 = vmul.f32 %v1842, 0.2
  %v1875 = vmul.f32 %v1843, 0.2
  %v1876 = vmul.f32 %v1844, 0.2
  %v1877 = vmul.f32 %v1845, 0.2
  %v1878 = vmul.f32 %v1846, 0.2
  %v1879 = vmul.f32 %v1847, 0.2
  %v1880 = vmul.f32 %v1848, 0.2
  %v1881 = vmul.f32 %v1849, 0.2
  %v1882 = vmul.f32 %v1850, 0.2
  %v1883 = vmul.f32 %v1851, 0.2
  %v1884 = vmul.f32 %v1852, 0.2
  %v1885 = vmul.f32 %v1853, 0.2
  %v1886 = vmul.f32 %v1854, 0.2
  %v1887 = vmul.f32 %v1855, 0.2
  %v1888 = vmul.f32 %v1856, 0.2
  %v1889 = vmul.f32 %v1857, 0.2
  %v1890 = vmul.f32 %v1858, 0.2
  %v1891 = vmul.f32 %v1859, 0.2
  %v1892 = vmul.f32 %v1860, 0.2
  %v1893 = vmul.f32 %v1861, 0.2
  %v1894 = vmul.f32 %v1862, 0.2
  %v1895 = vmul.f32 %v1863, 0.2
  %v1896 = vmul.f32 %v1864, 0.2
  %v1897 = vmul.f32 %v1865, 0.2
  %v1898 = vmul.f32 %v1866, 0.2
  %v1899 = vmul.f32 %v1867, 0.2
  %v1900 = vmul.f32 %v1868, 0.2
  %v1901 = vmul.f32 %v1869, 0.2
  %v1902 = vmul.f32 %v1870, 0.2
  %v1903 = vmax.f32 %v1839, %v1871
  %v1904 = vmax.f32 %v1840, %v1872
  %v1905 = vmax.f32 %v1841, %v1873
  %v1906 = vmax.f32 %v1842, %v1874
  %v1907 = vmax.f32 %v1843, %v1875
  %v1908 = vmax.f32 %v1844, %v1876
  %v1909 = vmax.f32 %v1845, %v1877
  %v1910 = vmax.f32 %v1846, %v1878
  %v1911 = vmax.f32 %v1847, %v1879
  %v1912 = vmax.f32 %v1848, %v1880
  %v1913 = vmax.f32 %v1849, %v1881
  %v1914 = vmax.f32 %v1850, %v1882
  %v1915 = vmax.f32 %v1851, %v1883
  %v1916 = vmax.f32 %v1852, %v1884
  %v1917 = vmax.f32 %v1853, %v1885
  %v1918 = vmax.f32 %v1854, %v1886
  %v1919 = vmax.f32 %v1855, %v1887
  %v1920 = vmax.f32 %v1856, %v1888
  %v1921 = vmax.f32 %v1857, %v1889
  %v1922 = vmax.f32 %v1858, %v1890
  %v1923 = vmax.f32 %v1859, %v1891
  %v1924 = vmax.f32 %v1860, %v1892
  %v1925 = vmax.f32 %v1861, %v1893
  %v1926 = vmax.f32 %v1862, %v1894
  %v1927 = vmax.f32 %v1863, %v1895
  %v1928 = vmax.f32 %v1864, %v1896
  %v1929 = vmax.f32 %v1865, %v1897
  %v1930 = vmax.f32 %v1866, %v1898
  %v1931 = vmax.f32 %v1867, %v1899
  %v1932 = vmax.f32 %v1868, %v1900
  %v1933 = vmax.f32 %v1869, %v1901
  %v1934 = vmax.f32 %v1870, %v1902
  %v1935 = vpack.c.bf16 %v1919, %v1903
  %v1936 = vpack.c.bf16 %v1920, %v1904
  %v1937 = vpack.c.bf16 %v1921, %v1905
  %v1938 = vpack.c.bf16 %v1922, %v1906
  %v1939 = vpack.c.bf16 %v1923, %v1907
  %v1940 = vpack.c.bf16 %v1924, %v1908
  %v1941 = vpack.c.bf16 %v1925, %v1909
  %v1942 = vpack.c.bf16 %v1926, %v1910
  %v1943 = vpack.c.bf16 %v1927, %v1911
  %v1944 = vpack.c.bf16 %v1928, %v1912
  %v1945 = vpack.c.bf16 %v1929, %v1913
  %v1946 = vpack.c.bf16 %v1930, %v1914
  %v1947 = vpack.c.bf16 %v1931, %v1915
  %v1948 = vpack.c.bf16 %v1932, %v1916
  %v1949 = vpack.c.bf16 %v1933, %v1917
  %v1950 = vpack.c.bf16 %v1934, %v1918
  %v1967 = vunpack.c.l.b16 %v1935
  %v1968 = vunpack.c.l.b16 %v1936
  %v1969 = vunpack.c.l.b16 %v1937
  %v1970 = vunpack.c.l.b16 %v1938
  %v1971 = vunpack.c.l.b16 %v1939
  %v1972 = vunpack.c.l.b16 %v1940
  %v1973 = vunpack.c.l.b16 %v1941
  %v1974 = vunpack.c.l.b16 %v1942
  %v1975 = vunpack.c.l.b16 %v1943
  %v1976 = vunpack.c.l.b16 %v1944
  %v1977 = vunpack.c.l.b16 %v1945
  %v1978 = vunpack.c.l.b16 %v1946
  %v1979 = vunpack.c.l.b16 %v1947
  %v1980 = vunpack.c.l.b16 %v1948
  %v1981 = vunpack.c.l.b16 %v1949
  %v1982 = vunpack.c.l.b16 %v1950
  %v1983 = vunpack.c.h.b16 %v1935
  %v1984 = vunpack.c.h.b16 %v1936
  %v1985 = vunpack.c.h.b16 %v1937
  %v1986 = vunpack.c.h.b16 %v1938
  %v1987 = vunpack.c.h.b16 %v1939
  %v1988 = vunpack.c.h.b16 %v1940
  %v1989 = vunpack.c.h.b16 %v1941
  %v1990 = vunpack.c.h.b16 %v1942
  %v1991 = vunpack.c.h.b16 %v1943
  %v1992 = vunpack.c.h.b16 %v1944
  %v1993 = vunpack.c.h.b16 %v1945
  %v1994 = vunpack.c.h.b16 %v1946
  %v1995 = vunpack.c.h.b16 %v1947
  %v1996 = vunpack.c.h.b16 %v1948
  %v1997 = vunpack.c.h.b16 %v1949
  %v1998 = vunpack.c.h.b16 %v1950
  %v1999 = vpack.c.b16 %v1968, %v1967
  %v2000 = vpack.c.b16 %v1970, %v1969
  %v2001 = vpack.c.b16 %v1972, %v1971
  %v2002 = vpack.c.b16 %v1974, %v1973
  %v2003 = vpack.c.b16 %v1976, %v1975
  %v2004 = vpack.c.b16 %v1978, %v1977
  %v2005 = vpack.c.b16 %v1980, %v1979
  %v2006 = vpack.c.b16 %v1982, %v1981
  %v2007 = vpack.c.b16 %v1984, %v1983
  %v2008 = vpack.c.b16 %v1986, %v1985
  %v2009 = vpack.c.b16 %v1988, %v1987
  %v2010 = vpack.c.b16 %v1990, %v1989
  %v2011 = vpack.c.b16 %v1992, %v1991
  %v2012 = vpack.c.b16 %v1994, %v1993
  %v2013 = vpack.c.b16 %v1996, %v1995
  %v2014 = vpack.c.b16 %v1998, %v1997
  %2031 = vst [vmem:[%s5] sm:$0xff] %v1999
  %2032 = vst [vmem:[%s5 + $0x8] sm:$0xff] %v2000
  %2033 = vst [vmem:[%s5 + $0x10] sm:$0xff] %v2001
  %2034 = vst [vmem:[%s5 + $0x18] sm:$0xff] %v2002
  %2035 = vst [vmem:[%s5 + $0x20] sm:$0xff] %v2003
  %2036 = vst [vmem:[%s5 + $0x28] sm:$0xff] %v2004
  %2037 = vst [vmem:[%s5 + $0x30] sm:$0xff] %v2005
  %2038 = vst [vmem:[%s5 + $0x38] sm:$0xff] %v2006
  %2039 = vst [vmem:[%s5 + $0x40] sm:$0xff] %v2007
  %2040 = vst [vmem:[%s5 + $0x48] sm:$0xff] %v2008
  %2041 = vst [vmem:[%s5 + $0x50] sm:$0xff] %v2009
  %2042 = vst [vmem:[%s5 + $0x58] sm:$0xff] %v2010
  %2043 = vst [vmem:[%s5 + $0x60] sm:$0xff] %v2011
  %2044 = vst [vmem:[%s5 + $0x68] sm:$0xff] %v2012
  %2045 = vst [vmem:[%s5 + $0x70] sm:$0xff] %v2013
  %2046 = vst [vmem:[%s5 + $0x78] sm:$0xff] %v2014
  // Predicated region
  $region22: #{dis_forward.5} parent=0 // pred_check
    _
  $region23: #{dis_forward.5} parent=0 // pred_check_branch
    %2048 = sbr.rel (0) target = $region25
  $region24: #{dis_forward.5} parent=0 // pred_region
    _
  $region25: #{dis_forward.5} parent=0 // pred_fallthru
    _
  // Predicated region
  $region26: #{dis_forward.5} parent=0 // pred_check
    _
  $region27: #{dis_forward.5} parent=0 // pred_check_branch
    %2050 = sbr.rel (0) target = $region29
  $region28: #{dis_forward.5} parent=0 // pred_region
    _
  $region29: #{dis_forward.5} parent=0 // pred_fallthru
    _

// kernel: dis_forward.6
$region0: #{dis_forward.6}
  #allocation0 [shape = 'u32[]', space=smem, size = 0x4, offset = 0x4, fixed_abs, tag = 'smem constant byte address 0x4 - core index']
  #allocation1 [shape = 'u32[144,128]{1,0:T(1,128)}', space=vmem, size = 0x12000, scoped, tag = 'internal scratch']
  %s0 = inlined_call_operand.vmem [shape: bf16[400,512], index: 0, kind: input, shape index: {}]
  %s1 = inlined_call_operand.vmem [shape: bf16[32,400], index: 1, kind: input, shape index: {}]
  %s2 = inlined_call_operand.vmem [shape: f32[32,1], index: 2, kind: input, shape index: {}]
  %s3 = inlined_call_operand.vmem [shape: f32[32,1], index: 3, kind: input, shape index: {}]
  %s4 = inlined_call_operand.vmem [shape: f32[32,1], index: 4, kind: input, shape index: {}]
  %s5 = inlined_call_operand.vmem [shape: bf16[32,512], index: 5, kind: output, shape index: {}]
  %s6 = sld [smem:[#allocation0]]
  $region30: #{dis_forward.6} parent=0
    _
  %s8 = ssub.s32 1, %s6
  %s9 = scalar_select 0, %s8, %s6
  // Predicated region
  $region2: #{dis_forward.6} parent=0 // pred_check
    _
  $region3: #{dis_forward.6} parent=0 // pred_check_branch
    %11 = sbr.rel (0) target = $region5
  $region4: #{dis_forward.6} parent=0 // pred_region
    _
  $region5: #{dis_forward.6} parent=0 // pred_fallthru
    _
  // Predicated region
  $region6: #{dis_forward.6} parent=0 // pred_check
    _
  $region7: #{dis_forward.6} parent=0 // pred_check_branch
    %13 = sbr.rel (0) target = $region9
  $region8: #{dis_forward.6} parent=0 // pred_region
    _
  $region9: #{dis_forward.6} parent=0 // pred_fallthru
    _
  // Predicated region
  $region10: #{dis_forward.6} parent=0 // pred_check
    _
  $region11: #{dis_forward.6} parent=0 // pred_check_branch
    %15 = sbr.rel (0) target = $region13
  $region12: #{dis_forward.6} parent=0 // pred_region
    _
  $region13: #{dis_forward.6} parent=0 // pred_fallthru
    _
  // Predicated region
  $region14: #{dis_forward.6} parent=0 // pred_check
    _
  $region15: #{dis_forward.6} parent=0 // pred_check_branch
    %17 = sbr.rel (0) target = $region17
  $region16: #{dis_forward.6} parent=0 // pred_region
    _
  $region17: #{dis_forward.6} parent=0 // pred_fallthru
    _
  // Predicated region
  $region18: #{dis_forward.6} parent=0 // pred_check
    _
  $region19: #{dis_forward.6} parent=0 // pred_check_branch
    %19 = sbr.rel (0) target = $region21
  $region20: #{dis_forward.6} parent=0 // pred_region
    _
  $region21: #{dis_forward.6} parent=0 // pred_fallthru
    _
  %v21 = vld [vmem:[%s1] sm:$0xff]
  %v22 = vld [vmem:[%s1 + $0x8] sm:$0xff]
  %v23 = vld [vmem:[%s1 + $0x10] sm:$0xff]
  %v24 = vld [vmem:[%s1 + $0x18] sm:$0xff]
  %v25 = vld [vmem:[%s1 + $0x20] sm:$0xff]
  %v26 = vld [vmem:[%s1 + $0x28] sm:$0xff]
  %v27 = vld [vmem:[%s1 + $0x30] sm:$0xff]
  %v28 = vld [vmem:[%s1 + $0x38] sm:$0xff]
  %v29 = vld [vmem:[%s0] sm:$0xff]
  %v30 = vld [vmem:[%s0 + $0x8] sm:$0xff]
  %v31 = vld [vmem:[%s0 + $0x10] sm:$0xff]
  %v32 = vld [vmem:[%s0 + $0x18] sm:$0xff]
  %v33 = vld [vmem:[%s0 + $0x20] sm:$0xff]
  %v34 = vld [vmem:[%s0 + $0x28] sm:$0xff]
  %v35 = vld [vmem:[%s0 + $0x30] sm:$0xff]
  %v36 = vld [vmem:[%s0 + $0x38] sm:$0xff]
  %v37 = vld [vmem:[%s0 + $0x40] sm:$0xff]
  %v38 = vld [vmem:[%s0 + $0x48] sm:$0xff]
  %v39 = vld [vmem:[%s0 + $0x50] sm:$0xff]
  %v40 = vld [vmem:[%s0 + $0x58] sm:$0xff]
  %v41 = vld [vmem:[%s0 + $0x60] sm:$0xff]
  %v42 = vld [vmem:[%s0 + $0x68] sm:$0xff]
  %v43 = vld [vmem:[%s0 + $0x70] sm:$0xff]
  %v44 = vld [vmem:[%s0 + $0x78] sm:$0xff]
  %v45 = vld [vmem:[%s0 + $0x80] sm:$0xff]
  %v46 = vld [vmem:[%s0 + $0x88] sm:$0xff]
  %v47 = vld [vmem:[%s0 + $0x90] sm:$0xff]
  %v48 = vld [vmem:[%s0 + $0x98] sm:$0xff]
  %v49 = vld [vmem:[%s0 + $0xa0] sm:$0xff]
  %v50 = vld [vmem:[%s0 + $0xa8] sm:$0xff]
  %v51 = vld [vmem:[%s0 + $0xb0] sm:$0xff]
  %v52 = vld [vmem:[%s0 + $0xb8] sm:$0xff]
  %v53 = vld [vmem:[%s0 + $0xc0] sm:$0xff]
  %v54 = vld [vmem:[%s0 + $0xc8] sm:$0xff]
  %v55 = vld [vmem:[%s0 + $0xd0] sm:$0xff]
  %v56 = vld [vmem:[%s0 + $0xd8] sm:$0xff]
  %v57 = vld [vmem:[%s0 + $0xe0] sm:$0xff]
  %v58 = vld [vmem:[%s0 + $0xe8] sm:$0xff]
  %v59 = vld [vmem:[%s0 + $0xf0] sm:$0xff]
  %v60 = vld [vmem:[%s0 + $0xf8] sm:$0xff]
  %v61 = vld [vmem:[%s0 + $0x100] sm:$0xff]
  %v62 = vld [vmem:[%s0 + $0x108] sm:$0xff]
  %v63 = vld [vmem:[%s0 + $0x110] sm:$0xff]
  %v64 = vld [vmem:[%s0 + $0x118] sm:$0xff]
  %v65 = vld [vmem:[%s0 + $0x120] sm:$0xff]
  %v66 = vld [vmem:[%s0 + $0x128] sm:$0xff]
  %v67 = vld [vmem:[%s0 + $0x130] sm:$0xff]
  %v68 = vld [vmem:[%s0 + $0x138] sm:$0xff]
  %v69 = vld [vmem:[%s0 + $0x140] sm:$0xff]
  %v70 = vld [vmem:[%s0 + $0x148] sm:$0xff]
  %v71 = vld [vmem:[%s0 + $0x150] sm:$0xff]
  %v72 = vld [vmem:[%s0 + $0x158] sm:$0xff]
  %v73 = vld [vmem:[%s0 + $0x160] sm:$0xff]
  %v74 = vld [vmem:[%s0 + $0x168] sm:$0xff]
  %v75 = vld [vmem:[%s0 + $0x170] sm:$0xff]
  %v76 = vld [vmem:[%s0 + $0x178] sm:$0xff]
  %v77 = vld [vmem:[%s0 + $0x180] sm:$0xff]
  %v78 = vld [vmem:[%s0 + $0x188] sm:$0xff]
  %v79 = vld [vmem:[%s0 + $0x190] sm:$0xff]
  %v80 = vld [vmem:[%s0 + $0x198] sm:$0xff]
  %v81 = vld [vmem:[%s0 + $0x1a0] sm:$0xff]
  %v82 = vld [vmem:[%s0 + $0x1a8] sm:$0xff]
  %v83 = vld [vmem:[%s0 + $0x1b0] sm:$0xff]
  %v84 = vld [vmem:[%s0 + $0x1b8] sm:$0xff]
  %v85 = vld [vmem:[%s0 + $0x1c0] sm:$0xff]
  %v86 = vld [vmem:[%s0 + $0x1c8] sm:$0xff]
  %v87 = vld [vmem:[%s0 + $0x1d0] sm:$0xff]
  %v88 = vld [vmem:[%s0 + $0x1d8] sm:$0xff]
  %v89 = vld [vmem:[%s0 + $0x1e0] sm:$0xff]
  %v90 = vld [vmem:[%s0 + $0x1e8] sm:$0xff]
  %v91 = vld [vmem:[%s0 + $0x1f0] sm:$0xff]
  %v92 = vld [vmem:[%s0 + $0x1f8] sm:$0xff]
  %v93 = vld [vmem:[%s0 + $0x200] sm:$0xff]
  %v94 = vld [vmem:[%s0 + $0x208] sm:$0xff]
  %v95 = vld [vmem:[%s0 + $0x210] sm:$0xff]
  %v96 = vld [vmem:[%s0 + $0x218] sm:$0xff]
  %v97 = vld [vmem:[%s0 + $0x220] sm:$0xff]
  %v98 = vld [vmem:[%s0 + $0x228] sm:$0xff]
  %v99 = vld [vmem:[%s0 + $0x230] sm:$0xff]
  %v100 = vld [vmem:[%s0 + $0x238] sm:$0xff]
  %v101 = vld [vmem:[%s0 + $0x240] sm:$0xff]
  %v102 = vld [vmem:[%s0 + $0x248] sm:$0xff]
  %v103 = vld [vmem:[%s0 + $0x250] sm:$0xff]
  %v104 = vld [vmem:[%s0 + $0x258] sm:$0xff]
  %v105 = vld [vmem:[%s0 + $0x260] sm:$0xff]
  %v106 = vld [vmem:[%s0 + $0x268] sm:$0xff]
  %v107 = vld [vmem:[%s0 + $0x270] sm:$0xff]
  %v108 = vld [vmem:[%s0 + $0x278] sm:$0xff]
  %v109 = vld [vmem:[%s0 + $0x280] sm:$0xff]
  %v110 = vld [vmem:[%s0 + $0x288] sm:$0xff]
  %v111 = vld [vmem:[%s0 + $0x290] sm:$0xff]
  %v112 = vld [vmem:[%s0 + $0x298] sm:$0xff]
  %v113 = vld [vmem:[%s0 + $0x2a0] sm:$0xff]
  %v114 = vld [vmem:[%s0 + $0x2a8] sm:$0xff]
  %v115 = vld [vmem:[%s0 + $0x2b0] sm:$0xff]
  %v116 = vld [vmem:[%s0 + $0x2b8] sm:$0xff]
  %v117 = vld [vmem:[%s0 + $0x2c0] sm:$0xff]
  %v118 = vld [vmem:[%s0 + $0x2c8] sm:$0xff]
  %v119 = vld [vmem:[%s0 + $0x2d0] sm:$0xff]
  %v120 = vld [vmem:[%s0 + $0x2d8] sm:$0xff]
  %v121 = vld [vmem:[%s0 + $0x2e0] sm:$0xff]
  %v122 = vld [vmem:[%s0 + $0x2e8] sm:$0xff]
  %v123 = vld [vmem:[%s0 + $0x2f0] sm:$0xff]
  %v124 = vld [vmem:[%s0 + $0x2f8] sm:$0xff]
  %v125 = vld [vmem:[%s0 + $0x300] sm:$0xff]
  %v126 = vld [vmem:[%s0 + $0x308] sm:$0xff]
  %v127 = vld [vmem:[%s0 + $0x310] sm:$0xff]
  %v128 = vld [vmem:[%s0 + $0x318] sm:$0xff]
  %v129 = vld [vmem:[%s2] sm:$0xff]
  %v130 = vld [vmem:[%s2 + $0x8] sm:$0xff]
  %v131 = vld [vmem:[%s2 + $0x10] sm:$0xff]
  %v132 = vld [vmem:[%s2 + $0x18] sm:$0xff]
  %134 = vset.pattern.permute.xlu0 0
  %135 = vperm.xlu0 %134, %v129
  %v136 = vpop.permute.xlu0 %135
  %139 = vset.pattern.permute.xlu0 0
  %140 = vperm.xlu0 %139, %v130
  %v141 = vpop.permute.xlu0 %140
  %144 = vset.pattern.permute.xlu0 0
  %145 = vperm.xlu0 %144, %v131
  %v146 = vpop.permute.xlu0 %145
  %149 = vset.pattern.permute.xlu0 0
  %150 = vperm.xlu0 %149, %v132
  %v151 = vpop.permute.xlu0 %150
  %v161 = vunpack.c.l.b16 %v21
  %v162 = vunpack.c.h.b16 %v21
  %v163 = vunpack.c.l.b16 %v22
  %v164 = vunpack.c.h.b16 %v22
  %v165 = vunpack.c.l.b16 %v23
  %v166 = vunpack.c.h.b16 %v23
  %v167 = vunpack.c.l.b16 %v24
  %v168 = vunpack.c.h.b16 %v24
  %v169 = vunpack.c.l.b16 %v25
  %v170 = vunpack.c.h.b16 %v25
  %v171 = vunpack.c.l.b16 %v26
  %v172 = vunpack.c.h.b16 %v26
  %v173 = vunpack.c.l.b16 %v27
  %v174 = vunpack.c.h.b16 %v27
  %v175 = vunpack.c.l.b16 %v28
  %v176 = vunpack.c.h.b16 %v28
  %v177 = vpack.c.b16 %v165, %v161
  %v178 = vpack.c.b16 %v166, %v162
  %v179 = vpack.c.b16 %v167, %v163
  %v180 = vpack.c.b16 %v168, %v164
  %v181 = vpack.c.b16 %v173, %v169
  %v182 = vpack.c.b16 %v174, %v170
  %v183 = vpack.c.b16 %v175, %v171
  %v184 = vpack.c.b16 %v176, %v172
  %v291 = vunpack.c.l.b16 %v29
  %v292 = vunpack.c.h.b16 %v29
  %v293 = vunpack.c.l.b16 %v30
  %v294 = vunpack.c.h.b16 %v30
  %v295 = vunpack.c.l.b16 %v31
  %v296 = vunpack.c.h.b16 %v31
  %v297 = vunpack.c.l.b16 %v32
  %v298 = vunpack.c.h.b16 %v32
  %v299 = vunpack.c.l.b16 %v33
  %v300 = vunpack.c.h.b16 %v33
  %v301 = vunpack.c.l.b16 %v34
  %v302 = vunpack.c.h.b16 %v34
  %v303 = vunpack.c.l.b16 %v35
  %v304 = vunpack.c.h.b16 %v35
  %v305 = vunpack.c.l.b16 %v36
  %v306 = vunpack.c.h.b16 %v36
  %v307 = vunpack.c.l.b16 %v37
  %v308 = vunpack.c.h.b16 %v37
  %v309 = vunpack.c.l.b16 %v38
  %v310 = vunpack.c.h.b16 %v38
  %v311 = vunpack.c.l.b16 %v39
  %v312 = vunpack.c.h.b16 %v39
  %v313 = vunpack.c.l.b16 %v40
  %v314 = vunpack.c.h.b16 %v40
  %v315 = vunpack.c.l.b16 %v41
  %v316 = vunpack.c.h.b16 %v41
  %v317 = vunpack.c.l.b16 %v42
  %v318 = vunpack.c.h.b16 %v42
  %v319 = vunpack.c.l.b16 %v43
  %v320 = vunpack.c.h.b16 %v43
  %v321 = vunpack.c.l.b16 %v44
  %v322 = vunpack.c.h.b16 %v44
  %v323 = vunpack.c.l.b16 %v45
  %v324 = vunpack.c.h.b16 %v45
  %v325 = vunpack.c.l.b16 %v46
  %v326 = vunpack.c.h.b16 %v46
  %v327 = vunpack.c.l.b16 %v47
  %v328 = vunpack.c.h.b16 %v47
  %v329 = vunpack.c.l.b16 %v48
  %v330 = vunpack.c.h.b16 %v48
  %v331 = vunpack.c.l.b16 %v49
  %v332 = vunpack.c.h.b16 %v49
  %v333 = vunpack.c.l.b16 %v50
  %v334 = vunpack.c.h.b16 %v50
  %v335 = vunpack.c.l.b16 %v51
  %v336 = vunpack.c.h.b16 %v51
  %v337 = vunpack.c.l.b16 %v52
  %v338 = vunpack.c.h.b16 %v52
  %v339 = vunpack.c.l.b16 %v53
  %v340 = vunpack.c.h.b16 %v53
  %v341 = vunpack.c.l.b16 %v54
  %v342 = vunpack.c.h.b16 %v54
  %v343 = vunpack.c.l.b16 %v55
  %v344 = vunpack.c.h.b16 %v55
  %v345 = vunpack.c.l.b16 %v56
  %v346 = vunpack.c.h.b16 %v56
  %v347 = vunpack.c.l.b16 %v57
  %v348 = vunpack.c.h.b16 %v57
  %v349 = vunpack.c.l.b16 %v58
  %v350 = vunpack.c.h.b16 %v58
  %v351 = vunpack.c.l.b16 %v59
  %v352 = vunpack.c.h.b16 %v59
  %v353 = vunpack.c.l.b16 %v60
  %v354 = vunpack.c.h.b16 %v60
  %v355 = vunpack.c.l.b16 %v61
  %v356 = vunpack.c.h.b16 %v61
  %v357 = vunpack.c.l.b16 %v62
  %v358 = vunpack.c.h.b16 %v62
  %v359 = vunpack.c.l.b16 %v63
  %v360 = vunpack.c.h.b16 %v63
  %v361 = vunpack.c.l.b16 %v64
  %v362 = vunpack.c.h.b16 %v64
  %v363 = vunpack.c.l.b16 %v65
  %v364 = vunpack.c.h.b16 %v65
  %v365 = vunpack.c.l.b16 %v66
  %v366 = vunpack.c.h.b16 %v66
  %v367 = vunpack.c.l.b16 %v67
  %v368 = vunpack.c.h.b16 %v67
  %v369 = vunpack.c.l.b16 %v68
  %v370 = vunpack.c.h.b16 %v68
  %v371 = vunpack.c.l.b16 %v69
  %v372 = vunpack.c.h.b16 %v69
  %v373 = vunpack.c.l.b16 %v70
  %v374 = vunpack.c.h.b16 %v70
  %v375 = vunpack.c.l.b16 %v71
  %v376 = vunpack.c.h.b16 %v71
  %v377 = vunpack.c.l.b16 %v72
  %v378 = vunpack.c.h.b16 %v72
  %v379 = vunpack.c.l.b16 %v73
  %v380 = vunpack.c.h.b16 %v73
  %v381 = vunpack.c.l.b16 %v74
  %v382 = vunpack.c.h.b16 %v74
  %v383 = vunpack.c.l.b16 %v75
  %v384 = vunpack.c.h.b16 %v75
  %v385 = vunpack.c.l.b16 %v76
  %v386 = vunpack.c.h.b16 %v76
  %v387 = vunpack.c.l.b16 %v77
  %v388 = vunpack.c.h.b16 %v77
  %v389 = vunpack.c.l.b16 %v78
  %v390 = vunpack.c.h.b16 %v78
  %v391 = vunpack.c.l.b16 %v79
  %v392 = vunpack.c.h.b16 %v79
  %v393 = vunpack.c.l.b16 %v80
  %v394 = vunpack.c.h.b16 %v80
  %v395 = vunpack.c.l.b16 %v81
  %v396 = vunpack.c.h.b16 %v81
  %v397 = vunpack.c.l.b16 %v82
  %v398 = vunpack.c.h.b16 %v82
  %v399 = vunpack.c.l.b16 %v83
  %v400 = vunpack.c.h.b16 %v83
  %v401 = vunpack.c.l.b16 %v84
  %v402 = vunpack.c.h.b16 %v84
  %v403 = vunpack.c.l.b16 %v85
  %v404 = vunpack.c.h.b16 %v85
  %v405 = vunpack.c.l.b16 %v86
  %v406 = vunpack.c.h.b16 %v86
  %v407 = vunpack.c.l.b16 %v87
  %v408 = vunpack.c.h.b16 %v87
  %v409 = vunpack.c.l.b16 %v88
  %v410 = vunpack.c.h.b16 %v88
  %v411 = vunpack.c.l.b16 %v89
  %v412 = vunpack.c.h.b16 %v89
  %v413 = vunpack.c.l.b16 %v90
  %v414 = vunpack.c.h.b16 %v90
  %v415 = vunpack.c.l.b16 %v91
  %v416 = vunpack.c.h.b16 %v91
  %v417 = vunpack.c.l.b16 %v92
  %v418 = vunpack.c.h.b16 %v92
  %v419 = vunpack.c.l.b16 %v93
  %v420 = vunpack.c.h.b16 %v93
  %v421 = vunpack.c.l.b16 %v94
  %v422 = vunpack.c.h.b16 %v94
  %v423 = vunpack.c.l.b16 %v95
  %v424 = vunpack.c.h.b16 %v95
  %v425 = vunpack.c.l.b16 %v96
  %v426 = vunpack.c.h.b16 %v96
  %v427 = vunpack.c.l.b16 %v97
  %v428 = vunpack.c.h.b16 %v97
  %v429 = vunpack.c.l.b16 %v98
  %v430 = vunpack.c.h.b16 %v98
  %v431 = vunpack.c.l.b16 %v99
  %v432 = vunpack.c.h.b16 %v99
  %v433 = vunpack.c.l.b16 %v100
  %v434 = vunpack.c.h.b16 %v100
  %v435 = vunpack.c.l.b16 %v101
  %v436 = vunpack.c.h.b16 %v101
  %v437 = vunpack.c.l.b16 %v102
  %v438 = vunpack.c.h.b16 %v102
  %v439 = vunpack.c.l.b16 %v103
  %v440 = vunpack.c.h.b16 %v103
  %v441 = vunpack.c.l.b16 %v104
  %v442 = vunpack.c.h.b16 %v104
  %v443 = vunpack.c.l.b16 %v105
  %v444 = vunpack.c.h.b16 %v105
  %v445 = vunpack.c.l.b16 %v106
  %v446 = vunpack.c.h.b16 %v106
  %v447 = vunpack.c.l.b16 %v107
  %v448 = vunpack.c.h.b16 %v107
  %v449 = vunpack.c.l.b16 %v108
  %v450 = vunpack.c.h.b16 %v108
  %v451 = vunpack.c.l.b16 %v109
  %v452 = vunpack.c.h.b16 %v109
  %v453 = vunpack.c.l.b16 %v110
  %v454 = vunpack.c.h.b16 %v110
  %v455 = vunpack.c.l.b16 %v111
  %v456 = vunpack.c.h.b16 %v111
  %v457 = vunpack.c.l.b16 %v112
  %v458 = vunpack.c.h.b16 %v112
  %v459 = vunpack.c.l.b16 %v113
  %v460 = vunpack.c.h.b16 %v113
  %v461 = vunpack.c.l.b16 %v114
  %v462 = vunpack.c.h.b16 %v114
  %v463 = vunpack.c.l.b16 %v115
  %v464 = vunpack.c.h.b16 %v115
  %v465 = vunpack.c.l.b16 %v116
  %v466 = vunpack.c.h.b16 %v116
  %v467 = vunpack.c.l.b16 %v117
  %v468 = vunpack.c.h.b16 %v117
  %v469 = vunpack.c.l.b16 %v118
  %v470 = vunpack.c.h.b16 %v118
  %v471 = vunpack.c.l.b16 %v119
  %v472 = vunpack.c.h.b16 %v119
  %v473 = vunpack.c.l.b16 %v120
  %v474 = vunpack.c.h.b16 %v120
  %v475 = vunpack.c.l.b16 %v121
  %v476 = vunpack.c.h.b16 %v121
  %v477 = vunpack.c.l.b16 %v122
  %v478 = vunpack.c.h.b16 %v122
  %v479 = vunpack.c.l.b16 %v123
  %v480 = vunpack.c.h.b16 %v123
  %v481 = vunpack.c.l.b16 %v124
  %v482 = vunpack.c.h.b16 %v124
  %v483 = vunpack.c.l.b16 %v125
  %v484 = vunpack.c.h.b16 %v125
  %v485 = vunpack.c.l.b16 %v126
  %v486 = vunpack.c.h.b16 %v126
  %v487 = vunpack.c.l.b16 %v127
  %v488 = vunpack.c.h.b16 %v127
  %v489 = vunpack.c.l.b16 %v128
  %v490 = vunpack.c.h.b16 %v128
  %v491 = vpack.c.b16 %v295, %v291
  %v492 = vpack.c.b16 %v296, %v292
  %v493 = vpack.c.b16 %v297, %v293
  %v494 = vpack.c.b16 %v298, %v294
  %v495 = vpack.c.b16 %v303, %v299
  %v496 = vpack.c.b16 %v304, %v300
  %v497 = vpack.c.b16 %v305, %v301
  %v498 = vpack.c.b16 %v306, %v302
  %v499 = vpack.c.b16 %v311, %v307
  %v500 = vpack.c.b16 %v312, %v308
  %v501 = vpack.c.b16 %v313, %v309
  %v502 = vpack.c.b16 %v314, %v310
  %v503 = vpack.c.b16 %v319, %v315
  %v504 = vpack.c.b16 %v320, %v316
  %v505 = vpack.c.b16 %v321, %v317
  %v506 = vpack.c.b16 %v322, %v318
  %v507 = vpack.c.b16 %v327, %v323
  %v508 = vpack.c.b16 %v328, %v324
  %v509 = vpack.c.b16 %v329, %v325
  %v510 = vpack.c.b16 %v330, %v326
  %v511 = vpack.c.b16 %v335, %v331
  %v512 = vpack.c.b16 %v336, %v332
  %v513 = vpack.c.b16 %v337, %v333
  %v514 = vpack.c.b16 %v338, %v334
  %v515 = vpack.c.b16 %v343, %v339
  %v516 = vpack.c.b16 %v344, %v340
  %v517 = vpack.c.b16 %v345, %v341
  %v518 = vpack.c.b16 %v346, %v342
  %v519 = vpack.c.b16 %v351, %v347
  %v520 = vpack.c.b16 %v352, %v348
  %v521 = vpack.c.b16 %v353, %v349
  %v522 = vpack.c.b16 %v354, %v350
  %v523 = vpack.c.b16 %v359, %v355
  %v524 = vpack.c.b16 %v360, %v356
  %v525 = vpack.c.b16 %v361, %v357
  %v526 = vpack.c.b16 %v362, %v358
  %v527 = vpack.c.b16 %v367, %v363
  %v528 = vpack.c.b16 %v368, %v364
  %v529 = vpack.c.b16 %v369, %v365
  %v530 = vpack.c.b16 %v370, %v366
  %v531 = vpack.c.b16 %v375, %v371
  %v532 = vpack.c.b16 %v376, %v372
  %v533 = vpack.c.b16 %v377, %v373
  %v534 = vpack.c.b16 %v378, %v374
  %v535 = vpack.c.b16 %v383, %v379
  %v536 = vpack.c.b16 %v384, %v380
  %v537 = vpack.c.b16 %v385, %v381
  %v538 = vpack.c.b16 %v386, %v382
  %v539 = vpack.c.b16 %v391, %v387
  %v540 = vpack.c.b16 %v392, %v388
  %v541 = vpack.c.b16 %v393, %v389
  %v542 = vpack.c.b16 %v394, %v390
  %v543 = vpack.c.b16 %v399, %v395
  %v544 = vpack.c.b16 %v400, %v396
  %v545 = vpack.c.b16 %v401, %v397
  %v546 = vpack.c.b16 %v402, %v398
  %v547 = vpack.c.b16 %v407, %v403
  %v548 = vpack.c.b16 %v408, %v404
  %v549 = vpack.c.b16 %v409, %v405
  %v550 = vpack.c.b16 %v410, %v406
  %v551 = vpack.c.b16 %v415, %v411
  %v552 = vpack.c.b16 %v416, %v412
  %v553 = vpack.c.b16 %v417, %v413
  %v554 = vpack.c.b16 %v418, %v414
  %v555 = vpack.c.b16 %v423, %v419
  %v556 = vpack.c.b16 %v424, %v420
  %v557 = vpack.c.b16 %v425, %v421
  %v558 = vpack.c.b16 %v426, %v422
  %v559 = vpack.c.b16 %v431, %v427
  %v560 = vpack.c.b16 %v432, %v428
  %v561 = vpack.c.b16 %v433, %v429
  %v562 = vpack.c.b16 %v434, %v430
  %v563 = vpack.c.b16 %v439, %v435
  %v564 = vpack.c.b16 %v440, %v436
  %v565 = vpack.c.b16 %v441, %v437
  %v566 = vpack.c.b16 %v442, %v438
  %v567 = vpack.c.b16 %v447, %v443
  %v568 = vpack.c.b16 %v448, %v444
  %v569 = vpack.c.b16 %v449, %v445
  %v570 = vpack.c.b16 %v450, %v446
  %v571 = vpack.c.b16 %v455, %v451
  %v572 = vpack.c.b16 %v456, %v452
  %v573 = vpack.c.b16 %v457, %v453
  %v574 = vpack.c.b16 %v458, %v454
  %v575 = vpack.c.b16 %v463, %v459
  %v576 = vpack.c.b16 %v464, %v460
  %v577 = vpack.c.b16 %v465, %v461
  %v578 = vpack.c.b16 %v466, %v462
  %v579 = vpack.c.b16 %v471, %v467
  %v580 = vpack.c.b16 %v472, %v468
  %v581 = vpack.c.b16 %v473, %v469
  %v582 = vpack.c.b16 %v474, %v470
  %v583 = vpack.c.b16 %v479, %v475
  %v584 = vpack.c.b16 %v480, %v476
  %v585 = vpack.c.b16 %v481, %v477
  %v586 = vpack.c.b16 %v482, %v478
  %v587 = vpack.c.b16 %v487, %v483
  %v588 = vpack.c.b16 %v488, %v484
  %v589 = vpack.c.b16 %v489, %v485
  %v590 = vpack.c.b16 %v490, %v486
  %vm691 = vcmask 130048
  %v693 = vsel %vm691, %v180, 0
  %v696 = vsel %vm691, %v184, 0
  %698 = vmatprep.subr.bf16.mxu0 %v492
  %699 = vmatpush1.bf16.msra.mxu0 %v491
  %700 = vmatprep.subr.bf16.mxu0 %v496
  %701 = vmatpush1.bf16.msra.mxu0 %v495
  %702 = vmatprep.subr.bf16.mxu0 %v500
  %703 = vmatpush1.bf16.msra.mxu0 %v499
  %704 = vmatprep.subr.bf16.mxu0 %v504
  %705 = vmatpush1.bf16.msra.mxu0 %v503
  %706 = vmatprep.subr.bf16.mxu0 %v508
  %707 = vmatpush1.bf16.msra.mxu0 %v507
  %708 = vmatprep.subr.bf16.mxu0 %v512
  %709 = vmatpush1.bf16.msra.mxu0 %v511
  %710 = vmatprep.subr.bf16.mxu0 %v516
  %711 = vmatpush1.bf16.msra.mxu0 %v515
  %712 = vmatprep.subr.bf16.mxu0 %v520
  %713 = vmatpush1.bf16.msra.mxu0 %v519
  %714 = vmatprep.subr.bf16.mxu0 %v524
  %715 = vmatpush1.bf16.msra.mxu0 %v523
  %716 = vmatprep.subr.bf16.mxu0 %v528
  %717 = vmatpush1.bf16.msra.mxu0 %v527
  %718 = vmatprep.subr.bf16.mxu0 %v532
  %719 = vmatpush1.bf16.msra.mxu0 %v531
  %720 = vmatprep.subr.bf16.mxu0 %v536
  %721 = vmatpush1.bf16.msra.mxu0 %v535
  %722 = vmatprep.subr.bf16.mxu0 %v540
  %723 = vmatpush1.bf16.msra.mxu0 %v539
  %724 = vmatprep.subr.bf16.mxu0 %v544
  %725 = vmatpush1.bf16.msra.mxu0 %v543
  %726 = vmatprep.subr.bf16.mxu0 %v548
  %727 = vmatpush1.bf16.msra.mxu0 %v547
  %728 = vmatprep.subr.bf16.mxu0 %v552
  %729 = vmatpush1.bf16.msra.mxu0 %v551
  %730 = vmatprep.mubr.bf16.mxu0 %v178
  %731 = vmatmul.mubr.bf16.gmra.mrb[0].mxu0 %v177
  %v732 = vpop.f32.mrb[0].mxu0
  %v733 = vadd.f32 %v136, %v732
  %v734 = vpop.f32.mrb[0].mxu0
  %v735 = vadd.f32 %v136, %v734
  %v736 = vpop.f32.mrb[0].mxu0
  %v737 = vadd.f32 %v141, %v736
  %v738 = vpop.f32.mrb[0].mxu0
  %v739 = vadd.f32 %v141, %v738
  %740 = vmatprep.mubr.bf16.mxu0 %v182
  %741 = vmatmul.mubr.bf16.gmra.mrb[0].mxu0 %v181
  %v742 = vpop.f32.mrb[0].mxu0
  %v743 = vadd.f32 %v146, %v742
  %v744 = vpop.f32.mrb[0].mxu0
  %v745 = vadd.f32 %v146, %v744
  %v746 = vpop.f32.mrb[0].mxu0
  %v747 = vadd.f32 %v151, %v746
  %v748 = vpop.f32.mrb[0].mxu0
  %v749 = vadd.f32 %v151, %v748
  %750 = vdwg.mxu0
  %751 = vmatprep.subr.bf16.mxu0 %v556
  %752 = vmatpush1.bf16.msra.mxu0 %v555
  %753 = vmatprep.subr.bf16.mxu0 %v560
  %754 = vmatpush1.bf16.msra.mxu0 %v559
  %755 = vmatprep.subr.bf16.mxu0 %v564
  %756 = vmatpush1.bf16.msra.mxu0 %v563
  %757 = vmatprep.subr.bf16.mxu0 %v568
  %758 = vmatpush1.bf16.msra.mxu0 %v567
  %759 = vmatprep.subr.bf16.mxu0 %v572
  %760 = vmatpush1.bf16.msra.mxu0 %v571
  %761 = vmatprep.subr.bf16.mxu0 %v576
  %762 = vmatpush1.bf16.msra.mxu0 %v575
  %763 = vmatprep.subr.bf16.mxu0 %v580
  %764 = vmatpush1.bf16.msra.mxu0 %v579
  %765 = vmatprep.subr.bf16.mxu0 %v584
  %766 = vmatpush1.bf16.msra.mxu0 %v583
  %767 = vmatprep.subr.bf16.mxu0 %v588
  %768 = vmatpush1.bf16.msra.mxu0 %v587
  %769 = vmatprep.subr.bf16.mxu0 0
  %770 = vmatpush1.bf16.msra.mxu0 0
  %771 = vmatprep.subr.bf16.mxu0 0
  %772 = vmatpush1.bf16.msra.mxu0 0
  %773 = vmatprep.subr.bf16.mxu0 0
  %774 = vmatpush1.bf16.msra.mxu0 0
  %775 = vmatprep.subr.bf16.mxu0 0
  %776 = vmatpush1.bf16.msra.mxu0 0
  %777 = vmatprep.subr.bf16.mxu0 0
  %778 = vmatpush1.bf16.msra.mxu0 0
  %779 = vmatprep.subr.bf16.mxu0 0
  %780 = vmatpush1.bf16.msra.mxu0 0
  %781 = vmatprep.subr.bf16.mxu0 0
  %782 = vmatpush1.bf16.msra.mxu0 0
  %783 = vmatprep.mubr.bf16.mxu0 %v693
  %784 = vmatmul.mubr.bf16.gmra.mrb[0].mxu0 %v179
  %v785 = vpop.f32.mrb[0].mxu0
  %v786 = vadd.f32 %v733, %v785
  %v787 = vpop.f32.mrb[0].mxu0
  %v788 = vadd.f32 %v735, %v787
  %v789 = vpop.f32.mrb[0].mxu0
  %v790 = vadd.f32 %v737, %v789
  %v791 = vpop.f32.mrb[0].mxu0
  %v792 = vadd.f32 %v739, %v791
  %793 = vmatprep.mubr.bf16.mxu0 %v696
  %794 = vmatmul.mubr.bf16.gmra.mrb[0].mxu0 %v183
  %v795 = vpop.f32.mrb[0].mxu0
  %v796 = vadd.f32 %v743, %v795
  %v797 = vpop.f32.mrb[0].mxu0
  %v798 = vadd.f32 %v745, %v797
  %v799 = vpop.f32.mrb[0].mxu0
  %v800 = vadd.f32 %v747, %v799
  %v801 = vpop.f32.mrb[0].mxu0
  %v802 = vadd.f32 %v749, %v801
  %803 = vdwg.mxu0
  %804 = vmatprep.subr.bf16.mxu0 %v494
  %805 = vmatpush1.bf16.msra.mxu0 %v493
  %806 = vmatprep.subr.bf16.mxu0 %v498
  %807 = vmatpush1.bf16.msra.mxu0 %v497
  %808 = vmatprep.subr.bf16.mxu0 %v502
  %809 = vmatpush1.bf16.msra.mxu0 %v501
  %810 = vmatprep.subr.bf16.mxu0 %v506
  %811 = vmatpush1.bf16.msra.mxu0 %v505
  %812 = vmatprep.subr.bf16.mxu0 %v510
  %813 = vmatpush1.bf16.msra.mxu0 %v509
  %814 = vmatprep.subr.bf16.mxu0 %v514
  %815 = vmatpush1.bf16.msra.mxu0 %v513
  %816 = vmatprep.subr.bf16.mxu0 %v518
  %817 = vmatpush1.bf16.msra.mxu0 %v517
  %818 = vmatprep.subr.bf16.mxu0 %v522
  %819 = vmatpush1.bf16.msra.mxu0 %v521
  %820 = vmatprep.subr.bf16.mxu0 %v526
  %821 = vmatpush1.bf16.msra.mxu0 %v525
  %822 = vmatprep.subr.bf16.mxu0 %v530
  %823 = vmatpush1.bf16.msra.mxu0 %v529
  %824 = vmatprep.subr.bf16.mxu0 %v534
  %825 = vmatpush1.bf16.msra.mxu0 %v533
  %826 = vmatprep.subr.bf16.mxu0 %v538
  %827 = vmatpush1.bf16.msra.mxu0 %v537
  %828 = vmatprep.subr.bf16.mxu0 %v542
  %829 = vmatpush1.bf16.msra.mxu0 %v541
  %830 = vmatprep.subr.bf16.mxu0 %v546
  %831 = vmatpush1.bf16.msra.mxu0 %v545
  %832 = vmatprep.subr.bf16.mxu0 %v550
  %833 = vmatpush1.bf16.msra.mxu0 %v549
  %834 = vmatprep.subr.bf16.mxu0 %v554
  %835 = vmatpush1.bf16.msra.mxu0 %v553
  %836 = vmatprep.mubr.bf16.mxu0 %v178
  %837 = vmatmul.mubr.bf16.gmra.mrb[0].mxu0 %v177
  %v838 = vpop.f32.mrb[0].mxu0
  %v839 = vadd.f32 %v136, %v838
  %v840 = vpop.f32.mrb[0].mxu0
  %v841 = vadd.f32 %v136, %v840
  %v842 = vpop.f32.mrb[0].mxu0
  %v843 = vadd.f32 %v141, %v842
  %v844 = vpop.f32.mrb[0].mxu0
  %v845 = vadd.f32 %v141, %v844
  %846 = vmatprep.mubr.bf16.mxu0 %v182
  %847 = vmatmul.mubr.bf16.gmra.mrb[0].mxu0 %v181
  %v848 = vpop.f32.mrb[0].mxu0
  %v849 = vadd.f32 %v146, %v848
  %v850 = vpop.f32.mrb[0].mxu0
  %v851 = vadd.f32 %v146, %v850
  %v852 = vpop.f32.mrb[0].mxu0
  %v853 = vadd.f32 %v151, %v852
  %v854 = vpop.f32.mrb[0].mxu0
  %v855 = vadd.f32 %v151, %v854
  %856 = vdwg.mxu0
  %857 = vmatprep.subr.bf16.mxu0 %v558
  %858 = vmatpush1.bf16.msra.mxu0 %v557
  %859 = vmatprep.subr.bf16.mxu0 %v562
  %860 = vmatpush1.bf16.msra.mxu0 %v561
  %861 = vmatprep.subr.bf16.mxu0 %v566
  %862 = vmatpush1.bf16.msra.mxu0 %v565
  %863 = vmatprep.subr.bf16.mxu0 %v570
  %864 = vmatpush1.bf16.msra.mxu0 %v569
  %865 = vmatprep.subr.bf16.mxu0 %v574
  %866 = vmatpush1.bf16.msra.mxu0 %v573
  %867 = vmatprep.subr.bf16.mxu0 %v578
  %868 = vmatpush1.bf16.msra.mxu0 %v577
  %869 = vmatprep.subr.bf16.mxu0 %v582
  %870 = vmatpush1.bf16.msra.mxu0 %v581
  %871 = vmatprep.subr.bf16.mxu0 %v586
  %872 = vmatpush1.bf16.msra.mxu0 %v585
  %873 = vmatprep.subr.bf16.mxu0 %v590
  %874 = vmatpush1.bf16.msra.mxu0 %v589
  %875 = vmatprep.subr.bf16.mxu0 0
  %876 = vmatpush1.bf16.msra.mxu0 0
  %877 = vmatprep.subr.bf16.mxu0 0
  %878 = vmatpush1.bf16.msra.mxu0 0
  %879 = vmatprep.subr.bf16.mxu0 0
  %880 = vmatpush1.bf16.msra.mxu0 0
  %881 = vmatprep.subr.bf16.mxu0 0
  %882 = vmatpush1.bf16.msra.mxu0 0
  %883 = vmatprep.subr.bf16.mxu0 0
  %884 = vmatpush1.bf16.msra.mxu0 0
  %885 = vmatprep.subr.bf16.mxu0 0
  %886 = vmatpush1.bf16.msra.mxu0 0
  %887 = vmatprep.subr.bf16.mxu0 0
  %888 = vmatpush1.bf16.msra.mxu0 0
  %889 = vmatprep.mubr.bf16.mxu0 %v693
  %890 = vmatmul.mubr.bf16.gmra.mrb[0].mxu0 %v179
  %v891 = vpop.f32.mrb[0].mxu0
  %v892 = vadd.f32 %v839, %v891
  %v893 = vpop.f32.mrb[0].mxu0
  %v894 = vadd.f32 %v841, %v893
  %v895 = vpop.f32.mrb[0].mxu0
  %v896 = vadd.f32 %v843, %v895
  %v897 = vpop.f32.mrb[0].mxu0
  %v898 = vadd.f32 %v845, %v897
  %899 = vmatprep.mubr.bf16.mxu0 %v696
  %900 = vmatmul.mubr.bf16.gmra.mrb[0].mxu0 %v183
  %v901 = vpop.f32.mrb[0].mxu0
  %v902 = vadd.f32 %v849, %v901
  %v903 = vpop.f32.mrb[0].mxu0
  %v904 = vadd.f32 %v851, %v903
  %v905 = vpop.f32.mrb[0].mxu0
  %v906 = vadd.f32 %v853, %v905
  %v907 = vpop.f32.mrb[0].mxu0
  %v908 = vadd.f32 %v855, %v907
  %909 = vdwg.mxu0
  %v910 = vadd.f32 %v786, %v788
  %v911 = vadd.f32 %v910, %v892
  %v912 = vadd.f32 %v911, %v894
  %913 = vadd.xlane.f32.xlu0 %v912
  %v914 = vpop.xlane.xlu0 %913
  %v915 = vadd.f32 %v790, %v792
  %v916 = vadd.f32 %v915, %v896
  %v917 = vadd.f32 %v916, %v898
  %918 = vadd.xlane.f32.xlu0 %v917
  %v919 = vpop.xlane.xlu0 %918
  %v920 = vadd.f32 %v796, %v798
  %v921 = vadd.f32 %v920, %v902
  %v922 = vadd.f32 %v921, %v904
  %923 = vadd.xlane.f32.xlu0 %v922
  %v924 = vpop.xlane.xlu0 %923
  %v925 = vadd.f32 %v800, %v802
  %v926 = vadd.f32 %v925, %v906
  %v927 = vadd.f32 %v926, %v908
  %928 = vadd.xlane.f32.xlu0 %v927
  %v929 = vpop.xlane.xlu0 %928
  %v930 = vmul.f32 %v914, 0.001953125
  %v931 = vmul.f32 %v919, 0.001953125
  %v932 = vmul.f32 %v924, 0.001953125
  %v933 = vmul.f32 %v929, 0.001953125
  %v934 = vsub.f32 %v786, %v930
  %v935 = vsub.f32 %v788, %v930
  %v936 = vsub.f32 %v892, %v930
  %v937 = vsub.f32 %v894, %v930
  %v938 = vsub.f32 %v790, %v931
  %v939 = vsub.f32 %v792, %v931
  %v940 = vsub.f32 %v896, %v931
  %v941 = vsub.f32 %v898, %v931
  %v942 = vsub.f32 %v796, %v932
  %v943 = vsub.f32 %v798, %v932
  %v944 = vsub.f32 %v902, %v932
  %v945 = vsub.f32 %v904, %v932
  %v946 = vsub.f32 %v800, %v933
  %v947 = vsub.f32 %v802, %v933
  %v948 = vsub.f32 %v906, %v933
  %v949 = vsub.f32 %v908, %v933
  %v950 = vmul.f32 %v934, %v934
  %v951 = vmul.f32 %v935, %v935
  %v952 = vmul.f32 %v936, %v936
  %v953 = vmul.f32 %v937, %v937
  %v954 = vmul.f32 %v938, %v938
  %v955 = vmul.f32 %v939, %v939
  %v956 = vmul.f32 %v940, %v940
  %v957 = vmul.f32 %v941, %v941
  %v958 = vmul.f32 %v942, %v942
  %v959 = vmul.f32 %v943, %v943
  %v960 = vmul.f32 %v944, %v944
  %v961 = vmul.f32 %v945, %v945
  %v962 = vmul.f32 %v946, %v946
  %v963 = vmul.f32 %v947, %v947
  %v964 = vmul.f32 %v948, %v948
  %v965 = vmul.f32 %v949, %v949
  %v966 = vadd.f32 %v950, %v951
  %v967 = vadd.f32 %v966, %v952
  %v968 = vadd.f32 %v967, %v953
  %969 = vadd.xlane.f32.xlu0 %v968
  %v970 = vpop.xlane.xlu0 %969
  %v971 = vadd.f32 %v954, %v955
  %v972 = vadd.f32 %v971, %v956
  %v973 = vadd.f32 %v972, %v957
  %974 = vadd.xlane.f32.xlu0 %v973
  %v975 = vpop.xlane.xlu0 %974
  %v976 = vadd.f32 %v958, %v959
  %v977 = vadd.f32 %v976, %v960
  %v978 = vadd.f32 %v977, %v961
  %979 = vadd.xlane.f32.xlu0 %v978
  %v980 = vpop.xlane.xlu0 %979
  %v981 = vadd.f32 %v962, %v963
  %v982 = vadd.f32 %v981, %v964
  %v983 = vadd.f32 %v982, %v965
  %984 = vadd.xlane.f32.xlu0 %v983
  %v985 = vpop.xlane.xlu0 %984
  %v986 = vmul.f32 %v970, 0.001953125
  %v987 = vmul.f32 %v975, 0.001953125
  %v988 = vmul.f32 %v980, 0.001953125
  %v989 = vmul.f32 %v985, 0.001953125
  %v990 = vld [vmem:[%s3] sm:$0xff]
  %v991 = vld [vmem:[%s3 + $0x8] sm:$0xff]
  %v992 = vld [vmem:[%s3 + $0x10] sm:$0xff]
  %v993 = vld [vmem:[%s3 + $0x18] sm:$0xff]
  %v994 = vadd.f32 %v986, 1e-05
  %v995 = vadd.f32 %v987, 1e-05
  %v996 = vadd.f32 %v988, 1e-05
  %v997 = vadd.f32 %v989, 1e-05
  %v998 = vrsqrt.pop %v994
  %v999 = vrsqrt.pop %v995
  %v1000 = vrsqrt.pop %v996
  %v1001 = vrsqrt.pop %v997
  %v1002 = vmul.f32 %v990, %v998
  %v1003 = vmul.f32 %v991, %v999
  %v1004 = vmul.f32 %v992, %v1000
  %v1005 = vmul.f32 %v993, %v1001
  %1007 = vset.pattern.permute.xlu0 0
  %1008 = vperm.xlu0 %1007, %v1002
  %v1009 = vpop.permute.xlu0 %1008
  %1012 = vset.pattern.permute.xlu0 0
  %1013 = vperm.xlu0 %1012, %v1003
  %v1014 = vpop.permute.xlu0 %1013
  %1017 = vset.pattern.permute.xlu0 0
  %1018 = vperm.xlu0 %1017, %v1004
  %v1019 = vpop.permute.xlu0 %1018
  %1022 = vset.pattern.permute.xlu0 0
  %1023 = vperm.xlu0 %1022, %v1005
  %v1024 = vpop.permute.xlu0 %1023
  %v1026 = vmul.f32 %v934, %v1009
  %v1027 = vmul.f32 %v935, %v1009
  %v1028 = vmul.f32 %v936, %v1009
  %v1029 = vmul.f32 %v937, %v1009
  %v1030 = vmul.f32 %v938, %v1014
  %v1031 = vmul.f32 %v939, %v1014
  %v1032 = vmul.f32 %v940, %v1014
  %v1033 = vmul.f32 %v941, %v1014
  %v1034 = vmul.f32 %v942, %v1019
  %v1035 = vmul.f32 %v943, %v1019
  %v1036 = vmul.f32 %v944, %v1019
  %v1037 = vmul.f32 %v945, %v1019
  %v1038 = vmul.f32 %v946, %v1024
  %v1039 = vmul.f32 %v947, %v1024
  %v1040 = vmul.f32 %v948, %v1024
  %v1041 = vmul.f32 %v949, %v1024
  %v1042 = vld [vmem:[%s4] sm:$0xff]
  %v1043 = vld [vmem:[%s4 + $0x8] sm:$0xff]
  %v1044 = vld [vmem:[%s4 + $0x10] sm:$0xff]
  %v1045 = vld [vmem:[%s4 + $0x18] sm:$0xff]
  %1047 = vset.pattern.permute.xlu0 0
  %1048 = vperm.xlu0 %1047, %v1042
  %v1049 = vpop.permute.xlu0 %1048
  %1052 = vset.pattern.permute.xlu0 0
  %1053 = vperm.xlu0 %1052, %v1043
  %v1054 = vpop.permute.xlu0 %1053
  %1057 = vset.pattern.permute.xlu0 0
  %1058 = vperm.xlu0 %1057, %v1044
  %v1059 = vpop.permute.xlu0 %1058
  %1062 = vset.pattern.permute.xlu0 0
  %1063 = vperm.xlu0 %1062, %v1045
  %v1064 = vpop.permute.xlu0 %1063
  %v1066 = vadd.f32 %v1026, %v1049
  %v1067 = vadd.f32 %v1027, %v1049
  %v1068 = vadd.f32 %v1028, %v1049
  %v1069 = vadd.f32 %v1029, %v1049
  %v1070 = vadd.f32 %v1030, %v1054
  %v1071 = vadd.f32 %v1031, %v1054
  %v1072 = vadd.f32 %v1032, %v1054
  %v1073 = vadd.f32 %v1033, %v1054
  %v1074 = vadd.f32 %v1034, %v1059
  %v1075 = vadd.f32 %v1035, %v1059
  %v1076 = vadd.f32 %v1036, %v1059
  %v1077 = vadd.f32 %v1037, %v1059
  %v1078 = vadd.f32 %v1038, %v1064
  %v1079 = vadd.f32 %v1039, %v1064
  %v1080 = vadd.f32 %v1040, %v1064
  %v1081 = vadd.f32 %v1041, %v1064
  %v1082 = vmul.f32 %v1066, 0.2
  %v1083 = vmul.f32 %v1067, 0.2
  %v1084 = vmul.f32 %v1068, 0.2
  %v1085 = vmul.f32 %v1069, 0.2
  %v1086 = vmul.f32 %v1070, 0.2
  %v1087 = vmul.f32 %v1071, 0.2
  %v1088 = vmul.f32 %v1072, 0.2
  %v1089 = vmul.f32 %v1073, 0.2
  %v1090 = vmul.f32 %v1074, 0.2
  %v1091 = vmul.f32 %v1075, 0.2
  %v1092 = vmul.f32 %v1076, 0.2
  %v1093 = vmul.f32 %v1077, 0.2
  %v1094 = vmul.f32 %v1078, 0.2
  %v1095 = vmul.f32 %v1079, 0.2
  %v1096 = vmul.f32 %v1080, 0.2
  %v1097 = vmul.f32 %v1081, 0.2
  %v1098 = vmax.f32 %v1066, %v1082
  %v1099 = vmax.f32 %v1067, %v1083
  %v1100 = vmax.f32 %v1068, %v1084
  %v1101 = vmax.f32 %v1069, %v1085
  %v1102 = vmax.f32 %v1070, %v1086
  %v1103 = vmax.f32 %v1071, %v1087
  %v1104 = vmax.f32 %v1072, %v1088
  %v1105 = vmax.f32 %v1073, %v1089
  %v1106 = vmax.f32 %v1074, %v1090
  %v1107 = vmax.f32 %v1075, %v1091
  %v1108 = vmax.f32 %v1076, %v1092
  %v1109 = vmax.f32 %v1077, %v1093
  %v1110 = vmax.f32 %v1078, %v1094
  %v1111 = vmax.f32 %v1079, %v1095
  %v1112 = vmax.f32 %v1080, %v1096
  %v1113 = vmax.f32 %v1081, %v1097
  %v1114 = vpack.c.bf16 %v1102, %v1098
  %v1115 = vpack.c.bf16 %v1103, %v1099
  %v1116 = vpack.c.bf16 %v1104, %v1100
  %v1117 = vpack.c.bf16 %v1105, %v1101
  %v1118 = vpack.c.bf16 %v1110, %v1106
  %v1119 = vpack.c.bf16 %v1111, %v1107
  %v1120 = vpack.c.bf16 %v1112, %v1108
  %v1121 = vpack.c.bf16 %v1113, %v1109
  %v1130 = vunpack.c.l.b16 %v1114
  %v1131 = vunpack.c.l.b16 %v1115
  %v1132 = vunpack.c.l.b16 %v1116
  %v1133 = vunpack.c.l.b16 %v1117
  %v1134 = vunpack.c.h.b16 %v1114
  %v1135 = vunpack.c.h.b16 %v1115
  %v1136 = vunpack.c.h.b16 %v1116
  %v1137 = vunpack.c.h.b16 %v1117
  %v1138 = vunpack.c.l.b16 %v1118
  %v1139 = vunpack.c.l.b16 %v1119
  %v1140 = vunpack.c.l.b16 %v1120
  %v1141 = vunpack.c.l.b16 %v1121
  %v1142 = vunpack.c.h.b16 %v1118
  %v1143 = vunpack.c.h.b16 %v1119
  %v1144 = vunpack.c.h.b16 %v1120
  %v1145 = vunpack.c.h.b16 %v1121
  %v1146 = vpack.c.b16 %v1131, %v1130
  %v1147 = vpack.c.b16 %v1133, %v1132
  %v1148 = vpack.c.b16 %v1135, %v1134
  %v1149 = vpack.c.b16 %v1137, %v1136
  %v1150 = vpack.c.b16 %v1139, %v1138
  %v1151 = vpack.c.b16 %v1141, %v1140
  %v1152 = vpack.c.b16 %v1143, %v1142
  %v1153 = vpack.c.b16 %v1145, %v1144
  %1162 = vst [vmem:[%s5] sm:$0xff] %v1146
  %1163 = vst [vmem:[%s5 + $0x8] sm:$0xff] %v1147
  %1164 = vst [vmem:[%s5 + $0x10] sm:$0xff] %v1148
  %1165 = vst [vmem:[%s5 + $0x18] sm:$0xff] %v1149
  %1166 = vst [vmem:[%s5 + $0x20] sm:$0xff] %v1150
  %1167 = vst [vmem:[%s5 + $0x28] sm:$0xff] %v1151
  %1168 = vst [vmem:[%s5 + $0x30] sm:$0xff] %v1152
  %1169 = vst [vmem:[%s5 + $0x38] sm:$0xff] %v1153
  // Predicated region
  $region22: #{dis_forward.6} parent=0 // pred_check
    _
  $region23: #{dis_forward.6} parent=0 // pred_check_branch
    %1171 = sbr.rel (0) target = $region25
  $region24: #{dis_forward.6} parent=0 // pred_region
    _
  $region25: #{dis_forward.6} parent=0 // pred_fallthru
    _
  // Predicated region
  $region26: #{dis_forward.6} parent=0 // pred_check
    _
  $region27: #{dis_forward.6} parent=0 // pred_check_branch
    %1173 = sbr.rel (0) target = $region29
  $region28: #{dis_forward.6} parent=0 // pred_region
    _
  $region29: #{dis_forward.6} parent=0 // pred_fallthru
    _

// kernel: dis_forward.7
$region0: #{dis_forward.7}
  #allocation0 [shape = 'u32[]', space=smem, size = 0x4, offset = 0x4, fixed_abs, tag = 'smem constant byte address 0x4 - core index']
  #allocation1 [shape = 'u32[144,128]{1,0:T(1,128)}', space=vmem, size = 0x12000, scoped, tag = 'internal scratch']
  #allocation2 [shape = 'f32[1,1]{1,0:T(1,128)S(1)}', space=vmem, size = 0x200, scoped, tag = 'scoped memory for dis_forward.7']
  %s0 = inlined_call_operand.vmem [shape: bf16[800,128], index: 0, kind: input, shape index: {}]
  %s1 = inlined_call_operand.vmem [shape: bf16[64,800], index: 1, kind: input, shape index: {}]
  %s2 = inlined_call_operand.vmem [shape: f32[64,1], index: 2, kind: input, shape index: {}]
  %s3 = inlined_call_operand.vmem [shape: f32[64,1], index: 3, kind: input, shape index: {}]
  %s4 = inlined_call_operand.vmem [shape: f32[64,1], index: 4, kind: input, shape index: {}]
  %s5 = inlined_call_operand.vmem [shape: f32[64,64], index: 5, kind: input, shape index: {}]
  %s6 = inlined_call_operand.<no memory space> [shape: f32[1,1], index: 6, kind: input, shape index: {}]
  %s7 = inlined_call_operand.vmem [shape: f32[2,1], index: 7, kind: output, shape index: {}]
  %s8 = sld [smem:[#allocation0]]
  $region38: #{dis_forward.7} parent=0
    _
  %s10 = ssub.s32 1, %s8
  %s11 = scalar_select 0, %s10, %s8
  %v12 = vstv %s6
  %13 = vst [vmem:[#allocation2] sm:$0x1] %v12
  // Predicated region
  $region2: #{dis_forward.7} parent=0 // pred_check
    _
  $region3: #{dis_forward.7} parent=0 // pred_check_branch
    %15 = sbr.rel (0) target = $region5
  $region4: #{dis_forward.7} parent=0 // pred_region
    _
  $region5: #{dis_forward.7} parent=0 // pred_fallthru
    _
  // Predicated region
  $region6: #{dis_forward.7} parent=0 // pred_check
    _
  $region7: #{dis_forward.7} parent=0 // pred_check_branch
    %17 = sbr.rel (0) target = $region9
  $region8: #{dis_forward.7} parent=0 // pred_region
    _
  $region9: #{dis_forward.7} parent=0 // pred_fallthru
    _
  // Predicated region
  $region10: #{dis_forward.7} parent=0 // pred_check
    _
  $region11: #{dis_forward.7} parent=0 // pred_check_branch
    %19 = sbr.rel (0) target = $region13
  $region12: #{dis_forward.7} parent=0 // pred_region
    _
  $region13: #{dis_forward.7} parent=0 // pred_fallthru
    _
  // Predicated region
  $region14: #{dis_forward.7} parent=0 // pred_check
    _
  $region15: #{dis_forward.7} parent=0 // pred_check_branch
    %21 = sbr.rel (0) target = $region17
  $region16: #{dis_forward.7} parent=0 // pred_region
    _
  $region17: #{dis_forward.7} parent=0 // pred_fallthru
    _
  // Predicated region
  $region18: #{dis_forward.7} parent=0 // pred_check
    _
  $region19: #{dis_forward.7} parent=0 // pred_check_branch
    %23 = sbr.rel (0) target = $region21
  $region20: #{dis_forward.7} parent=0 // pred_region
    _
  $region21: #{dis_forward.7} parent=0 // pred_fallthru
    _
  // Predicated region
  $region22: #{dis_forward.7} parent=0 // pred_check
    _
  $region23: #{dis_forward.7} parent=0 // pred_check_branch
    %25 = sbr.rel (0) target = $region25
  $region24: #{dis_forward.7} parent=0 // pred_region
    _
  $region25: #{dis_forward.7} parent=0 // pred_fallthru
    _
  // Predicated region
  $region26: #{dis_forward.7} parent=0 // pred_check
    _
  $region27: #{dis_forward.7} parent=0 // pred_check_branch
    %27 = sbr.rel (0) target = $region29
  $region28: #{dis_forward.7} parent=0 // pred_region
    _
  $region29: #{dis_forward.7} parent=0 // pred_fallthru
    _
  %v29 = vld [vmem:[%s1] sm:$0xff]
  %v30 = vld [vmem:[%s1 + $0x8] sm:$0xff]
  %v31 = vld [vmem:[%s1 + $0x10] sm:$0xff]
  %v32 = vld [vmem:[%s1 + $0x18] sm:$0xf]
  %v33 = vld [vmem:[%s1 + $0x1c] sm:$0xff]
  %v34 = vld [vmem:[%s1 + $0x24] sm:$0xff]
  %v35 = vld [vmem:[%s1 + $0x2c] sm:$0xff]
  %v36 = vld [vmem:[%s1 + $0x34] sm:$0xf]
  %v37 = vld [vmem:[%s1 + $0x38] sm:$0xff]
  %v38 = vld [vmem:[%s1 + $0x40] sm:$0xff]
  %v39 = vld [vmem:[%s1 + $0x48] sm:$0xff]
  %v40 = vld [vmem:[%s1 + $0x50] sm:$0xf]
  %v41 = vld [vmem:[%s1 + $0x54] sm:$0xff]
  %v42 = vld [vmem:[%s1 + $0x5c] sm:$0xff]
  %v43 = vld [vmem:[%s1 + $0x64] sm:$0xff]
  %v44 = vld [vmem:[%s1 + $0x6c] sm:$0xf]
  %v45 = vld [vmem:[%s1 + $0x70] sm:$0xff]
  %v46 = vld [vmem:[%s1 + $0x78] sm:$0xff]
  %v47 = vld [vmem:[%s1 + $0x80] sm:$0xff]
  %v48 = vld [vmem:[%s1 + $0x88] sm:$0xf]
  %v49 = vld [vmem:[%s1 + $0x8c] sm:$0xff]
  %v50 = vld [vmem:[%s1 + $0x94] sm:$0xff]
  %v51 = vld [vmem:[%s1 + $0x9c] sm:$0xff]
  %v52 = vld [vmem:[%s1 + $0xa4] sm:$0xf]
  %v53 = vld [vmem:[%s1 + $0xa8] sm:$0xff]
  %v54 = vld [vmem:[%s1 + $0xb0] sm:$0xff]
  %v55 = vld [vmem:[%s1 + $0xb8] sm:$0xff]
  %v56 = vld [vmem:[%s1 + $0xc0] sm:$0xf]
  %v57 = vld [vmem:[%s1 + $0xc4] sm:$0xff]
  %v58 = vld [vmem:[%s1 + $0xcc] sm:$0xff]
  %v59 = vld [vmem:[%s1 + $0xd4] sm:$0xff]
  %v60 = vld [vmem:[%s1 + $0xdc] sm:$0xf]
  %v61 = vld [vmem:[%s0] sm:$0xf]
  %v62 = vld [vmem:[%s0 + $0x4] sm:$0xf]
  %v63 = vld [vmem:[%s0 + $0x8] sm:$0xf]
  %v64 = vld [vmem:[%s0 + $0xc] sm:$0xf]
  %v65 = vld [vmem:[%s0 + $0x10] sm:$0xf]
  %v66 = vld [vmem:[%s0 + $0x14] sm:$0xf]
  %v67 = vld [vmem:[%s0 + $0x18] sm:$0xf]
  %v68 = vld [vmem:[%s0 + $0x1c] sm:$0xf]
  %v69 = vld [vmem:[%s0 + $0x20] sm:$0xf]
  %v70 = vld [vmem:[%s0 + $0x24] sm:$0xf]
  %v71 = vld [vmem:[%s0 + $0x28] sm:$0xf]
  %v72 = vld [vmem:[%s0 + $0x2c] sm:$0xf]
  %v73 = vld [vmem:[%s0 + $0x30] sm:$0xf]
  %v74 = vld [vmem:[%s0 + $0x34] sm:$0xf]
  %v75 = vld [vmem:[%s0 + $0x38] sm:$0xf]
  %v76 = vld [vmem:[%s0 + $0x3c] sm:$0xf]
  %v77 = vld [vmem:[%s0 + $0x40] sm:$0xf]
  %v78 = vld [vmem:[%s0 + $0x44] sm:$0xf]
  %v79 = vld [vmem:[%s0 + $0x48] sm:$0xf]
  %v80 = vld [vmem:[%s0 + $0x4c] sm:$0xf]
  %v81 = vld [vmem:[%s0 + $0x50] sm:$0xf]
  %v82 = vld [vmem:[%s0 + $0x54] sm:$0xf]
  %v83 = vld [vmem:[%s0 + $0x58] sm:$0xf]
  %v84 = vld [vmem:[%s0 + $0x5c] sm:$0xf]
  %v85 = vld [vmem:[%s0 + $0x60] sm:$0xf]
  %v86 = vld [vmem:[%s0 + $0x64] sm:$0xf]
  %v87 = vld [vmem:[%s0 + $0x68] sm:$0xf]
  %v88 = vld [vmem:[%s0 + $0x6c] sm:$0xf]
  %v89 = vld [vmem:[%s0 + $0x70] sm:$0xf]
  %v90 = vld [vmem:[%s0 + $0x74] sm:$0xf]
  %v91 = vld [vmem:[%s0 + $0x78] sm:$0xf]
  %v92 = vld [vmem:[%s0 + $0x7c] sm:$0xf]
  %v93 = vld [vmem:[%s0 + $0x80] sm:$0xf]
  %v94 = vld [vmem:[%s0 + $0x84] sm:$0xf]
  %v95 = vld [vmem:[%s0 + $0x88] sm:$0xf]
  %v96 = vld [vmem:[%s0 + $0x8c] sm:$0xf]
  %v97 = vld [vmem:[%s0 + $0x90] sm:$0xf]
  %v98 = vld [vmem:[%s0 + $0x94] sm:$0xf]
  %v99 = vld [vmem:[%s0 + $0x98] sm:$0xf]
  %v100 = vld [vmem:[%s0 + $0x9c] sm:$0xf]
  %v101 = vld [vmem:[%s0 + $0xa0] sm:$0xf]
  %v102 = vld [vmem:[%s0 + $0xa4] sm:$0xf]
  %v103 = vld [vmem:[%s0 + $0xa8] sm:$0xf]
  %v104 = vld [vmem:[%s0 + $0xac] sm:$0xf]
  %v105 = vld [vmem:[%s0 + $0xb0] sm:$0xf]
  %v106 = vld [vmem:[%s0 + $0xb4] sm:$0xf]
  %v107 = vld [vmem:[%s0 + $0xb8] sm:$0xf]
  %v108 = vld [vmem:[%s0 + $0xbc] sm:$0xf]
  %v109 = vld [vmem:[%s0 + $0xc0] sm:$0xf]
  %v110 = vld [vmem:[%s0 + $0xc4] sm:$0xf]
  %v111 = vld [vmem:[%s0 + $0xc8] sm:$0xf]
  %v112 = vld [vmem:[%s0 + $0xcc] sm:$0xf]
  %v113 = vld [vmem:[%s0 + $0xd0] sm:$0xf]
  %v114 = vld [vmem:[%s0 + $0xd4] sm:$0xf]
  %v115 = vld [vmem:[%s0 + $0xd8] sm:$0xf]
  %v116 = vld [vmem:[%s0 + $0xdc] sm:$0xf]
  %v117 = vld [vmem:[%s0 + $0xe0] sm:$0xf]
  %v118 = vld [vmem:[%s0 + $0xe4] sm:$0xf]
  %v119 = vld [vmem:[%s0 + $0xe8] sm:$0xf]
  %v120 = vld [vmem:[%s0 + $0xec] sm:$0xf]
  %v121 = vld [vmem:[%s0 + $0xf0] sm:$0xf]
  %v122 = vld [vmem:[%s0 + $0xf4] sm:$0xf]
  %v123 = vld [vmem:[%s0 + $0xf8] sm:$0xf]
  %v124 = vld [vmem:[%s0 + $0xfc] sm:$0xf]
  %v125 = vld [vmem:[%s0 + $0x100] sm:$0xf]
  %v126 = vld [vmem:[%s0 + $0x104] sm:$0xf]
  %v127 = vld [vmem:[%s0 + $0x108] sm:$0xf]
  %v128 = vld [vmem:[%s0 + $0x10c] sm:$0xf]
  %v129 = vld [vmem:[%s0 + $0x110] sm:$0xf]
  %v130 = vld [vmem:[%s0 + $0x114] sm:$0xf]
  %v131 = vld [vmem:[%s0 + $0x118] sm:$0xf]
  %v132 = vld [vmem:[%s0 + $0x11c] sm:$0xf]
  %v133 = vld [vmem:[%s0 + $0x120] sm:$0xf]
  %v134 = vld [vmem:[%s0 + $0x124] sm:$0xf]
  %v135 = vld [vmem:[%s0 + $0x128] sm:$0xf]
  %v136 = vld [vmem:[%s0 + $0x12c] sm:$0xf]
  %v137 = vld [vmem:[%s0 + $0x130] sm:$0xf]
  %v138 = vld [vmem:[%s0 + $0x134] sm:$0xf]
  %v139 = vld [vmem:[%s0 + $0x138] sm:$0xf]
  %v140 = vld [vmem:[%s0 + $0x13c] sm:$0xf]
  %v141 = vld [vmem:[%s0 + $0x140] sm:$0xf]
  %v142 = vld [vmem:[%s0 + $0x144] sm:$0xf]
  %v143 = vld [vmem:[%s0 + $0x148] sm:$0xf]
  %v144 = vld [vmem:[%s0 + $0x14c] sm:$0xf]
  %v145 = vld [vmem:[%s0 + $0x150] sm:$0xf]
  %v146 = vld [vmem:[%s0 + $0x154] sm:$0xf]
  %v147 = vld [vmem:[%s0 + $0x158] sm:$0xf]
  %v148 = vld [vmem:[%s0 + $0x15c] sm:$0xf]
  %v149 = vld [vmem:[%s0 + $0x160] sm:$0xf]
  %v150 = vld [vmem:[%s0 + $0x164] sm:$0xf]
  %v151 = vld [vmem:[%s0 + $0x168] sm:$0xf]
  %v152 = vld [vmem:[%s0 + $0x16c] sm:$0xf]
  %v153 = vld [vmem:[%s0 + $0x170] sm:$0xf]
  %v154 = vld [vmem:[%s0 + $0x174] sm:$0xf]
  %v155 = vld [vmem:[%s0 + $0x178] sm:$0xf]
  %v156 = vld [vmem:[%s0 + $0x17c] sm:$0xf]
  %v157 = vld [vmem:[%s0 + $0x180] sm:$0xf]
  %v158 = vld [vmem:[%s0 + $0x184] sm:$0xf]
  %v159 = vld [vmem:[%s0 + $0x188] sm:$0xf]
  %v160 = vld [vmem:[%s0 + $0x18c] sm:$0xf]
  %v161 = vld [vmem:[%s2] sm:$0xff]
  %v162 = vld [vmem:[%s2 + $0x8] sm:$0xff]
  %v163 = vld [vmem:[%s2 + $0x10] sm:$0xff]
  %v164 = vld [vmem:[%s2 + $0x18] sm:$0xff]
  %v165 = vld [vmem:[%s2 + $0x20] sm:$0xff]
  %v166 = vld [vmem:[%s2 + $0x28] sm:$0xff]
  %v167 = vld [vmem:[%s2 + $0x30] sm:$0xff]
  %v168 = vld [vmem:[%s2 + $0x38] sm:$0xff]
  %170 = vset.pattern.permute.xlu0 0
  %171 = vperm.xlu0 %170, %v161
  %v172 = vpop.permute.xlu0 %171
  %175 = vset.pattern.permute.xlu0 0
  %176 = vperm.xlu0 %175, %v162
  %v177 = vpop.permute.xlu0 %176
  %180 = vset.pattern.permute.xlu0 0
  %181 = vperm.xlu0 %180, %v163
  %v182 = vpop.permute.xlu0 %181
  %185 = vset.pattern.permute.xlu0 0
  %186 = vperm.xlu0 %185, %v164
  %v187 = vpop.permute.xlu0 %186
  %190 = vset.pattern.permute.xlu0 0
  %191 = vperm.xlu0 %190, %v165
  %v192 = vpop.permute.xlu0 %191
  %195 = vset.pattern.permute.xlu0 0
  %196 = vperm.xlu0 %195, %v166
  %v197 = vpop.permute.xlu0 %196
  %200 = vset.pattern.permute.xlu0 0
  %201 = vperm.xlu0 %200, %v167
  %v202 = vpop.permute.xlu0 %201
  %205 = vset.pattern.permute.xlu0 0
  %206 = vperm.xlu0 %205, %v168
  %v207 = vpop.permute.xlu0 %206
  %v241 = vunpack.c.l.b16 %v29
  %v242 = vunpack.c.h.b16 %v29
  %v243 = vunpack.c.l.b16 %v30
  %v244 = vunpack.c.h.b16 %v30
  %v245 = vunpack.c.l.b16 %v31
  %v246 = vunpack.c.h.b16 %v31
  %v247 = vunpack.c.l.b16 %v32
  %v248 = vunpack.c.l.b16 %v33
  %v249 = vunpack.c.h.b16 %v33
  %v250 = vunpack.c.l.b16 %v34
  %v251 = vunpack.c.h.b16 %v34
  %v252 = vunpack.c.l.b16 %v35
  %v253 = vunpack.c.h.b16 %v35
  %v254 = vunpack.c.l.b16 %v36
  %v255 = vunpack.c.l.b16 %v37
  %v256 = vunpack.c.h.b16 %v37
  %v257 = vunpack.c.l.b16 %v38
  %v258 = vunpack.c.h.b16 %v38
  %v259 = vunpack.c.l.b16 %v39
  %v260 = vunpack.c.h.b16 %v39
  %v261 = vunpack.c.l.b16 %v40
  %v262 = vunpack.c.l.b16 %v41
  %v263 = vunpack.c.h.b16 %v41
  %v264 = vunpack.c.l.b16 %v42
  %v265 = vunpack.c.h.b16 %v42
  %v266 = vunpack.c.l.b16 %v43
  %v267 = vunpack.c.h.b16 %v43
  %v268 = vunpack.c.l.b16 %v44
  %v269 = vunpack.c.l.b16 %v45
  %v270 = vunpack.c.h.b16 %v45
  %v271 = vunpack.c.l.b16 %v46
  %v272 = vunpack.c.h.b16 %v46
  %v273 = vunpack.c.l.b16 %v47
  %v274 = vunpack.c.h.b16 %v47
  %v275 = vunpack.c.l.b16 %v48
  %v276 = vunpack.c.l.b16 %v49
  %v277 = vunpack.c.h.b16 %v49
  %v278 = vunpack.c.l.b16 %v50
  %v279 = vunpack.c.h.b16 %v50
  %v280 = vunpack.c.l.b16 %v51
  %v281 = vunpack.c.h.b16 %v51
  %v282 = vunpack.c.l.b16 %v52
  %v283 = vunpack.c.l.b16 %v53
  %v284 = vunpack.c.h.b16 %v53
  %v285 = vunpack.c.l.b16 %v54
  %v286 = vunpack.c.h.b16 %v54
  %v287 = vunpack.c.l.b16 %v55
  %v288 = vunpack.c.h.b16 %v55
  %v289 = vunpack.c.l.b16 %v56
  %v290 = vunpack.c.l.b16 %v57
  %v291 = vunpack.c.h.b16 %v57
  %v292 = vunpack.c.l.b16 %v58
  %v293 = vunpack.c.h.b16 %v58
  %v294 = vunpack.c.l.b16 %v59
  %v295 = vunpack.c.h.b16 %v59
  %v296 = vunpack.c.l.b16 %v60
  %v297 = vpack.c.b16 %v248, %v241
  %v298 = vpack.c.b16 %v249, %v242
  %v299 = vpack.c.b16 %v250, %v243
  %v300 = vpack.c.b16 %v251, %v244
  %v301 = vpack.c.b16 %v252, %v245
  %v302 = vpack.c.b16 %v253, %v246
  %v303 = vpack.c.b16 %v254, %v247
  %v304 = vpack.c.b16 %v262, %v255
  %v305 = vpack.c.b16 %v263, %v256
  %v306 = vpack.c.b16 %v264, %v257
  %v307 = vpack.c.b16 %v265, %v258
  %v308 = vpack.c.b16 %v266, %v259
  %v309 = vpack.c.b16 %v267, %v260
  %v310 = vpack.c.b16 %v268, %v261
  %v311 = vpack.c.b16 %v276, %v269
  %v312 = vpack.c.b16 %v277, %v270
  %v313 = vpack.c.b16 %v278, %v271
  %v314 = vpack.c.b16 %v279, %v272
  %v315 = vpack.c.b16 %v280, %v273
  %v316 = vpack.c.b16 %v281, %v274
  %v317 = vpack.c.b16 %v282, %v275
  %v318 = vpack.c.b16 %v290, %v283
  %v319 = vpack.c.b16 %v291, %v284
  %v320 = vpack.c.b16 %v292, %v285
  %v321 = vpack.c.b16 %v293, %v286
  %v322 = vpack.c.b16 %v294, %v287
  %v323 = vpack.c.b16 %v295, %v288
  %v324 = vpack.c.b16 %v296, %v289
  %v449 = vunpack.c.l.b16 %v61
  %v450 = vunpack.c.l.b16 %v62
  %v451 = vunpack.c.l.b16 %v63
  %v452 = vunpack.c.l.b16 %v64
  %v453 = vunpack.c.l.b16 %v65
  %v454 = vunpack.c.l.b16 %v66
  %v455 = vunpack.c.l.b16 %v67
  %v456 = vunpack.c.l.b16 %v68
  %v457 = vunpack.c.l.b16 %v69
  %v458 = vunpack.c.l.b16 %v70
  %v459 = vunpack.c.l.b16 %v71
  %v460 = vunpack.c.l.b16 %v72
  %v461 = vunpack.c.l.b16 %v73
  %v462 = vunpack.c.l.b16 %v74
  %v463 = vunpack.c.l.b16 %v75
  %v464 = vunpack.c.l.b16 %v76
  %v465 = vunpack.c.l.b16 %v77
  %v466 = vunpack.c.l.b16 %v78
  %v467 = vunpack.c.l.b16 %v79
  %v468 = vunpack.c.l.b16 %v80
  %v469 = vunpack.c.l.b16 %v81
  %v470 = vunpack.c.l.b16 %v82
  %v471 = vunpack.c.l.b16 %v83
  %v472 = vunpack.c.l.b16 %v84
  %v473 = vunpack.c.l.b16 %v85
  %v474 = vunpack.c.l.b16 %v86
  %v475 = vunpack.c.l.b16 %v87
  %v476 = vunpack.c.l.b16 %v88
  %v477 = vunpack.c.l.b16 %v89
  %v478 = vunpack.c.l.b16 %v90
  %v479 = vunpack.c.l.b16 %v91
  %v480 = vunpack.c.l.b16 %v92
  %v481 = vunpack.c.l.b16 %v93
  %v482 = vunpack.c.l.b16 %v94
  %v483 = vunpack.c.l.b16 %v95
  %v484 = vunpack.c.l.b16 %v96
  %v485 = vunpack.c.l.b16 %v97
  %v486 = vunpack.c.l.b16 %v98
  %v487 = vunpack.c.l.b16 %v99
  %v488 = vunpack.c.l.b16 %v100
  %v489 = vunpack.c.l.b16 %v101
  %v490 = vunpack.c.l.b16 %v102
  %v491 = vunpack.c.l.b16 %v103
  %v492 = vunpack.c.l.b16 %v104
  %v493 = vunpack.c.l.b16 %v105
  %v494 = vunpack.c.l.b16 %v106
  %v495 = vunpack.c.l.b16 %v107
  %v496 = vunpack.c.l.b16 %v108
  %v497 = vunpack.c.l.b16 %v109
  %v498 = vunpack.c.l.b16 %v110
  %v499 = vunpack.c.l.b16 %v111
  %v500 = vunpack.c.l.b16 %v112
  %v501 = vunpack.c.l.b16 %v113
  %v502 = vunpack.c.l.b16 %v114
  %v503 = vunpack.c.l.b16 %v115
  %v504 = vunpack.c.l.b16 %v116
  %v505 = vunpack.c.l.b16 %v117
  %v506 = vunpack.c.l.b16 %v118
  %v507 = vunpack.c.l.b16 %v119
  %v508 = vunpack.c.l.b16 %v120
  %v509 = vunpack.c.l.b16 %v121
  %v510 = vunpack.c.l.b16 %v122
  %v511 = vunpack.c.l.b16 %v123
  %v512 = vunpack.c.l.b16 %v124
  %v513 = vunpack.c.l.b16 %v125
  %v514 = vunpack.c.l.b16 %v126
  %v515 = vunpack.c.l.b16 %v127
  %v516 = vunpack.c.l.b16 %v128
  %v517 = vunpack.c.l.b16 %v129
  %v518 = vunpack.c.l.b16 %v130
  %v519 = vunpack.c.l.b16 %v131
  %v520 = vunpack.c.l.b16 %v132
  %v521 = vunpack.c.l.b16 %v133
  %v522 = vunpack.c.l.b16 %v134
  %v523 = vunpack.c.l.b16 %v135
  %v524 = vunpack.c.l.b16 %v136
  %v525 = vunpack.c.l.b16 %v137
  %v526 = vunpack.c.l.b16 %v138
  %v527 = vunpack.c.l.b16 %v139
  %v528 = vunpack.c.l.b16 %v140
  %v529 = vunpack.c.l.b16 %v141
  %v530 = vunpack.c.l.b16 %v142
  %v531 = vunpack.c.l.b16 %v143
  %v532 = vunpack.c.l.b16 %v144
  %v533 = vunpack.c.l.b16 %v145
  %v534 = vunpack.c.l.b16 %v146
  %v535 = vunpack.c.l.b16 %v147
  %v536 = vunpack.c.l.b16 %v148
  %v537 = vunpack.c.l.b16 %v149
  %v538 = vunpack.c.l.b16 %v150
  %v539 = vunpack.c.l.b16 %v151
  %v540 = vunpack.c.l.b16 %v152
  %v541 = vunpack.c.l.b16 %v153
  %v542 = vunpack.c.l.b16 %v154
  %v543 = vunpack.c.l.b16 %v155
  %v544 = vunpack.c.l.b16 %v156
  %v545 = vunpack.c.l.b16 %v157
  %v546 = vunpack.c.l.b16 %v158
  %v547 = vunpack.c.l.b16 %v159
  %v548 = vunpack.c.l.b16 %v160
  %v549 = vpack.c.b16 %v450, %v449
  %v550 = vpack.c.b16 %v452, %v451
  %v551 = vpack.c.b16 %v454, %v453
  %v552 = vpack.c.b16 %v456, %v455
  %v553 = vpack.c.b16 %v458, %v457
  %v554 = vpack.c.b16 %v460, %v459
  %v555 = vpack.c.b16 %v462, %v461
  %v556 = vpack.c.b16 %v464, %v463
  %v557 = vpack.c.b16 %v466, %v465
  %v558 = vpack.c.b16 %v468, %v467
  %v559 = vpack.c.b16 %v470, %v469
  %v560 = vpack.c.b16 %v472, %v471
  %v561 = vpack.c.b16 %v474, %v473
  %v562 = vpack.c.b16 %v476, %v475
  %v563 = vpack.c.b16 %v478, %v477
  %v564 = vpack.c.b16 %v480, %v479
  %v565 = vpack.c.b16 %v482, %v481
  %v566 = vpack.c.b16 %v484, %v483
  %v567 = vpack.c.b16 %v486, %v485
  %v568 = vpack.c.b16 %v488, %v487
  %v569 = vpack.c.b16 %v490, %v489
  %v570 = vpack.c.b16 %v492, %v491
  %v571 = vpack.c.b16 %v494, %v493
  %v572 = vpack.c.b16 %v496, %v495
  %v573 = vpack.c.b16 %v498, %v497
  %v574 = vpack.c.b16 %v500, %v499
  %v575 = vpack.c.b16 %v502, %v501
  %v576 = vpack.c.b16 %v504, %v503
  %v577 = vpack.c.b16 %v506, %v505
  %v578 = vpack.c.b16 %v508, %v507
  %v579 = vpack.c.b16 %v510, %v509
  %v580 = vpack.c.b16 %v512, %v511
  %v581 = vpack.c.b16 %v514, %v513
  %v582 = vpack.c.b16 %v516, %v515
  %v583 = vpack.c.b16 %v518, %v517
  %v584 = vpack.c.b16 %v520, %v519
  %v585 = vpack.c.b16 %v522, %v521
  %v586 = vpack.c.b16 %v524, %v523
  %v587 = vpack.c.b16 %v526, %v525
  %v588 = vpack.c.b16 %v528, %v527
  %v589 = vpack.c.b16 %v530, %v529
  %v590 = vpack.c.b16 %v532, %v531
  %v591 = vpack.c.b16 %v534, %v533
  %v592 = vpack.c.b16 %v536, %v535
  %v593 = vpack.c.b16 %v538, %v537
  %v594 = vpack.c.b16 %v540, %v539
  %v595 = vpack.c.b16 %v542, %v541
  %v596 = vpack.c.b16 %v544, %v543
  %v597 = vpack.c.b16 %v546, %v545
  %v598 = vpack.c.b16 %v548, %v547
  %vm649 = vcmask 261120
  %v651 = vsel %vm649, %v303, 0
  %v654 = vsel %vm649, %v310, 0
  %v657 = vsel %vm649, %v317, 0
  %v660 = vsel %vm649, %v324, 0
  %662 = vmatprep.subr.bf16.mxu0 0
  %663 = vmatpush1.bf16.msra.mxu0 %v549
  %664 = vmatprep.subr.bf16.mxu0 0
  %665 = vmatpush1.bf16.msra.mxu0 %v550
  %666 = vmatprep.subr.bf16.mxu0 0
  %667 = vmatpush1.bf16.msra.mxu0 %v551
  %668 = vmatprep.subr.bf16.mxu0 0
  %669 = vmatpush1.bf16.msra.mxu0 %v552
  %670 = vmatprep.subr.bf16.mxu0 0
  %671 = vmatpush1.bf16.msra.mxu0 %v553
  %672 = vmatprep.subr.bf16.mxu0 0
  %673 = vmatpush1.bf16.msra.mxu0 %v554
  %674 = vmatprep.subr.bf16.mxu0 0
  %675 = vmatpush1.bf16.msra.mxu0 %v555
  %676 = vmatprep.subr.bf16.mxu0 0
  %677 = vmatpush1.bf16.msra.mxu0 %v556
  %678 = vmatprep.subr.bf16.mxu0 0
  %679 = vmatpush1.bf16.msra.mxu0 %v557
  %680 = vmatprep.subr.bf16.mxu0 0
  %681 = vmatpush1.bf16.msra.mxu0 %v558
  %682 = vmatprep.subr.bf16.mxu0 0
  %683 = vmatpush1.bf16.msra.mxu0 %v559
  %684 = vmatprep.subr.bf16.mxu0 0
  %685 = vmatpush1.bf16.msra.mxu0 %v560
  %686 = vmatprep.subr.bf16.mxu0 0
  %687 = vmatpush1.bf16.msra.mxu0 %v561
  %688 = vmatprep.subr.bf16.mxu0 0
  %689 = vmatpush1.bf16.msra.mxu0 %v562
  %690 = vmatprep.subr.bf16.mxu0 0
  %691 = vmatpush1.bf16.msra.mxu0 %v563
  %692 = vmatprep.subr.bf16.mxu0 0
  %693 = vmatpush1.bf16.msra.mxu0 %v564
  %694 = vmatprep.mubr.bf16.mxu0 %v298
  %695 = vmatmul.mubr.bf16.gmra.mrb[0].mxu0 %v297
  %v696 = vpop.f32.mrb[0].mxu0
  %v697 = vadd.f32 %v172, %v696
  %v698 = vpop.f32.mrb[0].mxu0
  %v699 = vpop.f32.mrb[0].mxu0
  %v700 = vadd.f32 %v177, %v699
  %v701 = vpop.f32.mrb[0].mxu0
  %702 = vmatprep.mubr.bf16.mxu0 %v305
  %703 = vmatmul.mubr.bf16.gmra.mrb[0].mxu0 %v304
  %v704 = vpop.f32.mrb[0].mxu0
  %v705 = vadd.f32 %v182, %v704
  %v706 = vpop.f32.mrb[0].mxu0
  %v707 = vpop.f32.mrb[0].mxu0
  %v708 = vadd.f32 %v187, %v707
  %v709 = vpop.f32.mrb[0].mxu0
  %710 = vmatprep.mubr.bf16.mxu0 %v312
  %711 = vmatmul.mubr.bf16.gmra.mrb[0].mxu0 %v311
  %v712 = vpop.f32.mrb[0].mxu0
  %v713 = vadd.f32 %v192, %v712
  %v714 = vpop.f32.mrb[0].mxu0
  %v715 = vpop.f32.mrb[0].mxu0
  %v716 = vadd.f32 %v197, %v715
  %v717 = vpop.f32.mrb[0].mxu0
  %718 = vmatprep.mubr.bf16.mxu0 %v319
  %719 = vmatmul.mubr.bf16.gmra.mrb[0].mxu0 %v318
  %v720 = vpop.f32.mrb[0].mxu0
  %v721 = vadd.f32 %v202, %v720
  %v722 = vpop.f32.mrb[0].mxu0
  %v723 = vpop.f32.mrb[0].mxu0
  %v724 = vadd.f32 %v207, %v723
  %v725 = vpop.f32.mrb[0].mxu0
  %726 = vdwg.mxu0
  %727 = vmatprep.subr.bf16.mxu0 0
  %728 = vmatpush1.bf16.msra.mxu0 %v565
  %729 = vmatprep.subr.bf16.mxu0 0
  %730 = vmatpush1.bf16.msra.mxu0 %v566
  %731 = vmatprep.subr.bf16.mxu0 0
  %732 = vmatpush1.bf16.msra.mxu0 %v567
  %733 = vmatprep.subr.bf16.mxu0 0
  %734 = vmatpush1.bf16.msra.mxu0 %v568
  %735 = vmatprep.subr.bf16.mxu0 0
  %736 = vmatpush1.bf16.msra.mxu0 %v569
  %737 = vmatprep.subr.bf16.mxu0 0
  %738 = vmatpush1.bf16.msra.mxu0 %v570
  %739 = vmatprep.subr.bf16.mxu0 0
  %740 = vmatpush1.bf16.msra.mxu0 %v571
  %741 = vmatprep.subr.bf16.mxu0 0
  %742 = vmatpush1.bf16.msra.mxu0 %v572
  %743 = vmatprep.subr.bf16.mxu0 0
  %744 = vmatpush1.bf16.msra.mxu0 %v573
  %745 = vmatprep.subr.bf16.mxu0 0
  %746 = vmatpush1.bf16.msra.mxu0 %v574
  %747 = vmatprep.subr.bf16.mxu0 0
  %748 = vmatpush1.bf16.msra.mxu0 %v575
  %749 = vmatprep.subr.bf16.mxu0 0
  %750 = vmatpush1.bf16.msra.mxu0 %v576
  %751 = vmatprep.subr.bf16.mxu0 0
  %752 = vmatpush1.bf16.msra.mxu0 %v577
  %753 = vmatprep.subr.bf16.mxu0 0
  %754 = vmatpush1.bf16.msra.mxu0 %v578
  %755 = vmatprep.subr.bf16.mxu0 0
  %756 = vmatpush1.bf16.msra.mxu0 %v579
  %757 = vmatprep.subr.bf16.mxu0 0
  %758 = vmatpush1.bf16.msra.mxu0 %v580
  %759 = vmatprep.mubr.bf16.mxu0 %v300
  %760 = vmatmul.mubr.bf16.gmra.mrb[0].mxu0 %v299
  %v761 = vpop.f32.mrb[0].mxu0
  %v762 = vadd.f32 %v697, %v761
  %v763 = vpop.f32.mrb[0].mxu0
  %v764 = vpop.f32.mrb[0].mxu0
  %v765 = vadd.f32 %v700, %v764
  %v766 = vpop.f32.mrb[0].mxu0
  %767 = vmatprep.mubr.bf16.mxu0 %v307
  %768 = vmatmul.mubr.bf16.gmra.mrb[0].mxu0 %v306
  %v769 = vpop.f32.mrb[0].mxu0
  %v770 = vadd.f32 %v705, %v769
  %v771 = vpop.f32.mrb[0].mxu0
  %v772 = vpop.f32.mrb[0].mxu0
  %v773 = vadd.f32 %v708, %v772
  %v774 = vpop.f32.mrb[0].mxu0
  %775 = vmatprep.mubr.bf16.mxu0 %v314
  %776 = vmatmul.mubr.bf16.gmra.mrb[0].mxu0 %v313
  %v777 = vpop.f32.mrb[0].mxu0
  %v778 = vadd.f32 %v713, %v777
  %v779 = vpop.f32.mrb[0].mxu0
  %v780 = vpop.f32.mrb[0].mxu0
  %v781 = vadd.f32 %v716, %v780
  %v782 = vpop.f32.mrb[0].mxu0
  %783 = vmatprep.mubr.bf16.mxu0 %v321
  %784 = vmatmul.mubr.bf16.gmra.mrb[0].mxu0 %v320
  %v785 = vpop.f32.mrb[0].mxu0
  %v786 = vadd.f32 %v721, %v785
  %v787 = vpop.f32.mrb[0].mxu0
  %v788 = vpop.f32.mrb[0].mxu0
  %v789 = vadd.f32 %v724, %v788
  %v790 = vpop.f32.mrb[0].mxu0
  %791 = vdwg.mxu0
  %792 = vmatprep.subr.bf16.mxu0 0
  %793 = vmatpush1.bf16.msra.mxu0 %v581
  %794 = vmatprep.subr.bf16.mxu0 0
  %795 = vmatpush1.bf16.msra.mxu0 %v582
  %796 = vmatprep.subr.bf16.mxu0 0
  %797 = vmatpush1.bf16.msra.mxu0 %v583
  %798 = vmatprep.subr.bf16.mxu0 0
  %799 = vmatpush1.bf16.msra.mxu0 %v584
  %800 = vmatprep.subr.bf16.mxu0 0
  %801 = vmatpush1.bf16.msra.mxu0 %v585
  %802 = vmatprep.subr.bf16.mxu0 0
  %803 = vmatpush1.bf16.msra.mxu0 %v586
  %804 = vmatprep.subr.bf16.mxu0 0
  %805 = vmatpush1.bf16.msra.mxu0 %v587
  %806 = vmatprep.subr.bf16.mxu0 0
  %807 = vmatpush1.bf16.msra.mxu0 %v588
  %808 = vmatprep.subr.bf16.mxu0 0
  %809 = vmatpush1.bf16.msra.mxu0 %v589
  %810 = vmatprep.subr.bf16.mxu0 0
  %811 = vmatpush1.bf16.msra.mxu0 %v590
  %812 = vmatprep.subr.bf16.mxu0 0
  %813 = vmatpush1.bf16.msra.mxu0 %v591
  %814 = vmatprep.subr.bf16.mxu0 0
  %815 = vmatpush1.bf16.msra.mxu0 %v592
  %816 = vmatprep.subr.bf16.mxu0 0
  %817 = vmatpush1.bf16.msra.mxu0 %v593
  %818 = vmatprep.subr.bf16.mxu0 0
  %819 = vmatpush1.bf16.msra.mxu0 %v594
  %820 = vmatprep.subr.bf16.mxu0 0
  %821 = vmatpush1.bf16.msra.mxu0 %v595
  %822 = vmatprep.subr.bf16.mxu0 0
  %823 = vmatpush1.bf16.msra.mxu0 %v596
  %824 = vmatprep.mubr.bf16.mxu0 %v302
  %825 = vmatmul.mubr.bf16.gmra.mrb[0].mxu0 %v301
  %v826 = vpop.f32.mrb[0].mxu0
  %v827 = vadd.f32 %v762, %v826
  %v828 = vpop.f32.mrb[0].mxu0
  %v829 = vpop.f32.mrb[0].mxu0
  %v830 = vadd.f32 %v765, %v829
  %v831 = vpop.f32.mrb[0].mxu0
  %832 = vmatprep.mubr.bf16.mxu0 %v309
  %833 = vmatmul.mubr.bf16.gmra.mrb[0].mxu0 %v308
  %v834 = vpop.f32.mrb[0].mxu0
  %v835 = vadd.f32 %v770, %v834
  %v836 = vpop.f32.mrb[0].mxu0
  %v837 = vpop.f32.mrb[0].mxu0
  %v838 = vadd.f32 %v773, %v837
  %v839 = vpop.f32.mrb[0].mxu0
  %840 = vmatprep.mubr.bf16.mxu0 %v316
  %841 = vmatmul.mubr.bf16.gmra.mrb[0].mxu0 %v315
  %v842 = vpop.f32.mrb[0].mxu0
  %v843 = vadd.f32 %v778, %v842
  %v844 = vpop.f32.mrb[0].mxu0
  %v845 = vpop.f32.mrb[0].mxu0
  %v846 = vadd.f32 %v781, %v845
  %v847 = vpop.f32.mrb[0].mxu0
  %848 = vmatprep.mubr.bf16.mxu0 %v323
  %849 = vmatmul.mubr.bf16.gmra.mrb[0].mxu0 %v322
  %v850 = vpop.f32.mrb[0].mxu0
  %v851 = vadd.f32 %v786, %v850
  %v852 = vpop.f32.mrb[0].mxu0
  %v853 = vpop.f32.mrb[0].mxu0
  %v854 = vadd.f32 %v789, %v853
  %v855 = vpop.f32.mrb[0].mxu0
  %856 = vdwg.mxu0
  %857 = vmatprep.subr.bf16.mxu0 0
  %858 = vmatpush1.bf16.msra.mxu0 %v597
  %859 = vmatprep.subr.bf16.mxu0 0
  %860 = vmatpush1.bf16.msra.mxu0 %v598
  %861 = vmatprep.subr.bf16.mxu0 0
  %862 = vmatpush1.bf16.msra.mxu0 0
  %863 = vmatprep.subr.bf16.mxu0 0
  %864 = vmatpush1.bf16.msra.mxu0 0
  %865 = vmatprep.subr.bf16.mxu0 0
  %866 = vmatpush1.bf16.msra.mxu0 0
  %867 = vmatprep.subr.bf16.mxu0 0
  %868 = vmatpush1.bf16.msra.mxu0 0
  %869 = vmatprep.subr.bf16.mxu0 0
  %870 = vmatpush1.bf16.msra.mxu0 0
  %871 = vmatprep.subr.bf16.mxu0 0
  %872 = vmatpush1.bf16.msra.mxu0 0
  %873 = vmatprep.subr.bf16.mxu0 0
  %874 = vmatpush1.bf16.msra.mxu0 0
  %875 = vmatprep.subr.bf16.mxu0 0
  %876 = vmatpush1.bf16.msra.mxu0 0
  %877 = vmatprep.subr.bf16.mxu0 0
  %878 = vmatpush1.bf16.msra.mxu0 0
  %879 = vmatprep.subr.bf16.mxu0 0
  %880 = vmatpush1.bf16.msra.mxu0 0
  %881 = vmatprep.subr.bf16.mxu0 0
  %882 = vmatpush1.bf16.msra.mxu0 0
  %883 = vmatprep.subr.bf16.mxu0 0
  %884 = vmatpush1.bf16.msra.mxu0 0
  %885 = vmatprep.subr.bf16.mxu0 0
  %886 = vmatpush1.bf16.msra.mxu0 0
  %887 = vmatprep.subr.bf16.mxu0 0
  %888 = vmatpush1.bf16.msra.mxu0 0
  %889 = vmatprep.mubr.bf16.mxu0 0
  %890 = vmatmul.mubr.bf16.gmra.mrb[0].mxu0 %v651
  %v891 = vpop.f32.mrb[0].mxu0
  %v892 = vadd.f32 %v827, %v891
  %v893 = vpop.f32.mrb[0].mxu0
  %v894 = vpop.f32.mrb[0].mxu0
  %v895 = vadd.f32 %v830, %v894
  %v896 = vpop.f32.mrb[0].mxu0
  %897 = vmatprep.mubr.bf16.mxu0 0
  %898 = vmatmul.mubr.bf16.gmra.mrb[0].mxu0 %v654
  %v899 = vpop.f32.mrb[0].mxu0
  %v900 = vadd.f32 %v835, %v899
  %v901 = vpop.f32.mrb[0].mxu0
  %v902 = vpop.f32.mrb[0].mxu0
  %v903 = vadd.f32 %v838, %v902
  %v904 = vpop.f32.mrb[0].mxu0
  %905 = vmatprep.mubr.bf16.mxu0 0
  %906 = vmatmul.mubr.bf16.gmra.mrb[0].mxu0 %v657
  %v907 = vpop.f32.mrb[0].mxu0
  %v908 = vadd.f32 %v843, %v907
  %v909 = vpop.f32.mrb[0].mxu0
  %v910 = vpop.f32.mrb[0].mxu0
  %v911 = vadd.f32 %v846, %v910
  %v912 = vpop.f32.mrb[0].mxu0
  %913 = vmatprep.mubr.bf16.mxu0 0
  %914 = vmatmul.mubr.bf16.gmra.mrb[0].mxu0 %v660
  %v915 = vpop.f32.mrb[0].mxu0
  %v916 = vadd.f32 %v851, %v915
  %v917 = vpop.f32.mrb[0].mxu0
  %v918 = vpop.f32.mrb[0].mxu0
  %v919 = vadd.f32 %v854, %v918
  %v920 = vpop.f32.mrb[0].mxu0
  %921 = vdwg.mxu0
  %922 = vadd.xlane.f32.xlu0 %v892
  %v923 = vpop.xlane.xlu0 %922
  %924 = vadd.xlane.f32.xlu0 %v895
  %v925 = vpop.xlane.xlu0 %924
  %926 = vadd.xlane.f32.xlu0 %v900
  %v927 = vpop.xlane.xlu0 %926
  %928 = vadd.xlane.f32.xlu0 %v903
  %v929 = vpop.xlane.xlu0 %928
  %930 = vadd.xlane.f32.xlu0 %v908
  %v931 = vpop.xlane.xlu0 %930
  %932 = vadd.xlane.f32.xlu0 %v911
  %v933 = vpop.xlane.xlu0 %932
  %934 = vadd.xlane.f32.xlu0 %v916
  %v935 = vpop.xlane.xlu0 %934
  %936 = vadd.xlane.f32.xlu0 %v919
  %v937 = vpop.xlane.xlu0 %936
  %v938 = vmul.f32 %v923, 0.0078125
  %v939 = vmul.f32 %v925, 0.0078125
  %v940 = vmul.f32 %v927, 0.0078125
  %v941 = vmul.f32 %v929, 0.0078125
  %v942 = vmul.f32 %v931, 0.0078125
  %v943 = vmul.f32 %v933, 0.0078125
  %v944 = vmul.f32 %v935, 0.0078125
  %v945 = vmul.f32 %v937, 0.0078125
  %v946 = vsub.f32 %v892, %v938
  %v947 = vsub.f32 %v895, %v939
  %v948 = vsub.f32 %v900, %v940
  %v949 = vsub.f32 %v903, %v941
  %v950 = vsub.f32 %v908, %v942
  %v951 = vsub.f32 %v911, %v943
  %v952 = vsub.f32 %v916, %v944
  %v953 = vsub.f32 %v919, %v945
  %v954 = vmul.f32 %v946, %v946
  %v955 = vmul.f32 %v947, %v947
  %v956 = vmul.f32 %v948, %v948
  %v957 = vmul.f32 %v949, %v949
  %v958 = vmul.f32 %v950, %v950
  %v959 = vmul.f32 %v951, %v951
  %v960 = vmul.f32 %v952, %v952
  %v961 = vmul.f32 %v953, %v953
  %962 = vadd.xlane.f32.xlu0 %v954
  %v963 = vpop.xlane.xlu0 %962
  %964 = vadd.xlane.f32.xlu0 %v955
  %v965 = vpop.xlane.xlu0 %964
  %966 = vadd.xlane.f32.xlu0 %v956
  %v967 = vpop.xlane.xlu0 %966
  %968 = vadd.xlane.f32.xlu0 %v957
  %v969 = vpop.xlane.xlu0 %968
  %970 = vadd.xlane.f32.xlu0 %v958
  %v971 = vpop.xlane.xlu0 %970
  %972 = vadd.xlane.f32.xlu0 %v959
  %v973 = vpop.xlane.xlu0 %972
  %974 = vadd.xlane.f32.xlu0 %v960
  %v975 = vpop.xlane.xlu0 %974
  %976 = vadd.xlane.f32.xlu0 %v961
  %v977 = vpop.xlane.xlu0 %976
  %v978 = vmul.f32 %v963, 0.0078125
  %v979 = vmul.f32 %v965, 0.0078125
  %v980 = vmul.f32 %v967, 0.0078125
  %v981 = vmul.f32 %v969, 0.0078125
  %v982 = vmul.f32 %v971, 0.0078125
  %v983 = vmul.f32 %v973, 0.0078125
  %v984 = vmul.f32 %v975, 0.0078125
  %v985 = vmul.f32 %v977, 0.0078125
  %v986 = vld [vmem:[%s3] sm:$0xff]
  %v987 = vld [vmem:[%s3 + $0x8] sm:$0xff]
  %v988 = vld [vmem:[%s3 + $0x10] sm:$0xff]
  %v989 = vld [vmem:[%s3 + $0x18] sm:$0xff]
  %v990 = vld [vmem:[%s3 + $0x20] sm:$0xff]
  %v991 = vld [vmem:[%s3 + $0x28] sm:$0xff]
  %v992 = vld [vmem:[%s3 + $0x30] sm:$0xff]
  %v993 = vld [vmem:[%s3 + $0x38] sm:$0xff]
  %v994 = vadd.f32 %v978, 1e-05
  %v995 = vadd.f32 %v979, 1e-05
  %v996 = vadd.f32 %v980, 1e-05
  %v997 = vadd.f32 %v981, 1e-05
  %v998 = vadd.f32 %v982, 1e-05
  %v999 = vadd.f32 %v983, 1e-05
  %v1000 = vadd.f32 %v984, 1e-05
  %v1001 = vadd.f32 %v985, 1e-05
  %v1002 = vrsqrt.pop %v994
  %v1003 = vrsqrt.pop %v995
  %v1004 = vrsqrt.pop %v996
  %v1005 = vrsqrt.pop %v997
  %v1006 = vrsqrt.pop %v998
  %v1007 = vrsqrt.pop %v999
  %v1008 = vrsqrt.pop %v1000
  %v1009 = vrsqrt.pop %v1001
  %v1010 = vmul.f32 %v986, %v1002
  %v1011 = vmul.f32 %v987, %v1003
  %v1012 = vmul.f32 %v988, %v1004
  %v1013 = vmul.f32 %v989, %v1005
  %v1014 = vmul.f32 %v990, %v1006
  %v1015 = vmul.f32 %v991, %v1007
  %v1016 = vmul.f32 %v992, %v1008
  %v1017 = vmul.f32 %v993, %v1009
  %1019 = vset.pattern.permute.xlu0 0
  %1020 = vperm.xlu0 %1019, %v1010
  %v1021 = vpop.permute.xlu0 %1020
  %1024 = vset.pattern.permute.xlu0 0
  %1025 = vperm.xlu0 %1024, %v1011
  %v1026 = vpop.permute.xlu0 %1025
  %1029 = vset.pattern.permute.xlu0 0
  %1030 = vperm.xlu0 %1029, %v1012
  %v1031 = vpop.permute.xlu0 %1030
  %1034 = vset.pattern.permute.xlu0 0
  %1035 = vperm.xlu0 %1034, %v1013
  %v1036 = vpop.permute.xlu0 %1035
  %1039 = vset.pattern.permute.xlu0 0
  %1040 = vperm.xlu0 %1039, %v1014
  %v1041 = vpop.permute.xlu0 %1040
  %1044 = vset.pattern.permute.xlu0 0
  %1045 = vperm.xlu0 %1044, %v1015
  %v1046 = vpop.permute.xlu0 %1045
  %1049 = vset.pattern.permute.xlu0 0
  %1050 = vperm.xlu0 %1049, %v1016
  %v1051 = vpop.permute.xlu0 %1050
  %1054 = vset.pattern.permute.xlu0 0
  %1055 = vperm.xlu0 %1054, %v1017
  %v1056 = vpop.permute.xlu0 %1055
  %v1058 = vmul.f32 %v946, %v1021
  %v1059 = vmul.f32 %v947, %v1026
  %v1060 = vmul.f32 %v948, %v1031
  %v1061 = vmul.f32 %v949, %v1036
  %v1062 = vmul.f32 %v950, %v1041
  %v1063 = vmul.f32 %v951, %v1046
  %v1064 = vmul.f32 %v952, %v1051
  %v1065 = vmul.f32 %v953, %v1056
  %v1066 = vld [vmem:[%s4] sm:$0xff]
  %v1067 = vld [vmem:[%s4 + $0x8] sm:$0xff]
  %v1068 = vld [vmem:[%s4 + $0x10] sm:$0xff]
  %v1069 = vld [vmem:[%s4 + $0x18] sm:$0xff]
  %v1070 = vld [vmem:[%s4 + $0x20] sm:$0xff]
  %v1071 = vld [vmem:[%s4 + $0x28] sm:$0xff]
  %v1072 = vld [vmem:[%s4 + $0x30] sm:$0xff]
  %v1073 = vld [vmem:[%s4 + $0x38] sm:$0xff]
  %1075 = vset.pattern.permute.xlu0 0
  %1076 = vperm.xlu0 %1075, %v1066
  %v1077 = vpop.permute.xlu0 %1076
  %1080 = vset.pattern.permute.xlu0 0
  %1081 = vperm.xlu0 %1080, %v1067
  %v1082 = vpop.permute.xlu0 %1081
  %1085 = vset.pattern.permute.xlu0 0
  %1086 = vperm.xlu0 %1085, %v1068
  %v1087 = vpop.permute.xlu0 %1086
  %1090 = vset.pattern.permute.xlu0 0
  %1091 = vperm.xlu0 %1090, %v1069
  %v1092 = vpop.permute.xlu0 %1091
  %1095 = vset.pattern.permute.xlu0 0
  %1096 = vperm.xlu0 %1095, %v1070
  %v1097 = vpop.permute.xlu0 %1096
  %1100 = vset.pattern.permute.xlu0 0
  %1101 = vperm.xlu0 %1100, %v1071
  %v1102 = vpop.permute.xlu0 %1101
  %1105 = vset.pattern.permute.xlu0 0
  %1106 = vperm.xlu0 %1105, %v1072
  %v1107 = vpop.permute.xlu0 %1106
  %1110 = vset.pattern.permute.xlu0 0
  %1111 = vperm.xlu0 %1110, %v1073
  %v1112 = vpop.permute.xlu0 %1111
  %v1114 = vadd.f32 %v1058, %v1077
  %v1115 = vadd.f32 %v1059, %v1082
  %v1116 = vadd.f32 %v1060, %v1087
  %v1117 = vadd.f32 %v1061, %v1092
  %v1118 = vadd.f32 %v1062, %v1097
  %v1119 = vadd.f32 %v1063, %v1102
  %v1120 = vadd.f32 %v1064, %v1107
  %v1121 = vadd.f32 %v1065, %v1112
  %v1122 = vmul.f32 %v1114, 0.2
  %v1123 = vmul.f32 %v1115, 0.2
  %v1124 = vmul.f32 %v1116, 0.2
  %v1125 = vmul.f32 %v1117, 0.2
  %v1126 = vmul.f32 %v1118, 0.2
  %v1127 = vmul.f32 %v1119, 0.2
  %v1128 = vmul.f32 %v1120, 0.2
  %v1129 = vmul.f32 %v1121, 0.2
  %v1130 = vmax.f32 %v1114, %v1122
  %v1131 = vmax.f32 %v1115, %v1123
  %v1132 = vmax.f32 %v1116, %v1124
  %v1133 = vmax.f32 %v1117, %v1125
  %v1134 = vmax.f32 %v1118, %v1126
  %v1135 = vmax.f32 %v1119, %v1127
  %v1136 = vmax.f32 %v1120, %v1128
  %v1137 = vmax.f32 %v1121, %v1129
  %v1138 = vld [vmem:[%s5] sm:$0xff]
  %v1139 = vld [vmem:[%s5 + $0x8] sm:$0xff]
  %v1140 = vld [vmem:[%s5 + $0x10] sm:$0xff]
  %v1141 = vld [vmem:[%s5 + $0x18] sm:$0xff]
  %v1142 = vld [vmem:[%s5 + $0x20] sm:$0xff]
  %v1143 = vld [vmem:[%s5 + $0x28] sm:$0xff]
  %v1144 = vld [vmem:[%s5 + $0x30] sm:$0xff]
  %v1145 = vld [vmem:[%s5 + $0x38] sm:$0xff]
  %v1146 = vmul.f32 %v1130, %v1138
  %v1147 = vmul.f32 %v1131, %v1139
  %v1148 = vmul.f32 %v1132, %v1140
  %v1149 = vmul.f32 %v1133, %v1141
  %v1150 = vmul.f32 %v1134, %v1142
  %v1151 = vmul.f32 %v1135, %v1143
  %v1152 = vmul.f32 %v1136, %v1144
  %v1153 = vmul.f32 %v1137, %v1145
  %vm1154 = vcmask 523264
  %v1155 = vsel %vm1154, %v1146, 0.0
  %1156 = vadd.xlane.f32.xlu0 %v1155
  %v1157 = vpop.xlane.xlu0 %1156
  %v1158 = vsel %vm1154, %v1147, 0.0
  %1159 = vadd.xlane.f32.xlu0 %v1158
  %v1160 = vpop.xlane.xlu0 %1159
  %v1161 = vsel %vm1154, %v1148, 0.0
  %1162 = vadd.xlane.f32.xlu0 %v1161
  %v1163 = vpop.xlane.xlu0 %1162
  %v1164 = vsel %vm1154, %v1149, 0.0
  %1165 = vadd.xlane.f32.xlu0 %v1164
  %v1166 = vpop.xlane.xlu0 %1165
  %v1167 = vsel %vm1154, %v1150, 0.0
  %1168 = vadd.xlane.f32.xlu0 %v1167
  %v1169 = vpop.xlane.xlu0 %1168
  %v1170 = vsel %vm1154, %v1151, 0.0
  %1171 = vadd.xlane.f32.xlu0 %v1170
  %v1172 = vpop.xlane.xlu0 %1171
  %v1173 = vsel %vm1154, %v1152, 0.0
  %1174 = vadd.xlane.f32.xlu0 %v1173
  %v1175 = vpop.xlane.xlu0 %1174
  %v1176 = vsel %vm1154, %v1153, 0.0
  %1177 = vadd.xlane.f32.xlu0 %v1176
  %v1178 = vpop.xlane.xlu0 %1177
  %v1179 = vadd.f32 %v1157, %v1160
  %v1180 = vadd.f32 %v1179, %v1163
  %v1181 = vadd.f32 %v1180, %v1166
  %v1182 = vadd.f32 %v1181, %v1169
  %v1183 = vadd.f32 %v1182, %v1172
  %v1184 = vadd.f32 %v1183, %v1175
  %v1185 = vadd.f32 %v1184, %v1178
  %v1186 = vrot.slane %v1185, 4
  %v1187 = vadd.f32 %v1185, %v1186
  %v1188 = vrot.slane %v1187, 2
  %v1189 = vadd.f32 %v1187, %v1188
  %v1190 = vrot.slane %v1189, 1
  %v1191 = vadd.f32 %v1189, %v1190
  %v1192 = vld [vmem:[#allocation2] sm:$0x1]
  %v1193 = vadd.f32 %v1191, %v1192
  %1202 = vrot.lane.b32.xlu0 %v1138, 64
  %v1203 = vpop.permute.xlu0 %1202
  %1204 = vrot.lane.b32.xlu0 %v1139, 64
  %v1205 = vpop.permute.xlu0 %1204
  %1206 = vrot.lane.b32.xlu0 %v1140, 64
  %v1207 = vpop.permute.xlu0 %1206
  %1208 = vrot.lane.b32.xlu0 %v1141, 64
  %v1209 = vpop.permute.xlu0 %1208
  %1210 = vrot.lane.b32.xlu0 %v1142, 64
  %v1211 = vpop.permute.xlu0 %1210
  %1212 = vrot.lane.b32.xlu0 %v1143, 64
  %v1213 = vpop.permute.xlu0 %1212
  %1214 = vrot.lane.b32.xlu0 %v1144, 64
  %v1215 = vpop.permute.xlu0 %1214
  %1216 = vrot.lane.b32.xlu0 %v1145, 64
  %v1217 = vpop.permute.xlu0 %1216
  %v1226 = vmul.f32 %v1130, %v1203
  %v1227 = vmul.f32 %v1131, %v1205
  %v1228 = vmul.f32 %v1132, %v1207
  %v1229 = vmul.f32 %v1133, %v1209
  %v1230 = vmul.f32 %v1134, %v1211
  %v1231 = vmul.f32 %v1135, %v1213
  %v1232 = vmul.f32 %v1136, %v1215
  %v1233 = vmul.f32 %v1137, %v1217
  %1242 = vrot.lane.b32.xlu0 %v1226, 64
  %v1243 = vpop.permute.xlu0 %1242
  %1244 = vrot.lane.b32.xlu0 %v1227, 64
  %v1245 = vpop.permute.xlu0 %1244
  %1246 = vrot.lane.b32.xlu0 %v1228, 64
  %v1247 = vpop.permute.xlu0 %1246
  %1248 = vrot.lane.b32.xlu0 %v1229, 64
  %v1249 = vpop.permute.xlu0 %1248
  %1250 = vrot.lane.b32.xlu0 %v1230, 64
  %v1251 = vpop.permute.xlu0 %1250
  %1252 = vrot.lane.b32.xlu0 %v1231, 64
  %v1253 = vpop.permute.xlu0 %1252
  %1254 = vrot.lane.b32.xlu0 %v1232, 64
  %v1255 = vpop.permute.xlu0 %1254
  %1256 = vrot.lane.b32.xlu0 %v1233, 64
  %v1257 = vpop.permute.xlu0 %1256
  %v1266 = vsel %vm1154, %v1243, 0.0
  %1267 = vadd.xlane.f32.xlu0 %v1266
  %v1268 = vpop.xlane.xlu0 %1267
  %v1269 = vsel %vm1154, %v1245, 0.0
  %1270 = vadd.xlane.f32.xlu0 %v1269
  %v1271 = vpop.xlane.xlu0 %1270
  %v1272 = vsel %vm1154, %v1247, 0.0
  %1273 = vadd.xlane.f32.xlu0 %v1272
  %v1274 = vpop.xlane.xlu0 %1273
  %v1275 = vsel %vm1154, %v1249, 0.0
  %1276 = vadd.xlane.f32.xlu0 %v1275
  %v1277 = vpop.xlane.xlu0 %1276
  %v1278 = vsel %vm1154, %v1251, 0.0
  %1279 = vadd.xlane.f32.xlu0 %v1278
  %v1280 = vpop.xlane.xlu0 %1279
  %v1281 = vsel %vm1154, %v1253, 0.0
  %1282 = vadd.xlane.f32.xlu0 %v1281
  %v1283 = vpop.xlane.xlu0 %1282
  %v1284 = vsel %vm1154, %v1255, 0.0
  %1285 = vadd.xlane.f32.xlu0 %v1284
  %v1286 = vpop.xlane.xlu0 %1285
  %v1287 = vsel %vm1154, %v1257, 0.0
  %1288 = vadd.xlane.f32.xlu0 %v1287
  %v1289 = vpop.xlane.xlu0 %1288
  %v1290 = vadd.f32 %v1268, %v1271
  %v1291 = vadd.f32 %v1290, %v1274
  %v1292 = vadd.f32 %v1291, %v1277
  %v1293 = vadd.f32 %v1292, %v1280
  %v1294 = vadd.f32 %v1293, %v1283
  %v1295 = vadd.f32 %v1294, %v1286
  %v1296 = vadd.f32 %v1295, %v1289
  %v1297 = vrot.slane %v1296, 4
  %v1298 = vadd.f32 %v1296, %v1297
  %v1299 = vrot.slane %v1298, 2
  %v1300 = vadd.f32 %v1298, %v1299
  %v1301 = vrot.slane %v1300, 1
  %v1302 = vadd.f32 %v1300, %v1301
  %v1303 = vadd.f32 %v1302, %v1192
  %v1305 = vlaneseq
  %v1306 = vshrl.u32 %v1305, 7
  %v1307 = vsub.s32 0, %v1306
  %v1308 = vrot.slane %v1303, %v1307
  %vm1310 = vcmask 1040384
  %v1311 = vsel %vm1310, %v1193, %v1308
  %v1312 = vsub.f32 0.0, %v1311
  %v1313 = vmul.f32 %v1312, 1.442695
  %v1314 = vpow.pop %v1313
  %v1315 = vadd.f32 %v1314, 1.0
  %v1316 = vrcp.pop %v1315
  %v1317 = vmul.f32 1.0, %v1316
  %vm1318 = vcmask 1024
  %1319 = vst.msk [vmem:[%s7] sm:$0x3] %vm1318, %v1317
  // Predicated region
  $region30: #{dis_forward.7} parent=0 // pred_check
    _
  $region31: #{dis_forward.7} parent=0 // pred_check_branch
    %1321 = sbr.rel (0) target = $region33
  $region32: #{dis_forward.7} parent=0 // pred_region
    _
  $region33: #{dis_forward.7} parent=0 // pred_fallthru
    _
  // Predicated region
  $region34: #{dis_forward.7} parent=0 // pred_check
    _
  $region35: #{dis_forward.7} parent=0 // pred_check_branch
    %1323 = sbr.rel (0) target = $region37
  $region36: #{dis_forward.7} parent=0 // pred_region
    _
  $region37: #{dis_forward.7} parent=0 // pred_fallthru
    _

</llo_original>
